<compile_context>
chip_gen: v7x
topology: tpu7x:2x2x1
jax: 0.10.0
libtpu: 0.0.40
codegen_flags: <defaults>
</compile_context>

<pallas_src>
import functools

import jax
import jax.numpy as jnp
from jax.experimental import pallas as pl
from jax.experimental.pallas import tpu as pltpu


def _leaky_relu(x, alpha=0.2):
    return jnp.where(x > 0, x, alpha * x)


def _round_up(n, m):
    return (n + m - 1) // m * m


def _make_kernel(lane_dense_out):
    def kernel(x_ref,
               w1_ref, b1_ref,
               w2_ref, b2_ref,
               w3_ref, b3_ref,
               w4_ref, b4_ref,
               out_ref):
        # fc1 + LeakyReLU: bf16 operands, fp32 MXU accumulation.  Cast the
        # activation back to bf16 in the epilogue so the (TB,1024) / (TB,512)
        # intermediates stay half-width in VMEM (matters at TB=512-1024).
        h = jnp.dot(x_ref[...], w1_ref[...], preferred_element_type=jnp.float32)
        h = _leaky_relu(h + b1_ref[...]).astype(jnp.bfloat16)
        # TODO(synk): nn.Dropout(0.3) is identity in eval mode; training-mode
        #             dropout is not implemented here.

        # fc2 + LeakyReLU
        h = jnp.dot(h, w2_ref[...], preferred_element_type=jnp.float32)
        h = _leaky_relu(h + b2_ref[...]).astype(jnp.bfloat16)

        # fc3 + LeakyReLU (kept fp32: feeds the fp32 fc4 reduction)
        h = jnp.dot(h, w3_ref[...], preferred_element_type=jnp.float32)
        h = _leaky_relu(h + b3_ref[...])

        # fc4 (N=1): VPU multiply + XLU lane reduction against the (1, 256)
        # row vector instead of a <1%-utilized 1-column MXU matmul.
        logits = jnp.sum(h * w4_ref[...], axis=-1, keepdims=True) + b4_ref[...]

        if lane_dense_out:
            # (TB,1) -> (1,TB): one cheap XLU transpose so the sigmoid runs on
            # dense vregs and the output store is an unmasked lane-dense vst.
            logits = jnp.transpose(logits)

        # Sigmoid: exp + approx reciprocal both land on the EUP slot.
        out_ref[...] = pl.reciprocal(1.0 + jnp.exp(-logits),
                                     approx=True).astype(out_ref.dtype)

    return kernel


@functools.partial(jax.jit, static_argnames=("block_b", "fast"))
def _forward(x, params, *, block_b=1024, fast=True):
    """x: (B, 784) float32/bfloat16.  params: bf16 (in, out) weights for
    fc1..fc3, fp32 (1, 256) row vector for fc4, fp32 (1, out) biases."""
    B = x.shape[0]
    x = x.astype(jnp.bfloat16)  # halve the activation HBM stream / VMEM tile

    # Batch tile: multiple of 16 sublanes (bf16 packing), capped at block_b.
    TB = min(block_b, _round_up(B, 16))
    # v7x megacore: if everything fits one tile but the batch is big, split it
    # into two tiles so both TensorCores get work (axis is "parallel").
    if B >= 256 and _round_up(B, 16) <= TB:
        TB = _round_up((B + 1) // 2, 16)
    Bp = _round_up(B, TB)
    if Bp != B:
        x = jnp.pad(x, ((0, Bp - B), (0, 0)))
    n_tiles = Bp // TB

    def resident(shape):
        # Full-array block, same index every grid step -> stays VMEM resident.
        if fast:
            # Constant blocks never re-DMA; single-buffering frees ~2.8 MiB.
            return pl.BlockSpec(shape, lambda i: (0, 0),
                                pipeline_mode=pl.Buffered(1))
        return pl.BlockSpec(shape, lambda i: (0, 0))

    if fast:
        # Lane-dense output: one (1, TB) row per grid step.
        out_shape = jax.ShapeDtypeStruct((n_tiles, TB), jnp.float32)
        out_spec = pl.BlockSpec((1, TB), lambda i: (i, 0))
    else:
        out_shape = jax.ShapeDtypeStruct((Bp, 1), jnp.float32)
        out_spec = pl.BlockSpec((TB, 1), lambda i: (i, 0))

    out = pl.pallas_call(
        _make_kernel(lane_dense_out=fast),
        out_shape=out_shape,
        grid=(n_tiles,),
        in_specs=[
            pl.BlockSpec((TB, 784), lambda i: (i, 0)),    # x batch tile (bf16)
            resident((784, 1024)), resident((1, 1024)),   # fc1
            resident((1024, 512)), resident((1, 512)),    # fc2
            resident((512, 256)), resident((1, 256)),     # fc3
            resident((1, 256)), resident((1, 1)),         # fc4 (row-vector w4)
        ],
        out_specs=out_spec,
        compiler_params=pltpu.CompilerParams(
            dimension_semantics=("parallel",),
            # 48 MiB fits every generation (v7x: 64 MiB physical) and leaves
            # room for TB=1024 tiles; 32 MiB is plenty for small tiles.
            vmem_limit_bytes=(48 << 20) if TB >= 512 else (32 << 20),
        ),
    )(x,
      params["w1"], params["b1"],
      params["w2"], params["b2"],
      params["w3"], params["b3"],
      params["w4"], params["b4"])

    return out.reshape(Bp, 1)[:B]


def discriminator_forward(x, params, *, block_b=1024):
    try:
        return _forward(x, params, block_b=block_b, fast=True)
    except Exception:
        # Fallback for jax builds that reject Buffered(1) single-buffering or
        # the in-kernel (TB,1)->(1,TB) transpose: default buffering + column
        # output (known-good configuration).
        return _forward(x, params, block_b=block_b, fast=False)


def init_params(key):
    """nn.Linear default init U(-1/sqrt(fan_in), +1/sqrt(fan_in)).
    w1..w3: (in, out) bfloat16; w4: (1, 256) fp32 row vector; biases fp32."""
    dims = [(784, 1024), (1024, 512), (512, 256), (256, 1)]
    params = {}
    for i, (fin, fout) in enumerate(dims, start=1):
        key, kw, kb = jax.random.split(key, 3)
        bound = 1.0 / (fin ** 0.5)
        w = jax.random.uniform(kw, (fin, fout), jnp.float32,
                               minval=-bound, maxval=bound)
        b = jax.random.uniform(kb, (1, fout), jnp.float32,
                               minval=-bound, maxval=bound)
        if i < 4:
            params[f"w{i}"] = w.astype(jnp.bfloat16)
        else:
            params[f"w{i}"] = w.reshape(1, fin)   # (1, 256) row vector, fp32
        params[f"b{i}"] = b
    return params


def reference_forward(x, params):
    """Pure-JAX reference doing the same math (bf16 operands, fp32 accum)."""
    h = jnp.dot(x.astype(jnp.bfloat16), params["w1"],
                preferred_element_type=jnp.float32) + params["b1"]
    h = jnp.where(h > 0, h, 0.2 * h)
    h = jnp.dot(h.astype(jnp.bfloat16), params["w2"],
                preferred_element_type=jnp.float32) + params["b2"]
    h = jnp.where(h > 0, h, 0.2 * h)
    h = jnp.dot(h.astype(jnp.bfloat16), params["w3"],
                preferred_element_type=jnp.float32) + params["b3"]
    h = jnp.where(h > 0, h, 0.2 * h)
    logits = jnp.sum(h * params["w4"], axis=-1, keepdims=True) + params["b4"]
    return jax.nn.sigmoid(logits)


if __name__ == "__main__":
    key = jax.random.PRNGKey(0)
    key, kx = jax.random.split(key)
    params = init_params(key)

    B = 2
    x = jax.random.normal(kx, (B, 784), jnp.float32)

    out = jax.block_until_ready(discriminator_forward(x, params))
    ref = reference_forward(x, params)

    assert out.shape == (B, 1), out.shape
    # bf16 weights/activations + approx reciprocal -> compare at ~1e-3 level.
    assert jnp.allclose(out, ref, atol=2e-3, rtol=2e-3), (out, ref)

    print("KERNEL_OK")
</pallas_src>

<mosaic_0001>
module attributes {stable_mosaic.version = 11 : i64} {
  func.func @kernel(%arg0: i32, %arg1: memref<16x784xbf16, #tpu.memory_space<vmem>>, %arg2: memref<784x1024xbf16, #tpu.memory_space<vmem>>, %arg3: memref<1x1024xf32, #tpu.memory_space<vmem>>, %arg4: memref<1024x512xbf16, #tpu.memory_space<vmem>>, %arg5: memref<1x512xf32, #tpu.memory_space<vmem>>, %arg6: memref<512x256xbf16, #tpu.memory_space<vmem>>, %arg7: memref<1x256xf32, #tpu.memory_space<vmem>>, %arg8: memref<1x256xf32, #tpu.memory_space<vmem>>, %arg9: memref<1x1xf32, #tpu.memory_space<vmem>>, %arg10: memref<1x16xf32, #tpu.memory_space<vmem>>) attributes {dimension_semantics = [#tpu.dimension_semantics<parallel>], iteration_bounds = array<i64: 1>, scalar_prefetch = 0 : i64, scratch_operands = 0 : i64, tpu.core_type = #tpu.core_type<tc>, window_params = [{transform_indices = @transform_0, window_bounds = array<i64: 16, 784>}, {pipeline_mode = #tpu.pipeline_mode<synchronous>, transform_indices = @transform_1, window_bounds = array<i64: 784, 1024>}, {pipeline_mode = #tpu.pipeline_mode<synchronous>, transform_indices = @transform_2, window_bounds = array<i64: 1, 1024>}, {pipeline_mode = #tpu.pipeline_mode<synchronous>, transform_indices = @transform_3, window_bounds = array<i64: 1024, 512>}, {pipeline_mode = #tpu.pipeline_mode<synchronous>, transform_indices = @transform_4, window_bounds = array<i64: 1, 512>}, {pipeline_mode = #tpu.pipeline_mode<synchronous>, transform_indices = @transform_5, window_bounds = array<i64: 512, 256>}, {pipeline_mode = #tpu.pipeline_mode<synchronous>, transform_indices = @transform_6, window_bounds = array<i64: 1, 256>}, {pipeline_mode = #tpu.pipeline_mode<synchronous>, transform_indices = @transform_7, window_bounds = array<i64: 1, 256>}, {pipeline_mode = #tpu.pipeline_mode<synchronous>, transform_indices = @transform_8, window_bounds = array<i64: 1, 1>}, {transform_indices = @transform_9, window_bounds = array<i64: 1, 16>}]} {
    %c0 = arith.constant 0 : index
    %c0_0 = arith.constant 0 : index
    %0 = vector.load %arg1[%c0, %c0_0] : memref<16x784xbf16, #tpu.memory_space<vmem>>, vector<16x784xbf16>
    %c0_1 = arith.constant 0 : index
    %c0_2 = arith.constant 0 : index
    %1 = vector.load %arg2[%c0_1, %c0_2] : memref<784x1024xbf16, #tpu.memory_space<vmem>>, vector<784x1024xbf16>
    %cst = arith.constant dense<0.000000e+00> : vector<16x1024xf32>
    %2 = tpu.matmul %0, %1, %cst {dimension_numbers = #tpu.dot_dimension_numbers<[1], [0], [0], [1], [0, 0, 1, 1], [], []>} : vector<16x784xbf16>, vector<784x1024xbf16>, vector<16x1024xf32> -> vector<16x1024xf32>
    %c0_3 = arith.constant 0 : index
    %c0_4 = arith.constant 0 : index
    %3 = vector.load %arg3[%c0_3, %c0_4] : memref<1x1024xf32, #tpu.memory_space<vmem>>, vector<1x1024xf32>
    %4 = vector.broadcast %3 : vector<1x1024xf32> to vector<16x1024xf32>
    %5 = arith.addf %2, %4 : vector<16x1024xf32>
    %cst_5 = arith.constant 0.000000e+00 : f32
    %6 = vector.broadcast %cst_5 : f32 to vector<16x1024xf32>
    %7 = arith.cmpf ogt, %5, %6 : vector<16x1024xf32>
    %cst_6 = arith.constant 2.000000e-01 : f32
    %8 = vector.broadcast %cst_6 : f32 to vector<16x1024xf32>
    %9 = arith.mulf %8, %5 : vector<16x1024xf32>
    %10 = arith.select %7, %5, %9 : vector<16x1024xi1>, vector<16x1024xf32>
    %11 = arith.truncf %10 : vector<16x1024xf32> to vector<16x1024xbf16>
    %c0_7 = arith.constant 0 : index
    %c0_8 = arith.constant 0 : index
    %12 = vector.load %arg4[%c0_7, %c0_8] : memref<1024x512xbf16, #tpu.memory_space<vmem>>, vector<1024x512xbf16>
    %cst_9 = arith.constant dense<0.000000e+00> : vector<16x512xf32>
    %13 = tpu.matmul %11, %12, %cst_9 {dimension_numbers = #tpu.dot_dimension_numbers<[1], [0], [0], [1], [0, 0, 1, 1], [], []>} : vector<16x1024xbf16>, vector<1024x512xbf16>, vector<16x512xf32> -> vector<16x512xf32>
    %c0_10 = arith.constant 0 : index
    %c0_11 = arith.constant 0 : index
    %14 = vector.load %arg5[%c0_10, %c0_11] : memref<1x512xf32, #tpu.memory_space<vmem>>, vector<1x512xf32>
    %15 = vector.broadcast %14 : vector<1x512xf32> to vector<16x512xf32>
    %16 = arith.addf %13, %15 : vector<16x512xf32>
    %cst_12 = arith.constant 0.000000e+00 : f32
    %17 = vector.broadcast %cst_12 : f32 to vector<16x512xf32>
    %18 = arith.cmpf ogt, %16, %17 : vector<16x512xf32>
    %cst_13 = arith.constant 2.000000e-01 : f32
    %19 = vector.broadcast %cst_13 : f32 to vector<16x512xf32>
    %20 = arith.mulf %19, %16 : vector<16x512xf32>
    %21 = arith.select %18, %16, %20 : vector<16x512xi1>, vector<16x512xf32>
    %22 = arith.truncf %21 : vector<16x512xf32> to vector<16x512xbf16>
    %c0_14 = arith.constant 0 : index
    %c0_15 = arith.constant 0 : index
    %23 = vector.load %arg6[%c0_14, %c0_15] : memref<512x256xbf16, #tpu.memory_space<vmem>>, vector<512x256xbf16>
    %cst_16 = arith.constant dense<0.000000e+00> : vector<16x256xf32>
    %24 = tpu.matmul %22, %23, %cst_16 {dimension_numbers = #tpu.dot_dimension_numbers<[1], [0], [0], [1], [0, 0, 1, 1], [], []>} : vector<16x512xbf16>, vector<512x256xbf16>, vector<16x256xf32> -> vector<16x256xf32>
    %c0_17 = arith.constant 0 : index
    %c0_18 = arith.constant 0 : index
    %25 = vector.load %arg7[%c0_17, %c0_18] : memref<1x256xf32, #tpu.memory_space<vmem>>, vector<1x256xf32>
    %26 = vector.broadcast %25 : vector<1x256xf32> to vector<16x256xf32>
    %27 = arith.addf %24, %26 : vector<16x256xf32>
    %cst_19 = arith.constant 0.000000e+00 : f32
    %28 = vector.broadcast %cst_19 : f32 to vector<16x256xf32>
    %29 = arith.cmpf ogt, %27, %28 : vector<16x256xf32>
    %cst_20 = arith.constant 2.000000e-01 : f32
    %30 = vector.broadcast %cst_20 : f32 to vector<16x256xf32>
    %31 = arith.mulf %30, %27 : vector<16x256xf32>
    %32 = arith.select %29, %27, %31 : vector<16x256xi1>, vector<16x256xf32>
    %c0_21 = arith.constant 0 : index
    %c0_22 = arith.constant 0 : index
    %33 = vector.load %arg8[%c0_21, %c0_22] : memref<1x256xf32, #tpu.memory_space<vmem>>, vector<1x256xf32>
    %34 = vector.broadcast %33 : vector<1x256xf32> to vector<16x256xf32>
    %35 = arith.mulf %32, %34 : vector<16x256xf32>
    %cst_23 = arith.constant dense<0.000000e+00> : vector<16xf32>
    %36 = vector.multi_reduction <add>, %35, %cst_23 [1] : vector<16x256xf32> to vector<16xf32>
    %37 = vector.shape_cast %36 : vector<16xf32> to vector<16x1xf32>
    %c0_24 = arith.constant 0 : index
    %c0_25 = arith.constant 0 : index
    %38 = vector.load %arg9[%c0_24, %c0_25] : memref<1x1xf32, #tpu.memory_space<vmem>>, vector<1x1xf32>
    %39 = vector.broadcast %38 : vector<1x1xf32> to vector<16x1xf32>
    %40 = arith.addf %37, %39 : vector<16x1xf32>
    %41 = tpu.transpose %40, [1, 0] : vector<16x1xf32> -> vector<1x16xf32>
    %cst_26 = arith.constant 0.000000e+00 : f32
    %42 = vector.broadcast %cst_26 : f32 to vector<1x16xf32>
    %43 = arith.subf %42, %41 : vector<1x16xf32>
    %44 = math.exp %43 : vector<1x16xf32>
    %cst_27 = arith.constant 1.000000e+00 : f32
    %45 = vector.broadcast %cst_27 : f32 to vector<1x16xf32>
    %46 = arith.addf %45, %44 : vector<1x16xf32>
    %47 = tpu.reciprocal %46 {approx = true} : vector<1x16xf32> -> vector<1x16xf32>
    %c0_28 = arith.constant 0 : index
    %c0_29 = arith.constant 0 : index
    %48 = vector.load %arg10[%c0_28, %c0_29] : memref<1x16xf32, #tpu.memory_space<vmem>>, vector<1x16xf32>
    tpu.vector_store %arg10[%c0_28, %c0_29], %47 {strides = array<i32>} : memref<1x16xf32, #tpu.memory_space<vmem>>, vector<1x16xf32>,
    return
  }
  func.func @transform_0(%arg0: i32) -> (i32, i32) {
    %c0_i32 = arith.constant 0 : i32
    %c0_i32_0 = arith.constant 0 : i32
    return %arg0, %c0_i32 : i32, i32
  }
  func.func @transform_1(%arg0: i32) -> (i32, i32) {
    %c0_i32 = arith.constant 0 : i32
    %c0_i32_0 = arith.constant 0 : i32
    %c0_i32_1 = arith.constant 0 : i32
    return %c0_i32, %c0_i32_0 : i32, i32
  }
  func.func @transform_2(%arg0: i32) -> (i32, i32) {
    %c0_i32 = arith.constant 0 : i32
    %c0_i32_0 = arith.constant 0 : i32
    %c0_i32_1 = arith.constant 0 : i32
    return %c0_i32, %c0_i32_0 : i32, i32
  }
  func.func @transform_3(%arg0: i32) -> (i32, i32) {
    %c0_i32 = arith.constant 0 : i32
    %c0_i32_0 = arith.constant 0 : i32
    %c0_i32_1 = arith.constant 0 : i32
    return %c0_i32, %c0_i32_0 : i32, i32
  }
  func.func @transform_4(%arg0: i32) -> (i32, i32) {
    %c0_i32 = arith.constant 0 : i32
    %c0_i32_0 = arith.constant 0 : i32
    %c0_i32_1 = arith.constant 0 : i32
    return %c0_i32, %c0_i32_0 : i32, i32
  }
  func.func @transform_5(%arg0: i32) -> (i32, i32) {
    %c0_i32 = arith.constant 0 : i32
    %c0_i32_0 = arith.constant 0 : i32
    %c0_i32_1 = arith.constant 0 : i32
    return %c0_i32, %c0_i32_0 : i32, i32
  }
  func.func @transform_6(%arg0: i32) -> (i32, i32) {
    %c0_i32 = arith.constant 0 : i32
    %c0_i32_0 = arith.constant 0 : i32
    %c0_i32_1 = arith.constant 0 : i32
    return %c0_i32, %c0_i32_0 : i32, i32
  }
  func.func @transform_7(%arg0: i32) -> (i32, i32) {
    %c0_i32 = arith.constant 0 : i32
    %c0_i32_0 = arith.constant 0 : i32
    %c0_i32_1 = arith.constant 0 : i32
    return %c0_i32, %c0_i32_0 : i32, i32
  }
  func.func @transform_8(%arg0: i32) -> (i32, i32) {
    %c0_i32 = arith.constant 0 : i32
    %c0_i32_0 = arith.constant 0 : i32
    %c0_i32_1 = arith.constant 0 : i32
    return %c0_i32, %c0_i32_0 : i32, i32
  }
  func.func @transform_9(%arg0: i32) -> (i32, i32) {
    %c0_i32 = arith.constant 0 : i32
    %c0_i32_0 = arith.constant 0 : i32
    return %arg0, %c0_i32 : i32, i32
  }
}

module attributes {stable_mosaic.version = 11 : i64} {
  func.func @kernel(%arg0: i32, %arg1: memref<16x784xbf16, #tpu.memory_space<vmem>>, %arg2: memref<784x1024xbf16, #tpu.memory_space<vmem>>, %arg3: memref<1x1024xf32, #tpu.memory_space<vmem>>, %arg4: memref<1024x512xbf16, #tpu.memory_space<vmem>>, %arg5: memref<1x512xf32, #tpu.memory_space<vmem>>, %arg6: memref<512x256xbf16, #tpu.memory_space<vmem>>, %arg7: memref<1x256xf32, #tpu.memory_space<vmem>>, %arg8: memref<1x256xf32, #tpu.memory_space<vmem>>, %arg9: memref<1x1xf32, #tpu.memory_space<vmem>>, %arg10: memref<16x1xf32, #tpu.memory_space<vmem>>) attributes {dimension_semantics = [#tpu.dimension_semantics<parallel>], iteration_bounds = array<i64: 1>, scalar_prefetch = 0 : i64, scratch_operands = 0 : i64, tpu.core_type = #tpu.core_type<tc>, window_params = [{transform_indices = @transform_0, window_bounds = array<i64: 16, 784>}, {pipeline_mode = #tpu.pipeline_mode<synchronous>, transform_indices = @transform_1, window_bounds = array<i64: 784, 1024>}, {pipeline_mode = #tpu.pipeline_mode<synchronous>, transform_indices = @transform_2, window_bounds = array<i64: 1, 1024>}, {pipeline_mode = #tpu.pipeline_mode<synchronous>, transform_indices = @transform_3, window_bounds = array<i64: 1024, 512>}, {pipeline_mode = #tpu.pipeline_mode<synchronous>, transform_indices = @transform_4, window_bounds = array<i64: 1, 512>}, {pipeline_mode = #tpu.pipeline_mode<synchronous>, transform_indices = @transform_5, window_bounds = array<i64: 512, 256>}, {pipeline_mode = #tpu.pipeline_mode<synchronous>, transform_indices = @transform_6, window_bounds = array<i64: 1, 256>}, {pipeline_mode = #tpu.pipeline_mode<synchronous>, transform_indices = @transform_7, window_bounds = array<i64: 1, 256>}, {pipeline_mode = #tpu.pipeline_mode<synchronous>, transform_indices = @transform_8, window_bounds = array<i64: 1, 1>}, {transform_indices = @transform_9, window_bounds = array<i64: 16, 1>}]} {
    %c0 = arith.constant 0 : index
    %c0_0 = arith.constant 0 : index
    %0 = vector.load %arg1[%c0, %c0_0] : memref<16x784xbf16, #tpu.memory_space<vmem>>, vector<16x784xbf16>
    %c0_1 = arith.constant 0 : index
    %c0_2 = arith.constant 0 : index
    %1 = vector.load %arg2[%c0_1, %c0_2] : memref<784x1024xbf16, #tpu.memory_space<vmem>>, vector<784x1024xbf16>
    %cst = arith.constant dense<0.000000e+00> : vector<16x1024xf32>
    %2 = tpu.matmul %0, %1, %cst {dimension_numbers = #tpu.dot_dimension_numbers<[1], [0], [0], [1], [0, 0, 1, 1], [], []>} : vector<16x784xbf16>, vector<784x1024xbf16>, vector<16x1024xf32> -> vector<16x1024xf32>
    %c0_3 = arith.constant 0 : index
    %c0_4 = arith.constant 0 : index
    %3 = vector.load %arg3[%c0_3, %c0_4] : memref<1x1024xf32, #tpu.memory_space<vmem>>, vector<1x1024xf32>
    %4 = vector.broadcast %3 : vector<1x1024xf32> to vector<16x1024xf32>
    %5 = arith.addf %2, %4 : vector<16x1024xf32>
    %cst_5 = arith.constant 0.000000e+00 : f32
    %6 = vector.broadcast %cst_5 : f32 to vector<16x1024xf32>
    %7 = arith.cmpf ogt, %5, %6 : vector<16x1024xf32>
    %cst_6 = arith.constant 2.000000e-01 : f32
    %8 = vector.broadcast %cst_6 : f32 to vector<16x1024xf32>
    %9 = arith.mulf %8, %5 : vector<16x1024xf32>
    %10 = arith.select %7, %5, %9 : vector<16x1024xi1>, vector<16x1024xf32>
    %11 = arith.truncf %10 : vector<16x1024xf32> to vector<16x1024xbf16>
    %c0_7 = arith.constant 0 : index
    %c0_8 = arith.constant 0 : index
    %12 = vector.load %arg4[%c0_7, %c0_8] : memref<1024x512xbf16, #tpu.memory_space<vmem>>, vector<1024x512xbf16>
    %cst_9 = arith.constant dense<0.000000e+00> : vector<16x512xf32>
    %13 = tpu.matmul %11, %12, %cst_9 {dimension_numbers = #tpu.dot_dimension_numbers<[1], [0], [0], [1], [0, 0, 1, 1], [], []>} : vector<16x1024xbf16>, vector<1024x512xbf16>, vector<16x512xf32> -> vector<16x512xf32>
    %c0_10 = arith.constant 0 : index
    %c0_11 = arith.constant 0 : index
    %14 = vector.load %arg5[%c0_10, %c0_11] : memref<1x512xf32, #tpu.memory_space<vmem>>, vector<1x512xf32>
    %15 = vector.broadcast %14 : vector<1x512xf32> to vector<16x512xf32>
    %16 = arith.addf %13, %15 : vector<16x512xf32>
    %cst_12 = arith.constant 0.000000e+00 : f32
    %17 = vector.broadcast %cst_12 : f32 to vector<16x512xf32>
    %18 = arith.cmpf ogt, %16, %17 : vector<16x512xf32>
    %cst_13 = arith.constant 2.000000e-01 : f32
    %19 = vector.broadcast %cst_13 : f32 to vector<16x512xf32>
    %20 = arith.mulf %19, %16 : vector<16x512xf32>
    %21 = arith.select %18, %16, %20 : vector<16x512xi1>, vector<16x512xf32>
    %22 = arith.truncf %21 : vector<16x512xf32> to vector<16x512xbf16>
    %c0_14 = arith.constant 0 : index
    %c0_15 = arith.constant 0 : index
    %23 = vector.load %arg6[%c0_14, %c0_15] : memref<512x256xbf16, #tpu.memory_space<vmem>>, vector<512x256xbf16>
    %cst_16 = arith.constant dense<0.000000e+00> : vector<16x256xf32>
    %24 = tpu.matmul %22, %23, %cst_16 {dimension_numbers = #tpu.dot_dimension_numbers<[1], [0], [0], [1], [0, 0, 1, 1], [], []>} : vector<16x512xbf16>, vector<512x256xbf16>, vector<16x256xf32> -> vector<16x256xf32>
    %c0_17 = arith.constant 0 : index
    %c0_18 = arith.constant 0 : index
    %25 = vector.load %arg7[%c0_17, %c0_18] : memref<1x256xf32, #tpu.memory_space<vmem>>, vector<1x256xf32>
    %26 = vector.broadcast %25 : vector<1x256xf32> to vector<16x256xf32>
    %27 = arith.addf %24, %26 : vector<16x256xf32>
    %cst_19 = arith.constant 0.000000e+00 : f32
    %28 = vector.broadcast %cst_19 : f32 to vector<16x256xf32>
    %29 = arith.cmpf ogt, %27, %28 : vector<16x256xf32>
    %cst_20 = arith.constant 2.000000e-01 : f32
    %30 = vector.broadcast %cst_20 : f32 to vector<16x256xf32>
    %31 = arith.mulf %30, %27 : vector<16x256xf32>
    %32 = arith.select %29, %27, %31 : vector<16x256xi1>, vector<16x256xf32>
    %c0_21 = arith.constant 0 : index
    %c0_22 = arith.constant 0 : index
    %33 = vector.load %arg8[%c0_21, %c0_22] : memref<1x256xf32, #tpu.memory_space<vmem>>, vector<1x256xf32>
    %34 = vector.broadcast %33 : vector<1x256xf32> to vector<16x256xf32>
    %35 = arith.mulf %32, %34 : vector<16x256xf32>
    %cst_23 = arith.constant dense<0.000000e+00> : vector<16xf32>
    %36 = vector.multi_reduction <add>, %35, %cst_23 [1] : vector<16x256xf32> to vector<16xf32>
    %37 = vector.shape_cast %36 : vector<16xf32> to vector<16x1xf32>
    %c0_24 = arith.constant 0 : index
    %c0_25 = arith.constant 0 : index
    %38 = vector.load %arg9[%c0_24, %c0_25] : memref<1x1xf32, #tpu.memory_space<vmem>>, vector<1x1xf32>
    %39 = vector.broadcast %38 : vector<1x1xf32> to vector<16x1xf32>
    %40 = arith.addf %37, %39 : vector<16x1xf32>
    %cst_26 = arith.constant 0.000000e+00 : f32
    %41 = vector.broadcast %cst_26 : f32 to vector<16x1xf32>
    %42 = arith.subf %41, %40 : vector<16x1xf32>
    %43 = math.exp %42 : vector<16x1xf32>
    %cst_27 = arith.constant 1.000000e+00 : f32
    %44 = vector.broadcast %cst_27 : f32 to vector<16x1xf32>
    %45 = arith.addf %44, %43 : vector<16x1xf32>
    %46 = tpu.reciprocal %45 {approx = true} : vector<16x1xf32> -> vector<16x1xf32>
    %c0_28 = arith.constant 0 : index
    %c0_29 = arith.constant 0 : index
    %47 = vector.load %arg10[%c0_28, %c0_29] : memref<16x1xf32, #tpu.memory_space<vmem>>, vector<16x1xf32>
    tpu.vector_store %arg10[%c0_28, %c0_29], %46 {strides = array<i32>} : memref<16x1xf32, #tpu.memory_space<vmem>>, vector<16x1xf32>,
    return
  }
  func.func @transform_0(%arg0: i32) -> (i32, i32) {
    %c0_i32 = arith.constant 0 : i32
    %c0_i32_0 = arith.constant 0 : i32
    return %arg0, %c0_i32 : i32, i32
  }
  func.func @transform_1(%arg0: i32) -> (i32, i32) {
    %c0_i32 = arith.constant 0 : i32
    %c0_i32_0 = arith.constant 0 : i32
    %c0_i32_1 = arith.constant 0 : i32
    return %c0_i32, %c0_i32_0 : i32, i32
  }
  func.func @transform_2(%arg0: i32) -> (i32, i32) {
    %c0_i32 = arith.constant 0 : i32
    %c0_i32_0 = arith.constant 0 : i32
    %c0_i32_1 = arith.constant 0 : i32
    return %c0_i32, %c0_i32_0 : i32, i32
  }
  func.func @transform_3(%arg0: i32) -> (i32, i32) {
    %c0_i32 = arith.constant 0 : i32
    %c0_i32_0 = arith.constant 0 : i32
    %c0_i32_1 = arith.constant 0 : i32
    return %c0_i32, %c0_i32_0 : i32, i32
  }
  func.func @transform_4(%arg0: i32) -> (i32, i32) {
    %c0_i32 = arith.constant 0 : i32
    %c0_i32_0 = arith.constant 0 : i32
    %c0_i32_1 = arith.constant 0 : i32
    return %c0_i32, %c0_i32_0 : i32, i32
  }
  func.func @transform_5(%arg0: i32) -> (i32, i32) {
    %c0_i32 = arith.constant 0 : i32
    %c0_i32_0 = arith.constant 0 : i32
    %c0_i32_1 = arith.constant 0 : i32
    return %c0_i32, %c0_i32_0 : i32, i32
  }
  func.func @transform_6(%arg0: i32) -> (i32, i32) {
    %c0_i32 = arith.constant 0 : i32
    %c0_i32_0 = arith.constant 0 : i32
    %c0_i32_1 = arith.constant 0 : i32
    return %c0_i32, %c0_i32_0 : i32, i32
  }
  func.func @transform_7(%arg0: i32) -> (i32, i32) {
    %c0_i32 = arith.constant 0 : i32
    %c0_i32_0 = arith.constant 0 : i32
    %c0_i32_1 = arith.constant 0 : i32
    return %c0_i32, %c0_i32_0 : i32, i32
  }
  func.func @transform_8(%arg0: i32) -> (i32, i32) {
    %c0_i32 = arith.constant 0 : i32
    %c0_i32_0 = arith.constant 0 : i32
    %c0_i32_1 = arith.constant 0 : i32
    return %c0_i32, %c0_i32_0 : i32, i32
  }
  func.func @transform_9(%arg0: i32) -> (i32, i32) {
    %c0_i32 = arith.constant 0 : i32
    %c0_i32_0 = arith.constant 0 : i32
    return %arg0, %c0_i32 : i32, i32
  }
}

</mosaic_0001>

<llo_original>
// kernel: _forward.1
$region0: #{_forward.1}
  #allocation0 [shape = 'u32[]', space=smem, size = 0x4, offset = 0x4, fixed_abs, tag = 'smem constant byte address 0x4 - core index']
  #allocation1 [shape = 'u32[144,128]{1,0:T(1,128)}', space=vmem, size = 0x12000, scoped, tag = 'internal scratch']
  #allocation2 [shape = 'f32[1,1]{1,0:T(1,128)S(1)}', space=vmem, size = 0x200, scoped, tag = 'scoped memory for _forward.1']
  %s0 = inlined_call_operand.vmem [shape: bf16[16,784], index: 0, kind: input, shape index: {}]
  %s1 = inlined_call_operand.hbm [shape: bf16[784,1024], index: 1, kind: input, shape index: {}]
  %s2 = inlined_call_operand.hbm [shape: f32[1,1024], index: 2, kind: input, shape index: {}]
  %s3 = inlined_call_operand.hbm [shape: bf16[1024,512], index: 3, kind: input, shape index: {}]
  %s4 = inlined_call_operand.hbm [shape: f32[1,512], index: 4, kind: input, shape index: {}]
  %s5 = inlined_call_operand.hbm [shape: bf16[512,256], index: 5, kind: input, shape index: {}]
  %s6 = inlined_call_operand.hbm [shape: f32[1,256], index: 6, kind: input, shape index: {}]
  %s7 = inlined_call_operand.hbm [shape: f32[1,256], index: 7, kind: input, shape index: {}]
  %s8 = inlined_call_operand.<no memory space> [shape: f32[1,1], index: 8, kind: input, shape index: {}]
  %s9 = inlined_call_operand.vmem [shape: f32[1,16], index: 9, kind: output, shape index: {}]
  %s10 = sld [smem:[#allocation0]]
  $region74: #{_forward.1} parent=0
    _
  %s12 = ssub.s32 1, %s10
  %s13 = scalar_select 0, %s12, %s10
  %v14 = vstv %s8
  %15 = vst [vmem:[#allocation2] sm:$0x1] %v14
  $region1: #{_forward.1} parent=0
    #allocation3 [shape = 'u8[1605632]{0}', space=vmem, size = 0x188000, scoped, tag = 'input window, operand 1, single buffered']
    #allocation4 [shape = 's32[1]{0}', space=sflag, size = 0x4, scoped, tag = 'scoped memory for _forward.1']
    #allocation5 [shape = 'u8[4096]{0}', space=vmem, size = 0x1000, scoped, tag = 'input window, operand 2, single buffered']
    #allocation6 [shape = 's32[1]{0}', space=sflag, size = 0x4, scoped, tag = 'scoped memory for _forward.1']
    #allocation7 [shape = 'u8[1048576]{0}', space=vmem, size = 0x100000, scoped, tag = 'input window, operand 3, single buffered']
    #allocation8 [shape = 'u8[2048]{0}', space=vmem, size = 0x800, scoped, tag = 'input window, operand 4, single buffered']
    #allocation9 [shape = 's32[1]{0}', space=sflag, size = 0x4, scoped, tag = 'scoped memory for _forward.1']
    #allocation10 [shape = 'u8[262144]{0}', space=vmem, size = 0x40000, scoped, tag = 'input window, operand 5, single buffered']
    #allocation11 [shape = 'u8[1024]{0}', space=vmem, size = 0x400, scoped, tag = 'input window, operand 6, single buffered']
    #allocation12 [shape = 's32[1]{0}', space=sflag, size = 0x4, scoped, tag = 'scoped memory for _forward.1']
    #allocation13 [shape = 'u8[1024]{0}', space=vmem, size = 0x400, scoped, tag = 'input window, operand 7, single buffered']
    %16 = vsyncpa [#allocation4], 0
    %17 = vsyncpa [#allocation6], 0
    %18 = vsyncpa [#allocation9], 0
    %19 = vsyncpa [#allocation12], 0
    // Predicated region
    $region2: #{_forward.1} parent=1 // pred_check
      _
    $region3: #{_forward.1} parent=1 // pred_check_branch
      %21 = sbr.rel (0) target = $region5
    $region4: #{_forward.1} parent=1 // pred_region
      _
    $region5: #{_forward.1} parent=1 // pred_fallthru
      _
    // Predicated region
    $region6: #{_forward.1} parent=1 // pred_check
      _
    $region7: #{_forward.1} parent=1 // pred_check_branch
      %23 = sbr.rel (0) target = $region9
    $region8: #{_forward.1} parent=1 // pred_region
      %s25 = ssub.s32 50176, 50176
      %26 = vsyncadd [#allocation4], %s25
      %s27 = sshll.u32 [#allocation3], 4
      %s28 = int_to_ptr.vmem [resolvable:$true] %s27
      %33 = dma.hbm_to_vmem [thread:$0]  %s1, 50176, %s28, [#allocation4], 512, 512, 32
    $region9: #{_forward.1} parent=1 // pred_fallthru
      _
    // Predicated region
    $region10: #{_forward.1} parent=1 // pred_check
      _
    $region11: #{_forward.1} parent=1 // pred_check_branch
      %35 = sbr.rel (0) target = $region13
    $region12: #{_forward.1} parent=1 // pred_region
      %s37 = ssub.s32 128, 128
      %38 = vsyncadd [#allocation6], %s37
      %s40 = sshll.u32 [#allocation5], 4
      %s41 = int_to_ptr.vmem [resolvable:$true] %s40
      %43 = dma.hbm_to_vmem [thread:$0]  %s2, 128, %s41, [#allocation6]
    $region13: #{_forward.1} parent=1 // pred_fallthru
      _
    // Predicated region
    $region14: #{_forward.1} parent=1 // pred_check
      _
    $region15: #{_forward.1} parent=1 // pred_check_branch
      %45 = sbr.rel (0) target = $region17
    $region16: #{_forward.1} parent=1 // pred_region
      %s47 = ssub.s32 32768, 32768
      %48 = vsyncadd [#allocation6], %s47
      %s49 = sshll.u32 [#allocation7], 4
      %s50 = int_to_ptr.vmem [resolvable:$true] %s49
      %55 = dma.hbm_to_vmem [thread:$0]  %s3, 32768, %s50, [#allocation6], 256, 256, 16
    $region17: #{_forward.1} parent=1 // pred_fallthru
      _
    // Predicated region
    $region18: #{_forward.1} parent=1 // pred_check
      _
    $region19: #{_forward.1} parent=1 // pred_check_branch
      %57 = sbr.rel (0) target = $region21
    $region20: #{_forward.1} parent=1 // pred_region
      %s59 = ssub.s32 64, 64
      %60 = vsyncadd [#allocation9], %s59
      %s62 = sshll.u32 [#allocation8], 4
      %s63 = int_to_ptr.vmem [resolvable:$true] %s62
      %65 = dma.hbm_to_vmem [thread:$0]  %s4, 64, %s63, [#allocation9]
    $region21: #{_forward.1} parent=1 // pred_fallthru
      _
    // Predicated region
    $region22: #{_forward.1} parent=1 // pred_check
      _
    $region23: #{_forward.1} parent=1 // pred_check_branch
      %67 = sbr.rel (0) target = $region25
    $region24: #{_forward.1} parent=1 // pred_region
      %s69 = ssub.s32 8192, 8192
      %70 = vsyncadd [#allocation9], %s69
      %s71 = sshll.u32 [#allocation10], 4
      %s72 = int_to_ptr.vmem [resolvable:$true] %s71
      %77 = dma.hbm_to_vmem [thread:$0]  %s5, 8192, %s72, [#allocation9], 128, 128, 8
    $region25: #{_forward.1} parent=1 // pred_fallthru
      _
    // Predicated region
    $region26: #{_forward.1} parent=1 // pred_check
      _
    $region27: #{_forward.1} parent=1 // pred_check_branch
      %79 = sbr.rel (0) target = $region29
    $region28: #{_forward.1} parent=1 // pred_region
      %s81 = ssub.s32 32, 32
      %82 = vsyncadd [#allocation12], %s81
      %s84 = sshll.u32 [#allocation11], 4
      %s85 = int_to_ptr.vmem [resolvable:$true] %s84
      %87 = dma.hbm_to_vmem [thread:$0]  %s6, 32, %s85, [#allocation12]
    $region29: #{_forward.1} parent=1 // pred_fallthru
      _
    // Predicated region
    $region30: #{_forward.1} parent=1 // pred_check
      _
    $region31: #{_forward.1} parent=1 // pred_check_branch
      %89 = sbr.rel (0) target = $region33
    $region32: #{_forward.1} parent=1 // pred_region
      %s91 = ssub.s32 32, 32
      %92 = vsyncadd [#allocation12], %s91
      %s94 = sshll.u32 [#allocation13], 4
      %s95 = int_to_ptr.vmem [resolvable:$true] %s94
      %97 = dma.hbm_to_vmem [thread:$0]  %s7, 32, %s95, [#allocation12]
    $region33: #{_forward.1} parent=1 // pred_fallthru
      _
    // Predicated region
    $region34: #{_forward.1} parent=1 // pred_check
      _
    $region35: #{_forward.1} parent=1 // pred_check_branch
      %99 = sbr.rel (0) target = $region37
    $region36: #{_forward.1} parent=1 // pred_region
      _
    $region37: #{_forward.1} parent=1 // pred_fallthru
      _
    // Predicated region
    $region38: #{_forward.1} parent=1 // pred_check
      _
    $region39: #{_forward.1} parent=1 // pred_check_branch
      %101 = sbr.rel (0) target = $region41
    $region40: #{_forward.1} parent=1 // pred_region
      %102 = dma.done [#allocation4], 50176
    $region41: #{_forward.1} parent=1 // pred_fallthru
      _
    // Predicated region
    $region42: #{_forward.1} parent=1 // pred_check
      _
    $region43: #{_forward.1} parent=1 // pred_check_branch
      %104 = sbr.rel (0) target = $region45
    $region44: #{_forward.1} parent=1 // pred_region
      %105 = dma.done [#allocation6], 128
    $region45: #{_forward.1} parent=1 // pred_fallthru
      _
    // Predicated region
    $region46: #{_forward.1} parent=1 // pred_check
      _
    $region47: #{_forward.1} parent=1 // pred_check_branch
      %107 = sbr.rel (0) target = $region49
    $region48: #{_forward.1} parent=1 // pred_region
      %108 = dma.done [#allocation6], 32768
    $region49: #{_forward.1} parent=1 // pred_fallthru
      _
    // Predicated region
    $region50: #{_forward.1} parent=1 // pred_check
      _
    $region51: #{_forward.1} parent=1 // pred_check_branch
      %110 = sbr.rel (0) target = $region53
    $region52: #{_forward.1} parent=1 // pred_region
      %111 = dma.done [#allocation9], 64
    $region53: #{_forward.1} parent=1 // pred_fallthru
      _
    // Predicated region
    $region54: #{_forward.1} parent=1 // pred_check
      _
    $region55: #{_forward.1} parent=1 // pred_check_branch
      %113 = sbr.rel (0) target = $region57
    $region56: #{_forward.1} parent=1 // pred_region
      %114 = dma.done [#allocation9], 8192
    $region57: #{_forward.1} parent=1 // pred_fallthru
      _
    // Predicated region
    $region58: #{_forward.1} parent=1 // pred_check
      _
    $region59: #{_forward.1} parent=1 // pred_check_branch
      %116 = sbr.rel (0) target = $region61
    $region60: #{_forward.1} parent=1 // pred_region
      %117 = dma.done [#allocation12], 32
    $region61: #{_forward.1} parent=1 // pred_fallthru
      _
    // Predicated region
    $region62: #{_forward.1} parent=1 // pred_check
      _
    $region63: #{_forward.1} parent=1 // pred_check_branch
      %119 = sbr.rel (0) target = $region65
    $region64: #{_forward.1} parent=1 // pred_region
      %120 = dma.done [#allocation12], 32
    $region65: #{_forward.1} parent=1 // pred_fallthru
      _
    %v122 = vld [vmem:[%s0] sm:$0xff]
    %v123 = vld [vmem:[%s0 + $0x8] sm:$0xff]
    %v124 = vld [vmem:[%s0 + $0x10] sm:$0xff]
    %v125 = vld [vmem:[%s0 + $0x18] sm:$0xf]
    %v126 = vld [vmem:[%s0 + $0x1c] sm:$0xff]
    %v127 = vld [vmem:[%s0 + $0x24] sm:$0xff]
    %v128 = vld [vmem:[%s0 + $0x2c] sm:$0xff]
    %v129 = vld [vmem:[%s0 + $0x34] sm:$0xf]
    %v130 = vld [vmem:[#allocation3] sm:$0xff]
    %v131 = vld [vmem:[#allocation3 + $0x8] sm:$0xff]
    %v132 = vld [vmem:[#allocation3 + $0x10] sm:$0xff]
    %v133 = vld [vmem:[#allocation3 + $0x18] sm:$0xff]
    %v134 = vld [vmem:[#allocation3 + $0x20] sm:$0xff]
    %v135 = vld [vmem:[#allocation3 + $0x28] sm:$0xff]
    %v136 = vld [vmem:[#allocation3 + $0x30] sm:$0xff]
    %v137 = vld [vmem:[#allocation3 + $0x38] sm:$0xff]
    %v138 = vld [vmem:[#allocation3 + $0x40] sm:$0xff]
    %v139 = vld [vmem:[#allocation3 + $0x48] sm:$0xff]
    %v140 = vld [vmem:[#allocation3 + $0x50] sm:$0xff]
    %v141 = vld [vmem:[#allocation3 + $0x58] sm:$0xff]
    %v142 = vld [vmem:[#allocation3 + $0x60] sm:$0xff]
    %v143 = vld [vmem:[#allocation3 + $0x68] sm:$0xff]
    %v144 = vld [vmem:[#allocation3 + $0x70] sm:$0xff]
    %v145 = vld [vmem:[#allocation3 + $0x78] sm:$0xff]
    %v146 = vld [vmem:[#allocation3 + $0x80] sm:$0xff]
    %v147 = vld [vmem:[#allocation3 + $0x88] sm:$0xff]
    %v148 = vld [vmem:[#allocation3 + $0x90] sm:$0xff]
    %v149 = vld [vmem:[#allocation3 + $0x98] sm:$0xff]
    %v150 = vld [vmem:[#allocation3 + $0xa0] sm:$0xff]
    %v151 = vld [vmem:[#allocation3 + $0xa8] sm:$0xff]
    %v152 = vld [vmem:[#allocation3 + $0xb0] sm:$0xff]
    %v153 = vld [vmem:[#allocation3 + $0xb8] sm:$0xff]
    %v154 = vld [vmem:[#allocation3 + $0xc0] sm:$0xff]
    %v155 = vld [vmem:[#allocation3 + $0xc8] sm:$0xff]
    %v156 = vld [vmem:[#allocation3 + $0xd0] sm:$0xff]
    %v157 = vld [vmem:[#allocation3 + $0xd8] sm:$0xff]
    %v158 = vld [vmem:[#allocation3 + $0xe0] sm:$0xff]
    %v159 = vld [vmem:[#allocation3 + $0xe8] sm:$0xff]
    %v160 = vld [vmem:[#allocation3 + $0xf0] sm:$0xff]
    %v161 = vld [vmem:[#allocation3 + $0xf8] sm:$0xff]
    %v162 = vld [vmem:[#allocation3 + $0x100] sm:$0xff]
    %v163 = vld [vmem:[#allocation3 + $0x108] sm:$0xff]
    %v164 = vld [vmem:[#allocation3 + $0x110] sm:$0xff]
    %v165 = vld [vmem:[#allocation3 + $0x118] sm:$0xff]
    %v166 = vld [vmem:[#allocation3 + $0x120] sm:$0xff]
    %v167 = vld [vmem:[#allocation3 + $0x128] sm:$0xff]
    %v168 = vld [vmem:[#allocation3 + $0x130] sm:$0xff]
    %v169 = vld [vmem:[#allocation3 + $0x138] sm:$0xff]
    %v170 = vld [vmem:[#allocation3 + $0x140] sm:$0xff]
    %v171 = vld [vmem:[#allocation3 + $0x148] sm:$0xff]
    %v172 = vld [vmem:[#allocation3 + $0x150] sm:$0xff]
    %v173 = vld [vmem:[#allocation3 + $0x158] sm:$0xff]
    %v174 = vld [vmem:[#allocation3 + $0x160] sm:$0xff]
    %v175 = vld [vmem:[#allocation3 + $0x168] sm:$0xff]
    %v176 = vld [vmem:[#allocation3 + $0x170] sm:$0xff]
    %v177 = vld [vmem:[#allocation3 + $0x178] sm:$0xff]
    %v178 = vld [vmem:[#allocation3 + $0x180] sm:$0xff]
    %v179 = vld [vmem:[#allocation3 + $0x188] sm:$0xff]
    %v180 = vld [vmem:[#allocation3 + $0x190] sm:$0xff]
    %v181 = vld [vmem:[#allocation3 + $0x198] sm:$0xff]
    %v182 = vld [vmem:[#allocation3 + $0x1a0] sm:$0xff]
    %v183 = vld [vmem:[#allocation3 + $0x1a8] sm:$0xff]
    %v184 = vld [vmem:[#allocation3 + $0x1b0] sm:$0xff]
    %v185 = vld [vmem:[#allocation3 + $0x1b8] sm:$0xff]
    %v186 = vld [vmem:[#allocation3 + $0x1c0] sm:$0xff]
    %v187 = vld [vmem:[#allocation3 + $0x1c8] sm:$0xff]
    %v188 = vld [vmem:[#allocation3 + $0x1d0] sm:$0xff]
    %v189 = vld [vmem:[#allocation3 + $0x1d8] sm:$0xff]
    %v190 = vld [vmem:[#allocation3 + $0x1e0] sm:$0xff]
    %v191 = vld [vmem:[#allocation3 + $0x1e8] sm:$0xff]
    %v192 = vld [vmem:[#allocation3 + $0x1f0] sm:$0xff]
    %v193 = vld [vmem:[#allocation3 + $0x1f8] sm:$0xff]
    %v194 = vld [vmem:[#allocation3 + $0x200] sm:$0xff]
    %v195 = vld [vmem:[#allocation3 + $0x208] sm:$0xff]
    %v196 = vld [vmem:[#allocation3 + $0x210] sm:$0xff]
    %v197 = vld [vmem:[#allocation3 + $0x218] sm:$0xff]
    %v198 = vld [vmem:[#allocation3 + $0x220] sm:$0xff]
    %v199 = vld [vmem:[#allocation3 + $0x228] sm:$0xff]
    %v200 = vld [vmem:[#allocation3 + $0x230] sm:$0xff]
    %v201 = vld [vmem:[#allocation3 + $0x238] sm:$0xff]
    %v202 = vld [vmem:[#allocation3 + $0x240] sm:$0xff]
    %v203 = vld [vmem:[#allocation3 + $0x248] sm:$0xff]
    %v204 = vld [vmem:[#allocation3 + $0x250] sm:$0xff]
    %v205 = vld [vmem:[#allocation3 + $0x258] sm:$0xff]
    %v206 = vld [vmem:[#allocation3 + $0x260] sm:$0xff]
    %v207 = vld [vmem:[#allocation3 + $0x268] sm:$0xff]
    %v208 = vld [vmem:[#allocation3 + $0x270] sm:$0xff]
    %v209 = vld [vmem:[#allocation3 + $0x278] sm:$0xff]
    %v210 = vld [vmem:[#allocation3 + $0x280] sm:$0xff]
    %v211 = vld [vmem:[#allocation3 + $0x288] sm:$0xff]
    %v212 = vld [vmem:[#allocation3 + $0x290] sm:$0xff]
    %v213 = vld [vmem:[#allocation3 + $0x298] sm:$0xff]
    %v214 = vld [vmem:[#allocation3 + $0x2a0] sm:$0xff]
    %v215 = vld [vmem:[#allocation3 + $0x2a8] sm:$0xff]
    %v216 = vld [vmem:[#allocation3 + $0x2b0] sm:$0xff]
    %v217 = vld [vmem:[#allocation3 + $0x2b8] sm:$0xff]
    %v218 = vld [vmem:[#allocation3 + $0x2c0] sm:$0xff]
    %v219 = vld [vmem:[#allocation3 + $0x2c8] sm:$0xff]
    %v220 = vld [vmem:[#allocation3 + $0x2d0] sm:$0xff]
    %v221 = vld [vmem:[#allocation3 + $0x2d8] sm:$0xff]
    %v222 = vld [vmem:[#allocation3 + $0x2e0] sm:$0xff]
    %v223 = vld [vmem:[#allocation3 + $0x2e8] sm:$0xff]
    %v224 = vld [vmem:[#allocation3 + $0x2f0] sm:$0xff]
    %v225 = vld [vmem:[#allocation3 + $0x2f8] sm:$0xff]
    %v226 = vld [vmem:[#allocation3 + $0x300] sm:$0xff]
    %v227 = vld [vmem:[#allocation3 + $0x308] sm:$0xff]
    %v228 = vld [vmem:[#allocation3 + $0x310] sm:$0xff]
    %v229 = vld [vmem:[#allocation3 + $0x318] sm:$0xff]
    %v230 = vld [vmem:[#allocation3 + $0x320] sm:$0xff]
    %v231 = vld [vmem:[#allocation3 + $0x328] sm:$0xff]
    %v232 = vld [vmem:[#allocation3 + $0x330] sm:$0xff]
    %v233 = vld [vmem:[#allocation3 + $0x338] sm:$0xff]
    %v234 = vld [vmem:[#allocation3 + $0x340] sm:$0xff]
    %v235 = vld [vmem:[#allocation3 + $0x348] sm:$0xff]
    %v236 = vld [vmem:[#allocation3 + $0x350] sm:$0xff]
    %v237 = vld [vmem:[#allocation3 + $0x358] sm:$0xff]
    %v238 = vld [vmem:[#allocation3 + $0x360] sm:$0xff]
    %v239 = vld [vmem:[#allocation3 + $0x368] sm:$0xff]
    %v240 = vld [vmem:[#allocation3 + $0x370] sm:$0xff]
    %v241 = vld [vmem:[#allocation3 + $0x378] sm:$0xff]
    %v242 = vld [vmem:[#allocation3 + $0x380] sm:$0xff]
    %v243 = vld [vmem:[#allocation3 + $0x388] sm:$0xff]
    %v244 = vld [vmem:[#allocation3 + $0x390] sm:$0xff]
    %v245 = vld [vmem:[#allocation3 + $0x398] sm:$0xff]
    %v246 = vld [vmem:[#allocation3 + $0x3a0] sm:$0xff]
    %v247 = vld [vmem:[#allocation3 + $0x3a8] sm:$0xff]
    %v248 = vld [vmem:[#allocation3 + $0x3b0] sm:$0xff]
    %v249 = vld [vmem:[#allocation3 + $0x3b8] sm:$0xff]
    %v250 = vld [vmem:[#allocation3 + $0x3c0] sm:$0xff]
    %v251 = vld [vmem:[#allocation3 + $0x3c8] sm:$0xff]
    %v252 = vld [vmem:[#allocation3 + $0x3d0] sm:$0xff]
    %v253 = vld [vmem:[#allocation3 + $0x3d8] sm:$0xff]
    %v254 = vld [vmem:[#allocation3 + $0x3e0] sm:$0xff]
    %v255 = vld [vmem:[#allocation3 + $0x3e8] sm:$0xff]
    %v256 = vld [vmem:[#allocation3 + $0x3f0] sm:$0xff]
    %v257 = vld [vmem:[#allocation3 + $0x3f8] sm:$0xff]
    %v258 = vld [vmem:[#allocation3 + $0x400] sm:$0xff]
    %v259 = vld [vmem:[#allocation3 + $0x408] sm:$0xff]
    %v260 = vld [vmem:[#allocation3 + $0x410] sm:$0xff]
    %v261 = vld [vmem:[#allocation3 + $0x418] sm:$0xff]
    %v262 = vld [vmem:[#allocation3 + $0x420] sm:$0xff]
    %v263 = vld [vmem:[#allocation3 + $0x428] sm:$0xff]
    %v264 = vld [vmem:[#allocation3 + $0x430] sm:$0xff]
    %v265 = vld [vmem:[#allocation3 + $0x438] sm:$0xff]
    %v266 = vld [vmem:[#allocation3 + $0x440] sm:$0xff]
    %v267 = vld [vmem:[#allocation3 + $0x448] sm:$0xff]
    %v268 = vld [vmem:[#allocation3 + $0x450] sm:$0xff]
    %v269 = vld [vmem:[#allocation3 + $0x458] sm:$0xff]
    %v270 = vld [vmem:[#allocation3 + $0x460] sm:$0xff]
    %v271 = vld [vmem:[#allocation3 + $0x468] sm:$0xff]
    %v272 = vld [vmem:[#allocation3 + $0x470] sm:$0xff]
    %v273 = vld [vmem:[#allocation3 + $0x478] sm:$0xff]
    %v274 = vld [vmem:[#allocation3 + $0x480] sm:$0xff]
    %v275 = vld [vmem:[#allocation3 + $0x488] sm:$0xff]
    %v276 = vld [vmem:[#allocation3 + $0x490] sm:$0xff]
    %v277 = vld [vmem:[#allocation3 + $0x498] sm:$0xff]
    %v278 = vld [vmem:[#allocation3 + $0x4a0] sm:$0xff]
    %v279 = vld [vmem:[#allocation3 + $0x4a8] sm:$0xff]
    %v280 = vld [vmem:[#allocation3 + $0x4b0] sm:$0xff]
    %v281 = vld [vmem:[#allocation3 + $0x4b8] sm:$0xff]
    %v282 = vld [vmem:[#allocation3 + $0x4c0] sm:$0xff]
    %v283 = vld [vmem:[#allocation3 + $0x4c8] sm:$0xff]
    %v284 = vld [vmem:[#allocation3 + $0x4d0] sm:$0xff]
    %v285 = vld [vmem:[#allocation3 + $0x4d8] sm:$0xff]
    %v286 = vld [vmem:[#allocation3 + $0x4e0] sm:$0xff]
    %v287 = vld [vmem:[#allocation3 + $0x4e8] sm:$0xff]
    %v288 = vld [vmem:[#allocation3 + $0x4f0] sm:$0xff]
    %v289 = vld [vmem:[#allocation3 + $0x4f8] sm:$0xff]
    %v290 = vld [vmem:[#allocation3 + $0x500] sm:$0xff]
    %v291 = vld [vmem:[#allocation3 + $0x508] sm:$0xff]
    %v292 = vld [vmem:[#allocation3 + $0x510] sm:$0xff]
    %v293 = vld [vmem:[#allocation3 + $0x518] sm:$0xff]
    %v294 = vld [vmem:[#allocation3 + $0x520] sm:$0xff]
    %v295 = vld [vmem:[#allocation3 + $0x528] sm:$0xff]
    %v296 = vld [vmem:[#allocation3 + $0x530] sm:$0xff]
    %v297 = vld [vmem:[#allocation3 + $0x538] sm:$0xff]
    %v298 = vld [vmem:[#allocation3 + $0x540] sm:$0xff]
    %v299 = vld [vmem:[#allocation3 + $0x548] sm:$0xff]
    %v300 = vld [vmem:[#allocation3 + $0x550] sm:$0xff]
    %v301 = vld [vmem:[#allocation3 + $0x558] sm:$0xff]
    %v302 = vld [vmem:[#allocation3 + $0x560] sm:$0xff]
    %v303 = vld [vmem:[#allocation3 + $0x568] sm:$0xff]
    %v304 = vld [vmem:[#allocation3 + $0x570] sm:$0xff]
    %v305 = vld [vmem:[#allocation3 + $0x578] sm:$0xff]
    %v306 = vld [vmem:[#allocation3 + $0x580] sm:$0xff]
    %v307 = vld [vmem:[#allocation3 + $0x588] sm:$0xff]
    %v308 = vld [vmem:[#allocation3 + $0x590] sm:$0xff]
    %v309 = vld [vmem:[#allocation3 + $0x598] sm:$0xff]
    %v310 = vld [vmem:[#allocation3 + $0x5a0] sm:$0xff]
    %v311 = vld [vmem:[#allocation3 + $0x5a8] sm:$0xff]
    %v312 = vld [vmem:[#allocation3 + $0x5b0] sm:$0xff]
    %v313 = vld [vmem:[#allocation3 + $0x5b8] sm:$0xff]
    %v314 = vld [vmem:[#allocation3 + $0x5c0] sm:$0xff]
    %v315 = vld [vmem:[#allocation3 + $0x5c8] sm:$0xff]
    %v316 = vld [vmem:[#allocation3 + $0x5d0] sm:$0xff]
    %v317 = vld [vmem:[#allocation3 + $0x5d8] sm:$0xff]
    %v318 = vld [vmem:[#allocation3 + $0x5e0] sm:$0xff]
    %v319 = vld [vmem:[#allocation3 + $0x5e8] sm:$0xff]
    %v320 = vld [vmem:[#allocation3 + $0x5f0] sm:$0xff]
    %v321 = vld [vmem:[#allocation3 + $0x5f8] sm:$0xff]
    %v322 = vld [vmem:[#allocation3 + $0x600] sm:$0xff]
    %v323 = vld [vmem:[#allocation3 + $0x608] sm:$0xff]
    %v324 = vld [vmem:[#allocation3 + $0x610] sm:$0xff]
    %v325 = vld [vmem:[#allocation3 + $0x618] sm:$0xff]
    %v326 = vld [vmem:[#allocation3 + $0x620] sm:$0xff]
    %v327 = vld [vmem:[#allocation3 + $0x628] sm:$0xff]
    %v328 = vld [vmem:[#allocation3 + $0x630] sm:$0xff]
    %v329 = vld [vmem:[#allocation3 + $0x638] sm:$0xff]
    %v330 = vld [vmem:[#allocation3 + $0x640] sm:$0xff]
    %v331 = vld [vmem:[#allocation3 + $0x648] sm:$0xff]
    %v332 = vld [vmem:[#allocation3 + $0x650] sm:$0xff]
    %v333 = vld [vmem:[#allocation3 + $0x658] sm:$0xff]
    %v334 = vld [vmem:[#allocation3 + $0x660] sm:$0xff]
    %v335 = vld [vmem:[#allocation3 + $0x668] sm:$0xff]
    %v336 = vld [vmem:[#allocation3 + $0x670] sm:$0xff]
    %v337 = vld [vmem:[#allocation3 + $0x678] sm:$0xff]
    %v338 = vld [vmem:[#allocation3 + $0x680] sm:$0xff]
    %v339 = vld [vmem:[#allocation3 + $0x688] sm:$0xff]
    %v340 = vld [vmem:[#allocation3 + $0x690] sm:$0xff]
    %v341 = vld [vmem:[#allocation3 + $0x698] sm:$0xff]
    %v342 = vld [vmem:[#allocation3 + $0x6a0] sm:$0xff]
    %v343 = vld [vmem:[#allocation3 + $0x6a8] sm:$0xff]
    %v344 = vld [vmem:[#allocation3 + $0x6b0] sm:$0xff]
    %v345 = vld [vmem:[#allocation3 + $0x6b8] sm:$0xff]
    %v346 = vld [vmem:[#allocation3 + $0x6c0] sm:$0xff]
    %v347 = vld [vmem:[#allocation3 + $0x6c8] sm:$0xff]
    %v348 = vld [vmem:[#allocation3 + $0x6d0] sm:$0xff]
    %v349 = vld [vmem:[#allocation3 + $0x6d8] sm:$0xff]
    %v350 = vld [vmem:[#allocation3 + $0x6e0] sm:$0xff]
    %v351 = vld [vmem:[#allocation3 + $0x6e8] sm:$0xff]
    %v352 = vld [vmem:[#allocation3 + $0x6f0] sm:$0xff]
    %v353 = vld [vmem:[#allocation3 + $0x6f8] sm:$0xff]
    %v354 = vld [vmem:[#allocation3 + $0x700] sm:$0xff]
    %v355 = vld [vmem:[#allocation3 + $0x708] sm:$0xff]
    %v356 = vld [vmem:[#allocation3 + $0x710] sm:$0xff]
    %v357 = vld [vmem:[#allocation3 + $0x718] sm:$0xff]
    %v358 = vld [vmem:[#allocation3 + $0x720] sm:$0xff]
    %v359 = vld [vmem:[#allocation3 + $0x728] sm:$0xff]
    %v360 = vld [vmem:[#allocation3 + $0x730] sm:$0xff]
    %v361 = vld [vmem:[#allocation3 + $0x738] sm:$0xff]
    %v362 = vld [vmem:[#allocation3 + $0x740] sm:$0xff]
    %v363 = vld [vmem:[#allocation3 + $0x748] sm:$0xff]
    %v364 = vld [vmem:[#allocation3 + $0x750] sm:$0xff]
    %v365 = vld [vmem:[#allocation3 + $0x758] sm:$0xff]
    %v366 = vld [vmem:[#allocation3 + $0x760] sm:$0xff]
    %v367 = vld [vmem:[#allocation3 + $0x768] sm:$0xff]
    %v368 = vld [vmem:[#allocation3 + $0x770] sm:$0xff]
    %v369 = vld [vmem:[#allocation3 + $0x778] sm:$0xff]
    %v370 = vld [vmem:[#allocation3 + $0x780] sm:$0xff]
    %v371 = vld [vmem:[#allocation3 + $0x788] sm:$0xff]
    %v372 = vld [vmem:[#allocation3 + $0x790] sm:$0xff]
    %v373 = vld [vmem:[#allocation3 + $0x798] sm:$0xff]
    %v374 = vld [vmem:[#allocation3 + $0x7a0] sm:$0xff]
    %v375 = vld [vmem:[#allocation3 + $0x7a8] sm:$0xff]
    %v376 = vld [vmem:[#allocation3 + $0x7b0] sm:$0xff]
    %v377 = vld [vmem:[#allocation3 + $0x7b8] sm:$0xff]
    %v378 = vld [vmem:[#allocation3 + $0x7c0] sm:$0xff]
    %v379 = vld [vmem:[#allocation3 + $0x7c8] sm:$0xff]
    %v380 = vld [vmem:[#allocation3 + $0x7d0] sm:$0xff]
    %v381 = vld [vmem:[#allocation3 + $0x7d8] sm:$0xff]
    %v382 = vld [vmem:[#allocation3 + $0x7e0] sm:$0xff]
    %v383 = vld [vmem:[#allocation3 + $0x7e8] sm:$0xff]
    %v384 = vld [vmem:[#allocation3 + $0x7f0] sm:$0xff]
    %v385 = vld [vmem:[#allocation3 + $0x7f8] sm:$0xff]
    %v386 = vld [vmem:[#allocation3 + $0x800] sm:$0xff]
    %v387 = vld [vmem:[#allocation3 + $0x808] sm:$0xff]
    %v388 = vld [vmem:[#allocation3 + $0x810] sm:$0xff]
    %v389 = vld [vmem:[#allocation3 + $0x818] sm:$0xff]
    %v390 = vld [vmem:[#allocation3 + $0x820] sm:$0xff]
    %v391 = vld [vmem:[#allocation3 + $0x828] sm:$0xff]
    %v392 = vld [vmem:[#allocation3 + $0x830] sm:$0xff]
    %v393 = vld [vmem:[#allocation3 + $0x838] sm:$0xff]
    %v394 = vld [vmem:[#allocation3 + $0x840] sm:$0xff]
    %v395 = vld [vmem:[#allocation3 + $0x848] sm:$0xff]
    %v396 = vld [vmem:[#allocation3 + $0x850] sm:$0xff]
    %v397 = vld [vmem:[#allocation3 + $0x858] sm:$0xff]
    %v398 = vld [vmem:[#allocation3 + $0x860] sm:$0xff]
    %v399 = vld [vmem:[#allocation3 + $0x868] sm:$0xff]
    %v400 = vld [vmem:[#allocation3 + $0x870] sm:$0xff]
    %v401 = vld [vmem:[#allocation3 + $0x878] sm:$0xff]
    %v402 = vld [vmem:[#allocation3 + $0x880] sm:$0xff]
    %v403 = vld [vmem:[#allocation3 + $0x888] sm:$0xff]
    %v404 = vld [vmem:[#allocation3 + $0x890] sm:$0xff]
    %v405 = vld [vmem:[#allocation3 + $0x898] sm:$0xff]
    %v406 = vld [vmem:[#allocation3 + $0x8a0] sm:$0xff]
    %v407 = vld [vmem:[#allocation3 + $0x8a8] sm:$0xff]
    %v408 = vld [vmem:[#allocation3 + $0x8b0] sm:$0xff]
    %v409 = vld [vmem:[#allocation3 + $0x8b8] sm:$0xff]
    %v410 = vld [vmem:[#allocation3 + $0x8c0] sm:$0xff]
    %v411 = vld [vmem:[#allocation3 + $0x8c8] sm:$0xff]
    %v412 = vld [vmem:[#allocation3 + $0x8d0] sm:$0xff]
    %v413 = vld [vmem:[#allocation3 + $0x8d8] sm:$0xff]
    %v414 = vld [vmem:[#allocation3 + $0x8e0] sm:$0xff]
    %v415 = vld [vmem:[#allocation3 + $0x8e8] sm:$0xff]
    %v416 = vld [vmem:[#allocation3 + $0x8f0] sm:$0xff]
    %v417 = vld [vmem:[#allocation3 + $0x8f8] sm:$0xff]
    %v418 = vld [vmem:[#allocation3 + $0x900] sm:$0xff]
    %v419 = vld [vmem:[#allocation3 + $0x908] sm:$0xff]
    %v420 = vld [vmem:[#allocation3 + $0x910] sm:$0xff]
    %v421 = vld [vmem:[#allocation3 + $0x918] sm:$0xff]
    %v422 = vld [vmem:[#allocation3 + $0x920] sm:$0xff]
    %v423 = vld [vmem:[#allocation3 + $0x928] sm:$0xff]
    %v424 = vld [vmem:[#allocation3 + $0x930] sm:$0xff]
    %v425 = vld [vmem:[#allocation3 + $0x938] sm:$0xff]
    %v426 = vld [vmem:[#allocation3 + $0x940] sm:$0xff]
    %v427 = vld [vmem:[#allocation3 + $0x948] sm:$0xff]
    %v428 = vld [vmem:[#allocation3 + $0x950] sm:$0xff]
    %v429 = vld [vmem:[#allocation3 + $0x958] sm:$0xff]
    %v430 = vld [vmem:[#allocation3 + $0x960] sm:$0xff]
    %v431 = vld [vmem:[#allocation3 + $0x968] sm:$0xff]
    %v432 = vld [vmem:[#allocation3 + $0x970] sm:$0xff]
    %v433 = vld [vmem:[#allocation3 + $0x978] sm:$0xff]
    %v434 = vld [vmem:[#allocation3 + $0x980] sm:$0xff]
    %v435 = vld [vmem:[#allocation3 + $0x988] sm:$0xff]
    %v436 = vld [vmem:[#allocation3 + $0x990] sm:$0xff]
    %v437 = vld [vmem:[#allocation3 + $0x998] sm:$0xff]
    %v438 = vld [vmem:[#allocation3 + $0x9a0] sm:$0xff]
    %v439 = vld [vmem:[#allocation3 + $0x9a8] sm:$0xff]
    %v440 = vld [vmem:[#allocation3 + $0x9b0] sm:$0xff]
    %v441 = vld [vmem:[#allocation3 + $0x9b8] sm:$0xff]
    %v442 = vld [vmem:[#allocation3 + $0x9c0] sm:$0xff]
    %v443 = vld [vmem:[#allocation3 + $0x9c8] sm:$0xff]
    %v444 = vld [vmem:[#allocation3 + $0x9d0] sm:$0xff]
    %v445 = vld [vmem:[#allocation3 + $0x9d8] sm:$0xff]
    %v446 = vld [vmem:[#allocation3 + $0x9e0] sm:$0xff]
    %v447 = vld [vmem:[#allocation3 + $0x9e8] sm:$0xff]
    %v448 = vld [vmem:[#allocation3 + $0x9f0] sm:$0xff]
    %v449 = vld [vmem:[#allocation3 + $0x9f8] sm:$0xff]
    %v450 = vld [vmem:[#allocation3 + $0xa00] sm:$0xff]
    %v451 = vld [vmem:[#allocation3 + $0xa08] sm:$0xff]
    %v452 = vld [vmem:[#allocation3 + $0xa10] sm:$0xff]
    %v453 = vld [vmem:[#allocation3 + $0xa18] sm:$0xff]
    %v454 = vld [vmem:[#allocation3 + $0xa20] sm:$0xff]
    %v455 = vld [vmem:[#allocation3 + $0xa28] sm:$0xff]
    %v456 = vld [vmem:[#allocation3 + $0xa30] sm:$0xff]
    %v457 = vld [vmem:[#allocation3 + $0xa38] sm:$0xff]
    %v458 = vld [vmem:[#allocation3 + $0xa40] sm:$0xff]
    %v459 = vld [vmem:[#allocation3 + $0xa48] sm:$0xff]
    %v460 = vld [vmem:[#allocation3 + $0xa50] sm:$0xff]
    %v461 = vld [vmem:[#allocation3 + $0xa58] sm:$0xff]
    %v462 = vld [vmem:[#allocation3 + $0xa60] sm:$0xff]
    %v463 = vld [vmem:[#allocation3 + $0xa68] sm:$0xff]
    %v464 = vld [vmem:[#allocation3 + $0xa70] sm:$0xff]
    %v465 = vld [vmem:[#allocation3 + $0xa78] sm:$0xff]
    %v466 = vld [vmem:[#allocation3 + $0xa80] sm:$0xff]
    %v467 = vld [vmem:[#allocation3 + $0xa88] sm:$0xff]
    %v468 = vld [vmem:[#allocation3 + $0xa90] sm:$0xff]
    %v469 = vld [vmem:[#allocation3 + $0xa98] sm:$0xff]
    %v470 = vld [vmem:[#allocation3 + $0xaa0] sm:$0xff]
    %v471 = vld [vmem:[#allocation3 + $0xaa8] sm:$0xff]
    %v472 = vld [vmem:[#allocation3 + $0xab0] sm:$0xff]
    %v473 = vld [vmem:[#allocation3 + $0xab8] sm:$0xff]
    %v474 = vld [vmem:[#allocation3 + $0xac0] sm:$0xff]
    %v475 = vld [vmem:[#allocation3 + $0xac8] sm:$0xff]
    %v476 = vld [vmem:[#allocation3 + $0xad0] sm:$0xff]
    %v477 = vld [vmem:[#allocation3 + $0xad8] sm:$0xff]
    %v478 = vld [vmem:[#allocation3 + $0xae0] sm:$0xff]
    %v479 = vld [vmem:[#allocation3 + $0xae8] sm:$0xff]
    %v480 = vld [vmem:[#allocation3 + $0xaf0] sm:$0xff]
    %v481 = vld [vmem:[#allocation3 + $0xaf8] sm:$0xff]
    %v482 = vld [vmem:[#allocation3 + $0xb00] sm:$0xff]
    %v483 = vld [vmem:[#allocation3 + $0xb08] sm:$0xff]
    %v484 = vld [vmem:[#allocation3 + $0xb10] sm:$0xff]
    %v485 = vld [vmem:[#allocation3 + $0xb18] sm:$0xff]
    %v486 = vld [vmem:[#allocation3 + $0xb20] sm:$0xff]
    %v487 = vld [vmem:[#allocation3 + $0xb28] sm:$0xff]
    %v488 = vld [vmem:[#allocation3 + $0xb30] sm:$0xff]
    %v489 = vld [vmem:[#allocation3 + $0xb38] sm:$0xff]
    %v490 = vld [vmem:[#allocation3 + $0xb40] sm:$0xff]
    %v491 = vld [vmem:[#allocation3 + $0xb48] sm:$0xff]
    %v492 = vld [vmem:[#allocation3 + $0xb50] sm:$0xff]
    %v493 = vld [vmem:[#allocation3 + $0xb58] sm:$0xff]
    %v494 = vld [vmem:[#allocation3 + $0xb60] sm:$0xff]
    %v495 = vld [vmem:[#allocation3 + $0xb68] sm:$0xff]
    %v496 = vld [vmem:[#allocation3 + $0xb70] sm:$0xff]
    %v497 = vld [vmem:[#allocation3 + $0xb78] sm:$0xff]
    %v498 = vld [vmem:[#allocation3 + $0xb80] sm:$0xff]
    %v499 = vld [vmem:[#allocation3 + $0xb88] sm:$0xff]
    %v500 = vld [vmem:[#allocation3 + $0xb90] sm:$0xff]
    %v501 = vld [vmem:[#allocation3 + $0xb98] sm:$0xff]
    %v502 = vld [vmem:[#allocation3 + $0xba0] sm:$0xff]
    %v503 = vld [vmem:[#allocation3 + $0xba8] sm:$0xff]
    %v504 = vld [vmem:[#allocation3 + $0xbb0] sm:$0xff]
    %v505 = vld [vmem:[#allocation3 + $0xbb8] sm:$0xff]
    %v506 = vld [vmem:[#allocation3 + $0xbc0] sm:$0xff]
    %v507 = vld [vmem:[#allocation3 + $0xbc8] sm:$0xff]
    %v508 = vld [vmem:[#allocation3 + $0xbd0] sm:$0xff]
    %v509 = vld [vmem:[#allocation3 + $0xbd8] sm:$0xff]
    %v510 = vld [vmem:[#allocation3 + $0xbe0] sm:$0xff]
    %v511 = vld [vmem:[#allocation3 + $0xbe8] sm:$0xff]
    %v512 = vld [vmem:[#allocation3 + $0xbf0] sm:$0xff]
    %v513 = vld [vmem:[#allocation3 + $0xbf8] sm:$0xff]
    %v514 = vld [vmem:[#allocation3 + $0xc00] sm:$0xff]
    %v515 = vld [vmem:[#allocation3 + $0xc08] sm:$0xff]
    %v516 = vld [vmem:[#allocation3 + $0xc10] sm:$0xff]
    %v517 = vld [vmem:[#allocation3 + $0xc18] sm:$0xff]
    %v518 = vld [vmem:[#allocation3 + $0xc20] sm:$0xff]
    %v519 = vld [vmem:[#allocation3 + $0xc28] sm:$0xff]
    %v520 = vld [vmem:[#allocation3 + $0xc30] sm:$0xff]
    %v521 = vld [vmem:[#allocation3 + $0xc38] sm:$0xff]
    %v522 = vld [vmem:[#allocation5] sm:$0xff]
    %v524 = vlaneseq
    %v525 = vshrl.u32 %v524, 7
    %v526 = vsub.s32 0, %v525
    %v527 = vrot.slane %v522, %v526
    %v528 = vlaneseq
    %v529 = vshrl.u32 %v528, 7
    %v530 = vsub.s32 1, %v529
    %v531 = vrot.slane %v522, %v530
    %v532 = vlaneseq
    %v533 = vshrl.u32 %v532, 7
    %v534 = vsub.s32 2, %v533
    %v535 = vrot.slane %v522, %v534
    %v536 = vlaneseq
    %v537 = vshrl.u32 %v536, 7
    %v538 = vsub.s32 3, %v537
    %v539 = vrot.slane %v522, %v538
    %v540 = vlaneseq
    %v541 = vshrl.u32 %v540, 7
    %v542 = vsub.s32 4, %v541
    %v543 = vrot.slane %v522, %v542
    %v544 = vlaneseq
    %v545 = vshrl.u32 %v544, 7
    %v546 = vsub.s32 5, %v545
    %v547 = vrot.slane %v522, %v546
    %v548 = vlaneseq
    %v549 = vshrl.u32 %v548, 7
    %v550 = vsub.s32 6, %v549
    %v551 = vrot.slane %v522, %v550
    %v552 = vlaneseq
    %v553 = vshrl.u32 %v552, 7
    %v554 = vsub.s32 7, %v553
    %v555 = vrot.slane %v522, %v554
    %v572 = vunpack.c.l.b16 %v122
    %v573 = vunpack.c.h.b16 %v122
    %v574 = vunpack.c.l.b16 %v123
    %v575 = vunpack.c.h.b16 %v123
    %v576 = vunpack.c.l.b16 %v124
    %v577 = vunpack.c.h.b16 %v124
    %v578 = vunpack.c.l.b16 %v125
    %v579 = vunpack.c.l.b16 %v126
    %v580 = vunpack.c.h.b16 %v126
    %v581 = vunpack.c.l.b16 %v127
    %v582 = vunpack.c.h.b16 %v127
    %v583 = vunpack.c.l.b16 %v128
    %v584 = vunpack.c.h.b16 %v128
    %v585 = vunpack.c.l.b16 %v129
    %v586 = vpack.c.b16 %v579, %v572
    %v587 = vpack.c.b16 %v580, %v573
    %v588 = vpack.c.b16 %v581, %v574
    %v589 = vpack.c.b16 %v582, %v575
    %v590 = vpack.c.b16 %v583, %v576
    %v591 = vpack.c.b16 %v584, %v577
    %v592 = vpack.c.b16 %v585, %v578
    %v991 = vunpack.c.l.b16 %v130
    %v992 = vunpack.c.h.b16 %v130
    %v993 = vunpack.c.l.b16 %v131
    %v994 = vunpack.c.h.b16 %v131
    %v995 = vunpack.c.l.b16 %v132
    %v996 = vunpack.c.h.b16 %v132
    %v997 = vunpack.c.l.b16 %v133
    %v998 = vunpack.c.h.b16 %v133
    %v999 = vunpack.c.l.b16 %v134
    %v1000 = vunpack.c.h.b16 %v134
    %v1001 = vunpack.c.l.b16 %v135
    %v1002 = vunpack.c.h.b16 %v135
    %v1003 = vunpack.c.l.b16 %v136
    %v1004 = vunpack.c.h.b16 %v136
    %v1005 = vunpack.c.l.b16 %v137
    %v1006 = vunpack.c.h.b16 %v137
    %v1007 = vunpack.c.l.b16 %v138
    %v1008 = vunpack.c.h.b16 %v138
    %v1009 = vunpack.c.l.b16 %v139
    %v1010 = vunpack.c.h.b16 %v139
    %v1011 = vunpack.c.l.b16 %v140
    %v1012 = vunpack.c.h.b16 %v140
    %v1013 = vunpack.c.l.b16 %v141
    %v1014 = vunpack.c.h.b16 %v141
    %v1015 = vunpack.c.l.b16 %v142
    %v1016 = vunpack.c.h.b16 %v142
    %v1017 = vunpack.c.l.b16 %v143
    %v1018 = vunpack.c.h.b16 %v143
    %v1019 = vunpack.c.l.b16 %v144
    %v1020 = vunpack.c.h.b16 %v144
    %v1021 = vunpack.c.l.b16 %v145
    %v1022 = vunpack.c.h.b16 %v145
    %v1023 = vunpack.c.l.b16 %v146
    %v1024 = vunpack.c.h.b16 %v146
    %v1025 = vunpack.c.l.b16 %v147
    %v1026 = vunpack.c.h.b16 %v147
    %v1027 = vunpack.c.l.b16 %v148
    %v1028 = vunpack.c.h.b16 %v148
    %v1029 = vunpack.c.l.b16 %v149
    %v1030 = vunpack.c.h.b16 %v149
    %v1031 = vunpack.c.l.b16 %v150
    %v1032 = vunpack.c.h.b16 %v150
    %v1033 = vunpack.c.l.b16 %v151
    %v1034 = vunpack.c.h.b16 %v151
    %v1035 = vunpack.c.l.b16 %v152
    %v1036 = vunpack.c.h.b16 %v152
    %v1037 = vunpack.c.l.b16 %v153
    %v1038 = vunpack.c.h.b16 %v153
    %v1039 = vunpack.c.l.b16 %v154
    %v1040 = vunpack.c.h.b16 %v154
    %v1041 = vunpack.c.l.b16 %v155
    %v1042 = vunpack.c.h.b16 %v155
    %v1043 = vunpack.c.l.b16 %v156
    %v1044 = vunpack.c.h.b16 %v156
    %v1045 = vunpack.c.l.b16 %v157
    %v1046 = vunpack.c.h.b16 %v157
    %v1047 = vunpack.c.l.b16 %v158
    %v1048 = vunpack.c.h.b16 %v158
    %v1049 = vunpack.c.l.b16 %v159
    %v1050 = vunpack.c.h.b16 %v159
    %v1051 = vunpack.c.l.b16 %v160
    %v1052 = vunpack.c.h.b16 %v160
    %v1053 = vunpack.c.l.b16 %v161
    %v1054 = vunpack.c.h.b16 %v161
    %v1055 = vunpack.c.l.b16 %v162
    %v1056 = vunpack.c.h.b16 %v162
    %v1057 = vunpack.c.l.b16 %v163
    %v1058 = vunpack.c.h.b16 %v163
    %v1059 = vunpack.c.l.b16 %v164
    %v1060 = vunpack.c.h.b16 %v164
    %v1061 = vunpack.c.l.b16 %v165
    %v1062 = vunpack.c.h.b16 %v165
    %v1063 = vunpack.c.l.b16 %v166
    %v1064 = vunpack.c.h.b16 %v166
    %v1065 = vunpack.c.l.b16 %v167
    %v1066 = vunpack.c.h.b16 %v167
    %v1067 = vunpack.c.l.b16 %v168
    %v1068 = vunpack.c.h.b16 %v168
    %v1069 = vunpack.c.l.b16 %v169
    %v1070 = vunpack.c.h.b16 %v169
    %v1071 = vunpack.c.l.b16 %v170
    %v1072 = vunpack.c.h.b16 %v170
    %v1073 = vunpack.c.l.b16 %v171
    %v1074 = vunpack.c.h.b16 %v171
    %v1075 = vunpack.c.l.b16 %v172
    %v1076 = vunpack.c.h.b16 %v172
    %v1077 = vunpack.c.l.b16 %v173
    %v1078 = vunpack.c.h.b16 %v173
    %v1079 = vunpack.c.l.b16 %v174
    %v1080 = vunpack.c.h.b16 %v174
    %v1081 = vunpack.c.l.b16 %v175
    %v1082 = vunpack.c.h.b16 %v175
    %v1083 = vunpack.c.l.b16 %v176
    %v1084 = vunpack.c.h.b16 %v176
    %v1085 = vunpack.c.l.b16 %v177
    %v1086 = vunpack.c.h.b16 %v177
    %v1087 = vunpack.c.l.b16 %v178
    %v1088 = vunpack.c.h.b16 %v178
    %v1089 = vunpack.c.l.b16 %v179
    %v1090 = vunpack.c.h.b16 %v179
    %v1091 = vunpack.c.l.b16 %v180
    %v1092 = vunpack.c.h.b16 %v180
    %v1093 = vunpack.c.l.b16 %v181
    %v1094 = vunpack.c.h.b16 %v181
    %v1095 = vunpack.c.l.b16 %v182
    %v1096 = vunpack.c.h.b16 %v182
    %v1097 = vunpack.c.l.b16 %v183
    %v1098 = vunpack.c.h.b16 %v183
    %v1099 = vunpack.c.l.b16 %v184
    %v1100 = vunpack.c.h.b16 %v184
    %v1101 = vunpack.c.l.b16 %v185
    %v1102 = vunpack.c.h.b16 %v185
    %v1103 = vunpack.c.l.b16 %v186
    %v1104 = vunpack.c.h.b16 %v186
    %v1105 = vunpack.c.l.b16 %v187
    %v1106 = vunpack.c.h.b16 %v187
    %v1107 = vunpack.c.l.b16 %v188
    %v1108 = vunpack.c.h.b16 %v188
    %v1109 = vunpack.c.l.b16 %v189
    %v1110 = vunpack.c.h.b16 %v189
    %v1111 = vunpack.c.l.b16 %v190
    %v1112 = vunpack.c.h.b16 %v190
    %v1113 = vunpack.c.l.b16 %v191
    %v1114 = vunpack.c.h.b16 %v191
    %v1115 = vunpack.c.l.b16 %v192
    %v1116 = vunpack.c.h.b16 %v192
    %v1117 = vunpack.c.l.b16 %v193
    %v1118 = vunpack.c.h.b16 %v193
    %v1119 = vunpack.c.l.b16 %v194
    %v1120 = vunpack.c.h.b16 %v194
    %v1121 = vunpack.c.l.b16 %v195
    %v1122 = vunpack.c.h.b16 %v195
    %v1123 = vunpack.c.l.b16 %v196
    %v1124 = vunpack.c.h.b16 %v196
    %v1125 = vunpack.c.l.b16 %v197
    %v1126 = vunpack.c.h.b16 %v197
    %v1127 = vunpack.c.l.b16 %v198
    %v1128 = vunpack.c.h.b16 %v198
    %v1129 = vunpack.c.l.b16 %v199
    %v1130 = vunpack.c.h.b16 %v199
    %v1131 = vunpack.c.l.b16 %v200
    %v1132 = vunpack.c.h.b16 %v200
    %v1133 = vunpack.c.l.b16 %v201
    %v1134 = vunpack.c.h.b16 %v201
    %v1135 = vunpack.c.l.b16 %v202
    %v1136 = vunpack.c.h.b16 %v202
    %v1137 = vunpack.c.l.b16 %v203
    %v1138 = vunpack.c.h.b16 %v203
    %v1139 = vunpack.c.l.b16 %v204
    %v1140 = vunpack.c.h.b16 %v204
    %v1141 = vunpack.c.l.b16 %v205
    %v1142 = vunpack.c.h.b16 %v205
    %v1143 = vunpack.c.l.b16 %v206
    %v1144 = vunpack.c.h.b16 %v206
    %v1145 = vunpack.c.l.b16 %v207
    %v1146 = vunpack.c.h.b16 %v207
    %v1147 = vunpack.c.l.b16 %v208
    %v1148 = vunpack.c.h.b16 %v208
    %v1149 = vunpack.c.l.b16 %v209
    %v1150 = vunpack.c.h.b16 %v209
    %v1151 = vunpack.c.l.b16 %v210
    %v1152 = vunpack.c.h.b16 %v210
    %v1153 = vunpack.c.l.b16 %v211
    %v1154 = vunpack.c.h.b16 %v211
    %v1155 = vunpack.c.l.b16 %v212
    %v1156 = vunpack.c.h.b16 %v212
    %v1157 = vunpack.c.l.b16 %v213
    %v1158 = vunpack.c.h.b16 %v213
    %v1159 = vunpack.c.l.b16 %v214
    %v1160 = vunpack.c.h.b16 %v214
    %v1161 = vunpack.c.l.b16 %v215
    %v1162 = vunpack.c.h.b16 %v215
    %v1163 = vunpack.c.l.b16 %v216
    %v1164 = vunpack.c.h.b16 %v216
    %v1165 = vunpack.c.l.b16 %v217
    %v1166 = vunpack.c.h.b16 %v217
    %v1167 = vunpack.c.l.b16 %v218
    %v1168 = vunpack.c.h.b16 %v218
    %v1169 = vunpack.c.l.b16 %v219
    %v1170 = vunpack.c.h.b16 %v219
    %v1171 = vunpack.c.l.b16 %v220
    %v1172 = vunpack.c.h.b16 %v220
    %v1173 = vunpack.c.l.b16 %v221
    %v1174 = vunpack.c.h.b16 %v221
    %v1175 = vunpack.c.l.b16 %v222
    %v1176 = vunpack.c.h.b16 %v222
    %v1177 = vunpack.c.l.b16 %v223
    %v1178 = vunpack.c.h.b16 %v223
    %v1179 = vunpack.c.l.b16 %v224
    %v1180 = vunpack.c.h.b16 %v224
    %v1181 = vunpack.c.l.b16 %v225
    %v1182 = vunpack.c.h.b16 %v225
    %v1183 = vunpack.c.l.b16 %v226
    %v1184 = vunpack.c.h.b16 %v226
    %v1185 = vunpack.c.l.b16 %v227
    %v1186 = vunpack.c.h.b16 %v227
    %v1187 = vunpack.c.l.b16 %v228
    %v1188 = vunpack.c.h.b16 %v228
    %v1189 = vunpack.c.l.b16 %v229
    %v1190 = vunpack.c.h.b16 %v229
    %v1191 = vunpack.c.l.b16 %v230
    %v1192 = vunpack.c.h.b16 %v230
    %v1193 = vunpack.c.l.b16 %v231
    %v1194 = vunpack.c.h.b16 %v231
    %v1195 = vunpack.c.l.b16 %v232
    %v1196 = vunpack.c.h.b16 %v232
    %v1197 = vunpack.c.l.b16 %v233
    %v1198 = vunpack.c.h.b16 %v233
    %v1199 = vunpack.c.l.b16 %v234
    %v1200 = vunpack.c.h.b16 %v234
    %v1201 = vunpack.c.l.b16 %v235
    %v1202 = vunpack.c.h.b16 %v235
    %v1203 = vunpack.c.l.b16 %v236
    %v1204 = vunpack.c.h.b16 %v236
    %v1205 = vunpack.c.l.b16 %v237
    %v1206 = vunpack.c.h.b16 %v237
    %v1207 = vunpack.c.l.b16 %v238
    %v1208 = vunpack.c.h.b16 %v238
    %v1209 = vunpack.c.l.b16 %v239
    %v1210 = vunpack.c.h.b16 %v239
    %v1211 = vunpack.c.l.b16 %v240
    %v1212 = vunpack.c.h.b16 %v240
    %v1213 = vunpack.c.l.b16 %v241
    %v1214 = vunpack.c.h.b16 %v241
    %v1215 = vunpack.c.l.b16 %v242
    %v1216 = vunpack.c.h.b16 %v242
    %v1217 = vunpack.c.l.b16 %v243
    %v1218 = vunpack.c.h.b16 %v243
    %v1219 = vunpack.c.l.b16 %v244
    %v1220 = vunpack.c.h.b16 %v244
    %v1221 = vunpack.c.l.b16 %v245
    %v1222 = vunpack.c.h.b16 %v245
    %v1223 = vunpack.c.l.b16 %v246
    %v1224 = vunpack.c.h.b16 %v246
    %v1225 = vunpack.c.l.b16 %v247
    %v1226 = vunpack.c.h.b16 %v247
    %v1227 = vunpack.c.l.b16 %v248
    %v1228 = vunpack.c.h.b16 %v248
    %v1229 = vunpack.c.l.b16 %v249
    %v1230 = vunpack.c.h.b16 %v249
    %v1231 = vunpack.c.l.b16 %v250
    %v1232 = vunpack.c.h.b16 %v250
    %v1233 = vunpack.c.l.b16 %v251
    %v1234 = vunpack.c.h.b16 %v251
    %v1235 = vunpack.c.l.b16 %v252
    %v1236 = vunpack.c.h.b16 %v252
    %v1237 = vunpack.c.l.b16 %v253
    %v1238 = vunpack.c.h.b16 %v253
    %v1239 = vunpack.c.l.b16 %v254
    %v1240 = vunpack.c.h.b16 %v254
    %v1241 = vunpack.c.l.b16 %v255
    %v1242 = vunpack.c.h.b16 %v255
    %v1243 = vunpack.c.l.b16 %v256
    %v1244 = vunpack.c.h.b16 %v256
    %v1245 = vunpack.c.l.b16 %v257
    %v1246 = vunpack.c.h.b16 %v257
    %v1247 = vunpack.c.l.b16 %v258
    %v1248 = vunpack.c.h.b16 %v258
    %v1249 = vunpack.c.l.b16 %v259
    %v1250 = vunpack.c.h.b16 %v259
    %v1251 = vunpack.c.l.b16 %v260
    %v1252 = vunpack.c.h.b16 %v260
    %v1253 = vunpack.c.l.b16 %v261
    %v1254 = vunpack.c.h.b16 %v261
    %v1255 = vunpack.c.l.b16 %v262
    %v1256 = vunpack.c.h.b16 %v262
    %v1257 = vunpack.c.l.b16 %v263
    %v1258 = vunpack.c.h.b16 %v263
    %v1259 = vunpack.c.l.b16 %v264
    %v1260 = vunpack.c.h.b16 %v264
    %v1261 = vunpack.c.l.b16 %v265
    %v1262 = vunpack.c.h.b16 %v265
    %v1263 = vunpack.c.l.b16 %v266
    %v1264 = vunpack.c.h.b16 %v266
    %v1265 = vunpack.c.l.b16 %v267
    %v1266 = vunpack.c.h.b16 %v267
    %v1267 = vunpack.c.l.b16 %v268
    %v1268 = vunpack.c.h.b16 %v268
    %v1269 = vunpack.c.l.b16 %v269
    %v1270 = vunpack.c.h.b16 %v269
    %v1271 = vunpack.c.l.b16 %v270
    %v1272 = vunpack.c.h.b16 %v270
    %v1273 = vunpack.c.l.b16 %v271
    %v1274 = vunpack.c.h.b16 %v271
    %v1275 = vunpack.c.l.b16 %v272
    %v1276 = vunpack.c.h.b16 %v272
    %v1277 = vunpack.c.l.b16 %v273
    %v1278 = vunpack.c.h.b16 %v273
    %v1279 = vunpack.c.l.b16 %v274
    %v1280 = vunpack.c.h.b16 %v274
    %v1281 = vunpack.c.l.b16 %v275
    %v1282 = vunpack.c.h.b16 %v275
    %v1283 = vunpack.c.l.b16 %v276
    %v1284 = vunpack.c.h.b16 %v276
    %v1285 = vunpack.c.l.b16 %v277
    %v1286 = vunpack.c.h.b16 %v277
    %v1287 = vunpack.c.l.b16 %v278
    %v1288 = vunpack.c.h.b16 %v278
    %v1289 = vunpack.c.l.b16 %v279
    %v1290 = vunpack.c.h.b16 %v279
    %v1291 = vunpack.c.l.b16 %v280
    %v1292 = vunpack.c.h.b16 %v280
    %v1293 = vunpack.c.l.b16 %v281
    %v1294 = vunpack.c.h.b16 %v281
    %v1295 = vunpack.c.l.b16 %v282
    %v1296 = vunpack.c.h.b16 %v282
    %v1297 = vunpack.c.l.b16 %v283
    %v1298 = vunpack.c.h.b16 %v283
    %v1299 = vunpack.c.l.b16 %v284
    %v1300 = vunpack.c.h.b16 %v284
    %v1301 = vunpack.c.l.b16 %v285
    %v1302 = vunpack.c.h.b16 %v285
    %v1303 = vunpack.c.l.b16 %v286
    %v1304 = vunpack.c.h.b16 %v286
    %v1305 = vunpack.c.l.b16 %v287
    %v1306 = vunpack.c.h.b16 %v287
    %v1307 = vunpack.c.l.b16 %v288
    %v1308 = vunpack.c.h.b16 %v288
    %v1309 = vunpack.c.l.b16 %v289
    %v1310 = vunpack.c.h.b16 %v289
    %v1311 = vunpack.c.l.b16 %v290
    %v1312 = vunpack.c.h.b16 %v290
    %v1313 = vunpack.c.l.b16 %v291
    %v1314 = vunpack.c.h.b16 %v291
    %v1315 = vunpack.c.l.b16 %v292
    %v1316 = vunpack.c.h.b16 %v292
    %v1317 = vunpack.c.l.b16 %v293
    %v1318 = vunpack.c.h.b16 %v293
    %v1319 = vunpack.c.l.b16 %v294
    %v1320 = vunpack.c.h.b16 %v294
    %v1321 = vunpack.c.l.b16 %v295
    %v1322 = vunpack.c.h.b16 %v295
    %v1323 = vunpack.c.l.b16 %v296
    %v1324 = vunpack.c.h.b16 %v296
    %v1325 = vunpack.c.l.b16 %v297
    %v1326 = vunpack.c.h.b16 %v297
    %v1327 = vunpack.c.l.b16 %v298
    %v1328 = vunpack.c.h.b16 %v298
    %v1329 = vunpack.c.l.b16 %v299
    %v1330 = vunpack.c.h.b16 %v299
    %v1331 = vunpack.c.l.b16 %v300
    %v1332 = vunpack.c.h.b16 %v300
    %v1333 = vunpack.c.l.b16 %v301
    %v1334 = vunpack.c.h.b16 %v301
    %v1335 = vunpack.c.l.b16 %v302
    %v1336 = vunpack.c.h.b16 %v302
    %v1337 = vunpack.c.l.b16 %v303
    %v1338 = vunpack.c.h.b16 %v303
    %v1339 = vunpack.c.l.b16 %v304
    %v1340 = vunpack.c.h.b16 %v304
    %v1341 = vunpack.c.l.b16 %v305
    %v1342 = vunpack.c.h.b16 %v305
    %v1343 = vunpack.c.l.b16 %v306
    %v1344 = vunpack.c.h.b16 %v306
    %v1345 = vunpack.c.l.b16 %v307
    %v1346 = vunpack.c.h.b16 %v307
    %v1347 = vunpack.c.l.b16 %v308
    %v1348 = vunpack.c.h.b16 %v308
    %v1349 = vunpack.c.l.b16 %v309
    %v1350 = vunpack.c.h.b16 %v309
    %v1351 = vunpack.c.l.b16 %v310
    %v1352 = vunpack.c.h.b16 %v310
    %v1353 = vunpack.c.l.b16 %v311
    %v1354 = vunpack.c.h.b16 %v311
    %v1355 = vunpack.c.l.b16 %v312
    %v1356 = vunpack.c.h.b16 %v312
    %v1357 = vunpack.c.l.b16 %v313
    %v1358 = vunpack.c.h.b16 %v313
    %v1359 = vunpack.c.l.b16 %v314
    %v1360 = vunpack.c.h.b16 %v314
    %v1361 = vunpack.c.l.b16 %v315
    %v1362 = vunpack.c.h.b16 %v315
    %v1363 = vunpack.c.l.b16 %v316
    %v1364 = vunpack.c.h.b16 %v316
    %v1365 = vunpack.c.l.b16 %v317
    %v1366 = vunpack.c.h.b16 %v317
    %v1367 = vunpack.c.l.b16 %v318
    %v1368 = vunpack.c.h.b16 %v318
    %v1369 = vunpack.c.l.b16 %v319
    %v1370 = vunpack.c.h.b16 %v319
    %v1371 = vunpack.c.l.b16 %v320
    %v1372 = vunpack.c.h.b16 %v320
    %v1373 = vunpack.c.l.b16 %v321
    %v1374 = vunpack.c.h.b16 %v321
    %v1375 = vunpack.c.l.b16 %v322
    %v1376 = vunpack.c.h.b16 %v322
    %v1377 = vunpack.c.l.b16 %v323
    %v1378 = vunpack.c.h.b16 %v323
    %v1379 = vunpack.c.l.b16 %v324
    %v1380 = vunpack.c.h.b16 %v324
    %v1381 = vunpack.c.l.b16 %v325
    %v1382 = vunpack.c.h.b16 %v325
    %v1383 = vunpack.c.l.b16 %v326
    %v1384 = vunpack.c.h.b16 %v326
    %v1385 = vunpack.c.l.b16 %v327
    %v1386 = vunpack.c.h.b16 %v327
    %v1387 = vunpack.c.l.b16 %v328
    %v1388 = vunpack.c.h.b16 %v328
    %v1389 = vunpack.c.l.b16 %v329
    %v1390 = vunpack.c.h.b16 %v329
    %v1391 = vunpack.c.l.b16 %v330
    %v1392 = vunpack.c.h.b16 %v330
    %v1393 = vunpack.c.l.b16 %v331
    %v1394 = vunpack.c.h.b16 %v331
    %v1395 = vunpack.c.l.b16 %v332
    %v1396 = vunpack.c.h.b16 %v332
    %v1397 = vunpack.c.l.b16 %v333
    %v1398 = vunpack.c.h.b16 %v333
    %v1399 = vunpack.c.l.b16 %v334
    %v1400 = vunpack.c.h.b16 %v334
    %v1401 = vunpack.c.l.b16 %v335
    %v1402 = vunpack.c.h.b16 %v335
    %v1403 = vunpack.c.l.b16 %v336
    %v1404 = vunpack.c.h.b16 %v336
    %v1405 = vunpack.c.l.b16 %v337
    %v1406 = vunpack.c.h.b16 %v337
    %v1407 = vunpack.c.l.b16 %v338
    %v1408 = vunpack.c.h.b16 %v338
    %v1409 = vunpack.c.l.b16 %v339
    %v1410 = vunpack.c.h.b16 %v339
    %v1411 = vunpack.c.l.b16 %v340
    %v1412 = vunpack.c.h.b16 %v340
    %v1413 = vunpack.c.l.b16 %v341
    %v1414 = vunpack.c.h.b16 %v341
    %v1415 = vunpack.c.l.b16 %v342
    %v1416 = vunpack.c.h.b16 %v342
    %v1417 = vunpack.c.l.b16 %v343
    %v1418 = vunpack.c.h.b16 %v343
    %v1419 = vunpack.c.l.b16 %v344
    %v1420 = vunpack.c.h.b16 %v344
    %v1421 = vunpack.c.l.b16 %v345
    %v1422 = vunpack.c.h.b16 %v345
    %v1423 = vunpack.c.l.b16 %v346
    %v1424 = vunpack.c.h.b16 %v346
    %v1425 = vunpack.c.l.b16 %v347
    %v1426 = vunpack.c.h.b16 %v347
    %v1427 = vunpack.c.l.b16 %v348
    %v1428 = vunpack.c.h.b16 %v348
    %v1429 = vunpack.c.l.b16 %v349
    %v1430 = vunpack.c.h.b16 %v349
    %v1431 = vunpack.c.l.b16 %v350
    %v1432 = vunpack.c.h.b16 %v350
    %v1433 = vunpack.c.l.b16 %v351
    %v1434 = vunpack.c.h.b16 %v351
    %v1435 = vunpack.c.l.b16 %v352
    %v1436 = vunpack.c.h.b16 %v352
    %v1437 = vunpack.c.l.b16 %v353
    %v1438 = vunpack.c.h.b16 %v353
    %v1439 = vunpack.c.l.b16 %v354
    %v1440 = vunpack.c.h.b16 %v354
    %v1441 = vunpack.c.l.b16 %v355
    %v1442 = vunpack.c.h.b16 %v355
    %v1443 = vunpack.c.l.b16 %v356
    %v1444 = vunpack.c.h.b16 %v356
    %v1445 = vunpack.c.l.b16 %v357
    %v1446 = vunpack.c.h.b16 %v357
    %v1447 = vunpack.c.l.b16 %v358
    %v1448 = vunpack.c.h.b16 %v358
    %v1449 = vunpack.c.l.b16 %v359
    %v1450 = vunpack.c.h.b16 %v359
    %v1451 = vunpack.c.l.b16 %v360
    %v1452 = vunpack.c.h.b16 %v360
    %v1453 = vunpack.c.l.b16 %v361
    %v1454 = vunpack.c.h.b16 %v361
    %v1455 = vunpack.c.l.b16 %v362
    %v1456 = vunpack.c.h.b16 %v362
    %v1457 = vunpack.c.l.b16 %v363
    %v1458 = vunpack.c.h.b16 %v363
    %v1459 = vunpack.c.l.b16 %v364
    %v1460 = vunpack.c.h.b16 %v364
    %v1461 = vunpack.c.l.b16 %v365
    %v1462 = vunpack.c.h.b16 %v365
    %v1463 = vunpack.c.l.b16 %v366
    %v1464 = vunpack.c.h.b16 %v366
    %v1465 = vunpack.c.l.b16 %v367
    %v1466 = vunpack.c.h.b16 %v367
    %v1467 = vunpack.c.l.b16 %v368
    %v1468 = vunpack.c.h.b16 %v368
    %v1469 = vunpack.c.l.b16 %v369
    %v1470 = vunpack.c.h.b16 %v369
    %v1471 = vunpack.c.l.b16 %v370
    %v1472 = vunpack.c.h.b16 %v370
    %v1473 = vunpack.c.l.b16 %v371
    %v1474 = vunpack.c.h.b16 %v371
    %v1475 = vunpack.c.l.b16 %v372
    %v1476 = vunpack.c.h.b16 %v372
    %v1477 = vunpack.c.l.b16 %v373
    %v1478 = vunpack.c.h.b16 %v373
    %v1479 = vunpack.c.l.b16 %v374
    %v1480 = vunpack.c.h.b16 %v374
    %v1481 = vunpack.c.l.b16 %v375
    %v1482 = vunpack.c.h.b16 %v375
    %v1483 = vunpack.c.l.b16 %v376
    %v1484 = vunpack.c.h.b16 %v376
    %v1485 = vunpack.c.l.b16 %v377
    %v1486 = vunpack.c.h.b16 %v377
    %v1487 = vunpack.c.l.b16 %v378
    %v1488 = vunpack.c.h.b16 %v378
    %v1489 = vunpack.c.l.b16 %v379
    %v1490 = vunpack.c.h.b16 %v379
    %v1491 = vunpack.c.l.b16 %v380
    %v1492 = vunpack.c.h.b16 %v380
    %v1493 = vunpack.c.l.b16 %v381
    %v1494 = vunpack.c.h.b16 %v381
    %v1495 = vunpack.c.l.b16 %v382
    %v1496 = vunpack.c.h.b16 %v382
    %v1497 = vunpack.c.l.b16 %v383
    %v1498 = vunpack.c.h.b16 %v383
    %v1499 = vunpack.c.l.b16 %v384
    %v1500 = vunpack.c.h.b16 %v384
    %v1501 = vunpack.c.l.b16 %v385
    %v1502 = vunpack.c.h.b16 %v385
    %v1503 = vunpack.c.l.b16 %v386
    %v1504 = vunpack.c.h.b16 %v386
    %v1505 = vunpack.c.l.b16 %v387
    %v1506 = vunpack.c.h.b16 %v387
    %v1507 = vunpack.c.l.b16 %v388
    %v1508 = vunpack.c.h.b16 %v388
    %v1509 = vunpack.c.l.b16 %v389
    %v1510 = vunpack.c.h.b16 %v389
    %v1511 = vunpack.c.l.b16 %v390
    %v1512 = vunpack.c.h.b16 %v390
    %v1513 = vunpack.c.l.b16 %v391
    %v1514 = vunpack.c.h.b16 %v391
    %v1515 = vunpack.c.l.b16 %v392
    %v1516 = vunpack.c.h.b16 %v392
    %v1517 = vunpack.c.l.b16 %v393
    %v1518 = vunpack.c.h.b16 %v393
    %v1519 = vunpack.c.l.b16 %v394
    %v1520 = vunpack.c.h.b16 %v394
    %v1521 = vunpack.c.l.b16 %v395
    %v1522 = vunpack.c.h.b16 %v395
    %v1523 = vunpack.c.l.b16 %v396
    %v1524 = vunpack.c.h.b16 %v396
    %v1525 = vunpack.c.l.b16 %v397
    %v1526 = vunpack.c.h.b16 %v397
    %v1527 = vunpack.c.l.b16 %v398
    %v1528 = vunpack.c.h.b16 %v398
    %v1529 = vunpack.c.l.b16 %v399
    %v1530 = vunpack.c.h.b16 %v399
    %v1531 = vunpack.c.l.b16 %v400
    %v1532 = vunpack.c.h.b16 %v400
    %v1533 = vunpack.c.l.b16 %v401
    %v1534 = vunpack.c.h.b16 %v401
    %v1535 = vunpack.c.l.b16 %v402
    %v1536 = vunpack.c.h.b16 %v402
    %v1537 = vunpack.c.l.b16 %v403
    %v1538 = vunpack.c.h.b16 %v403
    %v1539 = vunpack.c.l.b16 %v404
    %v1540 = vunpack.c.h.b16 %v404
    %v1541 = vunpack.c.l.b16 %v405
    %v1542 = vunpack.c.h.b16 %v405
    %v1543 = vunpack.c.l.b16 %v406
    %v1544 = vunpack.c.h.b16 %v406
    %v1545 = vunpack.c.l.b16 %v407
    %v1546 = vunpack.c.h.b16 %v407
    %v1547 = vunpack.c.l.b16 %v408
    %v1548 = vunpack.c.h.b16 %v408
    %v1549 = vunpack.c.l.b16 %v409
    %v1550 = vunpack.c.h.b16 %v409
    %v1551 = vunpack.c.l.b16 %v410
    %v1552 = vunpack.c.h.b16 %v410
    %v1553 = vunpack.c.l.b16 %v411
    %v1554 = vunpack.c.h.b16 %v411
    %v1555 = vunpack.c.l.b16 %v412
    %v1556 = vunpack.c.h.b16 %v412
    %v1557 = vunpack.c.l.b16 %v413
    %v1558 = vunpack.c.h.b16 %v413
    %v1559 = vunpack.c.l.b16 %v414
    %v1560 = vunpack.c.h.b16 %v414
    %v1561 = vunpack.c.l.b16 %v415
    %v1562 = vunpack.c.h.b16 %v415
    %v1563 = vunpack.c.l.b16 %v416
    %v1564 = vunpack.c.h.b16 %v416
    %v1565 = vunpack.c.l.b16 %v417
    %v1566 = vunpack.c.h.b16 %v417
    %v1567 = vunpack.c.l.b16 %v418
    %v1568 = vunpack.c.h.b16 %v418
    %v1569 = vunpack.c.l.b16 %v419
    %v1570 = vunpack.c.h.b16 %v419
    %v1571 = vunpack.c.l.b16 %v420
    %v1572 = vunpack.c.h.b16 %v420
    %v1573 = vunpack.c.l.b16 %v421
    %v1574 = vunpack.c.h.b16 %v421
    %v1575 = vunpack.c.l.b16 %v422
    %v1576 = vunpack.c.h.b16 %v422
    %v1577 = vunpack.c.l.b16 %v423
    %v1578 = vunpack.c.h.b16 %v423
    %v1579 = vunpack.c.l.b16 %v424
    %v1580 = vunpack.c.h.b16 %v424
    %v1581 = vunpack.c.l.b16 %v425
    %v1582 = vunpack.c.h.b16 %v425
    %v1583 = vunpack.c.l.b16 %v426
    %v1584 = vunpack.c.h.b16 %v426
    %v1585 = vunpack.c.l.b16 %v427
    %v1586 = vunpack.c.h.b16 %v427
    %v1587 = vunpack.c.l.b16 %v428
    %v1588 = vunpack.c.h.b16 %v428
    %v1589 = vunpack.c.l.b16 %v429
    %v1590 = vunpack.c.h.b16 %v429
    %v1591 = vunpack.c.l.b16 %v430
    %v1592 = vunpack.c.h.b16 %v430
    %v1593 = vunpack.c.l.b16 %v431
    %v1594 = vunpack.c.h.b16 %v431
    %v1595 = vunpack.c.l.b16 %v432
    %v1596 = vunpack.c.h.b16 %v432
    %v1597 = vunpack.c.l.b16 %v433
    %v1598 = vunpack.c.h.b16 %v433
    %v1599 = vunpack.c.l.b16 %v434
    %v1600 = vunpack.c.h.b16 %v434
    %v1601 = vunpack.c.l.b16 %v435
    %v1602 = vunpack.c.h.b16 %v435
    %v1603 = vunpack.c.l.b16 %v436
    %v1604 = vunpack.c.h.b16 %v436
    %v1605 = vunpack.c.l.b16 %v437
    %v1606 = vunpack.c.h.b16 %v437
    %v1607 = vunpack.c.l.b16 %v438
    %v1608 = vunpack.c.h.b16 %v438
    %v1609 = vunpack.c.l.b16 %v439
    %v1610 = vunpack.c.h.b16 %v439
    %v1611 = vunpack.c.l.b16 %v440
    %v1612 = vunpack.c.h.b16 %v440
    %v1613 = vunpack.c.l.b16 %v441
    %v1614 = vunpack.c.h.b16 %v441
    %v1615 = vunpack.c.l.b16 %v442
    %v1616 = vunpack.c.h.b16 %v442
    %v1617 = vunpack.c.l.b16 %v443
    %v1618 = vunpack.c.h.b16 %v443
    %v1619 = vunpack.c.l.b16 %v444
    %v1620 = vunpack.c.h.b16 %v444
    %v1621 = vunpack.c.l.b16 %v445
    %v1622 = vunpack.c.h.b16 %v445
    %v1623 = vunpack.c.l.b16 %v446
    %v1624 = vunpack.c.h.b16 %v446
    %v1625 = vunpack.c.l.b16 %v447
    %v1626 = vunpack.c.h.b16 %v447
    %v1627 = vunpack.c.l.b16 %v448
    %v1628 = vunpack.c.h.b16 %v448
    %v1629 = vunpack.c.l.b16 %v449
    %v1630 = vunpack.c.h.b16 %v449
    %v1631 = vunpack.c.l.b16 %v450
    %v1632 = vunpack.c.h.b16 %v450
    %v1633 = vunpack.c.l.b16 %v451
    %v1634 = vunpack.c.h.b16 %v451
    %v1635 = vunpack.c.l.b16 %v452
    %v1636 = vunpack.c.h.b16 %v452
    %v1637 = vunpack.c.l.b16 %v453
    %v1638 = vunpack.c.h.b16 %v453
    %v1639 = vunpack.c.l.b16 %v454
    %v1640 = vunpack.c.h.b16 %v454
    %v1641 = vunpack.c.l.b16 %v455
    %v1642 = vunpack.c.h.b16 %v455
    %v1643 = vunpack.c.l.b16 %v456
    %v1644 = vunpack.c.h.b16 %v456
    %v1645 = vunpack.c.l.b16 %v457
    %v1646 = vunpack.c.h.b16 %v457
    %v1647 = vunpack.c.l.b16 %v458
    %v1648 = vunpack.c.h.b16 %v458
    %v1649 = vunpack.c.l.b16 %v459
    %v1650 = vunpack.c.h.b16 %v459
    %v1651 = vunpack.c.l.b16 %v460
    %v1652 = vunpack.c.h.b16 %v460
    %v1653 = vunpack.c.l.b16 %v461
    %v1654 = vunpack.c.h.b16 %v461
    %v1655 = vunpack.c.l.b16 %v462
    %v1656 = vunpack.c.h.b16 %v462
    %v1657 = vunpack.c.l.b16 %v463
    %v1658 = vunpack.c.h.b16 %v463
    %v1659 = vunpack.c.l.b16 %v464
    %v1660 = vunpack.c.h.b16 %v464
    %v1661 = vunpack.c.l.b16 %v465
    %v1662 = vunpack.c.h.b16 %v465
    %v1663 = vunpack.c.l.b16 %v466
    %v1664 = vunpack.c.h.b16 %v466
    %v1665 = vunpack.c.l.b16 %v467
    %v1666 = vunpack.c.h.b16 %v467
    %v1667 = vunpack.c.l.b16 %v468
    %v1668 = vunpack.c.h.b16 %v468
    %v1669 = vunpack.c.l.b16 %v469
    %v1670 = vunpack.c.h.b16 %v469
    %v1671 = vunpack.c.l.b16 %v470
    %v1672 = vunpack.c.h.b16 %v470
    %v1673 = vunpack.c.l.b16 %v471
    %v1674 = vunpack.c.h.b16 %v471
    %v1675 = vunpack.c.l.b16 %v472
    %v1676 = vunpack.c.h.b16 %v472
    %v1677 = vunpack.c.l.b16 %v473
    %v1678 = vunpack.c.h.b16 %v473
    %v1679 = vunpack.c.l.b16 %v474
    %v1680 = vunpack.c.h.b16 %v474
    %v1681 = vunpack.c.l.b16 %v475
    %v1682 = vunpack.c.h.b16 %v475
    %v1683 = vunpack.c.l.b16 %v476
    %v1684 = vunpack.c.h.b16 %v476
    %v1685 = vunpack.c.l.b16 %v477
    %v1686 = vunpack.c.h.b16 %v477
    %v1687 = vunpack.c.l.b16 %v478
    %v1688 = vunpack.c.h.b16 %v478
    %v1689 = vunpack.c.l.b16 %v479
    %v1690 = vunpack.c.h.b16 %v479
    %v1691 = vunpack.c.l.b16 %v480
    %v1692 = vunpack.c.h.b16 %v480
    %v1693 = vunpack.c.l.b16 %v481
    %v1694 = vunpack.c.h.b16 %v481
    %v1695 = vunpack.c.l.b16 %v482
    %v1696 = vunpack.c.h.b16 %v482
    %v1697 = vunpack.c.l.b16 %v483
    %v1698 = vunpack.c.h.b16 %v483
    %v1699 = vunpack.c.l.b16 %v484
    %v1700 = vunpack.c.h.b16 %v484
    %v1701 = vunpack.c.l.b16 %v485
    %v1702 = vunpack.c.h.b16 %v485
    %v1703 = vunpack.c.l.b16 %v486
    %v1704 = vunpack.c.h.b16 %v486
    %v1705 = vunpack.c.l.b16 %v487
    %v1706 = vunpack.c.h.b16 %v487
    %v1707 = vunpack.c.l.b16 %v488
    %v1708 = vunpack.c.h.b16 %v488
    %v1709 = vunpack.c.l.b16 %v489
    %v1710 = vunpack.c.h.b16 %v489
    %v1711 = vunpack.c.l.b16 %v490
    %v1712 = vunpack.c.h.b16 %v490
    %v1713 = vunpack.c.l.b16 %v491
    %v1714 = vunpack.c.h.b16 %v491
    %v1715 = vunpack.c.l.b16 %v492
    %v1716 = vunpack.c.h.b16 %v492
    %v1717 = vunpack.c.l.b16 %v493
    %v1718 = vunpack.c.h.b16 %v493
    %v1719 = vunpack.c.l.b16 %v494
    %v1720 = vunpack.c.h.b16 %v494
    %v1721 = vunpack.c.l.b16 %v495
    %v1722 = vunpack.c.h.b16 %v495
    %v1723 = vunpack.c.l.b16 %v496
    %v1724 = vunpack.c.h.b16 %v496
    %v1725 = vunpack.c.l.b16 %v497
    %v1726 = vunpack.c.h.b16 %v497
    %v1727 = vunpack.c.l.b16 %v498
    %v1728 = vunpack.c.h.b16 %v498
    %v1729 = vunpack.c.l.b16 %v499
    %v1730 = vunpack.c.h.b16 %v499
    %v1731 = vunpack.c.l.b16 %v500
    %v1732 = vunpack.c.h.b16 %v500
    %v1733 = vunpack.c.l.b16 %v501
    %v1734 = vunpack.c.h.b16 %v501
    %v1735 = vunpack.c.l.b16 %v502
    %v1736 = vunpack.c.h.b16 %v502
    %v1737 = vunpack.c.l.b16 %v503
    %v1738 = vunpack.c.h.b16 %v503
    %v1739 = vunpack.c.l.b16 %v504
    %v1740 = vunpack.c.h.b16 %v504
    %v1741 = vunpack.c.l.b16 %v505
    %v1742 = vunpack.c.h.b16 %v505
    %v1743 = vunpack.c.l.b16 %v506
    %v1744 = vunpack.c.h.b16 %v506
    %v1745 = vunpack.c.l.b16 %v507
    %v1746 = vunpack.c.h.b16 %v507
    %v1747 = vunpack.c.l.b16 %v508
    %v1748 = vunpack.c.h.b16 %v508
    %v1749 = vunpack.c.l.b16 %v509
    %v1750 = vunpack.c.h.b16 %v509
    %v1751 = vunpack.c.l.b16 %v510
    %v1752 = vunpack.c.h.b16 %v510
    %v1753 = vunpack.c.l.b16 %v511
    %v1754 = vunpack.c.h.b16 %v511
    %v1755 = vunpack.c.l.b16 %v512
    %v1756 = vunpack.c.h.b16 %v512
    %v1757 = vunpack.c.l.b16 %v513
    %v1758 = vunpack.c.h.b16 %v513
    %v1759 = vunpack.c.l.b16 %v514
    %v1760 = vunpack.c.h.b16 %v514
    %v1761 = vunpack.c.l.b16 %v515
    %v1762 = vunpack.c.h.b16 %v515
    %v1763 = vunpack.c.l.b16 %v516
    %v1764 = vunpack.c.h.b16 %v516
    %v1765 = vunpack.c.l.b16 %v517
    %v1766 = vunpack.c.h.b16 %v517
    %v1767 = vunpack.c.l.b16 %v518
    %v1768 = vunpack.c.h.b16 %v518
    %v1769 = vunpack.c.l.b16 %v519
    %v1770 = vunpack.c.h.b16 %v519
    %v1771 = vunpack.c.l.b16 %v520
    %v1772 = vunpack.c.h.b16 %v520
    %v1773 = vunpack.c.l.b16 %v521
    %v1774 = vunpack.c.h.b16 %v521
    %v1775 = vpack.c.b16 %v999, %v991
    %v1776 = vpack.c.b16 %v1000, %v992
    %v1777 = vpack.c.b16 %v1001, %v993
    %v1778 = vpack.c.b16 %v1002, %v994
    %v1779 = vpack.c.b16 %v1003, %v995
    %v1780 = vpack.c.b16 %v1004, %v996
    %v1781 = vpack.c.b16 %v1005, %v997
    %v1782 = vpack.c.b16 %v1006, %v998
    %v1783 = vpack.c.b16 %v1015, %v1007
    %v1784 = vpack.c.b16 %v1016, %v1008
    %v1785 = vpack.c.b16 %v1017, %v1009
    %v1786 = vpack.c.b16 %v1018, %v1010
    %v1787 = vpack.c.b16 %v1019, %v1011
    %v1788 = vpack.c.b16 %v1020, %v1012
    %v1789 = vpack.c.b16 %v1021, %v1013
    %v1790 = vpack.c.b16 %v1022, %v1014
    %v1791 = vpack.c.b16 %v1031, %v1023
    %v1792 = vpack.c.b16 %v1032, %v1024
    %v1793 = vpack.c.b16 %v1033, %v1025
    %v1794 = vpack.c.b16 %v1034, %v1026
    %v1795 = vpack.c.b16 %v1035, %v1027
    %v1796 = vpack.c.b16 %v1036, %v1028
    %v1797 = vpack.c.b16 %v1037, %v1029
    %v1798 = vpack.c.b16 %v1038, %v1030
    %v1799 = vpack.c.b16 %v1047, %v1039
    %v1800 = vpack.c.b16 %v1048, %v1040
    %v1801 = vpack.c.b16 %v1049, %v1041
    %v1802 = vpack.c.b16 %v1050, %v1042
    %v1803 = vpack.c.b16 %v1051, %v1043
    %v1804 = vpack.c.b16 %v1052, %v1044
    %v1805 = vpack.c.b16 %v1053, %v1045
    %v1806 = vpack.c.b16 %v1054, %v1046
    %v1807 = vpack.c.b16 %v1063, %v1055
    %v1808 = vpack.c.b16 %v1064, %v1056
    %v1809 = vpack.c.b16 %v1065, %v1057
    %v1810 = vpack.c.b16 %v1066, %v1058
    %v1811 = vpack.c.b16 %v1067, %v1059
    %v1812 = vpack.c.b16 %v1068, %v1060
    %v1813 = vpack.c.b16 %v1069, %v1061
    %v1814 = vpack.c.b16 %v1070, %v1062
    %v1815 = vpack.c.b16 %v1079, %v1071
    %v1816 = vpack.c.b16 %v1080, %v1072
    %v1817 = vpack.c.b16 %v1081, %v1073
    %v1818 = vpack.c.b16 %v1082, %v1074
    %v1819 = vpack.c.b16 %v1083, %v1075
    %v1820 = vpack.c.b16 %v1084, %v1076
    %v1821 = vpack.c.b16 %v1085, %v1077
    %v1822 = vpack.c.b16 %v1086, %v1078
    %v1823 = vpack.c.b16 %v1095, %v1087
    %v1824 = vpack.c.b16 %v1096, %v1088
    %v1825 = vpack.c.b16 %v1097, %v1089
    %v1826 = vpack.c.b16 %v1098, %v1090
    %v1827 = vpack.c.b16 %v1099, %v1091
    %v1828 = vpack.c.b16 %v1100, %v1092
    %v1829 = vpack.c.b16 %v1101, %v1093
    %v1830 = vpack.c.b16 %v1102, %v1094
    %v1831 = vpack.c.b16 %v1111, %v1103
    %v1832 = vpack.c.b16 %v1112, %v1104
    %v1833 = vpack.c.b16 %v1113, %v1105
    %v1834 = vpack.c.b16 %v1114, %v1106
    %v1835 = vpack.c.b16 %v1115, %v1107
    %v1836 = vpack.c.b16 %v1116, %v1108
    %v1837 = vpack.c.b16 %v1117, %v1109
    %v1838 = vpack.c.b16 %v1118, %v1110
    %v1839 = vpack.c.b16 %v1127, %v1119
    %v1840 = vpack.c.b16 %v1128, %v1120
    %v1841 = vpack.c.b16 %v1129, %v1121
    %v1842 = vpack.c.b16 %v1130, %v1122
    %v1843 = vpack.c.b16 %v1131, %v1123
    %v1844 = vpack.c.b16 %v1132, %v1124
    %v1845 = vpack.c.b16 %v1133, %v1125
    %v1846 = vpack.c.b16 %v1134, %v1126
    %v1847 = vpack.c.b16 %v1143, %v1135
    %v1848 = vpack.c.b16 %v1144, %v1136
    %v1849 = vpack.c.b16 %v1145, %v1137
    %v1850 = vpack.c.b16 %v1146, %v1138
    %v1851 = vpack.c.b16 %v1147, %v1139
    %v1852 = vpack.c.b16 %v1148, %v1140
    %v1853 = vpack.c.b16 %v1149, %v1141
    %v1854 = vpack.c.b16 %v1150, %v1142
    %v1855 = vpack.c.b16 %v1159, %v1151
    %v1856 = vpack.c.b16 %v1160, %v1152
    %v1857 = vpack.c.b16 %v1161, %v1153
    %v1858 = vpack.c.b16 %v1162, %v1154
    %v1859 = vpack.c.b16 %v1163, %v1155
    %v1860 = vpack.c.b16 %v1164, %v1156
    %v1861 = vpack.c.b16 %v1165, %v1157
    %v1862 = vpack.c.b16 %v1166, %v1158
    %v1863 = vpack.c.b16 %v1175, %v1167
    %v1864 = vpack.c.b16 %v1176, %v1168
    %v1865 = vpack.c.b16 %v1177, %v1169
    %v1866 = vpack.c.b16 %v1178, %v1170
    %v1867 = vpack.c.b16 %v1179, %v1171
    %v1868 = vpack.c.b16 %v1180, %v1172
    %v1869 = vpack.c.b16 %v1181, %v1173
    %v1870 = vpack.c.b16 %v1182, %v1174
    %v1871 = vpack.c.b16 %v1191, %v1183
    %v1872 = vpack.c.b16 %v1192, %v1184
    %v1873 = vpack.c.b16 %v1193, %v1185
    %v1874 = vpack.c.b16 %v1194, %v1186
    %v1875 = vpack.c.b16 %v1195, %v1187
    %v1876 = vpack.c.b16 %v1196, %v1188
    %v1877 = vpack.c.b16 %v1197, %v1189
    %v1878 = vpack.c.b16 %v1198, %v1190
    %v1879 = vpack.c.b16 %v1207, %v1199
    %v1880 = vpack.c.b16 %v1208, %v1200
    %v1881 = vpack.c.b16 %v1209, %v1201
    %v1882 = vpack.c.b16 %v1210, %v1202
    %v1883 = vpack.c.b16 %v1211, %v1203
    %v1884 = vpack.c.b16 %v1212, %v1204
    %v1885 = vpack.c.b16 %v1213, %v1205
    %v1886 = vpack.c.b16 %v1214, %v1206
    %v1887 = vpack.c.b16 %v1223, %v1215
    %v1888 = vpack.c.b16 %v1224, %v1216
    %v1889 = vpack.c.b16 %v1225, %v1217
    %v1890 = vpack.c.b16 %v1226, %v1218
    %v1891 = vpack.c.b16 %v1227, %v1219
    %v1892 = vpack.c.b16 %v1228, %v1220
    %v1893 = vpack.c.b16 %v1229, %v1221
    %v1894 = vpack.c.b16 %v1230, %v1222
    %v1895 = vpack.c.b16 %v1239, %v1231
    %v1896 = vpack.c.b16 %v1240, %v1232
    %v1897 = vpack.c.b16 %v1241, %v1233
    %v1898 = vpack.c.b16 %v1242, %v1234
    %v1899 = vpack.c.b16 %v1243, %v1235
    %v1900 = vpack.c.b16 %v1244, %v1236
    %v1901 = vpack.c.b16 %v1245, %v1237
    %v1902 = vpack.c.b16 %v1246, %v1238
    %v1903 = vpack.c.b16 %v1255, %v1247
    %v1904 = vpack.c.b16 %v1256, %v1248
    %v1905 = vpack.c.b16 %v1257, %v1249
    %v1906 = vpack.c.b16 %v1258, %v1250
    %v1907 = vpack.c.b16 %v1259, %v1251
    %v1908 = vpack.c.b16 %v1260, %v1252
    %v1909 = vpack.c.b16 %v1261, %v1253
    %v1910 = vpack.c.b16 %v1262, %v1254
    %v1911 = vpack.c.b16 %v1271, %v1263
    %v1912 = vpack.c.b16 %v1272, %v1264
    %v1913 = vpack.c.b16 %v1273, %v1265
    %v1914 = vpack.c.b16 %v1274, %v1266
    %v1915 = vpack.c.b16 %v1275, %v1267
    %v1916 = vpack.c.b16 %v1276, %v1268
    %v1917 = vpack.c.b16 %v1277, %v1269
    %v1918 = vpack.c.b16 %v1278, %v1270
    %v1919 = vpack.c.b16 %v1287, %v1279
    %v1920 = vpack.c.b16 %v1288, %v1280
    %v1921 = vpack.c.b16 %v1289, %v1281
    %v1922 = vpack.c.b16 %v1290, %v1282
    %v1923 = vpack.c.b16 %v1291, %v1283
    %v1924 = vpack.c.b16 %v1292, %v1284
    %v1925 = vpack.c.b16 %v1293, %v1285
    %v1926 = vpack.c.b16 %v1294, %v1286
    %v1927 = vpack.c.b16 %v1303, %v1295
    %v1928 = vpack.c.b16 %v1304, %v1296
    %v1929 = vpack.c.b16 %v1305, %v1297
    %v1930 = vpack.c.b16 %v1306, %v1298
    %v1931 = vpack.c.b16 %v1307, %v1299
    %v1932 = vpack.c.b16 %v1308, %v1300
    %v1933 = vpack.c.b16 %v1309, %v1301
    %v1934 = vpack.c.b16 %v1310, %v1302
    %v1935 = vpack.c.b16 %v1319, %v1311
    %v1936 = vpack.c.b16 %v1320, %v1312
    %v1937 = vpack.c.b16 %v1321, %v1313
    %v1938 = vpack.c.b16 %v1322, %v1314
    %v1939 = vpack.c.b16 %v1323, %v1315
    %v1940 = vpack.c.b16 %v1324, %v1316
    %v1941 = vpack.c.b16 %v1325, %v1317
    %v1942 = vpack.c.b16 %v1326, %v1318
    %v1943 = vpack.c.b16 %v1335, %v1327
    %v1944 = vpack.c.b16 %v1336, %v1328
    %v1945 = vpack.c.b16 %v1337, %v1329
    %v1946 = vpack.c.b16 %v1338, %v1330
    %v1947 = vpack.c.b16 %v1339, %v1331
    %v1948 = vpack.c.b16 %v1340, %v1332
    %v1949 = vpack.c.b16 %v1341, %v1333
    %v1950 = vpack.c.b16 %v1342, %v1334
    %v1951 = vpack.c.b16 %v1351, %v1343
    %v1952 = vpack.c.b16 %v1352, %v1344
    %v1953 = vpack.c.b16 %v1353, %v1345
    %v1954 = vpack.c.b16 %v1354, %v1346
    %v1955 = vpack.c.b16 %v1355, %v1347
    %v1956 = vpack.c.b16 %v1356, %v1348
    %v1957 = vpack.c.b16 %v1357, %v1349
    %v1958 = vpack.c.b16 %v1358, %v1350
    %v1959 = vpack.c.b16 %v1367, %v1359
    %v1960 = vpack.c.b16 %v1368, %v1360
    %v1961 = vpack.c.b16 %v1369, %v1361
    %v1962 = vpack.c.b16 %v1370, %v1362
    %v1963 = vpack.c.b16 %v1371, %v1363
    %v1964 = vpack.c.b16 %v1372, %v1364
    %v1965 = vpack.c.b16 %v1373, %v1365
    %v1966 = vpack.c.b16 %v1374, %v1366
    %v1967 = vpack.c.b16 %v1383, %v1375
    %v1968 = vpack.c.b16 %v1384, %v1376
    %v1969 = vpack.c.b16 %v1385, %v1377
    %v1970 = vpack.c.b16 %v1386, %v1378
    %v1971 = vpack.c.b16 %v1387, %v1379
    %v1972 = vpack.c.b16 %v1388, %v1380
    %v1973 = vpack.c.b16 %v1389, %v1381
    %v1974 = vpack.c.b16 %v1390, %v1382
    %v1975 = vpack.c.b16 %v1399, %v1391
    %v1976 = vpack.c.b16 %v1400, %v1392
    %v1977 = vpack.c.b16 %v1401, %v1393
    %v1978 = vpack.c.b16 %v1402, %v1394
    %v1979 = vpack.c.b16 %v1403, %v1395
    %v1980 = vpack.c.b16 %v1404, %v1396
    %v1981 = vpack.c.b16 %v1405, %v1397
    %v1982 = vpack.c.b16 %v1406, %v1398
    %v1983 = vpack.c.b16 %v1415, %v1407
    %v1984 = vpack.c.b16 %v1416, %v1408
    %v1985 = vpack.c.b16 %v1417, %v1409
    %v1986 = vpack.c.b16 %v1418, %v1410
    %v1987 = vpack.c.b16 %v1419, %v1411
    %v1988 = vpack.c.b16 %v1420, %v1412
    %v1989 = vpack.c.b16 %v1421, %v1413
    %v1990 = vpack.c.b16 %v1422, %v1414
    %v1991 = vpack.c.b16 %v1431, %v1423
    %v1992 = vpack.c.b16 %v1432, %v1424
    %v1993 = vpack.c.b16 %v1433, %v1425
    %v1994 = vpack.c.b16 %v1434, %v1426
    %v1995 = vpack.c.b16 %v1435, %v1427
    %v1996 = vpack.c.b16 %v1436, %v1428
    %v1997 = vpack.c.b16 %v1437, %v1429
    %v1998 = vpack.c.b16 %v1438, %v1430
    %v1999 = vpack.c.b16 %v1447, %v1439
    %v2000 = vpack.c.b16 %v1448, %v1440
    %v2001 = vpack.c.b16 %v1449, %v1441
    %v2002 = vpack.c.b16 %v1450, %v1442
    %v2003 = vpack.c.b16 %v1451, %v1443
    %v2004 = vpack.c.b16 %v1452, %v1444
    %v2005 = vpack.c.b16 %v1453, %v1445
    %v2006 = vpack.c.b16 %v1454, %v1446
    %v2007 = vpack.c.b16 %v1463, %v1455
    %v2008 = vpack.c.b16 %v1464, %v1456
    %v2009 = vpack.c.b16 %v1465, %v1457
    %v2010 = vpack.c.b16 %v1466, %v1458
    %v2011 = vpack.c.b16 %v1467, %v1459
    %v2012 = vpack.c.b16 %v1468, %v1460
    %v2013 = vpack.c.b16 %v1469, %v1461
    %v2014 = vpack.c.b16 %v1470, %v1462
    %v2015 = vpack.c.b16 %v1479, %v1471
    %v2016 = vpack.c.b16 %v1480, %v1472
    %v2017 = vpack.c.b16 %v1481, %v1473
    %v2018 = vpack.c.b16 %v1482, %v1474
    %v2019 = vpack.c.b16 %v1483, %v1475
    %v2020 = vpack.c.b16 %v1484, %v1476
    %v2021 = vpack.c.b16 %v1485, %v1477
    %v2022 = vpack.c.b16 %v1486, %v1478
    %v2023 = vpack.c.b16 %v1495, %v1487
    %v2024 = vpack.c.b16 %v1496, %v1488
    %v2025 = vpack.c.b16 %v1497, %v1489
    %v2026 = vpack.c.b16 %v1498, %v1490
    %v2027 = vpack.c.b16 %v1499, %v1491
    %v2028 = vpack.c.b16 %v1500, %v1492
    %v2029 = vpack.c.b16 %v1501, %v1493
    %v2030 = vpack.c.b16 %v1502, %v1494
    %v2031 = vpack.c.b16 %v1511, %v1503
    %v2032 = vpack.c.b16 %v1512, %v1504
    %v2033 = vpack.c.b16 %v1513, %v1505
    %v2034 = vpack.c.b16 %v1514, %v1506
    %v2035 = vpack.c.b16 %v1515, %v1507
    %v2036 = vpack.c.b16 %v1516, %v1508
    %v2037 = vpack.c.b16 %v1517, %v1509
    %v2038 = vpack.c.b16 %v1518, %v1510
    %v2039 = vpack.c.b16 %v1527, %v1519
    %v2040 = vpack.c.b16 %v1528, %v1520
    %v2041 = vpack.c.b16 %v1529, %v1521
    %v2042 = vpack.c.b16 %v1530, %v1522
    %v2043 = vpack.c.b16 %v1531, %v1523
    %v2044 = vpack.c.b16 %v1532, %v1524
    %v2045 = vpack.c.b16 %v1533, %v1525
    %v2046 = vpack.c.b16 %v1534, %v1526
    %v2047 = vpack.c.b16 %v1543, %v1535
    %v2048 = vpack.c.b16 %v1544, %v1536
    %v2049 = vpack.c.b16 %v1545, %v1537
    %v2050 = vpack.c.b16 %v1546, %v1538
    %v2051 = vpack.c.b16 %v1547, %v1539
    %v2052 = vpack.c.b16 %v1548, %v1540
    %v2053 = vpack.c.b16 %v1549, %v1541
    %v2054 = vpack.c.b16 %v1550, %v1542
    %v2055 = vpack.c.b16 %v1559, %v1551
    %v2056 = vpack.c.b16 %v1560, %v1552
    %v2057 = vpack.c.b16 %v1561, %v1553
    %v2058 = vpack.c.b16 %v1562, %v1554
    %v2059 = vpack.c.b16 %v1563, %v1555
    %v2060 = vpack.c.b16 %v1564, %v1556
    %v2061 = vpack.c.b16 %v1565, %v1557
    %v2062 = vpack.c.b16 %v1566, %v1558
    %v2063 = vpack.c.b16 %v1575, %v1567
    %v2064 = vpack.c.b16 %v1576, %v1568
    %v2065 = vpack.c.b16 %v1577, %v1569
    %v2066 = vpack.c.b16 %v1578, %v1570
    %v2067 = vpack.c.b16 %v1579, %v1571
    %v2068 = vpack.c.b16 %v1580, %v1572
    %v2069 = vpack.c.b16 %v1581, %v1573
    %v2070 = vpack.c.b16 %v1582, %v1574
    %v2071 = vpack.c.b16 %v1591, %v1583
    %v2072 = vpack.c.b16 %v1592, %v1584
    %v2073 = vpack.c.b16 %v1593, %v1585
    %v2074 = vpack.c.b16 %v1594, %v1586
    %v2075 = vpack.c.b16 %v1595, %v1587
    %v2076 = vpack.c.b16 %v1596, %v1588
    %v2077 = vpack.c.b16 %v1597, %v1589
    %v2078 = vpack.c.b16 %v1598, %v1590
    %v2079 = vpack.c.b16 %v1607, %v1599
    %v2080 = vpack.c.b16 %v1608, %v1600
    %v2081 = vpack.c.b16 %v1609, %v1601
    %v2082 = vpack.c.b16 %v1610, %v1602
    %v2083 = vpack.c.b16 %v1611, %v1603
    %v2084 = vpack.c.b16 %v1612, %v1604
    %v2085 = vpack.c.b16 %v1613, %v1605
    %v2086 = vpack.c.b16 %v1614, %v1606
    %v2087 = vpack.c.b16 %v1623, %v1615
    %v2088 = vpack.c.b16 %v1624, %v1616
    %v2089 = vpack.c.b16 %v1625, %v1617
    %v2090 = vpack.c.b16 %v1626, %v1618
    %v2091 = vpack.c.b16 %v1627, %v1619
    %v2092 = vpack.c.b16 %v1628, %v1620
    %v2093 = vpack.c.b16 %v1629, %v1621
    %v2094 = vpack.c.b16 %v1630, %v1622
    %v2095 = vpack.c.b16 %v1639, %v1631
    %v2096 = vpack.c.b16 %v1640, %v1632
    %v2097 = vpack.c.b16 %v1641, %v1633
    %v2098 = vpack.c.b16 %v1642, %v1634
    %v2099 = vpack.c.b16 %v1643, %v1635
    %v2100 = vpack.c.b16 %v1644, %v1636
    %v2101 = vpack.c.b16 %v1645, %v1637
    %v2102 = vpack.c.b16 %v1646, %v1638
    %v2103 = vpack.c.b16 %v1655, %v1647
    %v2104 = vpack.c.b16 %v1656, %v1648
    %v2105 = vpack.c.b16 %v1657, %v1649
    %v2106 = vpack.c.b16 %v1658, %v1650
    %v2107 = vpack.c.b16 %v1659, %v1651
    %v2108 = vpack.c.b16 %v1660, %v1652
    %v2109 = vpack.c.b16 %v1661, %v1653
    %v2110 = vpack.c.b16 %v1662, %v1654
    %v2111 = vpack.c.b16 %v1671, %v1663
    %v2112 = vpack.c.b16 %v1672, %v1664
    %v2113 = vpack.c.b16 %v1673, %v1665
    %v2114 = vpack.c.b16 %v1674, %v1666
    %v2115 = vpack.c.b16 %v1675, %v1667
    %v2116 = vpack.c.b16 %v1676, %v1668
    %v2117 = vpack.c.b16 %v1677, %v1669
    %v2118 = vpack.c.b16 %v1678, %v1670
    %v2119 = vpack.c.b16 %v1687, %v1679
    %v2120 = vpack.c.b16 %v1688, %v1680
    %v2121 = vpack.c.b16 %v1689, %v1681
    %v2122 = vpack.c.b16 %v1690, %v1682
    %v2123 = vpack.c.b16 %v1691, %v1683
    %v2124 = vpack.c.b16 %v1692, %v1684
    %v2125 = vpack.c.b16 %v1693, %v1685
    %v2126 = vpack.c.b16 %v1694, %v1686
    %v2127 = vpack.c.b16 %v1703, %v1695
    %v2128 = vpack.c.b16 %v1704, %v1696
    %v2129 = vpack.c.b16 %v1705, %v1697
    %v2130 = vpack.c.b16 %v1706, %v1698
    %v2131 = vpack.c.b16 %v1707, %v1699
    %v2132 = vpack.c.b16 %v1708, %v1700
    %v2133 = vpack.c.b16 %v1709, %v1701
    %v2134 = vpack.c.b16 %v1710, %v1702
    %v2135 = vpack.c.b16 %v1719, %v1711
    %v2136 = vpack.c.b16 %v1720, %v1712
    %v2137 = vpack.c.b16 %v1721, %v1713
    %v2138 = vpack.c.b16 %v1722, %v1714
    %v2139 = vpack.c.b16 %v1723, %v1715
    %v2140 = vpack.c.b16 %v1724, %v1716
    %v2141 = vpack.c.b16 %v1725, %v1717
    %v2142 = vpack.c.b16 %v1726, %v1718
    %v2143 = vpack.c.b16 %v1735, %v1727
    %v2144 = vpack.c.b16 %v1736, %v1728
    %v2145 = vpack.c.b16 %v1737, %v1729
    %v2146 = vpack.c.b16 %v1738, %v1730
    %v2147 = vpack.c.b16 %v1739, %v1731
    %v2148 = vpack.c.b16 %v1740, %v1732
    %v2149 = vpack.c.b16 %v1741, %v1733
    %v2150 = vpack.c.b16 %v1742, %v1734
    %v2151 = vpack.c.b16 %v1751, %v1743
    %v2152 = vpack.c.b16 %v1752, %v1744
    %v2153 = vpack.c.b16 %v1753, %v1745
    %v2154 = vpack.c.b16 %v1754, %v1746
    %v2155 = vpack.c.b16 %v1755, %v1747
    %v2156 = vpack.c.b16 %v1756, %v1748
    %v2157 = vpack.c.b16 %v1757, %v1749
    %v2158 = vpack.c.b16 %v1758, %v1750
    %v2159 = vpack.c.b16 %v1767, %v1759
    %v2160 = vpack.c.b16 %v1768, %v1760
    %v2161 = vpack.c.b16 %v1769, %v1761
    %v2162 = vpack.c.b16 %v1770, %v1762
    %v2163 = vpack.c.b16 %v1771, %v1763
    %v2164 = vpack.c.b16 %v1772, %v1764
    %v2165 = vpack.c.b16 %v1773, %v1765
    %v2166 = vpack.c.b16 %v1774, %v1766
    %vm2559 = vcmask 130048
    %v2561 = vsel %vm2559, %v592, 0
    %2563 = vmatprep.subr.bf16.mxu0 %v1776
    %2564 = vmatpush1.bf16.msra.mxu0 %v1775
    %2565 = vmatprep.subr.bf16.mxu0 %v1784
    %2566 = vmatpush1.bf16.msra.mxu0 %v1783
    %2567 = vmatprep.subr.bf16.mxu0 %v1792
    %2568 = vmatpush1.bf16.msra.mxu0 %v1791
    %2569 = vmatprep.subr.bf16.mxu0 %v1800
    %2570 = vmatpush1.bf16.msra.mxu0 %v1799
    %2571 = vmatprep.subr.bf16.mxu0 %v1808
    %2572 = vmatpush1.bf16.msra.mxu0 %v1807
    %2573 = vmatprep.subr.bf16.mxu0 %v1816
    %2574 = vmatpush1.bf16.msra.mxu0 %v1815
    %2575 = vmatprep.subr.bf16.mxu0 %v1824
    %2576 = vmatpush1.bf16.msra.mxu0 %v1823
    %2577 = vmatprep.subr.bf16.mxu0 %v1832
    %2578 = vmatpush1.bf16.msra.mxu0 %v1831
    %2579 = vmatprep.subr.bf16.mxu0 %v1840
    %2580 = vmatpush1.bf16.msra.mxu0 %v1839
    %2581 = vmatprep.subr.bf16.mxu0 %v1848
    %2582 = vmatpush1.bf16.msra.mxu0 %v1847
    %2583 = vmatprep.subr.bf16.mxu0 %v1856
    %2584 = vmatpush1.bf16.msra.mxu0 %v1855
    %2585 = vmatprep.subr.bf16.mxu0 %v1864
    %2586 = vmatpush1.bf16.msra.mxu0 %v1863
    %2587 = vmatprep.subr.bf16.mxu0 %v1872
    %2588 = vmatpush1.bf16.msra.mxu0 %v1871
    %2589 = vmatprep.subr.bf16.mxu0 %v1880
    %2590 = vmatpush1.bf16.msra.mxu0 %v1879
    %2591 = vmatprep.subr.bf16.mxu0 %v1888
    %2592 = vmatpush1.bf16.msra.mxu0 %v1887
    %2593 = vmatprep.subr.bf16.mxu0 %v1896
    %2594 = vmatpush1.bf16.msra.mxu0 %v1895
    %2595 = vmatprep.mubr.bf16.mxu0 %v587
    %2596 = vmatmul.mubr.bf16.gmra.mrb[0].mxu0 %v586
    %v2597 = vpop.f32.mrb[0].mxu0
    %v2598 = vadd.f32 %v527, %v2597
    %v2599 = vpop.f32.mrb[0].mxu0
    %v2600 = vadd.f32 %v531, %v2599
    %v2601 = vpop.f32.mrb[0].mxu0
    %v2602 = vadd.f32 %v527, %v2601
    %v2603 = vpop.f32.mrb[0].mxu0
    %v2604 = vadd.f32 %v531, %v2603
    %2605 = vdwg.mxu0
    %2606 = vmatprep.subr.bf16.mxu0 %v1904
    %2607 = vmatpush1.bf16.msra.mxu0 %v1903
    %2608 = vmatprep.subr.bf16.mxu0 %v1912
    %2609 = vmatpush1.bf16.msra.mxu0 %v1911
    %2610 = vmatprep.subr.bf16.mxu0 %v1920
    %2611 = vmatpush1.bf16.msra.mxu0 %v1919
    %2612 = vmatprep.subr.bf16.mxu0 %v1928
    %2613 = vmatpush1.bf16.msra.mxu0 %v1927
    %2614 = vmatprep.subr.bf16.mxu0 %v1936
    %2615 = vmatpush1.bf16.msra.mxu0 %v1935
    %2616 = vmatprep.subr.bf16.mxu0 %v1944
    %2617 = vmatpush1.bf16.msra.mxu0 %v1943
    %2618 = vmatprep.subr.bf16.mxu0 %v1952
    %2619 = vmatpush1.bf16.msra.mxu0 %v1951
    %2620 = vmatprep.subr.bf16.mxu0 %v1960
    %2621 = vmatpush1.bf16.msra.mxu0 %v1959
    %2622 = vmatprep.subr.bf16.mxu0 %v1968
    %2623 = vmatpush1.bf16.msra.mxu0 %v1967
    %2624 = vmatprep.subr.bf16.mxu0 %v1976
    %2625 = vmatpush1.bf16.msra.mxu0 %v1975
    %2626 = vmatprep.subr.bf16.mxu0 %v1984
    %2627 = vmatpush1.bf16.msra.mxu0 %v1983
    %2628 = vmatprep.subr.bf16.mxu0 %v1992
    %2629 = vmatpush1.bf16.msra.mxu0 %v1991
    %2630 = vmatprep.subr.bf16.mxu0 %v2000
    %2631 = vmatpush1.bf16.msra.mxu0 %v1999
    %2632 = vmatprep.subr.bf16.mxu0 %v2008
    %2633 = vmatpush1.bf16.msra.mxu0 %v2007
    %2634 = vmatprep.subr.bf16.mxu0 %v2016
    %2635 = vmatpush1.bf16.msra.mxu0 %v2015
    %2636 = vmatprep.subr.bf16.mxu0 %v2024
    %2637 = vmatpush1.bf16.msra.mxu0 %v2023
    %2638 = vmatprep.mubr.bf16.mxu0 %v589
    %2639 = vmatmul.mubr.bf16.gmra.mrb[0].mxu0 %v588
    %v2640 = vpop.f32.mrb[0].mxu0
    %v2641 = vadd.f32 %v2598, %v2640
    %v2642 = vpop.f32.mrb[0].mxu0
    %v2643 = vadd.f32 %v2600, %v2642
    %v2644 = vpop.f32.mrb[0].mxu0
    %v2645 = vadd.f32 %v2602, %v2644
    %v2646 = vpop.f32.mrb[0].mxu0
    %v2647 = vadd.f32 %v2604, %v2646
    %2648 = vdwg.mxu0
    %2649 = vmatprep.subr.bf16.mxu0 %v2032
    %2650 = vmatpush1.bf16.msra.mxu0 %v2031
    %2651 = vmatprep.subr.bf16.mxu0 %v2040
    %2652 = vmatpush1.bf16.msra.mxu0 %v2039
    %2653 = vmatprep.subr.bf16.mxu0 %v2048
    %2654 = vmatpush1.bf16.msra.mxu0 %v2047
    %2655 = vmatprep.subr.bf16.mxu0 %v2056
    %2656 = vmatpush1.bf16.msra.mxu0 %v2055
    %2657 = vmatprep.subr.bf16.mxu0 %v2064
    %2658 = vmatpush1.bf16.msra.mxu0 %v2063
    %2659 = vmatprep.subr.bf16.mxu0 %v2072
    %2660 = vmatpush1.bf16.msra.mxu0 %v2071
    %2661 = vmatprep.subr.bf16.mxu0 %v2080
    %2662 = vmatpush1.bf16.msra.mxu0 %v2079
    %2663 = vmatprep.subr.bf16.mxu0 %v2088
    %2664 = vmatpush1.bf16.msra.mxu0 %v2087
    %2665 = vmatprep.subr.bf16.mxu0 %v2096
    %2666 = vmatpush1.bf16.msra.mxu0 %v2095
    %2667 = vmatprep.subr.bf16.mxu0 %v2104
    %2668 = vmatpush1.bf16.msra.mxu0 %v2103
    %2669 = vmatprep.subr.bf16.mxu0 %v2112
    %2670 = vmatpush1.bf16.msra.mxu0 %v2111
    %2671 = vmatprep.subr.bf16.mxu0 %v2120
    %2672 = vmatpush1.bf16.msra.mxu0 %v2119
    %2673 = vmatprep.subr.bf16.mxu0 %v2128
    %2674 = vmatpush1.bf16.msra.mxu0 %v2127
    %2675 = vmatprep.subr.bf16.mxu0 %v2136
    %2676 = vmatpush1.bf16.msra.mxu0 %v2135
    %2677 = vmatprep.subr.bf16.mxu0 %v2144
    %2678 = vmatpush1.bf16.msra.mxu0 %v2143
    %2679 = vmatprep.subr.bf16.mxu0 %v2152
    %2680 = vmatpush1.bf16.msra.mxu0 %v2151
    %2681 = vmatprep.mubr.bf16.mxu0 %v591
    %2682 = vmatmul.mubr.bf16.gmra.mrb[0].mxu0 %v590
    %v2683 = vpop.f32.mrb[0].mxu0
    %v2684 = vadd.f32 %v2641, %v2683
    %v2685 = vpop.f32.mrb[0].mxu0
    %v2686 = vadd.f32 %v2643, %v2685
    %v2687 = vpop.f32.mrb[0].mxu0
    %v2688 = vadd.f32 %v2645, %v2687
    %v2689 = vpop.f32.mrb[0].mxu0
    %v2690 = vadd.f32 %v2647, %v2689
    %2691 = vdwg.mxu0
    %2692 = vmatprep.subr.bf16.mxu0 %v2160
    %2693 = vmatpush1.bf16.msra.mxu0 %v2159
    %2694 = vmatprep.subr.bf16.mxu0 0
    %2695 = vmatpush1.bf16.msra.mxu0 0
    %2696 = vmatprep.subr.bf16.mxu0 0
    %2697 = vmatpush1.bf16.msra.mxu0 0
    %2698 = vmatprep.subr.bf16.mxu0 0
    %2699 = vmatpush1.bf16.msra.mxu0 0
    %2700 = vmatprep.subr.bf16.mxu0 0
    %2701 = vmatpush1.bf16.msra.mxu0 0
    %2702 = vmatprep.subr.bf16.mxu0 0
    %2703 = vmatpush1.bf16.msra.mxu0 0
    %2704 = vmatprep.subr.bf16.mxu0 0
    %2705 = vmatpush1.bf16.msra.mxu0 0
    %2706 = vmatprep.subr.bf16.mxu0 0
    %2707 = vmatpush1.bf16.msra.mxu0 0
    %2708 = vmatprep.subr.bf16.mxu0 0
    %2709 = vmatpush1.bf16.msra.mxu0 0
    %2710 = vmatprep.subr.bf16.mxu0 0
    %2711 = vmatpush1.bf16.msra.mxu0 0
    %2712 = vmatprep.subr.bf16.mxu0 0
    %2713 = vmatpush1.bf16.msra.mxu0 0
    %2714 = vmatprep.subr.bf16.mxu0 0
    %2715 = vmatpush1.bf16.msra.mxu0 0
    %2716 = vmatprep.subr.bf16.mxu0 0
    %2717 = vmatpush1.bf16.msra.mxu0 0
    %2718 = vmatprep.subr.bf16.mxu0 0
    %2719 = vmatpush1.bf16.msra.mxu0 0
    %2720 = vmatprep.subr.bf16.mxu0 0
    %2721 = vmatpush1.bf16.msra.mxu0 0
    %2722 = vmatprep.subr.bf16.mxu0 0
    %2723 = vmatpush1.bf16.msra.mxu0 0
    %2724 = vmatprep.mubr.bf16.mxu0 0
    %2725 = vmatmul.mubr.bf16.gmra.mrb[0].mxu0 %v2561
    %v2726 = vpop.f32.mrb[0].mxu0
    %v2727 = vadd.f32 %v2684, %v2726
    %v2728 = vpop.f32.mrb[0].mxu0
    %v2729 = vadd.f32 %v2686, %v2728
    %v2730 = vpop.f32.mrb[0].mxu0
    %v2731 = vadd.f32 %v2688, %v2730
    %v2732 = vpop.f32.mrb[0].mxu0
    %v2733 = vadd.f32 %v2690, %v2732
    %2734 = vdwg.mxu0
    %2735 = vmatprep.subr.bf16.mxu0 %v1778
    %2736 = vmatpush1.bf16.msra.mxu0 %v1777
    %2737 = vmatprep.subr.bf16.mxu0 %v1786
    %2738 = vmatpush1.bf16.msra.mxu0 %v1785
    %2739 = vmatprep.subr.bf16.mxu0 %v1794
    %2740 = vmatpush1.bf16.msra.mxu0 %v1793
    %2741 = vmatprep.subr.bf16.mxu0 %v1802
    %2742 = vmatpush1.bf16.msra.mxu0 %v1801
    %2743 = vmatprep.subr.bf16.mxu0 %v1810
    %2744 = vmatpush1.bf16.msra.mxu0 %v1809
    %2745 = vmatprep.subr.bf16.mxu0 %v1818
    %2746 = vmatpush1.bf16.msra.mxu0 %v1817
    %2747 = vmatprep.subr.bf16.mxu0 %v1826
    %2748 = vmatpush1.bf16.msra.mxu0 %v1825
    %2749 = vmatprep.subr.bf16.mxu0 %v1834
    %2750 = vmatpush1.bf16.msra.mxu0 %v1833
    %2751 = vmatprep.subr.bf16.mxu0 %v1842
    %2752 = vmatpush1.bf16.msra.mxu0 %v1841
    %2753 = vmatprep.subr.bf16.mxu0 %v1850
    %2754 = vmatpush1.bf16.msra.mxu0 %v1849
    %2755 = vmatprep.subr.bf16.mxu0 %v1858
    %2756 = vmatpush1.bf16.msra.mxu0 %v1857
    %2757 = vmatprep.subr.bf16.mxu0 %v1866
    %2758 = vmatpush1.bf16.msra.mxu0 %v1865
    %2759 = vmatprep.subr.bf16.mxu0 %v1874
    %2760 = vmatpush1.bf16.msra.mxu0 %v1873
    %2761 = vmatprep.subr.bf16.mxu0 %v1882
    %2762 = vmatpush1.bf16.msra.mxu0 %v1881
    %2763 = vmatprep.subr.bf16.mxu0 %v1890
    %2764 = vmatpush1.bf16.msra.mxu0 %v1889
    %2765 = vmatprep.subr.bf16.mxu0 %v1898
    %2766 = vmatpush1.bf16.msra.mxu0 %v1897
    %2767 = vmatprep.mubr.bf16.mxu0 %v587
    %2768 = vmatmul.mubr.bf16.gmra.mrb[0].mxu0 %v586
    %v2769 = vpop.f32.mrb[0].mxu0
    %v2770 = vadd.f32 %v535, %v2769
    %v2771 = vpop.f32.mrb[0].mxu0
    %v2772 = vadd.f32 %v539, %v2771
    %v2773 = vpop.f32.mrb[0].mxu0
    %v2774 = vadd.f32 %v535, %v2773
    %v2775 = vpop.f32.mrb[0].mxu0
    %v2776 = vadd.f32 %v539, %v2775
    %2777 = vdwg.mxu0
    %2778 = vmatprep.subr.bf16.mxu0 %v1906
    %2779 = vmatpush1.bf16.msra.mxu0 %v1905
    %2780 = vmatprep.subr.bf16.mxu0 %v1914
    %2781 = vmatpush1.bf16.msra.mxu0 %v1913
    %2782 = vmatprep.subr.bf16.mxu0 %v1922
    %2783 = vmatpush1.bf16.msra.mxu0 %v1921
    %2784 = vmatprep.subr.bf16.mxu0 %v1930
    %2785 = vmatpush1.bf16.msra.mxu0 %v1929
    %2786 = vmatprep.subr.bf16.mxu0 %v1938
    %2787 = vmatpush1.bf16.msra.mxu0 %v1937
    %2788 = vmatprep.subr.bf16.mxu0 %v1946
    %2789 = vmatpush1.bf16.msra.mxu0 %v1945
    %2790 = vmatprep.subr.bf16.mxu0 %v1954
    %2791 = vmatpush1.bf16.msra.mxu0 %v1953
    %2792 = vmatprep.subr.bf16.mxu0 %v1962
    %2793 = vmatpush1.bf16.msra.mxu0 %v1961
    %2794 = vmatprep.subr.bf16.mxu0 %v1970
    %2795 = vmatpush1.bf16.msra.mxu0 %v1969
    %2796 = vmatprep.subr.bf16.mxu0 %v1978
    %2797 = vmatpush1.bf16.msra.mxu0 %v1977
    %2798 = vmatprep.subr.bf16.mxu0 %v1986
    %2799 = vmatpush1.bf16.msra.mxu0 %v1985
    %2800 = vmatprep.subr.bf16.mxu0 %v1994
    %2801 = vmatpush1.bf16.msra.mxu0 %v1993
    %2802 = vmatprep.subr.bf16.mxu0 %v2002
    %2803 = vmatpush1.bf16.msra.mxu0 %v2001
    %2804 = vmatprep.subr.bf16.mxu0 %v2010
    %2805 = vmatpush1.bf16.msra.mxu0 %v2009
    %2806 = vmatprep.subr.bf16.mxu0 %v2018
    %2807 = vmatpush1.bf16.msra.mxu0 %v2017
    %2808 = vmatprep.subr.bf16.mxu0 %v2026
    %2809 = vmatpush1.bf16.msra.mxu0 %v2025
    %2810 = vmatprep.mubr.bf16.mxu0 %v589
    %2811 = vmatmul.mubr.bf16.gmra.mrb[0].mxu0 %v588
    %v2812 = vpop.f32.mrb[0].mxu0
    %v2813 = vadd.f32 %v2770, %v2812
    %v2814 = vpop.f32.mrb[0].mxu0
    %v2815 = vadd.f32 %v2772, %v2814
    %v2816 = vpop.f32.mrb[0].mxu0
    %v2817 = vadd.f32 %v2774, %v2816
    %v2818 = vpop.f32.mrb[0].mxu0
    %v2819 = vadd.f32 %v2776, %v2818
    %2820 = vdwg.mxu0
    %2821 = vmatprep.subr.bf16.mxu0 %v2034
    %2822 = vmatpush1.bf16.msra.mxu0 %v2033
    %2823 = vmatprep.subr.bf16.mxu0 %v2042
    %2824 = vmatpush1.bf16.msra.mxu0 %v2041
    %2825 = vmatprep.subr.bf16.mxu0 %v2050
    %2826 = vmatpush1.bf16.msra.mxu0 %v2049
    %2827 = vmatprep.subr.bf16.mxu0 %v2058
    %2828 = vmatpush1.bf16.msra.mxu0 %v2057
    %2829 = vmatprep.subr.bf16.mxu0 %v2066
    %2830 = vmatpush1.bf16.msra.mxu0 %v2065
    %2831 = vmatprep.subr.bf16.mxu0 %v2074
    %2832 = vmatpush1.bf16.msra.mxu0 %v2073
    %2833 = vmatprep.subr.bf16.mxu0 %v2082
    %2834 = vmatpush1.bf16.msra.mxu0 %v2081
    %2835 = vmatprep.subr.bf16.mxu0 %v2090
    %2836 = vmatpush1.bf16.msra.mxu0 %v2089
    %2837 = vmatprep.subr.bf16.mxu0 %v2098
    %2838 = vmatpush1.bf16.msra.mxu0 %v2097
    %2839 = vmatprep.subr.bf16.mxu0 %v2106
    %2840 = vmatpush1.bf16.msra.mxu0 %v2105
    %2841 = vmatprep.subr.bf16.mxu0 %v2114
    %2842 = vmatpush1.bf16.msra.mxu0 %v2113
    %2843 = vmatprep.subr.bf16.mxu0 %v2122
    %2844 = vmatpush1.bf16.msra.mxu0 %v2121
    %2845 = vmatprep.subr.bf16.mxu0 %v2130
    %2846 = vmatpush1.bf16.msra.mxu0 %v2129
    %2847 = vmatprep.subr.bf16.mxu0 %v2138
    %2848 = vmatpush1.bf16.msra.mxu0 %v2137
    %2849 = vmatprep.subr.bf16.mxu0 %v2146
    %2850 = vmatpush1.bf16.msra.mxu0 %v2145
    %2851 = vmatprep.subr.bf16.mxu0 %v2154
    %2852 = vmatpush1.bf16.msra.mxu0 %v2153
    %2853 = vmatprep.mubr.bf16.mxu0 %v591
    %2854 = vmatmul.mubr.bf16.gmra.mrb[0].mxu0 %v590
    %v2855 = vpop.f32.mrb[0].mxu0
    %v2856 = vadd.f32 %v2813, %v2855
    %v2857 = vpop.f32.mrb[0].mxu0
    %v2858 = vadd.f32 %v2815, %v2857
    %v2859 = vpop.f32.mrb[0].mxu0
    %v2860 = vadd.f32 %v2817, %v2859
    %v2861 = vpop.f32.mrb[0].mxu0
    %v2862 = vadd.f32 %v2819, %v2861
    %2863 = vdwg.mxu0
    %2864 = vmatprep.subr.bf16.mxu0 %v2162
    %2865 = vmatpush1.bf16.msra.mxu0 %v2161
    %2866 = vmatprep.subr.bf16.mxu0 0
    %2867 = vmatpush1.bf16.msra.mxu0 0
    %2868 = vmatprep.subr.bf16.mxu0 0
    %2869 = vmatpush1.bf16.msra.mxu0 0
    %2870 = vmatprep.subr.bf16.mxu0 0
    %2871 = vmatpush1.bf16.msra.mxu0 0
    %2872 = vmatprep.subr.bf16.mxu0 0
    %2873 = vmatpush1.bf16.msra.mxu0 0
    %2874 = vmatprep.subr.bf16.mxu0 0
    %2875 = vmatpush1.bf16.msra.mxu0 0
    %2876 = vmatprep.subr.bf16.mxu0 0
    %2877 = vmatpush1.bf16.msra.mxu0 0
    %2878 = vmatprep.subr.bf16.mxu0 0
    %2879 = vmatpush1.bf16.msra.mxu0 0
    %2880 = vmatprep.subr.bf16.mxu0 0
    %2881 = vmatpush1.bf16.msra.mxu0 0
    %2882 = vmatprep.subr.bf16.mxu0 0
    %2883 = vmatpush1.bf16.msra.mxu0 0
    %2884 = vmatprep.subr.bf16.mxu0 0
    %2885 = vmatpush1.bf16.msra.mxu0 0
    %2886 = vmatprep.subr.bf16.mxu0 0
    %2887 = vmatpush1.bf16.msra.mxu0 0
    %2888 = vmatprep.subr.bf16.mxu0 0
    %2889 = vmatpush1.bf16.msra.mxu0 0
    %2890 = vmatprep.subr.bf16.mxu0 0
    %2891 = vmatpush1.bf16.msra.mxu0 0
    %2892 = vmatprep.subr.bf16.mxu0 0
    %2893 = vmatpush1.bf16.msra.mxu0 0
    %2894 = vmatprep.subr.bf16.mxu0 0
    %2895 = vmatpush1.bf16.msra.mxu0 0
    %2896 = vmatprep.mubr.bf16.mxu0 0
    %2897 = vmatmul.mubr.bf16.gmra.mrb[0].mxu0 %v2561
    %v2898 = vpop.f32.mrb[0].mxu0
    %v2899 = vadd.f32 %v2856, %v2898
    %v2900 = vpop.f32.mrb[0].mxu0
    %v2901 = vadd.f32 %v2858, %v2900
    %v2902 = vpop.f32.mrb[0].mxu0
    %v2903 = vadd.f32 %v2860, %v2902
    %v2904 = vpop.f32.mrb[0].mxu0
    %v2905 = vadd.f32 %v2862, %v2904
    %2906 = vdwg.mxu0
    %2907 = vmatprep.subr.bf16.mxu0 %v1780
    %2908 = vmatpush1.bf16.msra.mxu0 %v1779
    %2909 = vmatprep.subr.bf16.mxu0 %v1788
    %2910 = vmatpush1.bf16.msra.mxu0 %v1787
    %2911 = vmatprep.subr.bf16.mxu0 %v1796
    %2912 = vmatpush1.bf16.msra.mxu0 %v1795
    %2913 = vmatprep.subr.bf16.mxu0 %v1804
    %2914 = vmatpush1.bf16.msra.mxu0 %v1803
    %2915 = vmatprep.subr.bf16.mxu0 %v1812
    %2916 = vmatpush1.bf16.msra.mxu0 %v1811
    %2917 = vmatprep.subr.bf16.mxu0 %v1820
    %2918 = vmatpush1.bf16.msra.mxu0 %v1819
    %2919 = vmatprep.subr.bf16.mxu0 %v1828
    %2920 = vmatpush1.bf16.msra.mxu0 %v1827
    %2921 = vmatprep.subr.bf16.mxu0 %v1836
    %2922 = vmatpush1.bf16.msra.mxu0 %v1835
    %2923 = vmatprep.subr.bf16.mxu0 %v1844
    %2924 = vmatpush1.bf16.msra.mxu0 %v1843
    %2925 = vmatprep.subr.bf16.mxu0 %v1852
    %2926 = vmatpush1.bf16.msra.mxu0 %v1851
    %2927 = vmatprep.subr.bf16.mxu0 %v1860
    %2928 = vmatpush1.bf16.msra.mxu0 %v1859
    %2929 = vmatprep.subr.bf16.mxu0 %v1868
    %2930 = vmatpush1.bf16.msra.mxu0 %v1867
    %2931 = vmatprep.subr.bf16.mxu0 %v1876
    %2932 = vmatpush1.bf16.msra.mxu0 %v1875
    %2933 = vmatprep.subr.bf16.mxu0 %v1884
    %2934 = vmatpush1.bf16.msra.mxu0 %v1883
    %2935 = vmatprep.subr.bf16.mxu0 %v1892
    %2936 = vmatpush1.bf16.msra.mxu0 %v1891
    %2937 = vmatprep.subr.bf16.mxu0 %v1900
    %2938 = vmatpush1.bf16.msra.mxu0 %v1899
    %2939 = vmatprep.mubr.bf16.mxu0 %v587
    %2940 = vmatmul.mubr.bf16.gmra.mrb[0].mxu0 %v586
    %v2941 = vpop.f32.mrb[0].mxu0
    %v2942 = vadd.f32 %v543, %v2941
    %v2943 = vpop.f32.mrb[0].mxu0
    %v2944 = vadd.f32 %v547, %v2943
    %v2945 = vpop.f32.mrb[0].mxu0
    %v2946 = vadd.f32 %v543, %v2945
    %v2947 = vpop.f32.mrb[0].mxu0
    %v2948 = vadd.f32 %v547, %v2947
    %2949 = vdwg.mxu0
    %2950 = vmatprep.subr.bf16.mxu0 %v1908
    %2951 = vmatpush1.bf16.msra.mxu0 %v1907
    %2952 = vmatprep.subr.bf16.mxu0 %v1916
    %2953 = vmatpush1.bf16.msra.mxu0 %v1915
    %2954 = vmatprep.subr.bf16.mxu0 %v1924
    %2955 = vmatpush1.bf16.msra.mxu0 %v1923
    %2956 = vmatprep.subr.bf16.mxu0 %v1932
    %2957 = vmatpush1.bf16.msra.mxu0 %v1931
    %2958 = vmatprep.subr.bf16.mxu0 %v1940
    %2959 = vmatpush1.bf16.msra.mxu0 %v1939
    %2960 = vmatprep.subr.bf16.mxu0 %v1948
    %2961 = vmatpush1.bf16.msra.mxu0 %v1947
    %2962 = vmatprep.subr.bf16.mxu0 %v1956
    %2963 = vmatpush1.bf16.msra.mxu0 %v1955
    %2964 = vmatprep.subr.bf16.mxu0 %v1964
    %2965 = vmatpush1.bf16.msra.mxu0 %v1963
    %2966 = vmatprep.subr.bf16.mxu0 %v1972
    %2967 = vmatpush1.bf16.msra.mxu0 %v1971
    %2968 = vmatprep.subr.bf16.mxu0 %v1980
    %2969 = vmatpush1.bf16.msra.mxu0 %v1979
    %2970 = vmatprep.subr.bf16.mxu0 %v1988
    %2971 = vmatpush1.bf16.msra.mxu0 %v1987
    %2972 = vmatprep.subr.bf16.mxu0 %v1996
    %2973 = vmatpush1.bf16.msra.mxu0 %v1995
    %2974 = vmatprep.subr.bf16.mxu0 %v2004
    %2975 = vmatpush1.bf16.msra.mxu0 %v2003
    %2976 = vmatprep.subr.bf16.mxu0 %v2012
    %2977 = vmatpush1.bf16.msra.mxu0 %v2011
    %2978 = vmatprep.subr.bf16.mxu0 %v2020
    %2979 = vmatpush1.bf16.msra.mxu0 %v2019
    %2980 = vmatprep.subr.bf16.mxu0 %v2028
    %2981 = vmatpush1.bf16.msra.mxu0 %v2027
    %2982 = vmatprep.mubr.bf16.mxu0 %v589
    %2983 = vmatmul.mubr.bf16.gmra.mrb[0].mxu0 %v588
    %v2984 = vpop.f32.mrb[0].mxu0
    %v2985 = vadd.f32 %v2942, %v2984
    %v2986 = vpop.f32.mrb[0].mxu0
    %v2987 = vadd.f32 %v2944, %v2986
    %v2988 = vpop.f32.mrb[0].mxu0
    %v2989 = vadd.f32 %v2946, %v2988
    %v2990 = vpop.f32.mrb[0].mxu0
    %v2991 = vadd.f32 %v2948, %v2990
    %2992 = vdwg.mxu0
    %2993 = vmatprep.subr.bf16.mxu0 %v2036
    %2994 = vmatpush1.bf16.msra.mxu0 %v2035
    %2995 = vmatprep.subr.bf16.mxu0 %v2044
    %2996 = vmatpush1.bf16.msra.mxu0 %v2043
    %2997 = vmatprep.subr.bf16.mxu0 %v2052
    %2998 = vmatpush1.bf16.msra.mxu0 %v2051
    %2999 = vmatprep.subr.bf16.mxu0 %v2060
    %3000 = vmatpush1.bf16.msra.mxu0 %v2059
    %3001 = vmatprep.subr.bf16.mxu0 %v2068
    %3002 = vmatpush1.bf16.msra.mxu0 %v2067
    %3003 = vmatprep.subr.bf16.mxu0 %v2076
    %3004 = vmatpush1.bf16.msra.mxu0 %v2075
    %3005 = vmatprep.subr.bf16.mxu0 %v2084
    %3006 = vmatpush1.bf16.msra.mxu0 %v2083
    %3007 = vmatprep.subr.bf16.mxu0 %v2092
    %3008 = vmatpush1.bf16.msra.mxu0 %v2091
    %3009 = vmatprep.subr.bf16.mxu0 %v2100
    %3010 = vmatpush1.bf16.msra.mxu0 %v2099
    %3011 = vmatprep.subr.bf16.mxu0 %v2108
    %3012 = vmatpush1.bf16.msra.mxu0 %v2107
    %3013 = vmatprep.subr.bf16.mxu0 %v2116
    %3014 = vmatpush1.bf16.msra.mxu0 %v2115
    %3015 = vmatprep.subr.bf16.mxu0 %v2124
    %3016 = vmatpush1.bf16.msra.mxu0 %v2123
    %3017 = vmatprep.subr.bf16.mxu0 %v2132
    %3018 = vmatpush1.bf16.msra.mxu0 %v2131
    %3019 = vmatprep.subr.bf16.mxu0 %v2140
    %3020 = vmatpush1.bf16.msra.mxu0 %v2139
    %3021 = vmatprep.subr.bf16.mxu0 %v2148
    %3022 = vmatpush1.bf16.msra.mxu0 %v2147
    %3023 = vmatprep.subr.bf16.mxu0 %v2156
    %3024 = vmatpush1.bf16.msra.mxu0 %v2155
    %3025 = vmatprep.mubr.bf16.mxu0 %v591
    %3026 = vmatmul.mubr.bf16.gmra.mrb[0].mxu0 %v590
    %v3027 = vpop.f32.mrb[0].mxu0
    %v3028 = vadd.f32 %v2985, %v3027
    %v3029 = vpop.f32.mrb[0].mxu0
    %v3030 = vadd.f32 %v2987, %v3029
    %v3031 = vpop.f32.mrb[0].mxu0
    %v3032 = vadd.f32 %v2989, %v3031
    %v3033 = vpop.f32.mrb[0].mxu0
    %v3034 = vadd.f32 %v2991, %v3033
    %3035 = vdwg.mxu0
    %3036 = vmatprep.subr.bf16.mxu0 %v2164
    %3037 = vmatpush1.bf16.msra.mxu0 %v2163
    %3038 = vmatprep.subr.bf16.mxu0 0
    %3039 = vmatpush1.bf16.msra.mxu0 0
    %3040 = vmatprep.subr.bf16.mxu0 0
    %3041 = vmatpush1.bf16.msra.mxu0 0
    %3042 = vmatprep.subr.bf16.mxu0 0
    %3043 = vmatpush1.bf16.msra.mxu0 0
    %3044 = vmatprep.subr.bf16.mxu0 0
    %3045 = vmatpush1.bf16.msra.mxu0 0
    %3046 = vmatprep.subr.bf16.mxu0 0
    %3047 = vmatpush1.bf16.msra.mxu0 0
    %3048 = vmatprep.subr.bf16.mxu0 0
    %3049 = vmatpush1.bf16.msra.mxu0 0
    %3050 = vmatprep.subr.bf16.mxu0 0
    %3051 = vmatpush1.bf16.msra.mxu0 0
    %3052 = vmatprep.subr.bf16.mxu0 0
    %3053 = vmatpush1.bf16.msra.mxu0 0
    %3054 = vmatprep.subr.bf16.mxu0 0
    %3055 = vmatpush1.bf16.msra.mxu0 0
    %3056 = vmatprep.subr.bf16.mxu0 0
    %3057 = vmatpush1.bf16.msra.mxu0 0
    %3058 = vmatprep.subr.bf16.mxu0 0
    %3059 = vmatpush1.bf16.msra.mxu0 0
    %3060 = vmatprep.subr.bf16.mxu0 0
    %3061 = vmatpush1.bf16.msra.mxu0 0
    %3062 = vmatprep.subr.bf16.mxu0 0
    %3063 = vmatpush1.bf16.msra.mxu0 0
    %3064 = vmatprep.subr.bf16.mxu0 0
    %3065 = vmatpush1.bf16.msra.mxu0 0
    %3066 = vmatprep.subr.bf16.mxu0 0
    %3067 = vmatpush1.bf16.msra.mxu0 0
    %3068 = vmatprep.mubr.bf16.mxu0 0
    %3069 = vmatmul.mubr.bf16.gmra.mrb[0].mxu0 %v2561
    %v3070 = vpop.f32.mrb[0].mxu0
    %v3071 = vadd.f32 %v3028, %v3070
    %v3072 = vpop.f32.mrb[0].mxu0
    %v3073 = vadd.f32 %v3030, %v3072
    %v3074 = vpop.f32.mrb[0].mxu0
    %v3075 = vadd.f32 %v3032, %v3074
    %v3076 = vpop.f32.mrb[0].mxu0
    %v3077 = vadd.f32 %v3034, %v3076
    %3078 = vdwg.mxu0
    %3079 = vmatprep.subr.bf16.mxu0 %v1782
    %3080 = vmatpush1.bf16.msra.mxu0 %v1781
    %3081 = vmatprep.subr.bf16.mxu0 %v1790
    %3082 = vmatpush1.bf16.msra.mxu0 %v1789
    %3083 = vmatprep.subr.bf16.mxu0 %v1798
    %3084 = vmatpush1.bf16.msra.mxu0 %v1797
    %3085 = vmatprep.subr.bf16.mxu0 %v1806
    %3086 = vmatpush1.bf16.msra.mxu0 %v1805
    %3087 = vmatprep.subr.bf16.mxu0 %v1814
    %3088 = vmatpush1.bf16.msra.mxu0 %v1813
    %3089 = vmatprep.subr.bf16.mxu0 %v1822
    %3090 = vmatpush1.bf16.msra.mxu0 %v1821
    %3091 = vmatprep.subr.bf16.mxu0 %v1830
    %3092 = vmatpush1.bf16.msra.mxu0 %v1829
    %3093 = vmatprep.subr.bf16.mxu0 %v1838
    %3094 = vmatpush1.bf16.msra.mxu0 %v1837
    %3095 = vmatprep.subr.bf16.mxu0 %v1846
    %3096 = vmatpush1.bf16.msra.mxu0 %v1845
    %3097 = vmatprep.subr.bf16.mxu0 %v1854
    %3098 = vmatpush1.bf16.msra.mxu0 %v1853
    %3099 = vmatprep.subr.bf16.mxu0 %v1862
    %3100 = vmatpush1.bf16.msra.mxu0 %v1861
    %3101 = vmatprep.subr.bf16.mxu0 %v1870
    %3102 = vmatpush1.bf16.msra.mxu0 %v1869
    %3103 = vmatprep.subr.bf16.mxu0 %v1878
    %3104 = vmatpush1.bf16.msra.mxu0 %v1877
    %3105 = vmatprep.subr.bf16.mxu0 %v1886
    %3106 = vmatpush1.bf16.msra.mxu0 %v1885
    %3107 = vmatprep.subr.bf16.mxu0 %v1894
    %3108 = vmatpush1.bf16.msra.mxu0 %v1893
    %3109 = vmatprep.subr.bf16.mxu0 %v1902
    %3110 = vmatpush1.bf16.msra.mxu0 %v1901
    %3111 = vmatprep.mubr.bf16.mxu0 %v587
    %3112 = vmatmul.mubr.bf16.gmra.mrb[0].mxu0 %v586
    %v3113 = vpop.f32.mrb[0].mxu0
    %v3114 = vadd.f32 %v551, %v3113
    %v3115 = vpop.f32.mrb[0].mxu0
    %v3116 = vadd.f32 %v555, %v3115
    %v3117 = vpop.f32.mrb[0].mxu0
    %v3118 = vadd.f32 %v551, %v3117
    %v3119 = vpop.f32.mrb[0].mxu0
    %v3120 = vadd.f32 %v555, %v3119
    %3121 = vdwg.mxu0
    %3122 = vmatprep.subr.bf16.mxu0 %v1910
    %3123 = vmatpush1.bf16.msra.mxu0 %v1909
    %3124 = vmatprep.subr.bf16.mxu0 %v1918
    %3125 = vmatpush1.bf16.msra.mxu0 %v1917
    %3126 = vmatprep.subr.bf16.mxu0 %v1926
    %3127 = vmatpush1.bf16.msra.mxu0 %v1925
    %3128 = vmatprep.subr.bf16.mxu0 %v1934
    %3129 = vmatpush1.bf16.msra.mxu0 %v1933
    %3130 = vmatprep.subr.bf16.mxu0 %v1942
    %3131 = vmatpush1.bf16.msra.mxu0 %v1941
    %3132 = vmatprep.subr.bf16.mxu0 %v1950
    %3133 = vmatpush1.bf16.msra.mxu0 %v1949
    %3134 = vmatprep.subr.bf16.mxu0 %v1958
    %3135 = vmatpush1.bf16.msra.mxu0 %v1957
    %3136 = vmatprep.subr.bf16.mxu0 %v1966
    %3137 = vmatpush1.bf16.msra.mxu0 %v1965
    %3138 = vmatprep.subr.bf16.mxu0 %v1974
    %3139 = vmatpush1.bf16.msra.mxu0 %v1973
    %3140 = vmatprep.subr.bf16.mxu0 %v1982
    %3141 = vmatpush1.bf16.msra.mxu0 %v1981
    %3142 = vmatprep.subr.bf16.mxu0 %v1990
    %3143 = vmatpush1.bf16.msra.mxu0 %v1989
    %3144 = vmatprep.subr.bf16.mxu0 %v1998
    %3145 = vmatpush1.bf16.msra.mxu0 %v1997
    %3146 = vmatprep.subr.bf16.mxu0 %v2006
    %3147 = vmatpush1.bf16.msra.mxu0 %v2005
    %3148 = vmatprep.subr.bf16.mxu0 %v2014
    %3149 = vmatpush1.bf16.msra.mxu0 %v2013
    %3150 = vmatprep.subr.bf16.mxu0 %v2022
    %3151 = vmatpush1.bf16.msra.mxu0 %v2021
    %3152 = vmatprep.subr.bf16.mxu0 %v2030
    %3153 = vmatpush1.bf16.msra.mxu0 %v2029
    %3154 = vmatprep.mubr.bf16.mxu0 %v589
    %3155 = vmatmul.mubr.bf16.gmra.mrb[0].mxu0 %v588
    %v3156 = vpop.f32.mrb[0].mxu0
    %v3157 = vadd.f32 %v3114, %v3156
    %v3158 = vpop.f32.mrb[0].mxu0
    %v3159 = vadd.f32 %v3116, %v3158
    %v3160 = vpop.f32.mrb[0].mxu0
    %v3161 = vadd.f32 %v3118, %v3160
    %v3162 = vpop.f32.mrb[0].mxu0
    %v3163 = vadd.f32 %v3120, %v3162
    %3164 = vdwg.mxu0
    %3165 = vmatprep.subr.bf16.mxu0 %v2038
    %3166 = vmatpush1.bf16.msra.mxu0 %v2037
    %3167 = vmatprep.subr.bf16.mxu0 %v2046
    %3168 = vmatpush1.bf16.msra.mxu0 %v2045
    %3169 = vmatprep.subr.bf16.mxu0 %v2054
    %3170 = vmatpush1.bf16.msra.mxu0 %v2053
    %3171 = vmatprep.subr.bf16.mxu0 %v2062
    %3172 = vmatpush1.bf16.msra.mxu0 %v2061
    %3173 = vmatprep.subr.bf16.mxu0 %v2070
    %3174 = vmatpush1.bf16.msra.mxu0 %v2069
    %3175 = vmatprep.subr.bf16.mxu0 %v2078
    %3176 = vmatpush1.bf16.msra.mxu0 %v2077
    %3177 = vmatprep.subr.bf16.mxu0 %v2086
    %3178 = vmatpush1.bf16.msra.mxu0 %v2085
    %3179 = vmatprep.subr.bf16.mxu0 %v2094
    %3180 = vmatpush1.bf16.msra.mxu0 %v2093
    %3181 = vmatprep.subr.bf16.mxu0 %v2102
    %3182 = vmatpush1.bf16.msra.mxu0 %v2101
    %3183 = vmatprep.subr.bf16.mxu0 %v2110
    %3184 = vmatpush1.bf16.msra.mxu0 %v2109
    %3185 = vmatprep.subr.bf16.mxu0 %v2118
    %3186 = vmatpush1.bf16.msra.mxu0 %v2117
    %3187 = vmatprep.subr.bf16.mxu0 %v2126
    %3188 = vmatpush1.bf16.msra.mxu0 %v2125
    %3189 = vmatprep.subr.bf16.mxu0 %v2134
    %3190 = vmatpush1.bf16.msra.mxu0 %v2133
    %3191 = vmatprep.subr.bf16.mxu0 %v2142
    %3192 = vmatpush1.bf16.msra.mxu0 %v2141
    %3193 = vmatprep.subr.bf16.mxu0 %v2150
    %3194 = vmatpush1.bf16.msra.mxu0 %v2149
    %3195 = vmatprep.subr.bf16.mxu0 %v2158
    %3196 = vmatpush1.bf16.msra.mxu0 %v2157
    %3197 = vmatprep.mubr.bf16.mxu0 %v591
    %3198 = vmatmul.mubr.bf16.gmra.mrb[0].mxu0 %v590
    %v3199 = vpop.f32.mrb[0].mxu0
    %v3200 = vadd.f32 %v3157, %v3199
    %v3201 = vpop.f32.mrb[0].mxu0
    %v3202 = vadd.f32 %v3159, %v3201
    %v3203 = vpop.f32.mrb[0].mxu0
    %v3204 = vadd.f32 %v3161, %v3203
    %v3205 = vpop.f32.mrb[0].mxu0
    %v3206 = vadd.f32 %v3163, %v3205
    %3207 = vdwg.mxu0
    %3208 = vmatprep.subr.bf16.mxu0 %v2166
    %3209 = vmatpush1.bf16.msra.mxu0 %v2165
    %3210 = vmatprep.subr.bf16.mxu0 0
    %3211 = vmatpush1.bf16.msra.mxu0 0
    %3212 = vmatprep.subr.bf16.mxu0 0
    %3213 = vmatpush1.bf16.msra.mxu0 0
    %3214 = vmatprep.subr.bf16.mxu0 0
    %3215 = vmatpush1.bf16.msra.mxu0 0
    %3216 = vmatprep.subr.bf16.mxu0 0
    %3217 = vmatpush1.bf16.msra.mxu0 0
    %3218 = vmatprep.subr.bf16.mxu0 0
    %3219 = vmatpush1.bf16.msra.mxu0 0
    %3220 = vmatprep.subr.bf16.mxu0 0
    %3221 = vmatpush1.bf16.msra.mxu0 0
    %3222 = vmatprep.subr.bf16.mxu0 0
    %3223 = vmatpush1.bf16.msra.mxu0 0
    %3224 = vmatprep.subr.bf16.mxu0 0
    %3225 = vmatpush1.bf16.msra.mxu0 0
    %3226 = vmatprep.subr.bf16.mxu0 0
    %3227 = vmatpush1.bf16.msra.mxu0 0
    %3228 = vmatprep.subr.bf16.mxu0 0
    %3229 = vmatpush1.bf16.msra.mxu0 0
    %3230 = vmatprep.subr.bf16.mxu0 0
    %3231 = vmatpush1.bf16.msra.mxu0 0
    %3232 = vmatprep.subr.bf16.mxu0 0
    %3233 = vmatpush1.bf16.msra.mxu0 0
    %3234 = vmatprep.subr.bf16.mxu0 0
    %3235 = vmatpush1.bf16.msra.mxu0 0
    %3236 = vmatprep.subr.bf16.mxu0 0
    %3237 = vmatpush1.bf16.msra.mxu0 0
    %3238 = vmatprep.subr.bf16.mxu0 0
    %3239 = vmatpush1.bf16.msra.mxu0 0
    %3240 = vmatprep.mubr.bf16.mxu0 0
    %3241 = vmatmul.mubr.bf16.gmra.mrb[0].mxu0 %v2561
    %v3242 = vpop.f32.mrb[0].mxu0
    %v3243 = vadd.f32 %v3200, %v3242
    %v3244 = vpop.f32.mrb[0].mxu0
    %v3245 = vadd.f32 %v3202, %v3244
    %v3246 = vpop.f32.mrb[0].mxu0
    %v3247 = vadd.f32 %v3204, %v3246
    %v3248 = vpop.f32.mrb[0].mxu0
    %v3249 = vadd.f32 %v3206, %v3248
    %3250 = vdwg.mxu0
    %vm3251 = vcmp.gt.f32.partialorder %v2727, 0.0
    %vm3252 = vcmp.gt.f32.partialorder %v2729, 0.0
    %vm3253 = vcmp.gt.f32.partialorder %v2899, 0.0
    %vm3254 = vcmp.gt.f32.partialorder %v2901, 0.0
    %vm3255 = vcmp.gt.f32.partialorder %v3071, 0.0
    %vm3256 = vcmp.gt.f32.partialorder %v3073, 0.0
    %vm3257 = vcmp.gt.f32.partialorder %v3243, 0.0
    %vm3258 = vcmp.gt.f32.partialorder %v3245, 0.0
    %vm3259 = vcmp.gt.f32.partialorder %v2731, 0.0
    %vm3260 = vcmp.gt.f32.partialorder %v2733, 0.0
    %vm3261 = vcmp.gt.f32.partialorder %v2903, 0.0
    %vm3262 = vcmp.gt.f32.partialorder %v2905, 0.0
    %vm3263 = vcmp.gt.f32.partialorder %v3075, 0.0
    %vm3264 = vcmp.gt.f32.partialorder %v3077, 0.0
    %vm3265 = vcmp.gt.f32.partialorder %v3247, 0.0
    %vm3266 = vcmp.gt.f32.partialorder %v3249, 0.0
    %v3267 = vmul.f32 %v2727, 0.2
    %v3268 = vmul.f32 %v2729, 0.2
    %v3269 = vmul.f32 %v2899, 0.2
    %v3270 = vmul.f32 %v2901, 0.2
    %v3271 = vmul.f32 %v3071, 0.2
    %v3272 = vmul.f32 %v3073, 0.2
    %v3273 = vmul.f32 %v3243, 0.2
    %v3274 = vmul.f32 %v3245, 0.2
    %v3275 = vmul.f32 %v2731, 0.2
    %v3276 = vmul.f32 %v2733, 0.2
    %v3277 = vmul.f32 %v2903, 0.2
    %v3278 = vmul.f32 %v2905, 0.2
    %v3279 = vmul.f32 %v3075, 0.2
    %v3280 = vmul.f32 %v3077, 0.2
    %v3281 = vmul.f32 %v3247, 0.2
    %v3282 = vmul.f32 %v3249, 0.2
    %v3283 = vsel %vm3251, %v2727, %v3267
    %v3284 = vsel %vm3252, %v2729, %v3268
    %v3285 = vsel %vm3253, %v2899, %v3269
    %v3286 = vsel %vm3254, %v2901, %v3270
    %v3287 = vsel %vm3255, %v3071, %v3271
    %v3288 = vsel %vm3256, %v3073, %v3272
    %v3289 = vsel %vm3257, %v3243, %v3273
    %v3290 = vsel %vm3258, %v3245, %v3274
    %v3291 = vsel %vm3259, %v2731, %v3275
    %v3292 = vsel %vm3260, %v2733, %v3276
    %v3293 = vsel %vm3261, %v2903, %v3277
    %v3294 = vsel %vm3262, %v2905, %v3278
    %v3295 = vsel %vm3263, %v3075, %v3279
    %v3296 = vsel %vm3264, %v3077, %v3280
    %v3297 = vsel %vm3265, %v3247, %v3281
    %v3298 = vsel %vm3266, %v3249, %v3282
    %v3299 = vpack.c.bf16 %v3291, %v3283
    %v3300 = vpack.c.bf16 %v3292, %v3284
    %v3301 = vpack.c.bf16 %v3293, %v3285
    %v3302 = vpack.c.bf16 %v3294, %v3286
    %v3303 = vpack.c.bf16 %v3295, %v3287
    %v3304 = vpack.c.bf16 %v3296, %v3288
    %v3305 = vpack.c.bf16 %v3297, %v3289
    %v3306 = vpack.c.bf16 %v3298, %v3290
    %v3307 = vld [vmem:[#allocation7] sm:$0xff]
    %v3308 = vld [vmem:[#allocation7 + $0x8] sm:$0xff]
    %v3309 = vld [vmem:[#allocation7 + $0x10] sm:$0xff]
    %v3310 = vld [vmem:[#allocation7 + $0x18] sm:$0xff]
    %v3311 = vld [vmem:[#allocation7 + $0x20] sm:$0xff]
    %v3312 = vld [vmem:[#allocation7 + $0x28] sm:$0xff]
    %v3313 = vld [vmem:[#allocation7 + $0x30] sm:$0xff]
    %v3314 = vld [vmem:[#allocation7 + $0x38] sm:$0xff]
    %v3315 = vld [vmem:[#allocation7 + $0x40] sm:$0xff]
    %v3316 = vld [vmem:[#allocation7 + $0x48] sm:$0xff]
    %v3317 = vld [vmem:[#allocation7 + $0x50] sm:$0xff]
    %v3318 = vld [vmem:[#allocation7 + $0x58] sm:$0xff]
    %v3319 = vld [vmem:[#allocation7 + $0x60] sm:$0xff]
    %v3320 = vld [vmem:[#allocation7 + $0x68] sm:$0xff]
    %v3321 = vld [vmem:[#allocation7 + $0x70] sm:$0xff]
    %v3322 = vld [vmem:[#allocation7 + $0x78] sm:$0xff]
    %v3323 = vld [vmem:[#allocation7 + $0x80] sm:$0xff]
    %v3324 = vld [vmem:[#allocation7 + $0x88] sm:$0xff]
    %v3325 = vld [vmem:[#allocation7 + $0x90] sm:$0xff]
    %v3326 = vld [vmem:[#allocation7 + $0x98] sm:$0xff]
    %v3327 = vld [vmem:[#allocation7 + $0xa0] sm:$0xff]
    %v3328 = vld [vmem:[#allocation7 + $0xa8] sm:$0xff]
    %v3329 = vld [vmem:[#allocation7 + $0xb0] sm:$0xff]
    %v3330 = vld [vmem:[#allocation7 + $0xb8] sm:$0xff]
    %v3331 = vld [vmem:[#allocation7 + $0xc0] sm:$0xff]
    %v3332 = vld [vmem:[#allocation7 + $0xc8] sm:$0xff]
    %v3333 = vld [vmem:[#allocation7 + $0xd0] sm:$0xff]
    %v3334 = vld [vmem:[#allocation7 + $0xd8] sm:$0xff]
    %v3335 = vld [vmem:[#allocation7 + $0xe0] sm:$0xff]
    %v3336 = vld [vmem:[#allocation7 + $0xe8] sm:$0xff]
    %v3337 = vld [vmem:[#allocation7 + $0xf0] sm:$0xff]
    %v3338 = vld [vmem:[#allocation7 + $0xf8] sm:$0xff]
    %v3339 = vld [vmem:[#allocation7 + $0x100] sm:$0xff]
    %v3340 = vld [vmem:[#allocation7 + $0x108] sm:$0xff]
    %v3341 = vld [vmem:[#allocation7 + $0x110] sm:$0xff]
    %v3342 = vld [vmem:[#allocation7 + $0x118] sm:$0xff]
    %v3343 = vld [vmem:[#allocation7 + $0x120] sm:$0xff]
    %v3344 = vld [vmem:[#allocation7 + $0x128] sm:$0xff]
    %v3345 = vld [vmem:[#allocation7 + $0x130] sm:$0xff]
    %v3346 = vld [vmem:[#allocation7 + $0x138] sm:$0xff]
    %v3347 = vld [vmem:[#allocation7 + $0x140] sm:$0xff]
    %v3348 = vld [vmem:[#allocation7 + $0x148] sm:$0xff]
    %v3349 = vld [vmem:[#allocation7 + $0x150] sm:$0xff]
    %v3350 = vld [vmem:[#allocation7 + $0x158] sm:$0xff]
    %v3351 = vld [vmem:[#allocation7 + $0x160] sm:$0xff]
    %v3352 = vld [vmem:[#allocation7 + $0x168] sm:$0xff]
    %v3353 = vld [vmem:[#allocation7 + $0x170] sm:$0xff]
    %v3354 = vld [vmem:[#allocation7 + $0x178] sm:$0xff]
    %v3355 = vld [vmem:[#allocation7 + $0x180] sm:$0xff]
    %v3356 = vld [vmem:[#allocation7 + $0x188] sm:$0xff]
    %v3357 = vld [vmem:[#allocation7 + $0x190] sm:$0xff]
    %v3358 = vld [vmem:[#allocation7 + $0x198] sm:$0xff]
    %v3359 = vld [vmem:[#allocation7 + $0x1a0] sm:$0xff]
    %v3360 = vld [vmem:[#allocation7 + $0x1a8] sm:$0xff]
    %v3361 = vld [vmem:[#allocation7 + $0x1b0] sm:$0xff]
    %v3362 = vld [vmem:[#allocation7 + $0x1b8] sm:$0xff]
    %v3363 = vld [vmem:[#allocation7 + $0x1c0] sm:$0xff]
    %v3364 = vld [vmem:[#allocation7 + $0x1c8] sm:$0xff]
    %v3365 = vld [vmem:[#allocation7 + $0x1d0] sm:$0xff]
    %v3366 = vld [vmem:[#allocation7 + $0x1d8] sm:$0xff]
    %v3367 = vld [vmem:[#allocation7 + $0x1e0] sm:$0xff]
    %v3368 = vld [vmem:[#allocation7 + $0x1e8] sm:$0xff]
    %v3369 = vld [vmem:[#allocation7 + $0x1f0] sm:$0xff]
    %v3370 = vld [vmem:[#allocation7 + $0x1f8] sm:$0xff]
    %v3371 = vld [vmem:[#allocation7 + $0x200] sm:$0xff]
    %v3372 = vld [vmem:[#allocation7 + $0x208] sm:$0xff]
    %v3373 = vld [vmem:[#allocation7 + $0x210] sm:$0xff]
    %v3374 = vld [vmem:[#allocation7 + $0x218] sm:$0xff]
    %v3375 = vld [vmem:[#allocation7 + $0x220] sm:$0xff]
    %v3376 = vld [vmem:[#allocation7 + $0x228] sm:$0xff]
    %v3377 = vld [vmem:[#allocation7 + $0x230] sm:$0xff]
    %v3378 = vld [vmem:[#allocation7 + $0x238] sm:$0xff]
    %v3379 = vld [vmem:[#allocation7 + $0x240] sm:$0xff]
    %v3380 = vld [vmem:[#allocation7 + $0x248] sm:$0xff]
    %v3381 = vld [vmem:[#allocation7 + $0x250] sm:$0xff]
    %v3382 = vld [vmem:[#allocation7 + $0x258] sm:$0xff]
    %v3383 = vld [vmem:[#allocation7 + $0x260] sm:$0xff]
    %v3384 = vld [vmem:[#allocation7 + $0x268] sm:$0xff]
    %v3385 = vld [vmem:[#allocation7 + $0x270] sm:$0xff]
    %v3386 = vld [vmem:[#allocation7 + $0x278] sm:$0xff]
    %v3387 = vld [vmem:[#allocation7 + $0x280] sm:$0xff]
    %v3388 = vld [vmem:[#allocation7 + $0x288] sm:$0xff]
    %v3389 = vld [vmem:[#allocation7 + $0x290] sm:$0xff]
    %v3390 = vld [vmem:[#allocation7 + $0x298] sm:$0xff]
    %v3391 = vld [vmem:[#allocation7 + $0x2a0] sm:$0xff]
    %v3392 = vld [vmem:[#allocation7 + $0x2a8] sm:$0xff]
    %v3393 = vld [vmem:[#allocation7 + $0x2b0] sm:$0xff]
    %v3394 = vld [vmem:[#allocation7 + $0x2b8] sm:$0xff]
    %v3395 = vld [vmem:[#allocation7 + $0x2c0] sm:$0xff]
    %v3396 = vld [vmem:[#allocation7 + $0x2c8] sm:$0xff]
    %v3397 = vld [vmem:[#allocation7 + $0x2d0] sm:$0xff]
    %v3398 = vld [vmem:[#allocation7 + $0x2d8] sm:$0xff]
    %v3399 = vld [vmem:[#allocation7 + $0x2e0] sm:$0xff]
    %v3400 = vld [vmem:[#allocation7 + $0x2e8] sm:$0xff]
    %v3401 = vld [vmem:[#allocation7 + $0x2f0] sm:$0xff]
    %v3402 = vld [vmem:[#allocation7 + $0x2f8] sm:$0xff]
    %v3403 = vld [vmem:[#allocation7 + $0x300] sm:$0xff]
    %v3404 = vld [vmem:[#allocation7 + $0x308] sm:$0xff]
    %v3405 = vld [vmem:[#allocation7 + $0x310] sm:$0xff]
    %v3406 = vld [vmem:[#allocation7 + $0x318] sm:$0xff]
    %v3407 = vld [vmem:[#allocation7 + $0x320] sm:$0xff]
    %v3408 = vld [vmem:[#allocation7 + $0x328] sm:$0xff]
    %v3409 = vld [vmem:[#allocation7 + $0x330] sm:$0xff]
    %v3410 = vld [vmem:[#allocation7 + $0x338] sm:$0xff]
    %v3411 = vld [vmem:[#allocation7 + $0x340] sm:$0xff]
    %v3412 = vld [vmem:[#allocation7 + $0x348] sm:$0xff]
    %v3413 = vld [vmem:[#allocation7 + $0x350] sm:$0xff]
    %v3414 = vld [vmem:[#allocation7 + $0x358] sm:$0xff]
    %v3415 = vld [vmem:[#allocation7 + $0x360] sm:$0xff]
    %v3416 = vld [vmem:[#allocation7 + $0x368] sm:$0xff]
    %v3417 = vld [vmem:[#allocation7 + $0x370] sm:$0xff]
    %v3418 = vld [vmem:[#allocation7 + $0x378] sm:$0xff]
    %v3419 = vld [vmem:[#allocation7 + $0x380] sm:$0xff]
    %v3420 = vld [vmem:[#allocation7 + $0x388] sm:$0xff]
    %v3421 = vld [vmem:[#allocation7 + $0x390] sm:$0xff]
    %v3422 = vld [vmem:[#allocation7 + $0x398] sm:$0xff]
    %v3423 = vld [vmem:[#allocation7 + $0x3a0] sm:$0xff]
    %v3424 = vld [vmem:[#allocation7 + $0x3a8] sm:$0xff]
    %v3425 = vld [vmem:[#allocation7 + $0x3b0] sm:$0xff]
    %v3426 = vld [vmem:[#allocation7 + $0x3b8] sm:$0xff]
    %v3427 = vld [vmem:[#allocation7 + $0x3c0] sm:$0xff]
    %v3428 = vld [vmem:[#allocation7 + $0x3c8] sm:$0xff]
    %v3429 = vld [vmem:[#allocation7 + $0x3d0] sm:$0xff]
    %v3430 = vld [vmem:[#allocation7 + $0x3d8] sm:$0xff]
    %v3431 = vld [vmem:[#allocation7 + $0x3e0] sm:$0xff]
    %v3432 = vld [vmem:[#allocation7 + $0x3e8] sm:$0xff]
    %v3433 = vld [vmem:[#allocation7 + $0x3f0] sm:$0xff]
    %v3434 = vld [vmem:[#allocation7 + $0x3f8] sm:$0xff]
    %v3435 = vld [vmem:[#allocation7 + $0x400] sm:$0xff]
    %v3436 = vld [vmem:[#allocation7 + $0x408] sm:$0xff]
    %v3437 = vld [vmem:[#allocation7 + $0x410] sm:$0xff]
    %v3438 = vld [vmem:[#allocation7 + $0x418] sm:$0xff]
    %v3439 = vld [vmem:[#allocation7 + $0x420] sm:$0xff]
    %v3440 = vld [vmem:[#allocation7 + $0x428] sm:$0xff]
    %v3441 = vld [vmem:[#allocation7 + $0x430] sm:$0xff]
    %v3442 = vld [vmem:[#allocation7 + $0x438] sm:$0xff]
    %v3443 = vld [vmem:[#allocation7 + $0x440] sm:$0xff]
    %v3444 = vld [vmem:[#allocation7 + $0x448] sm:$0xff]
    %v3445 = vld [vmem:[#allocation7 + $0x450] sm:$0xff]
    %v3446 = vld [vmem:[#allocation7 + $0x458] sm:$0xff]
    %v3447 = vld [vmem:[#allocation7 + $0x460] sm:$0xff]
    %v3448 = vld [vmem:[#allocation7 + $0x468] sm:$0xff]
    %v3449 = vld [vmem:[#allocation7 + $0x470] sm:$0xff]
    %v3450 = vld [vmem:[#allocation7 + $0x478] sm:$0xff]
    %v3451 = vld [vmem:[#allocation7 + $0x480] sm:$0xff]
    %v3452 = vld [vmem:[#allocation7 + $0x488] sm:$0xff]
    %v3453 = vld [vmem:[#allocation7 + $0x490] sm:$0xff]
    %v3454 = vld [vmem:[#allocation7 + $0x498] sm:$0xff]
    %v3455 = vld [vmem:[#allocation7 + $0x4a0] sm:$0xff]
    %v3456 = vld [vmem:[#allocation7 + $0x4a8] sm:$0xff]
    %v3457 = vld [vmem:[#allocation7 + $0x4b0] sm:$0xff]
    %v3458 = vld [vmem:[#allocation7 + $0x4b8] sm:$0xff]
    %v3459 = vld [vmem:[#allocation7 + $0x4c0] sm:$0xff]
    %v3460 = vld [vmem:[#allocation7 + $0x4c8] sm:$0xff]
    %v3461 = vld [vmem:[#allocation7 + $0x4d0] sm:$0xff]
    %v3462 = vld [vmem:[#allocation7 + $0x4d8] sm:$0xff]
    %v3463 = vld [vmem:[#allocation7 + $0x4e0] sm:$0xff]
    %v3464 = vld [vmem:[#allocation7 + $0x4e8] sm:$0xff]
    %v3465 = vld [vmem:[#allocation7 + $0x4f0] sm:$0xff]
    %v3466 = vld [vmem:[#allocation7 + $0x4f8] sm:$0xff]
    %v3467 = vld [vmem:[#allocation7 + $0x500] sm:$0xff]
    %v3468 = vld [vmem:[#allocation7 + $0x508] sm:$0xff]
    %v3469 = vld [vmem:[#allocation7 + $0x510] sm:$0xff]
    %v3470 = vld [vmem:[#allocation7 + $0x518] sm:$0xff]
    %v3471 = vld [vmem:[#allocation7 + $0x520] sm:$0xff]
    %v3472 = vld [vmem:[#allocation7 + $0x528] sm:$0xff]
    %v3473 = vld [vmem:[#allocation7 + $0x530] sm:$0xff]
    %v3474 = vld [vmem:[#allocation7 + $0x538] sm:$0xff]
    %v3475 = vld [vmem:[#allocation7 + $0x540] sm:$0xff]
    %v3476 = vld [vmem:[#allocation7 + $0x548] sm:$0xff]
    %v3477 = vld [vmem:[#allocation7 + $0x550] sm:$0xff]
    %v3478 = vld [vmem:[#allocation7 + $0x558] sm:$0xff]
    %v3479 = vld [vmem:[#allocation7 + $0x560] sm:$0xff]
    %v3480 = vld [vmem:[#allocation7 + $0x568] sm:$0xff]
    %v3481 = vld [vmem:[#allocation7 + $0x570] sm:$0xff]
    %v3482 = vld [vmem:[#allocation7 + $0x578] sm:$0xff]
    %v3483 = vld [vmem:[#allocation7 + $0x580] sm:$0xff]
    %v3484 = vld [vmem:[#allocation7 + $0x588] sm:$0xff]
    %v3485 = vld [vmem:[#allocation7 + $0x590] sm:$0xff]
    %v3486 = vld [vmem:[#allocation7 + $0x598] sm:$0xff]
    %v3487 = vld [vmem:[#allocation7 + $0x5a0] sm:$0xff]
    %v3488 = vld [vmem:[#allocation7 + $0x5a8] sm:$0xff]
    %v3489 = vld [vmem:[#allocation7 + $0x5b0] sm:$0xff]
    %v3490 = vld [vmem:[#allocation7 + $0x5b8] sm:$0xff]
    %v3491 = vld [vmem:[#allocation7 + $0x5c0] sm:$0xff]
    %v3492 = vld [vmem:[#allocation7 + $0x5c8] sm:$0xff]
    %v3493 = vld [vmem:[#allocation7 + $0x5d0] sm:$0xff]
    %v3494 = vld [vmem:[#allocation7 + $0x5d8] sm:$0xff]
    %v3495 = vld [vmem:[#allocation7 + $0x5e0] sm:$0xff]
    %v3496 = vld [vmem:[#allocation7 + $0x5e8] sm:$0xff]
    %v3497 = vld [vmem:[#allocation7 + $0x5f0] sm:$0xff]
    %v3498 = vld [vmem:[#allocation7 + $0x5f8] sm:$0xff]
    %v3499 = vld [vmem:[#allocation7 + $0x600] sm:$0xff]
    %v3500 = vld [vmem:[#allocation7 + $0x608] sm:$0xff]
    %v3501 = vld [vmem:[#allocation7 + $0x610] sm:$0xff]
    %v3502 = vld [vmem:[#allocation7 + $0x618] sm:$0xff]
    %v3503 = vld [vmem:[#allocation7 + $0x620] sm:$0xff]
    %v3504 = vld [vmem:[#allocation7 + $0x628] sm:$0xff]
    %v3505 = vld [vmem:[#allocation7 + $0x630] sm:$0xff]
    %v3506 = vld [vmem:[#allocation7 + $0x638] sm:$0xff]
    %v3507 = vld [vmem:[#allocation7 + $0x640] sm:$0xff]
    %v3508 = vld [vmem:[#allocation7 + $0x648] sm:$0xff]
    %v3509 = vld [vmem:[#allocation7 + $0x650] sm:$0xff]
    %v3510 = vld [vmem:[#allocation7 + $0x658] sm:$0xff]
    %v3511 = vld [vmem:[#allocation7 + $0x660] sm:$0xff]
    %v3512 = vld [vmem:[#allocation7 + $0x668] sm:$0xff]
    %v3513 = vld [vmem:[#allocation7 + $0x670] sm:$0xff]
    %v3514 = vld [vmem:[#allocation7 + $0x678] sm:$0xff]
    %v3515 = vld [vmem:[#allocation7 + $0x680] sm:$0xff]
    %v3516 = vld [vmem:[#allocation7 + $0x688] sm:$0xff]
    %v3517 = vld [vmem:[#allocation7 + $0x690] sm:$0xff]
    %v3518 = vld [vmem:[#allocation7 + $0x698] sm:$0xff]
    %v3519 = vld [vmem:[#allocation7 + $0x6a0] sm:$0xff]
    %v3520 = vld [vmem:[#allocation7 + $0x6a8] sm:$0xff]
    %v3521 = vld [vmem:[#allocation7 + $0x6b0] sm:$0xff]
    %v3522 = vld [vmem:[#allocation7 + $0x6b8] sm:$0xff]
    %v3523 = vld [vmem:[#allocation7 + $0x6c0] sm:$0xff]
    %v3524 = vld [vmem:[#allocation7 + $0x6c8] sm:$0xff]
    %v3525 = vld [vmem:[#allocation7 + $0x6d0] sm:$0xff]
    %v3526 = vld [vmem:[#allocation7 + $0x6d8] sm:$0xff]
    %v3527 = vld [vmem:[#allocation7 + $0x6e0] sm:$0xff]
    %v3528 = vld [vmem:[#allocation7 + $0x6e8] sm:$0xff]
    %v3529 = vld [vmem:[#allocation7 + $0x6f0] sm:$0xff]
    %v3530 = vld [vmem:[#allocation7 + $0x6f8] sm:$0xff]
    %v3531 = vld [vmem:[#allocation7 + $0x700] sm:$0xff]
    %v3532 = vld [vmem:[#allocation7 + $0x708] sm:$0xff]
    %v3533 = vld [vmem:[#allocation7 + $0x710] sm:$0xff]
    %v3534 = vld [vmem:[#allocation7 + $0x718] sm:$0xff]
    %v3535 = vld [vmem:[#allocation7 + $0x720] sm:$0xff]
    %v3536 = vld [vmem:[#allocation7 + $0x728] sm:$0xff]
    %v3537 = vld [vmem:[#allocation7 + $0x730] sm:$0xff]
    %v3538 = vld [vmem:[#allocation7 + $0x738] sm:$0xff]
    %v3539 = vld [vmem:[#allocation7 + $0x740] sm:$0xff]
    %v3540 = vld [vmem:[#allocation7 + $0x748] sm:$0xff]
    %v3541 = vld [vmem:[#allocation7 + $0x750] sm:$0xff]
    %v3542 = vld [vmem:[#allocation7 + $0x758] sm:$0xff]
    %v3543 = vld [vmem:[#allocation7 + $0x760] sm:$0xff]
    %v3544 = vld [vmem:[#allocation7 + $0x768] sm:$0xff]
    %v3545 = vld [vmem:[#allocation7 + $0x770] sm:$0xff]
    %v3546 = vld [vmem:[#allocation7 + $0x778] sm:$0xff]
    %v3547 = vld [vmem:[#allocation7 + $0x780] sm:$0xff]
    %v3548 = vld [vmem:[#allocation7 + $0x788] sm:$0xff]
    %v3549 = vld [vmem:[#allocation7 + $0x790] sm:$0xff]
    %v3550 = vld [vmem:[#allocation7 + $0x798] sm:$0xff]
    %v3551 = vld [vmem:[#allocation7 + $0x7a0] sm:$0xff]
    %v3552 = vld [vmem:[#allocation7 + $0x7a8] sm:$0xff]
    %v3553 = vld [vmem:[#allocation7 + $0x7b0] sm:$0xff]
    %v3554 = vld [vmem:[#allocation7 + $0x7b8] sm:$0xff]
    %v3555 = vld [vmem:[#allocation7 + $0x7c0] sm:$0xff]
    %v3556 = vld [vmem:[#allocation7 + $0x7c8] sm:$0xff]
    %v3557 = vld [vmem:[#allocation7 + $0x7d0] sm:$0xff]
    %v3558 = vld [vmem:[#allocation7 + $0x7d8] sm:$0xff]
    %v3559 = vld [vmem:[#allocation7 + $0x7e0] sm:$0xff]
    %v3560 = vld [vmem:[#allocation7 + $0x7e8] sm:$0xff]
    %v3561 = vld [vmem:[#allocation7 + $0x7f0] sm:$0xff]
    %v3562 = vld [vmem:[#allocation7 + $0x7f8] sm:$0xff]
    %v3563 = vld [vmem:[#allocation8] sm:$0xf]
    %v3565 = vlaneseq
    %v3566 = vshrl.u32 %v3565, 7
    %v3567 = vsub.s32 0, %v3566
    %v3568 = vrot.slane %v3563, %v3567
    %v3569 = vlaneseq
    %v3570 = vshrl.u32 %v3569, 7
    %v3571 = vsub.s32 1, %v3570
    %v3572 = vrot.slane %v3563, %v3571
    %v3573 = vlaneseq
    %v3574 = vshrl.u32 %v3573, 7
    %v3575 = vsub.s32 2, %v3574
    %v3576 = vrot.slane %v3563, %v3575
    %v3577 = vlaneseq
    %v3578 = vshrl.u32 %v3577, 7
    %v3579 = vsub.s32 3, %v3578
    %v3580 = vrot.slane %v3563, %v3579
    %v3841 = vunpack.c.l.b16 %v3307
    %v3842 = vunpack.c.h.b16 %v3307
    %v3843 = vunpack.c.l.b16 %v3308
    %v3844 = vunpack.c.h.b16 %v3308
    %v3845 = vunpack.c.l.b16 %v3309
    %v3846 = vunpack.c.h.b16 %v3309
    %v3847 = vunpack.c.l.b16 %v3310
    %v3848 = vunpack.c.h.b16 %v3310
    %v3849 = vunpack.c.l.b16 %v3311
    %v3850 = vunpack.c.h.b16 %v3311
    %v3851 = vunpack.c.l.b16 %v3312
    %v3852 = vunpack.c.h.b16 %v3312
    %v3853 = vunpack.c.l.b16 %v3313
    %v3854 = vunpack.c.h.b16 %v3313
    %v3855 = vunpack.c.l.b16 %v3314
    %v3856 = vunpack.c.h.b16 %v3314
    %v3857 = vunpack.c.l.b16 %v3315
    %v3858 = vunpack.c.h.b16 %v3315
    %v3859 = vunpack.c.l.b16 %v3316
    %v3860 = vunpack.c.h.b16 %v3316
    %v3861 = vunpack.c.l.b16 %v3317
    %v3862 = vunpack.c.h.b16 %v3317
    %v3863 = vunpack.c.l.b16 %v3318
    %v3864 = vunpack.c.h.b16 %v3318
    %v3865 = vunpack.c.l.b16 %v3319
    %v3866 = vunpack.c.h.b16 %v3319
    %v3867 = vunpack.c.l.b16 %v3320
    %v3868 = vunpack.c.h.b16 %v3320
    %v3869 = vunpack.c.l.b16 %v3321
    %v3870 = vunpack.c.h.b16 %v3321
    %v3871 = vunpack.c.l.b16 %v3322
    %v3872 = vunpack.c.h.b16 %v3322
    %v3873 = vunpack.c.l.b16 %v3323
    %v3874 = vunpack.c.h.b16 %v3323
    %v3875 = vunpack.c.l.b16 %v3324
    %v3876 = vunpack.c.h.b16 %v3324
    %v3877 = vunpack.c.l.b16 %v3325
    %v3878 = vunpack.c.h.b16 %v3325
    %v3879 = vunpack.c.l.b16 %v3326
    %v3880 = vunpack.c.h.b16 %v3326
    %v3881 = vunpack.c.l.b16 %v3327
    %v3882 = vunpack.c.h.b16 %v3327
    %v3883 = vunpack.c.l.b16 %v3328
    %v3884 = vunpack.c.h.b16 %v3328
    %v3885 = vunpack.c.l.b16 %v3329
    %v3886 = vunpack.c.h.b16 %v3329
    %v3887 = vunpack.c.l.b16 %v3330
    %v3888 = vunpack.c.h.b16 %v3330
    %v3889 = vunpack.c.l.b16 %v3331
    %v3890 = vunpack.c.h.b16 %v3331
    %v3891 = vunpack.c.l.b16 %v3332
    %v3892 = vunpack.c.h.b16 %v3332
    %v3893 = vunpack.c.l.b16 %v3333
    %v3894 = vunpack.c.h.b16 %v3333
    %v3895 = vunpack.c.l.b16 %v3334
    %v3896 = vunpack.c.h.b16 %v3334
    %v3897 = vunpack.c.l.b16 %v3335
    %v3898 = vunpack.c.h.b16 %v3335
    %v3899 = vunpack.c.l.b16 %v3336
    %v3900 = vunpack.c.h.b16 %v3336
    %v3901 = vunpack.c.l.b16 %v3337
    %v3902 = vunpack.c.h.b16 %v3337
    %v3903 = vunpack.c.l.b16 %v3338
    %v3904 = vunpack.c.h.b16 %v3338
    %v3905 = vunpack.c.l.b16 %v3339
    %v3906 = vunpack.c.h.b16 %v3339
    %v3907 = vunpack.c.l.b16 %v3340
    %v3908 = vunpack.c.h.b16 %v3340
    %v3909 = vunpack.c.l.b16 %v3341
    %v3910 = vunpack.c.h.b16 %v3341
    %v3911 = vunpack.c.l.b16 %v3342
    %v3912 = vunpack.c.h.b16 %v3342
    %v3913 = vunpack.c.l.b16 %v3343
    %v3914 = vunpack.c.h.b16 %v3343
    %v3915 = vunpack.c.l.b16 %v3344
    %v3916 = vunpack.c.h.b16 %v3344
    %v3917 = vunpack.c.l.b16 %v3345
    %v3918 = vunpack.c.h.b16 %v3345
    %v3919 = vunpack.c.l.b16 %v3346
    %v3920 = vunpack.c.h.b16 %v3346
    %v3921 = vunpack.c.l.b16 %v3347
    %v3922 = vunpack.c.h.b16 %v3347
    %v3923 = vunpack.c.l.b16 %v3348
    %v3924 = vunpack.c.h.b16 %v3348
    %v3925 = vunpack.c.l.b16 %v3349
    %v3926 = vunpack.c.h.b16 %v3349
    %v3927 = vunpack.c.l.b16 %v3350
    %v3928 = vunpack.c.h.b16 %v3350
    %v3929 = vunpack.c.l.b16 %v3351
    %v3930 = vunpack.c.h.b16 %v3351
    %v3931 = vunpack.c.l.b16 %v3352
    %v3932 = vunpack.c.h.b16 %v3352
    %v3933 = vunpack.c.l.b16 %v3353
    %v3934 = vunpack.c.h.b16 %v3353
    %v3935 = vunpack.c.l.b16 %v3354
    %v3936 = vunpack.c.h.b16 %v3354
    %v3937 = vunpack.c.l.b16 %v3355
    %v3938 = vunpack.c.h.b16 %v3355
    %v3939 = vunpack.c.l.b16 %v3356
    %v3940 = vunpack.c.h.b16 %v3356
    %v3941 = vunpack.c.l.b16 %v3357
    %v3942 = vunpack.c.h.b16 %v3357
    %v3943 = vunpack.c.l.b16 %v3358
    %v3944 = vunpack.c.h.b16 %v3358
    %v3945 = vunpack.c.l.b16 %v3359
    %v3946 = vunpack.c.h.b16 %v3359
    %v3947 = vunpack.c.l.b16 %v3360
    %v3948 = vunpack.c.h.b16 %v3360
    %v3949 = vunpack.c.l.b16 %v3361
    %v3950 = vunpack.c.h.b16 %v3361
    %v3951 = vunpack.c.l.b16 %v3362
    %v3952 = vunpack.c.h.b16 %v3362
    %v3953 = vunpack.c.l.b16 %v3363
    %v3954 = vunpack.c.h.b16 %v3363
    %v3955 = vunpack.c.l.b16 %v3364
    %v3956 = vunpack.c.h.b16 %v3364
    %v3957 = vunpack.c.l.b16 %v3365
    %v3958 = vunpack.c.h.b16 %v3365
    %v3959 = vunpack.c.l.b16 %v3366
    %v3960 = vunpack.c.h.b16 %v3366
    %v3961 = vunpack.c.l.b16 %v3367
    %v3962 = vunpack.c.h.b16 %v3367
    %v3963 = vunpack.c.l.b16 %v3368
    %v3964 = vunpack.c.h.b16 %v3368
    %v3965 = vunpack.c.l.b16 %v3369
    %v3966 = vunpack.c.h.b16 %v3369
    %v3967 = vunpack.c.l.b16 %v3370
    %v3968 = vunpack.c.h.b16 %v3370
    %v3969 = vunpack.c.l.b16 %v3371
    %v3970 = vunpack.c.h.b16 %v3371
    %v3971 = vunpack.c.l.b16 %v3372
    %v3972 = vunpack.c.h.b16 %v3372
    %v3973 = vunpack.c.l.b16 %v3373
    %v3974 = vunpack.c.h.b16 %v3373
    %v3975 = vunpack.c.l.b16 %v3374
    %v3976 = vunpack.c.h.b16 %v3374
    %v3977 = vunpack.c.l.b16 %v3375
    %v3978 = vunpack.c.h.b16 %v3375
    %v3979 = vunpack.c.l.b16 %v3376
    %v3980 = vunpack.c.h.b16 %v3376
    %v3981 = vunpack.c.l.b16 %v3377
    %v3982 = vunpack.c.h.b16 %v3377
    %v3983 = vunpack.c.l.b16 %v3378
    %v3984 = vunpack.c.h.b16 %v3378
    %v3985 = vunpack.c.l.b16 %v3379
    %v3986 = vunpack.c.h.b16 %v3379
    %v3987 = vunpack.c.l.b16 %v3380
    %v3988 = vunpack.c.h.b16 %v3380
    %v3989 = vunpack.c.l.b16 %v3381
    %v3990 = vunpack.c.h.b16 %v3381
    %v3991 = vunpack.c.l.b16 %v3382
    %v3992 = vunpack.c.h.b16 %v3382
    %v3993 = vunpack.c.l.b16 %v3383
    %v3994 = vunpack.c.h.b16 %v3383
    %v3995 = vunpack.c.l.b16 %v3384
    %v3996 = vunpack.c.h.b16 %v3384
    %v3997 = vunpack.c.l.b16 %v3385
    %v3998 = vunpack.c.h.b16 %v3385
    %v3999 = vunpack.c.l.b16 %v3386
    %v4000 = vunpack.c.h.b16 %v3386
    %v4001 = vunpack.c.l.b16 %v3387
    %v4002 = vunpack.c.h.b16 %v3387
    %v4003 = vunpack.c.l.b16 %v3388
    %v4004 = vunpack.c.h.b16 %v3388
    %v4005 = vunpack.c.l.b16 %v3389
    %v4006 = vunpack.c.h.b16 %v3389
    %v4007 = vunpack.c.l.b16 %v3390
    %v4008 = vunpack.c.h.b16 %v3390
    %v4009 = vunpack.c.l.b16 %v3391
    %v4010 = vunpack.c.h.b16 %v3391
    %v4011 = vunpack.c.l.b16 %v3392
    %v4012 = vunpack.c.h.b16 %v3392
    %v4013 = vunpack.c.l.b16 %v3393
    %v4014 = vunpack.c.h.b16 %v3393
    %v4015 = vunpack.c.l.b16 %v3394
    %v4016 = vunpack.c.h.b16 %v3394
    %v4017 = vunpack.c.l.b16 %v3395
    %v4018 = vunpack.c.h.b16 %v3395
    %v4019 = vunpack.c.l.b16 %v3396
    %v4020 = vunpack.c.h.b16 %v3396
    %v4021 = vunpack.c.l.b16 %v3397
    %v4022 = vunpack.c.h.b16 %v3397
    %v4023 = vunpack.c.l.b16 %v3398
    %v4024 = vunpack.c.h.b16 %v3398
    %v4025 = vunpack.c.l.b16 %v3399
    %v4026 = vunpack.c.h.b16 %v3399
    %v4027 = vunpack.c.l.b16 %v3400
    %v4028 = vunpack.c.h.b16 %v3400
    %v4029 = vunpack.c.l.b16 %v3401
    %v4030 = vunpack.c.h.b16 %v3401
    %v4031 = vunpack.c.l.b16 %v3402
    %v4032 = vunpack.c.h.b16 %v3402
    %v4033 = vunpack.c.l.b16 %v3403
    %v4034 = vunpack.c.h.b16 %v3403
    %v4035 = vunpack.c.l.b16 %v3404
    %v4036 = vunpack.c.h.b16 %v3404
    %v4037 = vunpack.c.l.b16 %v3405
    %v4038 = vunpack.c.h.b16 %v3405
    %v4039 = vunpack.c.l.b16 %v3406
    %v4040 = vunpack.c.h.b16 %v3406
    %v4041 = vunpack.c.l.b16 %v3407
    %v4042 = vunpack.c.h.b16 %v3407
    %v4043 = vunpack.c.l.b16 %v3408
    %v4044 = vunpack.c.h.b16 %v3408
    %v4045 = vunpack.c.l.b16 %v3409
    %v4046 = vunpack.c.h.b16 %v3409
    %v4047 = vunpack.c.l.b16 %v3410
    %v4048 = vunpack.c.h.b16 %v3410
    %v4049 = vunpack.c.l.b16 %v3411
    %v4050 = vunpack.c.h.b16 %v3411
    %v4051 = vunpack.c.l.b16 %v3412
    %v4052 = vunpack.c.h.b16 %v3412
    %v4053 = vunpack.c.l.b16 %v3413
    %v4054 = vunpack.c.h.b16 %v3413
    %v4055 = vunpack.c.l.b16 %v3414
    %v4056 = vunpack.c.h.b16 %v3414
    %v4057 = vunpack.c.l.b16 %v3415
    %v4058 = vunpack.c.h.b16 %v3415
    %v4059 = vunpack.c.l.b16 %v3416
    %v4060 = vunpack.c.h.b16 %v3416
    %v4061 = vunpack.c.l.b16 %v3417
    %v4062 = vunpack.c.h.b16 %v3417
    %v4063 = vunpack.c.l.b16 %v3418
    %v4064 = vunpack.c.h.b16 %v3418
    %v4065 = vunpack.c.l.b16 %v3419
    %v4066 = vunpack.c.h.b16 %v3419
    %v4067 = vunpack.c.l.b16 %v3420
    %v4068 = vunpack.c.h.b16 %v3420
    %v4069 = vunpack.c.l.b16 %v3421
    %v4070 = vunpack.c.h.b16 %v3421
    %v4071 = vunpack.c.l.b16 %v3422
    %v4072 = vunpack.c.h.b16 %v3422
    %v4073 = vunpack.c.l.b16 %v3423
    %v4074 = vunpack.c.h.b16 %v3423
    %v4075 = vunpack.c.l.b16 %v3424
    %v4076 = vunpack.c.h.b16 %v3424
    %v4077 = vunpack.c.l.b16 %v3425
    %v4078 = vunpack.c.h.b16 %v3425
    %v4079 = vunpack.c.l.b16 %v3426
    %v4080 = vunpack.c.h.b16 %v3426
    %v4081 = vunpack.c.l.b16 %v3427
    %v4082 = vunpack.c.h.b16 %v3427
    %v4083 = vunpack.c.l.b16 %v3428
    %v4084 = vunpack.c.h.b16 %v3428
    %v4085 = vunpack.c.l.b16 %v3429
    %v4086 = vunpack.c.h.b16 %v3429
    %v4087 = vunpack.c.l.b16 %v3430
    %v4088 = vunpack.c.h.b16 %v3430
    %v4089 = vunpack.c.l.b16 %v3431
    %v4090 = vunpack.c.h.b16 %v3431
    %v4091 = vunpack.c.l.b16 %v3432
    %v4092 = vunpack.c.h.b16 %v3432
    %v4093 = vunpack.c.l.b16 %v3433
    %v4094 = vunpack.c.h.b16 %v3433
    %v4095 = vunpack.c.l.b16 %v3434
    %v4096 = vunpack.c.h.b16 %v3434
    %v4097 = vunpack.c.l.b16 %v3435
    %v4098 = vunpack.c.h.b16 %v3435
    %v4099 = vunpack.c.l.b16 %v3436
    %v4100 = vunpack.c.h.b16 %v3436
    %v4101 = vunpack.c.l.b16 %v3437
    %v4102 = vunpack.c.h.b16 %v3437
    %v4103 = vunpack.c.l.b16 %v3438
    %v4104 = vunpack.c.h.b16 %v3438
    %v4105 = vunpack.c.l.b16 %v3439
    %v4106 = vunpack.c.h.b16 %v3439
    %v4107 = vunpack.c.l.b16 %v3440
    %v4108 = vunpack.c.h.b16 %v3440
    %v4109 = vunpack.c.l.b16 %v3441
    %v4110 = vunpack.c.h.b16 %v3441
    %v4111 = vunpack.c.l.b16 %v3442
    %v4112 = vunpack.c.h.b16 %v3442
    %v4113 = vunpack.c.l.b16 %v3443
    %v4114 = vunpack.c.h.b16 %v3443
    %v4115 = vunpack.c.l.b16 %v3444
    %v4116 = vunpack.c.h.b16 %v3444
    %v4117 = vunpack.c.l.b16 %v3445
    %v4118 = vunpack.c.h.b16 %v3445
    %v4119 = vunpack.c.l.b16 %v3446
    %v4120 = vunpack.c.h.b16 %v3446
    %v4121 = vunpack.c.l.b16 %v3447
    %v4122 = vunpack.c.h.b16 %v3447
    %v4123 = vunpack.c.l.b16 %v3448
    %v4124 = vunpack.c.h.b16 %v3448
    %v4125 = vunpack.c.l.b16 %v3449
    %v4126 = vunpack.c.h.b16 %v3449
    %v4127 = vunpack.c.l.b16 %v3450
    %v4128 = vunpack.c.h.b16 %v3450
    %v4129 = vunpack.c.l.b16 %v3451
    %v4130 = vunpack.c.h.b16 %v3451
    %v4131 = vunpack.c.l.b16 %v3452
    %v4132 = vunpack.c.h.b16 %v3452
    %v4133 = vunpack.c.l.b16 %v3453
    %v4134 = vunpack.c.h.b16 %v3453
    %v4135 = vunpack.c.l.b16 %v3454
    %v4136 = vunpack.c.h.b16 %v3454
    %v4137 = vunpack.c.l.b16 %v3455
    %v4138 = vunpack.c.h.b16 %v3455
    %v4139 = vunpack.c.l.b16 %v3456
    %v4140 = vunpack.c.h.b16 %v3456
    %v4141 = vunpack.c.l.b16 %v3457
    %v4142 = vunpack.c.h.b16 %v3457
    %v4143 = vunpack.c.l.b16 %v3458
    %v4144 = vunpack.c.h.b16 %v3458
    %v4145 = vunpack.c.l.b16 %v3459
    %v4146 = vunpack.c.h.b16 %v3459
    %v4147 = vunpack.c.l.b16 %v3460
    %v4148 = vunpack.c.h.b16 %v3460
    %v4149 = vunpack.c.l.b16 %v3461
    %v4150 = vunpack.c.h.b16 %v3461
    %v4151 = vunpack.c.l.b16 %v3462
    %v4152 = vunpack.c.h.b16 %v3462
    %v4153 = vunpack.c.l.b16 %v3463
    %v4154 = vunpack.c.h.b16 %v3463
    %v4155 = vunpack.c.l.b16 %v3464
    %v4156 = vunpack.c.h.b16 %v3464
    %v4157 = vunpack.c.l.b16 %v3465
    %v4158 = vunpack.c.h.b16 %v3465
    %v4159 = vunpack.c.l.b16 %v3466
    %v4160 = vunpack.c.h.b16 %v3466
    %v4161 = vunpack.c.l.b16 %v3467
    %v4162 = vunpack.c.h.b16 %v3467
    %v4163 = vunpack.c.l.b16 %v3468
    %v4164 = vunpack.c.h.b16 %v3468
    %v4165 = vunpack.c.l.b16 %v3469
    %v4166 = vunpack.c.h.b16 %v3469
    %v4167 = vunpack.c.l.b16 %v3470
    %v4168 = vunpack.c.h.b16 %v3470
    %v4169 = vunpack.c.l.b16 %v3471
    %v4170 = vunpack.c.h.b16 %v3471
    %v4171 = vunpack.c.l.b16 %v3472
    %v4172 = vunpack.c.h.b16 %v3472
    %v4173 = vunpack.c.l.b16 %v3473
    %v4174 = vunpack.c.h.b16 %v3473
    %v4175 = vunpack.c.l.b16 %v3474
    %v4176 = vunpack.c.h.b16 %v3474
    %v4177 = vunpack.c.l.b16 %v3475
    %v4178 = vunpack.c.h.b16 %v3475
    %v4179 = vunpack.c.l.b16 %v3476
    %v4180 = vunpack.c.h.b16 %v3476
    %v4181 = vunpack.c.l.b16 %v3477
    %v4182 = vunpack.c.h.b16 %v3477
    %v4183 = vunpack.c.l.b16 %v3478
    %v4184 = vunpack.c.h.b16 %v3478
    %v4185 = vunpack.c.l.b16 %v3479
    %v4186 = vunpack.c.h.b16 %v3479
    %v4187 = vunpack.c.l.b16 %v3480
    %v4188 = vunpack.c.h.b16 %v3480
    %v4189 = vunpack.c.l.b16 %v3481
    %v4190 = vunpack.c.h.b16 %v3481
    %v4191 = vunpack.c.l.b16 %v3482
    %v4192 = vunpack.c.h.b16 %v3482
    %v4193 = vunpack.c.l.b16 %v3483
    %v4194 = vunpack.c.h.b16 %v3483
    %v4195 = vunpack.c.l.b16 %v3484
    %v4196 = vunpack.c.h.b16 %v3484
    %v4197 = vunpack.c.l.b16 %v3485
    %v4198 = vunpack.c.h.b16 %v3485
    %v4199 = vunpack.c.l.b16 %v3486
    %v4200 = vunpack.c.h.b16 %v3486
    %v4201 = vunpack.c.l.b16 %v3487
    %v4202 = vunpack.c.h.b16 %v3487
    %v4203 = vunpack.c.l.b16 %v3488
    %v4204 = vunpack.c.h.b16 %v3488
    %v4205 = vunpack.c.l.b16 %v3489
    %v4206 = vunpack.c.h.b16 %v3489
    %v4207 = vunpack.c.l.b16 %v3490
    %v4208 = vunpack.c.h.b16 %v3490
    %v4209 = vunpack.c.l.b16 %v3491
    %v4210 = vunpack.c.h.b16 %v3491
    %v4211 = vunpack.c.l.b16 %v3492
    %v4212 = vunpack.c.h.b16 %v3492
    %v4213 = vunpack.c.l.b16 %v3493
    %v4214 = vunpack.c.h.b16 %v3493
    %v4215 = vunpack.c.l.b16 %v3494
    %v4216 = vunpack.c.h.b16 %v3494
    %v4217 = vunpack.c.l.b16 %v3495
    %v4218 = vunpack.c.h.b16 %v3495
    %v4219 = vunpack.c.l.b16 %v3496
    %v4220 = vunpack.c.h.b16 %v3496
    %v4221 = vunpack.c.l.b16 %v3497
    %v4222 = vunpack.c.h.b16 %v3497
    %v4223 = vunpack.c.l.b16 %v3498
    %v4224 = vunpack.c.h.b16 %v3498
    %v4225 = vunpack.c.l.b16 %v3499
    %v4226 = vunpack.c.h.b16 %v3499
    %v4227 = vunpack.c.l.b16 %v3500
    %v4228 = vunpack.c.h.b16 %v3500
    %v4229 = vunpack.c.l.b16 %v3501
    %v4230 = vunpack.c.h.b16 %v3501
    %v4231 = vunpack.c.l.b16 %v3502
    %v4232 = vunpack.c.h.b16 %v3502
    %v4233 = vunpack.c.l.b16 %v3503
    %v4234 = vunpack.c.h.b16 %v3503
    %v4235 = vunpack.c.l.b16 %v3504
    %v4236 = vunpack.c.h.b16 %v3504
    %v4237 = vunpack.c.l.b16 %v3505
    %v4238 = vunpack.c.h.b16 %v3505
    %v4239 = vunpack.c.l.b16 %v3506
    %v4240 = vunpack.c.h.b16 %v3506
    %v4241 = vunpack.c.l.b16 %v3507
    %v4242 = vunpack.c.h.b16 %v3507
    %v4243 = vunpack.c.l.b16 %v3508
    %v4244 = vunpack.c.h.b16 %v3508
    %v4245 = vunpack.c.l.b16 %v3509
    %v4246 = vunpack.c.h.b16 %v3509
    %v4247 = vunpack.c.l.b16 %v3510
    %v4248 = vunpack.c.h.b16 %v3510
    %v4249 = vunpack.c.l.b16 %v3511
    %v4250 = vunpack.c.h.b16 %v3511
    %v4251 = vunpack.c.l.b16 %v3512
    %v4252 = vunpack.c.h.b16 %v3512
    %v4253 = vunpack.c.l.b16 %v3513
    %v4254 = vunpack.c.h.b16 %v3513
    %v4255 = vunpack.c.l.b16 %v3514
    %v4256 = vunpack.c.h.b16 %v3514
    %v4257 = vunpack.c.l.b16 %v3515
    %v4258 = vunpack.c.h.b16 %v3515
    %v4259 = vunpack.c.l.b16 %v3516
    %v4260 = vunpack.c.h.b16 %v3516
    %v4261 = vunpack.c.l.b16 %v3517
    %v4262 = vunpack.c.h.b16 %v3517
    %v4263 = vunpack.c.l.b16 %v3518
    %v4264 = vunpack.c.h.b16 %v3518
    %v4265 = vunpack.c.l.b16 %v3519
    %v4266 = vunpack.c.h.b16 %v3519
    %v4267 = vunpack.c.l.b16 %v3520
    %v4268 = vunpack.c.h.b16 %v3520
    %v4269 = vunpack.c.l.b16 %v3521
    %v4270 = vunpack.c.h.b16 %v3521
    %v4271 = vunpack.c.l.b16 %v3522
    %v4272 = vunpack.c.h.b16 %v3522
    %v4273 = vunpack.c.l.b16 %v3523
    %v4274 = vunpack.c.h.b16 %v3523
    %v4275 = vunpack.c.l.b16 %v3524
    %v4276 = vunpack.c.h.b16 %v3524
    %v4277 = vunpack.c.l.b16 %v3525
    %v4278 = vunpack.c.h.b16 %v3525
    %v4279 = vunpack.c.l.b16 %v3526
    %v4280 = vunpack.c.h.b16 %v3526
    %v4281 = vunpack.c.l.b16 %v3527
    %v4282 = vunpack.c.h.b16 %v3527
    %v4283 = vunpack.c.l.b16 %v3528
    %v4284 = vunpack.c.h.b16 %v3528
    %v4285 = vunpack.c.l.b16 %v3529
    %v4286 = vunpack.c.h.b16 %v3529
    %v4287 = vunpack.c.l.b16 %v3530
    %v4288 = vunpack.c.h.b16 %v3530
    %v4289 = vunpack.c.l.b16 %v3531
    %v4290 = vunpack.c.h.b16 %v3531
    %v4291 = vunpack.c.l.b16 %v3532
    %v4292 = vunpack.c.h.b16 %v3532
    %v4293 = vunpack.c.l.b16 %v3533
    %v4294 = vunpack.c.h.b16 %v3533
    %v4295 = vunpack.c.l.b16 %v3534
    %v4296 = vunpack.c.h.b16 %v3534
    %v4297 = vunpack.c.l.b16 %v3535
    %v4298 = vunpack.c.h.b16 %v3535
    %v4299 = vunpack.c.l.b16 %v3536
    %v4300 = vunpack.c.h.b16 %v3536
    %v4301 = vunpack.c.l.b16 %v3537
    %v4302 = vunpack.c.h.b16 %v3537
    %v4303 = vunpack.c.l.b16 %v3538
    %v4304 = vunpack.c.h.b16 %v3538
    %v4305 = vunpack.c.l.b16 %v3539
    %v4306 = vunpack.c.h.b16 %v3539
    %v4307 = vunpack.c.l.b16 %v3540
    %v4308 = vunpack.c.h.b16 %v3540
    %v4309 = vunpack.c.l.b16 %v3541
    %v4310 = vunpack.c.h.b16 %v3541
    %v4311 = vunpack.c.l.b16 %v3542
    %v4312 = vunpack.c.h.b16 %v3542
    %v4313 = vunpack.c.l.b16 %v3543
    %v4314 = vunpack.c.h.b16 %v3543
    %v4315 = vunpack.c.l.b16 %v3544
    %v4316 = vunpack.c.h.b16 %v3544
    %v4317 = vunpack.c.l.b16 %v3545
    %v4318 = vunpack.c.h.b16 %v3545
    %v4319 = vunpack.c.l.b16 %v3546
    %v4320 = vunpack.c.h.b16 %v3546
    %v4321 = vunpack.c.l.b16 %v3547
    %v4322 = vunpack.c.h.b16 %v3547
    %v4323 = vunpack.c.l.b16 %v3548
    %v4324 = vunpack.c.h.b16 %v3548
    %v4325 = vunpack.c.l.b16 %v3549
    %v4326 = vunpack.c.h.b16 %v3549
    %v4327 = vunpack.c.l.b16 %v3550
    %v4328 = vunpack.c.h.b16 %v3550
    %v4329 = vunpack.c.l.b16 %v3551
    %v4330 = vunpack.c.h.b16 %v3551
    %v4331 = vunpack.c.l.b16 %v3552
    %v4332 = vunpack.c.h.b16 %v3552
    %v4333 = vunpack.c.l.b16 %v3553
    %v4334 = vunpack.c.h.b16 %v3553
    %v4335 = vunpack.c.l.b16 %v3554
    %v4336 = vunpack.c.h.b16 %v3554
    %v4337 = vunpack.c.l.b16 %v3555
    %v4338 = vunpack.c.h.b16 %v3555
    %v4339 = vunpack.c.l.b16 %v3556
    %v4340 = vunpack.c.h.b16 %v3556
    %v4341 = vunpack.c.l.b16 %v3557
    %v4342 = vunpack.c.h.b16 %v3557
    %v4343 = vunpack.c.l.b16 %v3558
    %v4344 = vunpack.c.h.b16 %v3558
    %v4345 = vunpack.c.l.b16 %v3559
    %v4346 = vunpack.c.h.b16 %v3559
    %v4347 = vunpack.c.l.b16 %v3560
    %v4348 = vunpack.c.h.b16 %v3560
    %v4349 = vunpack.c.l.b16 %v3561
    %v4350 = vunpack.c.h.b16 %v3561
    %v4351 = vunpack.c.l.b16 %v3562
    %v4352 = vunpack.c.h.b16 %v3562
    %v4353 = vpack.c.b16 %v3845, %v3841
    %v4354 = vpack.c.b16 %v3846, %v3842
    %v4355 = vpack.c.b16 %v3847, %v3843
    %v4356 = vpack.c.b16 %v3848, %v3844
    %v4357 = vpack.c.b16 %v3853, %v3849
    %v4358 = vpack.c.b16 %v3854, %v3850
    %v4359 = vpack.c.b16 %v3855, %v3851
    %v4360 = vpack.c.b16 %v3856, %v3852
    %v4361 = vpack.c.b16 %v3861, %v3857
    %v4362 = vpack.c.b16 %v3862, %v3858
    %v4363 = vpack.c.b16 %v3863, %v3859
    %v4364 = vpack.c.b16 %v3864, %v3860
    %v4365 = vpack.c.b16 %v3869, %v3865
    %v4366 = vpack.c.b16 %v3870, %v3866
    %v4367 = vpack.c.b16 %v3871, %v3867
    %v4368 = vpack.c.b16 %v3872, %v3868
    %v4369 = vpack.c.b16 %v3877, %v3873
    %v4370 = vpack.c.b16 %v3878, %v3874
    %v4371 = vpack.c.b16 %v3879, %v3875
    %v4372 = vpack.c.b16 %v3880, %v3876
    %v4373 = vpack.c.b16 %v3885, %v3881
    %v4374 = vpack.c.b16 %v3886, %v3882
    %v4375 = vpack.c.b16 %v3887, %v3883
    %v4376 = vpack.c.b16 %v3888, %v3884
    %v4377 = vpack.c.b16 %v3893, %v3889
    %v4378 = vpack.c.b16 %v3894, %v3890
    %v4379 = vpack.c.b16 %v3895, %v3891
    %v4380 = vpack.c.b16 %v3896, %v3892
    %v4381 = vpack.c.b16 %v3901, %v3897
    %v4382 = vpack.c.b16 %v3902, %v3898
    %v4383 = vpack.c.b16 %v3903, %v3899
    %v4384 = vpack.c.b16 %v3904, %v3900
    %v4385 = vpack.c.b16 %v3909, %v3905
    %v4386 = vpack.c.b16 %v3910, %v3906
    %v4387 = vpack.c.b16 %v3911, %v3907
    %v4388 = vpack.c.b16 %v3912, %v3908
    %v4389 = vpack.c.b16 %v3917, %v3913
    %v4390 = vpack.c.b16 %v3918, %v3914
    %v4391 = vpack.c.b16 %v3919, %v3915
    %v4392 = vpack.c.b16 %v3920, %v3916
    %v4393 = vpack.c.b16 %v3925, %v3921
    %v4394 = vpack.c.b16 %v3926, %v3922
    %v4395 = vpack.c.b16 %v3927, %v3923
    %v4396 = vpack.c.b16 %v3928, %v3924
    %v4397 = vpack.c.b16 %v3933, %v3929
    %v4398 = vpack.c.b16 %v3934, %v3930
    %v4399 = vpack.c.b16 %v3935, %v3931
    %v4400 = vpack.c.b16 %v3936, %v3932
    %v4401 = vpack.c.b16 %v3941, %v3937
    %v4402 = vpack.c.b16 %v3942, %v3938
    %v4403 = vpack.c.b16 %v3943, %v3939
    %v4404 = vpack.c.b16 %v3944, %v3940
    %v4405 = vpack.c.b16 %v3949, %v3945
    %v4406 = vpack.c.b16 %v3950, %v3946
    %v4407 = vpack.c.b16 %v3951, %v3947
    %v4408 = vpack.c.b16 %v3952, %v3948
    %v4409 = vpack.c.b16 %v3957, %v3953
    %v4410 = vpack.c.b16 %v3958, %v3954
    %v4411 = vpack.c.b16 %v3959, %v3955
    %v4412 = vpack.c.b16 %v3960, %v3956
    %v4413 = vpack.c.b16 %v3965, %v3961
    %v4414 = vpack.c.b16 %v3966, %v3962
    %v4415 = vpack.c.b16 %v3967, %v3963
    %v4416 = vpack.c.b16 %v3968, %v3964
    %v4417 = vpack.c.b16 %v3973, %v3969
    %v4418 = vpack.c.b16 %v3974, %v3970
    %v4419 = vpack.c.b16 %v3975, %v3971
    %v4420 = vpack.c.b16 %v3976, %v3972
    %v4421 = vpack.c.b16 %v3981, %v3977
    %v4422 = vpack.c.b16 %v3982, %v3978
    %v4423 = vpack.c.b16 %v3983, %v3979
    %v4424 = vpack.c.b16 %v3984, %v3980
    %v4425 = vpack.c.b16 %v3989, %v3985
    %v4426 = vpack.c.b16 %v3990, %v3986
    %v4427 = vpack.c.b16 %v3991, %v3987
    %v4428 = vpack.c.b16 %v3992, %v3988
    %v4429 = vpack.c.b16 %v3997, %v3993
    %v4430 = vpack.c.b16 %v3998, %v3994
    %v4431 = vpack.c.b16 %v3999, %v3995
    %v4432 = vpack.c.b16 %v4000, %v3996
    %v4433 = vpack.c.b16 %v4005, %v4001
    %v4434 = vpack.c.b16 %v4006, %v4002
    %v4435 = vpack.c.b16 %v4007, %v4003
    %v4436 = vpack.c.b16 %v4008, %v4004
    %v4437 = vpack.c.b16 %v4013, %v4009
    %v4438 = vpack.c.b16 %v4014, %v4010
    %v4439 = vpack.c.b16 %v4015, %v4011
    %v4440 = vpack.c.b16 %v4016, %v4012
    %v4441 = vpack.c.b16 %v4021, %v4017
    %v4442 = vpack.c.b16 %v4022, %v4018
    %v4443 = vpack.c.b16 %v4023, %v4019
    %v4444 = vpack.c.b16 %v4024, %v4020
    %v4445 = vpack.c.b16 %v4029, %v4025
    %v4446 = vpack.c.b16 %v4030, %v4026
    %v4447 = vpack.c.b16 %v4031, %v4027
    %v4448 = vpack.c.b16 %v4032, %v4028
    %v4449 = vpack.c.b16 %v4037, %v4033
    %v4450 = vpack.c.b16 %v4038, %v4034
    %v4451 = vpack.c.b16 %v4039, %v4035
    %v4452 = vpack.c.b16 %v4040, %v4036
    %v4453 = vpack.c.b16 %v4045, %v4041
    %v4454 = vpack.c.b16 %v4046, %v4042
    %v4455 = vpack.c.b16 %v4047, %v4043
    %v4456 = vpack.c.b16 %v4048, %v4044
    %v4457 = vpack.c.b16 %v4053, %v4049
    %v4458 = vpack.c.b16 %v4054, %v4050
    %v4459 = vpack.c.b16 %v4055, %v4051
    %v4460 = vpack.c.b16 %v4056, %v4052
    %v4461 = vpack.c.b16 %v4061, %v4057
    %v4462 = vpack.c.b16 %v4062, %v4058
    %v4463 = vpack.c.b16 %v4063, %v4059
    %v4464 = vpack.c.b16 %v4064, %v4060
    %v4465 = vpack.c.b16 %v4069, %v4065
    %v4466 = vpack.c.b16 %v4070, %v4066
    %v4467 = vpack.c.b16 %v4071, %v4067
    %v4468 = vpack.c.b16 %v4072, %v4068
    %v4469 = vpack.c.b16 %v4077, %v4073
    %v4470 = vpack.c.b16 %v4078, %v4074
    %v4471 = vpack.c.b16 %v4079, %v4075
    %v4472 = vpack.c.b16 %v4080, %v4076
    %v4473 = vpack.c.b16 %v4085, %v4081
    %v4474 = vpack.c.b16 %v4086, %v4082
    %v4475 = vpack.c.b16 %v4087, %v4083
    %v4476 = vpack.c.b16 %v4088, %v4084
    %v4477 = vpack.c.b16 %v4093, %v4089
    %v4478 = vpack.c.b16 %v4094, %v4090
    %v4479 = vpack.c.b16 %v4095, %v4091
    %v4480 = vpack.c.b16 %v4096, %v4092
    %v4481 = vpack.c.b16 %v4101, %v4097
    %v4482 = vpack.c.b16 %v4102, %v4098
    %v4483 = vpack.c.b16 %v4103, %v4099
    %v4484 = vpack.c.b16 %v4104, %v4100
    %v4485 = vpack.c.b16 %v4109, %v4105
    %v4486 = vpack.c.b16 %v4110, %v4106
    %v4487 = vpack.c.b16 %v4111, %v4107
    %v4488 = vpack.c.b16 %v4112, %v4108
    %v4489 = vpack.c.b16 %v4117, %v4113
    %v4490 = vpack.c.b16 %v4118, %v4114
    %v4491 = vpack.c.b16 %v4119, %v4115
    %v4492 = vpack.c.b16 %v4120, %v4116
    %v4493 = vpack.c.b16 %v4125, %v4121
    %v4494 = vpack.c.b16 %v4126, %v4122
    %v4495 = vpack.c.b16 %v4127, %v4123
    %v4496 = vpack.c.b16 %v4128, %v4124
    %v4497 = vpack.c.b16 %v4133, %v4129
    %v4498 = vpack.c.b16 %v4134, %v4130
    %v4499 = vpack.c.b16 %v4135, %v4131
    %v4500 = vpack.c.b16 %v4136, %v4132
    %v4501 = vpack.c.b16 %v4141, %v4137
    %v4502 = vpack.c.b16 %v4142, %v4138
    %v4503 = vpack.c.b16 %v4143, %v4139
    %v4504 = vpack.c.b16 %v4144, %v4140
    %v4505 = vpack.c.b16 %v4149, %v4145
    %v4506 = vpack.c.b16 %v4150, %v4146
    %v4507 = vpack.c.b16 %v4151, %v4147
    %v4508 = vpack.c.b16 %v4152, %v4148
    %v4509 = vpack.c.b16 %v4157, %v4153
    %v4510 = vpack.c.b16 %v4158, %v4154
    %v4511 = vpack.c.b16 %v4159, %v4155
    %v4512 = vpack.c.b16 %v4160, %v4156
    %v4513 = vpack.c.b16 %v4165, %v4161
    %v4514 = vpack.c.b16 %v4166, %v4162
    %v4515 = vpack.c.b16 %v4167, %v4163
    %v4516 = vpack.c.b16 %v4168, %v4164
    %v4517 = vpack.c.b16 %v4173, %v4169
    %v4518 = vpack.c.b16 %v4174, %v4170
    %v4519 = vpack.c.b16 %v4175, %v4171
    %v4520 = vpack.c.b16 %v4176, %v4172
    %v4521 = vpack.c.b16 %v4181, %v4177
    %v4522 = vpack.c.b16 %v4182, %v4178
    %v4523 = vpack.c.b16 %v4183, %v4179
    %v4524 = vpack.c.b16 %v4184, %v4180
    %v4525 = vpack.c.b16 %v4189, %v4185
    %v4526 = vpack.c.b16 %v4190, %v4186
    %v4527 = vpack.c.b16 %v4191, %v4187
    %v4528 = vpack.c.b16 %v4192, %v4188
    %v4529 = vpack.c.b16 %v4197, %v4193
    %v4530 = vpack.c.b16 %v4198, %v4194
    %v4531 = vpack.c.b16 %v4199, %v4195
    %v4532 = vpack.c.b16 %v4200, %v4196
    %v4533 = vpack.c.b16 %v4205, %v4201
    %v4534 = vpack.c.b16 %v4206, %v4202
    %v4535 = vpack.c.b16 %v4207, %v4203
    %v4536 = vpack.c.b16 %v4208, %v4204
    %v4537 = vpack.c.b16 %v4213, %v4209
    %v4538 = vpack.c.b16 %v4214, %v4210
    %v4539 = vpack.c.b16 %v4215, %v4211
    %v4540 = vpack.c.b16 %v4216, %v4212
    %v4541 = vpack.c.b16 %v4221, %v4217
    %v4542 = vpack.c.b16 %v4222, %v4218
    %v4543 = vpack.c.b16 %v4223, %v4219
    %v4544 = vpack.c.b16 %v4224, %v4220
    %v4545 = vpack.c.b16 %v4229, %v4225
    %v4546 = vpack.c.b16 %v4230, %v4226
    %v4547 = vpack.c.b16 %v4231, %v4227
    %v4548 = vpack.c.b16 %v4232, %v4228
    %v4549 = vpack.c.b16 %v4237, %v4233
    %v4550 = vpack.c.b16 %v4238, %v4234
    %v4551 = vpack.c.b16 %v4239, %v4235
    %v4552 = vpack.c.b16 %v4240, %v4236
    %v4553 = vpack.c.b16 %v4245, %v4241
    %v4554 = vpack.c.b16 %v4246, %v4242
    %v4555 = vpack.c.b16 %v4247, %v4243
    %v4556 = vpack.c.b16 %v4248, %v4244
    %v4557 = vpack.c.b16 %v4253, %v4249
    %v4558 = vpack.c.b16 %v4254, %v4250
    %v4559 = vpack.c.b16 %v4255, %v4251
    %v4560 = vpack.c.b16 %v4256, %v4252
    %v4561 = vpack.c.b16 %v4261, %v4257
    %v4562 = vpack.c.b16 %v4262, %v4258
    %v4563 = vpack.c.b16 %v4263, %v4259
    %v4564 = vpack.c.b16 %v4264, %v4260
    %v4565 = vpack.c.b16 %v4269, %v4265
    %v4566 = vpack.c.b16 %v4270, %v4266
    %v4567 = vpack.c.b16 %v4271, %v4267
    %v4568 = vpack.c.b16 %v4272, %v4268
    %v4569 = vpack.c.b16 %v4277, %v4273
    %v4570 = vpack.c.b16 %v4278, %v4274
    %v4571 = vpack.c.b16 %v4279, %v4275
    %v4572 = vpack.c.b16 %v4280, %v4276
    %v4573 = vpack.c.b16 %v4285, %v4281
    %v4574 = vpack.c.b16 %v4286, %v4282
    %v4575 = vpack.c.b16 %v4287, %v4283
    %v4576 = vpack.c.b16 %v4288, %v4284
    %v4577 = vpack.c.b16 %v4293, %v4289
    %v4578 = vpack.c.b16 %v4294, %v4290
    %v4579 = vpack.c.b16 %v4295, %v4291
    %v4580 = vpack.c.b16 %v4296, %v4292
    %v4581 = vpack.c.b16 %v4301, %v4297
    %v4582 = vpack.c.b16 %v4302, %v4298
    %v4583 = vpack.c.b16 %v4303, %v4299
    %v4584 = vpack.c.b16 %v4304, %v4300
    %v4585 = vpack.c.b16 %v4309, %v4305
    %v4586 = vpack.c.b16 %v4310, %v4306
    %v4587 = vpack.c.b16 %v4311, %v4307
    %v4588 = vpack.c.b16 %v4312, %v4308
    %v4589 = vpack.c.b16 %v4317, %v4313
    %v4590 = vpack.c.b16 %v4318, %v4314
    %v4591 = vpack.c.b16 %v4319, %v4315
    %v4592 = vpack.c.b16 %v4320, %v4316
    %v4593 = vpack.c.b16 %v4325, %v4321
    %v4594 = vpack.c.b16 %v4326, %v4322
    %v4595 = vpack.c.b16 %v4327, %v4323
    %v4596 = vpack.c.b16 %v4328, %v4324
    %v4597 = vpack.c.b16 %v4333, %v4329
    %v4598 = vpack.c.b16 %v4334, %v4330
    %v4599 = vpack.c.b16 %v4335, %v4331
    %v4600 = vpack.c.b16 %v4336, %v4332
    %v4601 = vpack.c.b16 %v4341, %v4337
    %v4602 = vpack.c.b16 %v4342, %v4338
    %v4603 = vpack.c.b16 %v4343, %v4339
    %v4604 = vpack.c.b16 %v4344, %v4340
    %v4605 = vpack.c.b16 %v4349, %v4345
    %v4606 = vpack.c.b16 %v4350, %v4346
    %v4607 = vpack.c.b16 %v4351, %v4347
    %v4608 = vpack.c.b16 %v4352, %v4348
    %4865 = vmatprep.subr.bf16.mxu0 %v4354
    %4866 = vmatpush1.bf16.msra.mxu0 %v4353
    %4867 = vmatprep.subr.bf16.mxu0 %v4358
    %4868 = vmatpush1.bf16.msra.mxu0 %v4357
    %4869 = vmatprep.subr.bf16.mxu0 %v4362
    %4870 = vmatpush1.bf16.msra.mxu0 %v4361
    %4871 = vmatprep.subr.bf16.mxu0 %v4366
    %4872 = vmatpush1.bf16.msra.mxu0 %v4365
    %4873 = vmatprep.subr.bf16.mxu0 %v4370
    %4874 = vmatpush1.bf16.msra.mxu0 %v4369
    %4875 = vmatprep.subr.bf16.mxu0 %v4374
    %4876 = vmatpush1.bf16.msra.mxu0 %v4373
    %4877 = vmatprep.subr.bf16.mxu0 %v4378
    %4878 = vmatpush1.bf16.msra.mxu0 %v4377
    %4879 = vmatprep.subr.bf16.mxu0 %v4382
    %4880 = vmatpush1.bf16.msra.mxu0 %v4381
    %4881 = vmatprep.subr.bf16.mxu0 %v4386
    %4882 = vmatpush1.bf16.msra.mxu0 %v4385
    %4883 = vmatprep.subr.bf16.mxu0 %v4390
    %4884 = vmatpush1.bf16.msra.mxu0 %v4389
    %4885 = vmatprep.subr.bf16.mxu0 %v4394
    %4886 = vmatpush1.bf16.msra.mxu0 %v4393
    %4887 = vmatprep.subr.bf16.mxu0 %v4398
    %4888 = vmatpush1.bf16.msra.mxu0 %v4397
    %4889 = vmatprep.subr.bf16.mxu0 %v4402
    %4890 = vmatpush1.bf16.msra.mxu0 %v4401
    %4891 = vmatprep.subr.bf16.mxu0 %v4406
    %4892 = vmatpush1.bf16.msra.mxu0 %v4405
    %4893 = vmatprep.subr.bf16.mxu0 %v4410
    %4894 = vmatpush1.bf16.msra.mxu0 %v4409
    %4895 = vmatprep.subr.bf16.mxu0 %v4414
    %4896 = vmatpush1.bf16.msra.mxu0 %v4413
    %4897 = vmatprep.mubr.bf16.mxu0 %v3300
    %4898 = vmatmul.mubr.bf16.gmra.mrb[0].mxu0 %v3299
    %v4899 = vpop.f32.mrb[0].mxu0
    %v4900 = vadd.f32 %v3568, %v4899
    %v4901 = vpop.f32.mrb[0].mxu0
    %v4902 = vadd.f32 %v3572, %v4901
    %v4903 = vpop.f32.mrb[0].mxu0
    %v4904 = vadd.f32 %v3568, %v4903
    %v4905 = vpop.f32.mrb[0].mxu0
    %v4906 = vadd.f32 %v3572, %v4905
    %4907 = vdwg.mxu0
    %4908 = vmatprep.subr.bf16.mxu0 %v4418
    %4909 = vmatpush1.bf16.msra.mxu0 %v4417
    %4910 = vmatprep.subr.bf16.mxu0 %v4422
    %4911 = vmatpush1.bf16.msra.mxu0 %v4421
    %4912 = vmatprep.subr.bf16.mxu0 %v4426
    %4913 = vmatpush1.bf16.msra.mxu0 %v4425
    %4914 = vmatprep.subr.bf16.mxu0 %v4430
    %4915 = vmatpush1.bf16.msra.mxu0 %v4429
    %4916 = vmatprep.subr.bf16.mxu0 %v4434
    %4917 = vmatpush1.bf16.msra.mxu0 %v4433
    %4918 = vmatprep.subr.bf16.mxu0 %v4438
    %4919 = vmatpush1.bf16.msra.mxu0 %v4437
    %4920 = vmatprep.subr.bf16.mxu0 %v4442
    %4921 = vmatpush1.bf16.msra.mxu0 %v4441
    %4922 = vmatprep.subr.bf16.mxu0 %v4446
    %4923 = vmatpush1.bf16.msra.mxu0 %v4445
    %4924 = vmatprep.subr.bf16.mxu0 %v4450
    %4925 = vmatpush1.bf16.msra.mxu0 %v4449
    %4926 = vmatprep.subr.bf16.mxu0 %v4454
    %4927 = vmatpush1.bf16.msra.mxu0 %v4453
    %4928 = vmatprep.subr.bf16.mxu0 %v4458
    %4929 = vmatpush1.bf16.msra.mxu0 %v4457
    %4930 = vmatprep.subr.bf16.mxu0 %v4462
    %4931 = vmatpush1.bf16.msra.mxu0 %v4461
    %4932 = vmatprep.subr.bf16.mxu0 %v4466
    %4933 = vmatpush1.bf16.msra.mxu0 %v4465
    %4934 = vmatprep.subr.bf16.mxu0 %v4470
    %4935 = vmatpush1.bf16.msra.mxu0 %v4469
    %4936 = vmatprep.subr.bf16.mxu0 %v4474
    %4937 = vmatpush1.bf16.msra.mxu0 %v4473
    %4938 = vmatprep.subr.bf16.mxu0 %v4478
    %4939 = vmatpush1.bf16.msra.mxu0 %v4477
    %4940 = vmatprep.mubr.bf16.mxu0 %v3302
    %4941 = vmatmul.mubr.bf16.gmra.mrb[0].mxu0 %v3301
    %v4942 = vpop.f32.mrb[0].mxu0
    %v4943 = vadd.f32 %v4900, %v4942
    %v4944 = vpop.f32.mrb[0].mxu0
    %v4945 = vadd.f32 %v4902, %v4944
    %v4946 = vpop.f32.mrb[0].mxu0
    %v4947 = vadd.f32 %v4904, %v4946
    %v4948 = vpop.f32.mrb[0].mxu0
    %v4949 = vadd.f32 %v4906, %v4948
    %4950 = vdwg.mxu0
    %4951 = vmatprep.subr.bf16.mxu0 %v4482
    %4952 = vmatpush1.bf16.msra.mxu0 %v4481
    %4953 = vmatprep.subr.bf16.mxu0 %v4486
    %4954 = vmatpush1.bf16.msra.mxu0 %v4485
    %4955 = vmatprep.subr.bf16.mxu0 %v4490
    %4956 = vmatpush1.bf16.msra.mxu0 %v4489
    %4957 = vmatprep.subr.bf16.mxu0 %v4494
    %4958 = vmatpush1.bf16.msra.mxu0 %v4493
    %4959 = vmatprep.subr.bf16.mxu0 %v4498
    %4960 = vmatpush1.bf16.msra.mxu0 %v4497
    %4961 = vmatprep.subr.bf16.mxu0 %v4502
    %4962 = vmatpush1.bf16.msra.mxu0 %v4501
    %4963 = vmatprep.subr.bf16.mxu0 %v4506
    %4964 = vmatpush1.bf16.msra.mxu0 %v4505
    %4965 = vmatprep.subr.bf16.mxu0 %v4510
    %4966 = vmatpush1.bf16.msra.mxu0 %v4509
    %4967 = vmatprep.subr.bf16.mxu0 %v4514
    %4968 = vmatpush1.bf16.msra.mxu0 %v4513
    %4969 = vmatprep.subr.bf16.mxu0 %v4518
    %4970 = vmatpush1.bf16.msra.mxu0 %v4517
    %4971 = vmatprep.subr.bf16.mxu0 %v4522
    %4972 = vmatpush1.bf16.msra.mxu0 %v4521
    %4973 = vmatprep.subr.bf16.mxu0 %v4526
    %4974 = vmatpush1.bf16.msra.mxu0 %v4525
    %4975 = vmatprep.subr.bf16.mxu0 %v4530
    %4976 = vmatpush1.bf16.msra.mxu0 %v4529
    %4977 = vmatprep.subr.bf16.mxu0 %v4534
    %4978 = vmatpush1.bf16.msra.mxu0 %v4533
    %4979 = vmatprep.subr.bf16.mxu0 %v4538
    %4980 = vmatpush1.bf16.msra.mxu0 %v4537
    %4981 = vmatprep.subr.bf16.mxu0 %v4542
    %4982 = vmatpush1.bf16.msra.mxu0 %v4541
    %4983 = vmatprep.mubr.bf16.mxu0 %v3304
    %4984 = vmatmul.mubr.bf16.gmra.mrb[0].mxu0 %v3303
    %v4985 = vpop.f32.mrb[0].mxu0
    %v4986 = vadd.f32 %v4943, %v4985
    %v4987 = vpop.f32.mrb[0].mxu0
    %v4988 = vadd.f32 %v4945, %v4987
    %v4989 = vpop.f32.mrb[0].mxu0
    %v4990 = vadd.f32 %v4947, %v4989
    %v4991 = vpop.f32.mrb[0].mxu0
    %v4992 = vadd.f32 %v4949, %v4991
    %4993 = vdwg.mxu0
    %4994 = vmatprep.subr.bf16.mxu0 %v4546
    %4995 = vmatpush1.bf16.msra.mxu0 %v4545
    %4996 = vmatprep.subr.bf16.mxu0 %v4550
    %4997 = vmatpush1.bf16.msra.mxu0 %v4549
    %4998 = vmatprep.subr.bf16.mxu0 %v4554
    %4999 = vmatpush1.bf16.msra.mxu0 %v4553
    %5000 = vmatprep.subr.bf16.mxu0 %v4558
    %5001 = vmatpush1.bf16.msra.mxu0 %v4557
    %5002 = vmatprep.subr.bf16.mxu0 %v4562
    %5003 = vmatpush1.bf16.msra.mxu0 %v4561
    %5004 = vmatprep.subr.bf16.mxu0 %v4566
    %5005 = vmatpush1.bf16.msra.mxu0 %v4565
    %5006 = vmatprep.subr.bf16.mxu0 %v4570
    %5007 = vmatpush1.bf16.msra.mxu0 %v4569
    %5008 = vmatprep.subr.bf16.mxu0 %v4574
    %5009 = vmatpush1.bf16.msra.mxu0 %v4573
    %5010 = vmatprep.subr.bf16.mxu0 %v4578
    %5011 = vmatpush1.bf16.msra.mxu0 %v4577
    %5012 = vmatprep.subr.bf16.mxu0 %v4582
    %5013 = vmatpush1.bf16.msra.mxu0 %v4581
    %5014 = vmatprep.subr.bf16.mxu0 %v4586
    %5015 = vmatpush1.bf16.msra.mxu0 %v4585
    %5016 = vmatprep.subr.bf16.mxu0 %v4590
    %5017 = vmatpush1.bf16.msra.mxu0 %v4589
    %5018 = vmatprep.subr.bf16.mxu0 %v4594
    %5019 = vmatpush1.bf16.msra.mxu0 %v4593
    %5020 = vmatprep.subr.bf16.mxu0 %v4598
    %5021 = vmatpush1.bf16.msra.mxu0 %v4597
    %5022 = vmatprep.subr.bf16.mxu0 %v4602
    %5023 = vmatpush1.bf16.msra.mxu0 %v4601
    %5024 = vmatprep.subr.bf16.mxu0 %v4606
    %5025 = vmatpush1.bf16.msra.mxu0 %v4605
    %5026 = vmatprep.mubr.bf16.mxu0 %v3306
    %5027 = vmatmul.mubr.bf16.gmra.mrb[0].mxu0 %v3305
    %v5028 = vpop.f32.mrb[0].mxu0
    %v5029 = vadd.f32 %v4986, %v5028
    %v5030 = vpop.f32.mrb[0].mxu0
    %v5031 = vadd.f32 %v4988, %v5030
    %v5032 = vpop.f32.mrb[0].mxu0
    %v5033 = vadd.f32 %v4990, %v5032
    %v5034 = vpop.f32.mrb[0].mxu0
    %v5035 = vadd.f32 %v4992, %v5034
    %5036 = vdwg.mxu0
    %5037 = vmatprep.subr.bf16.mxu0 %v4356
    %5038 = vmatpush1.bf16.msra.mxu0 %v4355
    %5039 = vmatprep.subr.bf16.mxu0 %v4360
    %5040 = vmatpush1.bf16.msra.mxu0 %v4359
    %5041 = vmatprep.subr.bf16.mxu0 %v4364
    %5042 = vmatpush1.bf16.msra.mxu0 %v4363
    %5043 = vmatprep.subr.bf16.mxu0 %v4368
    %5044 = vmatpush1.bf16.msra.mxu0 %v4367
    %5045 = vmatprep.subr.bf16.mxu0 %v4372
    %5046 = vmatpush1.bf16.msra.mxu0 %v4371
    %5047 = vmatprep.subr.bf16.mxu0 %v4376
    %5048 = vmatpush1.bf16.msra.mxu0 %v4375
    %5049 = vmatprep.subr.bf16.mxu0 %v4380
    %5050 = vmatpush1.bf16.msra.mxu0 %v4379
    %5051 = vmatprep.subr.bf16.mxu0 %v4384
    %5052 = vmatpush1.bf16.msra.mxu0 %v4383
    %5053 = vmatprep.subr.bf16.mxu0 %v4388
    %5054 = vmatpush1.bf16.msra.mxu0 %v4387
    %5055 = vmatprep.subr.bf16.mxu0 %v4392
    %5056 = vmatpush1.bf16.msra.mxu0 %v4391
    %5057 = vmatprep.subr.bf16.mxu0 %v4396
    %5058 = vmatpush1.bf16.msra.mxu0 %v4395
    %5059 = vmatprep.subr.bf16.mxu0 %v4400
    %5060 = vmatpush1.bf16.msra.mxu0 %v4399
    %5061 = vmatprep.subr.bf16.mxu0 %v4404
    %5062 = vmatpush1.bf16.msra.mxu0 %v4403
    %5063 = vmatprep.subr.bf16.mxu0 %v4408
    %5064 = vmatpush1.bf16.msra.mxu0 %v4407
    %5065 = vmatprep.subr.bf16.mxu0 %v4412
    %5066 = vmatpush1.bf16.msra.mxu0 %v4411
    %5067 = vmatprep.subr.bf16.mxu0 %v4416
    %5068 = vmatpush1.bf16.msra.mxu0 %v4415
    %5069 = vmatprep.mubr.bf16.mxu0 %v3300
    %5070 = vmatmul.mubr.bf16.gmra.mrb[0].mxu0 %v3299
    %v5071 = vpop.f32.mrb[0].mxu0
    %v5072 = vadd.f32 %v3576, %v5071
    %v5073 = vpop.f32.mrb[0].mxu0
    %v5074 = vadd.f32 %v3580, %v5073
    %v5075 = vpop.f32.mrb[0].mxu0
    %v5076 = vadd.f32 %v3576, %v5075
    %v5077 = vpop.f32.mrb[0].mxu0
    %v5078 = vadd.f32 %v3580, %v5077
    %5079 = vdwg.mxu0
    %5080 = vmatprep.subr.bf16.mxu0 %v4420
    %5081 = vmatpush1.bf16.msra.mxu0 %v4419
    %5082 = vmatprep.subr.bf16.mxu0 %v4424
    %5083 = vmatpush1.bf16.msra.mxu0 %v4423
    %5084 = vmatprep.subr.bf16.mxu0 %v4428
    %5085 = vmatpush1.bf16.msra.mxu0 %v4427
    %5086 = vmatprep.subr.bf16.mxu0 %v4432
    %5087 = vmatpush1.bf16.msra.mxu0 %v4431
    %5088 = vmatprep.subr.bf16.mxu0 %v4436
    %5089 = vmatpush1.bf16.msra.mxu0 %v4435
    %5090 = vmatprep.subr.bf16.mxu0 %v4440
    %5091 = vmatpush1.bf16.msra.mxu0 %v4439
    %5092 = vmatprep.subr.bf16.mxu0 %v4444
    %5093 = vmatpush1.bf16.msra.mxu0 %v4443
    %5094 = vmatprep.subr.bf16.mxu0 %v4448
    %5095 = vmatpush1.bf16.msra.mxu0 %v4447
    %5096 = vmatprep.subr.bf16.mxu0 %v4452
    %5097 = vmatpush1.bf16.msra.mxu0 %v4451
    %5098 = vmatprep.subr.bf16.mxu0 %v4456
    %5099 = vmatpush1.bf16.msra.mxu0 %v4455
    %5100 = vmatprep.subr.bf16.mxu0 %v4460
    %5101 = vmatpush1.bf16.msra.mxu0 %v4459
    %5102 = vmatprep.subr.bf16.mxu0 %v4464
    %5103 = vmatpush1.bf16.msra.mxu0 %v4463
    %5104 = vmatprep.subr.bf16.mxu0 %v4468
    %5105 = vmatpush1.bf16.msra.mxu0 %v4467
    %5106 = vmatprep.subr.bf16.mxu0 %v4472
    %5107 = vmatpush1.bf16.msra.mxu0 %v4471
    %5108 = vmatprep.subr.bf16.mxu0 %v4476
    %5109 = vmatpush1.bf16.msra.mxu0 %v4475
    %5110 = vmatprep.subr.bf16.mxu0 %v4480
    %5111 = vmatpush1.bf16.msra.mxu0 %v4479
    %5112 = vmatprep.mubr.bf16.mxu0 %v3302
    %5113 = vmatmul.mubr.bf16.gmra.mrb[0].mxu0 %v3301
    %v5114 = vpop.f32.mrb[0].mxu0
    %v5115 = vadd.f32 %v5072, %v5114
    %v5116 = vpop.f32.mrb[0].mxu0
    %v5117 = vadd.f32 %v5074, %v5116
    %v5118 = vpop.f32.mrb[0].mxu0
    %v5119 = vadd.f32 %v5076, %v5118
    %v5120 = vpop.f32.mrb[0].mxu0
    %v5121 = vadd.f32 %v5078, %v5120
    %5122 = vdwg.mxu0
    %5123 = vmatprep.subr.bf16.mxu0 %v4484
    %5124 = vmatpush1.bf16.msra.mxu0 %v4483
    %5125 = vmatprep.subr.bf16.mxu0 %v4488
    %5126 = vmatpush1.bf16.msra.mxu0 %v4487
    %5127 = vmatprep.subr.bf16.mxu0 %v4492
    %5128 = vmatpush1.bf16.msra.mxu0 %v4491
    %5129 = vmatprep.subr.bf16.mxu0 %v4496
    %5130 = vmatpush1.bf16.msra.mxu0 %v4495
    %5131 = vmatprep.subr.bf16.mxu0 %v4500
    %5132 = vmatpush1.bf16.msra.mxu0 %v4499
    %5133 = vmatprep.subr.bf16.mxu0 %v4504
    %5134 = vmatpush1.bf16.msra.mxu0 %v4503
    %5135 = vmatprep.subr.bf16.mxu0 %v4508
    %5136 = vmatpush1.bf16.msra.mxu0 %v4507
    %5137 = vmatprep.subr.bf16.mxu0 %v4512
    %5138 = vmatpush1.bf16.msra.mxu0 %v4511
    %5139 = vmatprep.subr.bf16.mxu0 %v4516
    %5140 = vmatpush1.bf16.msra.mxu0 %v4515
    %5141 = vmatprep.subr.bf16.mxu0 %v4520
    %5142 = vmatpush1.bf16.msra.mxu0 %v4519
    %5143 = vmatprep.subr.bf16.mxu0 %v4524
    %5144 = vmatpush1.bf16.msra.mxu0 %v4523
    %5145 = vmatprep.subr.bf16.mxu0 %v4528
    %5146 = vmatpush1.bf16.msra.mxu0 %v4527
    %5147 = vmatprep.subr.bf16.mxu0 %v4532
    %5148 = vmatpush1.bf16.msra.mxu0 %v4531
    %5149 = vmatprep.subr.bf16.mxu0 %v4536
    %5150 = vmatpush1.bf16.msra.mxu0 %v4535
    %5151 = vmatprep.subr.bf16.mxu0 %v4540
    %5152 = vmatpush1.bf16.msra.mxu0 %v4539
    %5153 = vmatprep.subr.bf16.mxu0 %v4544
    %5154 = vmatpush1.bf16.msra.mxu0 %v4543
    %5155 = vmatprep.mubr.bf16.mxu0 %v3304
    %5156 = vmatmul.mubr.bf16.gmra.mrb[0].mxu0 %v3303
    %v5157 = vpop.f32.mrb[0].mxu0
    %v5158 = vadd.f32 %v5115, %v5157
    %v5159 = vpop.f32.mrb[0].mxu0
    %v5160 = vadd.f32 %v5117, %v5159
    %v5161 = vpop.f32.mrb[0].mxu0
    %v5162 = vadd.f32 %v5119, %v5161
    %v5163 = vpop.f32.mrb[0].mxu0
    %v5164 = vadd.f32 %v5121, %v5163
    %5165 = vdwg.mxu0
    %5166 = vmatprep.subr.bf16.mxu0 %v4548
    %5167 = vmatpush1.bf16.msra.mxu0 %v4547
    %5168 = vmatprep.subr.bf16.mxu0 %v4552
    %5169 = vmatpush1.bf16.msra.mxu0 %v4551
    %5170 = vmatprep.subr.bf16.mxu0 %v4556
    %5171 = vmatpush1.bf16.msra.mxu0 %v4555
    %5172 = vmatprep.subr.bf16.mxu0 %v4560
    %5173 = vmatpush1.bf16.msra.mxu0 %v4559
    %5174 = vmatprep.subr.bf16.mxu0 %v4564
    %5175 = vmatpush1.bf16.msra.mxu0 %v4563
    %5176 = vmatprep.subr.bf16.mxu0 %v4568
    %5177 = vmatpush1.bf16.msra.mxu0 %v4567
    %5178 = vmatprep.subr.bf16.mxu0 %v4572
    %5179 = vmatpush1.bf16.msra.mxu0 %v4571
    %5180 = vmatprep.subr.bf16.mxu0 %v4576
    %5181 = vmatpush1.bf16.msra.mxu0 %v4575
    %5182 = vmatprep.subr.bf16.mxu0 %v4580
    %5183 = vmatpush1.bf16.msra.mxu0 %v4579
    %5184 = vmatprep.subr.bf16.mxu0 %v4584
    %5185 = vmatpush1.bf16.msra.mxu0 %v4583
    %5186 = vmatprep.subr.bf16.mxu0 %v4588
    %5187 = vmatpush1.bf16.msra.mxu0 %v4587
    %5188 = vmatprep.subr.bf16.mxu0 %v4592
    %5189 = vmatpush1.bf16.msra.mxu0 %v4591
    %5190 = vmatprep.subr.bf16.mxu0 %v4596
    %5191 = vmatpush1.bf16.msra.mxu0 %v4595
    %5192 = vmatprep.subr.bf16.mxu0 %v4600
    %5193 = vmatpush1.bf16.msra.mxu0 %v4599
    %5194 = vmatprep.subr.bf16.mxu0 %v4604
    %5195 = vmatpush1.bf16.msra.mxu0 %v4603
    %5196 = vmatprep.subr.bf16.mxu0 %v4608
    %5197 = vmatpush1.bf16.msra.mxu0 %v4607
    %5198 = vmatprep.mubr.bf16.mxu0 %v3306
    %5199 = vmatmul.mubr.bf16.gmra.mrb[0].mxu0 %v3305
    %v5200 = vpop.f32.mrb[0].mxu0
    %v5201 = vadd.f32 %v5158, %v5200
    %v5202 = vpop.f32.mrb[0].mxu0
    %v5203 = vadd.f32 %v5160, %v5202
    %v5204 = vpop.f32.mrb[0].mxu0
    %v5205 = vadd.f32 %v5162, %v5204
    %v5206 = vpop.f32.mrb[0].mxu0
    %v5207 = vadd.f32 %v5164, %v5206
    %5208 = vdwg.mxu0
    %vm5209 = vcmp.gt.f32.partialorder %v5029, 0.0
    %vm5210 = vcmp.gt.f32.partialorder %v5031, 0.0
    %vm5211 = vcmp.gt.f32.partialorder %v5201, 0.0
    %vm5212 = vcmp.gt.f32.partialorder %v5203, 0.0
    %vm5213 = vcmp.gt.f32.partialorder %v5033, 0.0
    %vm5214 = vcmp.gt.f32.partialorder %v5035, 0.0
    %vm5215 = vcmp.gt.f32.partialorder %v5205, 0.0
    %vm5216 = vcmp.gt.f32.partialorder %v5207, 0.0
    %v5217 = vmul.f32 %v5029, 0.2
    %v5218 = vmul.f32 %v5031, 0.2
    %v5219 = vmul.f32 %v5201, 0.2
    %v5220 = vmul.f32 %v5203, 0.2
    %v5221 = vmul.f32 %v5033, 0.2
    %v5222 = vmul.f32 %v5035, 0.2
    %v5223 = vmul.f32 %v5205, 0.2
    %v5224 = vmul.f32 %v5207, 0.2
    %v5225 = vsel %vm5209, %v5029, %v5217
    %v5226 = vsel %vm5210, %v5031, %v5218
    %v5227 = vsel %vm5211, %v5201, %v5219
    %v5228 = vsel %vm5212, %v5203, %v5220
    %v5229 = vsel %vm5213, %v5033, %v5221
    %v5230 = vsel %vm5214, %v5035, %v5222
    %v5231 = vsel %vm5215, %v5205, %v5223
    %v5232 = vsel %vm5216, %v5207, %v5224
    %v5233 = vpack.c.bf16 %v5229, %v5225
    %v5234 = vpack.c.bf16 %v5230, %v5226
    %v5235 = vpack.c.bf16 %v5231, %v5227
    %v5236 = vpack.c.bf16 %v5232, %v5228
    %v5237 = vld [vmem:[#allocation10] sm:$0xff]
    %v5238 = vld [vmem:[#allocation10 + $0x8] sm:$0xff]
    %v5239 = vld [vmem:[#allocation10 + $0x10] sm:$0xff]
    %v5240 = vld [vmem:[#allocation10 + $0x18] sm:$0xff]
    %v5241 = vld [vmem:[#allocation10 + $0x20] sm:$0xff]
    %v5242 = vld [vmem:[#allocation10 + $0x28] sm:$0xff]
    %v5243 = vld [vmem:[#allocation10 + $0x30] sm:$0xff]
    %v5244 = vld [vmem:[#allocation10 + $0x38] sm:$0xff]
    %v5245 = vld [vmem:[#allocation10 + $0x40] sm:$0xff]
    %v5246 = vld [vmem:[#allocation10 + $0x48] sm:$0xff]
    %v5247 = vld [vmem:[#allocation10 + $0x50] sm:$0xff]
    %v5248 = vld [vmem:[#allocation10 + $0x58] sm:$0xff]
    %v5249 = vld [vmem:[#allocation10 + $0x60] sm:$0xff]
    %v5250 = vld [vmem:[#allocation10 + $0x68] sm:$0xff]
    %v5251 = vld [vmem:[#allocation10 + $0x70] sm:$0xff]
    %v5252 = vld [vmem:[#allocation10 + $0x78] sm:$0xff]
    %v5253 = vld [vmem:[#allocation10 + $0x80] sm:$0xff]
    %v5254 = vld [vmem:[#allocation10 + $0x88] sm:$0xff]
    %v5255 = vld [vmem:[#allocation10 + $0x90] sm:$0xff]
    %v5256 = vld [vmem:[#allocation10 + $0x98] sm:$0xff]
    %v5257 = vld [vmem:[#allocation10 + $0xa0] sm:$0xff]
    %v5258 = vld [vmem:[#allocation10 + $0xa8] sm:$0xff]
    %v5259 = vld [vmem:[#allocation10 + $0xb0] sm:$0xff]
    %v5260 = vld [vmem:[#allocation10 + $0xb8] sm:$0xff]
    %v5261 = vld [vmem:[#allocation10 + $0xc0] sm:$0xff]
    %v5262 = vld [vmem:[#allocation10 + $0xc8] sm:$0xff]
    %v5263 = vld [vmem:[#allocation10 + $0xd0] sm:$0xff]
    %v5264 = vld [vmem:[#allocation10 + $0xd8] sm:$0xff]
    %v5265 = vld [vmem:[#allocation10 + $0xe0] sm:$0xff]
    %v5266 = vld [vmem:[#allocation10 + $0xe8] sm:$0xff]
    %v5267 = vld [vmem:[#allocation10 + $0xf0] sm:$0xff]
    %v5268 = vld [vmem:[#allocation10 + $0xf8] sm:$0xff]
    %v5269 = vld [vmem:[#allocation10 + $0x100] sm:$0xff]
    %v5270 = vld [vmem:[#allocation10 + $0x108] sm:$0xff]
    %v5271 = vld [vmem:[#allocation10 + $0x110] sm:$0xff]
    %v5272 = vld [vmem:[#allocation10 + $0x118] sm:$0xff]
    %v5273 = vld [vmem:[#allocation10 + $0x120] sm:$0xff]
    %v5274 = vld [vmem:[#allocation10 + $0x128] sm:$0xff]
    %v5275 = vld [vmem:[#allocation10 + $0x130] sm:$0xff]
    %v5276 = vld [vmem:[#allocation10 + $0x138] sm:$0xff]
    %v5277 = vld [vmem:[#allocation10 + $0x140] sm:$0xff]
    %v5278 = vld [vmem:[#allocation10 + $0x148] sm:$0xff]
    %v5279 = vld [vmem:[#allocation10 + $0x150] sm:$0xff]
    %v5280 = vld [vmem:[#allocation10 + $0x158] sm:$0xff]
    %v5281 = vld [vmem:[#allocation10 + $0x160] sm:$0xff]
    %v5282 = vld [vmem:[#allocation10 + $0x168] sm:$0xff]
    %v5283 = vld [vmem:[#allocation10 + $0x170] sm:$0xff]
    %v5284 = vld [vmem:[#allocation10 + $0x178] sm:$0xff]
    %v5285 = vld [vmem:[#allocation10 + $0x180] sm:$0xff]
    %v5286 = vld [vmem:[#allocation10 + $0x188] sm:$0xff]
    %v5287 = vld [vmem:[#allocation10 + $0x190] sm:$0xff]
    %v5288 = vld [vmem:[#allocation10 + $0x198] sm:$0xff]
    %v5289 = vld [vmem:[#allocation10 + $0x1a0] sm:$0xff]
    %v5290 = vld [vmem:[#allocation10 + $0x1a8] sm:$0xff]
    %v5291 = vld [vmem:[#allocation10 + $0x1b0] sm:$0xff]
    %v5292 = vld [vmem:[#allocation10 + $0x1b8] sm:$0xff]
    %v5293 = vld [vmem:[#allocation10 + $0x1c0] sm:$0xff]
    %v5294 = vld [vmem:[#allocation10 + $0x1c8] sm:$0xff]
    %v5295 = vld [vmem:[#allocation10 + $0x1d0] sm:$0xff]
    %v5296 = vld [vmem:[#allocation10 + $0x1d8] sm:$0xff]
    %v5297 = vld [vmem:[#allocation10 + $0x1e0] sm:$0xff]
    %v5298 = vld [vmem:[#allocation10 + $0x1e8] sm:$0xff]
    %v5299 = vld [vmem:[#allocation10 + $0x1f0] sm:$0xff]
    %v5300 = vld [vmem:[#allocation10 + $0x1f8] sm:$0xff]
    %v5301 = vld [vmem:[#allocation11] sm:$0x3]
    %v5303 = vlaneseq
    %v5304 = vshrl.u32 %v5303, 7
    %v5305 = vsub.s32 0, %v5304
    %v5306 = vrot.slane %v5301, %v5305
    %v5307 = vlaneseq
    %v5308 = vshrl.u32 %v5307, 7
    %v5309 = vsub.s32 1, %v5308
    %v5310 = vrot.slane %v5301, %v5309
    %v5377 = vunpack.c.l.b16 %v5237
    %v5378 = vunpack.c.h.b16 %v5237
    %v5379 = vunpack.c.l.b16 %v5238
    %v5380 = vunpack.c.h.b16 %v5238
    %v5381 = vunpack.c.l.b16 %v5239
    %v5382 = vunpack.c.h.b16 %v5239
    %v5383 = vunpack.c.l.b16 %v5240
    %v5384 = vunpack.c.h.b16 %v5240
    %v5385 = vunpack.c.l.b16 %v5241
    %v5386 = vunpack.c.h.b16 %v5241
    %v5387 = vunpack.c.l.b16 %v5242
    %v5388 = vunpack.c.h.b16 %v5242
    %v5389 = vunpack.c.l.b16 %v5243
    %v5390 = vunpack.c.h.b16 %v5243
    %v5391 = vunpack.c.l.b16 %v5244
    %v5392 = vunpack.c.h.b16 %v5244
    %v5393 = vunpack.c.l.b16 %v5245
    %v5394 = vunpack.c.h.b16 %v5245
    %v5395 = vunpack.c.l.b16 %v5246
    %v5396 = vunpack.c.h.b16 %v5246
    %v5397 = vunpack.c.l.b16 %v5247
    %v5398 = vunpack.c.h.b16 %v5247
    %v5399 = vunpack.c.l.b16 %v5248
    %v5400 = vunpack.c.h.b16 %v5248
    %v5401 = vunpack.c.l.b16 %v5249
    %v5402 = vunpack.c.h.b16 %v5249
    %v5403 = vunpack.c.l.b16 %v5250
    %v5404 = vunpack.c.h.b16 %v5250
    %v5405 = vunpack.c.l.b16 %v5251
    %v5406 = vunpack.c.h.b16 %v5251
    %v5407 = vunpack.c.l.b16 %v5252
    %v5408 = vunpack.c.h.b16 %v5252
    %v5409 = vunpack.c.l.b16 %v5253
    %v5410 = vunpack.c.h.b16 %v5253
    %v5411 = vunpack.c.l.b16 %v5254
    %v5412 = vunpack.c.h.b16 %v5254
    %v5413 = vunpack.c.l.b16 %v5255
    %v5414 = vunpack.c.h.b16 %v5255
    %v5415 = vunpack.c.l.b16 %v5256
    %v5416 = vunpack.c.h.b16 %v5256
    %v5417 = vunpack.c.l.b16 %v5257
    %v5418 = vunpack.c.h.b16 %v5257
    %v5419 = vunpack.c.l.b16 %v5258
    %v5420 = vunpack.c.h.b16 %v5258
    %v5421 = vunpack.c.l.b16 %v5259
    %v5422 = vunpack.c.h.b16 %v5259
    %v5423 = vunpack.c.l.b16 %v5260
    %v5424 = vunpack.c.h.b16 %v5260
    %v5425 = vunpack.c.l.b16 %v5261
    %v5426 = vunpack.c.h.b16 %v5261
    %v5427 = vunpack.c.l.b16 %v5262
    %v5428 = vunpack.c.h.b16 %v5262
    %v5429 = vunpack.c.l.b16 %v5263
    %v5430 = vunpack.c.h.b16 %v5263
    %v5431 = vunpack.c.l.b16 %v5264
    %v5432 = vunpack.c.h.b16 %v5264
    %v5433 = vunpack.c.l.b16 %v5265
    %v5434 = vunpack.c.h.b16 %v5265
    %v5435 = vunpack.c.l.b16 %v5266
    %v5436 = vunpack.c.h.b16 %v5266
    %v5437 = vunpack.c.l.b16 %v5267
    %v5438 = vunpack.c.h.b16 %v5267
    %v5439 = vunpack.c.l.b16 %v5268
    %v5440 = vunpack.c.h.b16 %v5268
    %v5441 = vunpack.c.l.b16 %v5269
    %v5442 = vunpack.c.h.b16 %v5269
    %v5443 = vunpack.c.l.b16 %v5270
    %v5444 = vunpack.c.h.b16 %v5270
    %v5445 = vunpack.c.l.b16 %v5271
    %v5446 = vunpack.c.h.b16 %v5271
    %v5447 = vunpack.c.l.b16 %v5272
    %v5448 = vunpack.c.h.b16 %v5272
    %v5449 = vunpack.c.l.b16 %v5273
    %v5450 = vunpack.c.h.b16 %v5273
    %v5451 = vunpack.c.l.b16 %v5274
    %v5452 = vunpack.c.h.b16 %v5274
    %v5453 = vunpack.c.l.b16 %v5275
    %v5454 = vunpack.c.h.b16 %v5275
    %v5455 = vunpack.c.l.b16 %v5276
    %v5456 = vunpack.c.h.b16 %v5276
    %v5457 = vunpack.c.l.b16 %v5277
    %v5458 = vunpack.c.h.b16 %v5277
    %v5459 = vunpack.c.l.b16 %v5278
    %v5460 = vunpack.c.h.b16 %v5278
    %v5461 = vunpack.c.l.b16 %v5279
    %v5462 = vunpack.c.h.b16 %v5279
    %v5463 = vunpack.c.l.b16 %v5280
    %v5464 = vunpack.c.h.b16 %v5280
    %v5465 = vunpack.c.l.b16 %v5281
    %v5466 = vunpack.c.h.b16 %v5281
    %v5467 = vunpack.c.l.b16 %v5282
    %v5468 = vunpack.c.h.b16 %v5282
    %v5469 = vunpack.c.l.b16 %v5283
    %v5470 = vunpack.c.h.b16 %v5283
    %v5471 = vunpack.c.l.b16 %v5284
    %v5472 = vunpack.c.h.b16 %v5284
    %v5473 = vunpack.c.l.b16 %v5285
    %v5474 = vunpack.c.h.b16 %v5285
    %v5475 = vunpack.c.l.b16 %v5286
    %v5476 = vunpack.c.h.b16 %v5286
    %v5477 = vunpack.c.l.b16 %v5287
    %v5478 = vunpack.c.h.b16 %v5287
    %v5479 = vunpack.c.l.b16 %v5288
    %v5480 = vunpack.c.h.b16 %v5288
    %v5481 = vunpack.c.l.b16 %v5289
    %v5482 = vunpack.c.h.b16 %v5289
    %v5483 = vunpack.c.l.b16 %v5290
    %v5484 = vunpack.c.h.b16 %v5290
    %v5485 = vunpack.c.l.b16 %v5291
    %v5486 = vunpack.c.h.b16 %v5291
    %v5487 = vunpack.c.l.b16 %v5292
    %v5488 = vunpack.c.h.b16 %v5292
    %v5489 = vunpack.c.l.b16 %v5293
    %v5490 = vunpack.c.h.b16 %v5293
    %v5491 = vunpack.c.l.b16 %v5294
    %v5492 = vunpack.c.h.b16 %v5294
    %v5493 = vunpack.c.l.b16 %v5295
    %v5494 = vunpack.c.h.b16 %v5295
    %v5495 = vunpack.c.l.b16 %v5296
    %v5496 = vunpack.c.h.b16 %v5296
    %v5497 = vunpack.c.l.b16 %v5297
    %v5498 = vunpack.c.h.b16 %v5297
    %v5499 = vunpack.c.l.b16 %v5298
    %v5500 = vunpack.c.h.b16 %v5298
    %v5501 = vunpack.c.l.b16 %v5299
    %v5502 = vunpack.c.h.b16 %v5299
    %v5503 = vunpack.c.l.b16 %v5300
    %v5504 = vunpack.c.h.b16 %v5300
    %v5505 = vpack.c.b16 %v5379, %v5377
    %v5506 = vpack.c.b16 %v5380, %v5378
    %v5507 = vpack.c.b16 %v5383, %v5381
    %v5508 = vpack.c.b16 %v5384, %v5382
    %v5509 = vpack.c.b16 %v5387, %v5385
    %v5510 = vpack.c.b16 %v5388, %v5386
    %v5511 = vpack.c.b16 %v5391, %v5389
    %v5512 = vpack.c.b16 %v5392, %v5390
    %v5513 = vpack.c.b16 %v5395, %v5393
    %v5514 = vpack.c.b16 %v5396, %v5394
    %v5515 = vpack.c.b16 %v5399, %v5397
    %v5516 = vpack.c.b16 %v5400, %v5398
    %v5517 = vpack.c.b16 %v5403, %v5401
    %v5518 = vpack.c.b16 %v5404, %v5402
    %v5519 = vpack.c.b16 %v5407, %v5405
    %v5520 = vpack.c.b16 %v5408, %v5406
    %v5521 = vpack.c.b16 %v5411, %v5409
    %v5522 = vpack.c.b16 %v5412, %v5410
    %v5523 = vpack.c.b16 %v5415, %v5413
    %v5524 = vpack.c.b16 %v5416, %v5414
    %v5525 = vpack.c.b16 %v5419, %v5417
    %v5526 = vpack.c.b16 %v5420, %v5418
    %v5527 = vpack.c.b16 %v5423, %v5421
    %v5528 = vpack.c.b16 %v5424, %v5422
    %v5529 = vpack.c.b16 %v5427, %v5425
    %v5530 = vpack.c.b16 %v5428, %v5426
    %v5531 = vpack.c.b16 %v5431, %v5429
    %v5532 = vpack.c.b16 %v5432, %v5430
    %v5533 = vpack.c.b16 %v5435, %v5433
    %v5534 = vpack.c.b16 %v5436, %v5434
    %v5535 = vpack.c.b16 %v5439, %v5437
    %v5536 = vpack.c.b16 %v5440, %v5438
    %v5537 = vpack.c.b16 %v5443, %v5441
    %v5538 = vpack.c.b16 %v5444, %v5442
    %v5539 = vpack.c.b16 %v5447, %v5445
    %v5540 = vpack.c.b16 %v5448, %v5446
    %v5541 = vpack.c.b16 %v5451, %v5449
    %v5542 = vpack.c.b16 %v5452, %v5450
    %v5543 = vpack.c.b16 %v5455, %v5453
    %v5544 = vpack.c.b16 %v5456, %v5454
    %v5545 = vpack.c.b16 %v5459, %v5457
    %v5546 = vpack.c.b16 %v5460, %v5458
    %v5547 = vpack.c.b16 %v5463, %v5461
    %v5548 = vpack.c.b16 %v5464, %v5462
    %v5549 = vpack.c.b16 %v5467, %v5465
    %v5550 = vpack.c.b16 %v5468, %v5466
    %v5551 = vpack.c.b16 %v5471, %v5469
    %v5552 = vpack.c.b16 %v5472, %v5470
    %v5553 = vpack.c.b16 %v5475, %v5473
    %v5554 = vpack.c.b16 %v5476, %v5474
    %v5555 = vpack.c.b16 %v5479, %v5477
    %v5556 = vpack.c.b16 %v5480, %v5478
    %v5557 = vpack.c.b16 %v5483, %v5481
    %v5558 = vpack.c.b16 %v5484, %v5482
    %v5559 = vpack.c.b16 %v5487, %v5485
    %v5560 = vpack.c.b16 %v5488, %v5486
    %v5561 = vpack.c.b16 %v5491, %v5489
    %v5562 = vpack.c.b16 %v5492, %v5490
    %v5563 = vpack.c.b16 %v5495, %v5493
    %v5564 = vpack.c.b16 %v5496, %v5494
    %v5565 = vpack.c.b16 %v5499, %v5497
    %v5566 = vpack.c.b16 %v5500, %v5498
    %v5567 = vpack.c.b16 %v5503, %v5501
    %v5568 = vpack.c.b16 %v5504, %v5502
    %5633 = vmatprep.subr.bf16.mxu0 %v5506
    %5634 = vmatpush1.bf16.msra.mxu0 %v5505
    %5635 = vmatprep.subr.bf16.mxu0 %v5508
    %5636 = vmatpush1.bf16.msra.mxu0 %v5507
    %5637 = vmatprep.subr.bf16.mxu0 %v5510
    %5638 = vmatpush1.bf16.msra.mxu0 %v5509
    %5639 = vmatprep.subr.bf16.mxu0 %v5512
    %5640 = vmatpush1.bf16.msra.mxu0 %v5511
    %5641 = vmatprep.subr.bf16.mxu0 %v5514
    %5642 = vmatpush1.bf16.msra.mxu0 %v5513
    %5643 = vmatprep.subr.bf16.mxu0 %v5516
    %5644 = vmatpush1.bf16.msra.mxu0 %v5515
    %5645 = vmatprep.subr.bf16.mxu0 %v5518
    %5646 = vmatpush1.bf16.msra.mxu0 %v5517
    %5647 = vmatprep.subr.bf16.mxu0 %v5520
    %5648 = vmatpush1.bf16.msra.mxu0 %v5519
    %5649 = vmatprep.subr.bf16.mxu0 %v5522
    %5650 = vmatpush1.bf16.msra.mxu0 %v5521
    %5651 = vmatprep.subr.bf16.mxu0 %v5524
    %5652 = vmatpush1.bf16.msra.mxu0 %v5523
    %5653 = vmatprep.subr.bf16.mxu0 %v5526
    %5654 = vmatpush1.bf16.msra.mxu0 %v5525
    %5655 = vmatprep.subr.bf16.mxu0 %v5528
    %5656 = vmatpush1.bf16.msra.mxu0 %v5527
    %5657 = vmatprep.subr.bf16.mxu0 %v5530
    %5658 = vmatpush1.bf16.msra.mxu0 %v5529
    %5659 = vmatprep.subr.bf16.mxu0 %v5532
    %5660 = vmatpush1.bf16.msra.mxu0 %v5531
    %5661 = vmatprep.subr.bf16.mxu0 %v5534
    %5662 = vmatpush1.bf16.msra.mxu0 %v5533
    %5663 = vmatprep.subr.bf16.mxu0 %v5536
    %5664 = vmatpush1.bf16.msra.mxu0 %v5535
    %5665 = vmatprep.mubr.bf16.mxu0 %v5234
    %5666 = vmatmul.mubr.bf16.gmra.mrb[0].mxu0 %v5233
    %v5667 = vpop.f32.mrb[0].mxu0
    %v5668 = vadd.f32 %v5306, %v5667
    %v5669 = vpop.f32.mrb[0].mxu0
    %v5670 = vadd.f32 %v5310, %v5669
    %v5671 = vpop.f32.mrb[0].mxu0
    %v5672 = vadd.f32 %v5306, %v5671
    %v5673 = vpop.f32.mrb[0].mxu0
    %v5674 = vadd.f32 %v5310, %v5673
    %5675 = vdwg.mxu0
    %5676 = vmatprep.subr.bf16.mxu0 %v5538
    %5677 = vmatpush1.bf16.msra.mxu0 %v5537
    %5678 = vmatprep.subr.bf16.mxu0 %v5540
    %5679 = vmatpush1.bf16.msra.mxu0 %v5539
    %5680 = vmatprep.subr.bf16.mxu0 %v5542
    %5681 = vmatpush1.bf16.msra.mxu0 %v5541
    %5682 = vmatprep.subr.bf16.mxu0 %v5544
    %5683 = vmatpush1.bf16.msra.mxu0 %v5543
    %5684 = vmatprep.subr.bf16.mxu0 %v5546
    %5685 = vmatpush1.bf16.msra.mxu0 %v5545
    %5686 = vmatprep.subr.bf16.mxu0 %v5548
    %5687 = vmatpush1.bf16.msra.mxu0 %v5547
    %5688 = vmatprep.subr.bf16.mxu0 %v5550
    %5689 = vmatpush1.bf16.msra.mxu0 %v5549
    %5690 = vmatprep.subr.bf16.mxu0 %v5552
    %5691 = vmatpush1.bf16.msra.mxu0 %v5551
    %5692 = vmatprep.subr.bf16.mxu0 %v5554
    %5693 = vmatpush1.bf16.msra.mxu0 %v5553
    %5694 = vmatprep.subr.bf16.mxu0 %v5556
    %5695 = vmatpush1.bf16.msra.mxu0 %v5555
    %5696 = vmatprep.subr.bf16.mxu0 %v5558
    %5697 = vmatpush1.bf16.msra.mxu0 %v5557
    %5698 = vmatprep.subr.bf16.mxu0 %v5560
    %5699 = vmatpush1.bf16.msra.mxu0 %v5559
    %5700 = vmatprep.subr.bf16.mxu0 %v5562
    %5701 = vmatpush1.bf16.msra.mxu0 %v5561
    %5702 = vmatprep.subr.bf16.mxu0 %v5564
    %5703 = vmatpush1.bf16.msra.mxu0 %v5563
    %5704 = vmatprep.subr.bf16.mxu0 %v5566
    %5705 = vmatpush1.bf16.msra.mxu0 %v5565
    %5706 = vmatprep.subr.bf16.mxu0 %v5568
    %5707 = vmatpush1.bf16.msra.mxu0 %v5567
    %5708 = vmatprep.mubr.bf16.mxu0 %v5236
    %5709 = vmatmul.mubr.bf16.gmra.mrb[0].mxu0 %v5235
    %v5710 = vpop.f32.mrb[0].mxu0
    %v5711 = vadd.f32 %v5668, %v5710
    %v5712 = vpop.f32.mrb[0].mxu0
    %v5713 = vadd.f32 %v5670, %v5712
    %v5714 = vpop.f32.mrb[0].mxu0
    %v5715 = vadd.f32 %v5672, %v5714
    %v5716 = vpop.f32.mrb[0].mxu0
    %v5717 = vadd.f32 %v5674, %v5716
    %5718 = vdwg.mxu0
    %vm5719 = vcmp.gt.f32.partialorder %v5711, 0.0
    %vm5720 = vcmp.gt.f32.partialorder %v5713, 0.0
    %vm5721 = vcmp.gt.f32.partialorder %v5715, 0.0
    %vm5722 = vcmp.gt.f32.partialorder %v5717, 0.0
    %v5723 = vmul.f32 %v5711, 0.2
    %v5724 = vmul.f32 %v5713, 0.2
    %v5725 = vmul.f32 %v5715, 0.2
    %v5726 = vmul.f32 %v5717, 0.2
    %v5727 = vsel %vm5719, %v5711, %v5723
    %v5728 = vsel %vm5720, %v5713, %v5724
    %v5729 = vsel %vm5721, %v5715, %v5725
    %v5730 = vsel %vm5722, %v5717, %v5726
    %v5731 = vld [vmem:[#allocation13] sm:$0x3]
    %v5733 = vlaneseq
    %v5734 = vshrl.u32 %v5733, 7
    %v5735 = vsub.s32 0, %v5734
    %v5736 = vrot.slane %v5731, %v5735
    %v5737 = vlaneseq
    %v5738 = vshrl.u32 %v5737, 7
    %v5739 = vsub.s32 1, %v5738
    %v5740 = vrot.slane %v5731, %v5739
    %v5743 = vmul.f32 %v5727, %v5736
    %v5744 = vmul.f32 %v5728, %v5740
    %v5745 = vmul.f32 %v5729, %v5736
    %v5746 = vmul.f32 %v5730, %v5740
    %v5747 = vadd.f32 %v5743, %v5744
    %5748 = vadd.xlane.f32.xlu0 %v5747
    %v5749 = vpop.xlane.xlu0 %5748
    %v5750 = vadd.f32 %v5745, %v5746
    %5751 = vadd.xlane.f32.xlu0 %v5750
    %v5752 = vpop.xlane.xlu0 %5751
    %v5753 = vld [vmem:[#allocation2] sm:$0x1]
    %v5755 = vlaneseq
    %v5756 = vshrl.u32 %v5755, 7
    %v5757 = vsub.s32 0, %v5756
    %v5758 = vrot.slane %v5753, %v5757
    %v5760 = vadd.f32 %v5749, %v5758
    %v5761 = vadd.f32 %v5752, %v5758
    %5762 = vxpose.xlu0.b32.start [1/16] %v5760, 128
    %5763 = vxpose.xlu0.b32.cont [2/16] %v5761, 128
    %5764 = vxpose.xlu0.b32.cont [3/16] 0.0, 128
    %5765 = vxpose.xlu0.b32.cont [4/16] 0.0, 128
    %5766 = vxpose.xlu0.b32.cont [5/16] 0.0, 128
    %5767 = vxpose.xlu0.b32.cont [6/16] 0.0, 128
    %5768 = vxpose.xlu0.b32.cont [7/16] 0.0, 128
    %5769 = vxpose.xlu0.b32.cont [8/16] 0.0, 128
    %5770 = vxpose.xlu0.b32.cont [9/16] 0.0, 128
    %5771 = vxpose.xlu0.b32.cont [10/16] 0.0, 128
    %5772 = vxpose.xlu0.b32.cont [11/16] 0.0, 128
    %5773 = vxpose.xlu0.b32.cont [12/16] 0.0, 128
    %5774 = vxpose.xlu0.b32.cont [13/16] 0.0, 128
    %5775 = vxpose.xlu0.b32.cont [14/16] 0.0, 128
    %5776 = vxpose.xlu0.b32.cont [15/16] 0.0, 128
    %5777 = vxpose.xlu0.b32.end [16/16] 0.0, 128
    %v5778 = vpop.trf.xlu0
    %v5779 = vpop.trf.xlu0
    %v5780 = vpop.trf.xlu0
    %v5781 = vpop.trf.xlu0
    %v5782 = vpop.trf.xlu0
    %v5783 = vpop.trf.xlu0
    %v5784 = vpop.trf.xlu0
    %v5785 = vpop.trf.xlu0
    %v5786 = vpop.trf.xlu0
    %v5787 = vpop.trf.xlu0
    %v5788 = vpop.trf.xlu0
    %v5789 = vpop.trf.xlu0
    %v5790 = vpop.trf.xlu0
    %v5791 = vpop.trf.xlu0
    %v5792 = vpop.trf.xlu0
    %v5793 = vpop.trf.xlu0
    %v5794 = vsub.f32 0.0, %v5778
    %v5795 = vmul.f32 %v5794, 1.442695
    %v5796 = vpow.pop %v5795
    %v5797 = vadd.f32 %v5796, 1.0
    %v5798 = vrcp.pop %v5797
    %vm5799 = vcmask 122880
    %5800 = vst.msk [vmem:[%s9] sm:$0x1] %vm5799, %v5798
    // Predicated region
    $region66: #{_forward.1} parent=1 // pred_check
      _
    $region67: #{_forward.1} parent=1 // pred_check_branch
      %5802 = sbr.rel (0) target = $region69
    $region68: #{_forward.1} parent=1 // pred_region
      _
    $region69: #{_forward.1} parent=1 // pred_fallthru
      _
    // Predicated region
    $region70: #{_forward.1} parent=1 // pred_check
      _
    $region71: #{_forward.1} parent=1 // pred_check_branch
      %5804 = sbr.rel (0) target = $region73
    $region72: #{_forward.1} parent=1 // pred_region
      _
    $region73: #{_forward.1} parent=1 // pred_fallthru
      _
    %5805 = vsyncpa [#allocation4], 1
    %5806 = vsyncpa [#allocation6], 1
    %5807 = vsyncpa [#allocation9], 1
    %5808 = vsyncpa [#allocation12], 1

// kernel: _forward.1
$region0: #{_forward.1}
  #allocation0 [shape = 'u32[]', space=smem, size = 0x4, offset = 0x4, fixed_abs, tag = 'smem constant byte address 0x4 - core index']
  #allocation1 [shape = 'u32[144,128]{1,0:T(1,128)}', space=vmem, size = 0x12000, scoped, tag = 'internal scratch']
  #allocation2 [shape = 'f32[1,1]{1,0:T(1,128)S(1)}', space=vmem, size = 0x200, scoped, tag = 'scoped memory for _forward.1']
  %s0 = inlined_call_operand.vmem [shape: bf16[16,784], index: 0, kind: input, shape index: {}]
  %s1 = inlined_call_operand.hbm [shape: bf16[784,1024], index: 1, kind: input, shape index: {}]
  %s2 = inlined_call_operand.hbm [shape: f32[1,1024], index: 2, kind: input, shape index: {}]
  %s3 = inlined_call_operand.hbm [shape: bf16[1024,512], index: 3, kind: input, shape index: {}]
  %s4 = inlined_call_operand.hbm [shape: f32[1,512], index: 4, kind: input, shape index: {}]
  %s5 = inlined_call_operand.hbm [shape: bf16[512,256], index: 5, kind: input, shape index: {}]
  %s6 = inlined_call_operand.hbm [shape: f32[1,256], index: 6, kind: input, shape index: {}]
  %s7 = inlined_call_operand.hbm [shape: f32[1,256], index: 7, kind: input, shape index: {}]
  %s8 = inlined_call_operand.<no memory space> [shape: f32[1,1], index: 8, kind: input, shape index: {}]
  %s9 = inlined_call_operand.vmem [shape: f32[16,1], index: 9, kind: output, shape index: {}]
  %s10 = sld [smem:[#allocation0]]
  $region74: #{_forward.1} parent=0
    _
  %s12 = ssub.s32 1, %s10
  %s13 = scalar_select 0, %s12, %s10
  %v14 = vstv %s8
  %15 = vst [vmem:[#allocation2] sm:$0x1] %v14
  $region1: #{_forward.1} parent=0
    #allocation3 [shape = 'u8[1605632]{0}', space=vmem, size = 0x188000, scoped, tag = 'input window, operand 1, single buffered']
    #allocation4 [shape = 's32[1]{0}', space=sflag, size = 0x4, scoped, tag = 'scoped memory for _forward.1']
    #allocation5 [shape = 'u8[4096]{0}', space=vmem, size = 0x1000, scoped, tag = 'input window, operand 2, single buffered']
    #allocation6 [shape = 's32[1]{0}', space=sflag, size = 0x4, scoped, tag = 'scoped memory for _forward.1']
    #allocation7 [shape = 'u8[1048576]{0}', space=vmem, size = 0x100000, scoped, tag = 'input window, operand 3, single buffered']
    #allocation8 [shape = 'u8[2048]{0}', space=vmem, size = 0x800, scoped, tag = 'input window, operand 4, single buffered']
    #allocation9 [shape = 's32[1]{0}', space=sflag, size = 0x4, scoped, tag = 'scoped memory for _forward.1']
    #allocation10 [shape = 'u8[262144]{0}', space=vmem, size = 0x40000, scoped, tag = 'input window, operand 5, single buffered']
    #allocation11 [shape = 'u8[1024]{0}', space=vmem, size = 0x400, scoped, tag = 'input window, operand 6, single buffered']
    #allocation12 [shape = 's32[1]{0}', space=sflag, size = 0x4, scoped, tag = 'scoped memory for _forward.1']
    #allocation13 [shape = 'u8[1024]{0}', space=vmem, size = 0x400, scoped, tag = 'input window, operand 7, single buffered']
    %16 = vsyncpa [#allocation4], 0
    %17 = vsyncpa [#allocation6], 0
    %18 = vsyncpa [#allocation9], 0
    %19 = vsyncpa [#allocation12], 0
    // Predicated region
    $region2: #{_forward.1} parent=1 // pred_check
      _
    $region3: #{_forward.1} parent=1 // pred_check_branch
      %21 = sbr.rel (0) target = $region5
    $region4: #{_forward.1} parent=1 // pred_region
      _
    $region5: #{_forward.1} parent=1 // pred_fallthru
      _
    // Predicated region
    $region6: #{_forward.1} parent=1 // pred_check
      _
    $region7: #{_forward.1} parent=1 // pred_check_branch
      %23 = sbr.rel (0) target = $region9
    $region8: #{_forward.1} parent=1 // pred_region
      %s25 = ssub.s32 50176, 50176
      %26 = vsyncadd [#allocation4], %s25
      %s27 = sshll.u32 [#allocation3], 4
      %s28 = int_to_ptr.vmem [resolvable:$true] %s27
      %33 = dma.hbm_to_vmem [thread:$0]  %s1, 50176, %s28, [#allocation4], 512, 512, 32
    $region9: #{_forward.1} parent=1 // pred_fallthru
      _
    // Predicated region
    $region10: #{_forward.1} parent=1 // pred_check
      _
    $region11: #{_forward.1} parent=1 // pred_check_branch
      %35 = sbr.rel (0) target = $region13
    $region12: #{_forward.1} parent=1 // pred_region
      %s37 = ssub.s32 128, 128
      %38 = vsyncadd [#allocation6], %s37
      %s40 = sshll.u32 [#allocation5], 4
      %s41 = int_to_ptr.vmem [resolvable:$true] %s40
      %43 = dma.hbm_to_vmem [thread:$0]  %s2, 128, %s41, [#allocation6]
    $region13: #{_forward.1} parent=1 // pred_fallthru
      _
    // Predicated region
    $region14: #{_forward.1} parent=1 // pred_check
      _
    $region15: #{_forward.1} parent=1 // pred_check_branch
      %45 = sbr.rel (0) target = $region17
    $region16: #{_forward.1} parent=1 // pred_region
      %s47 = ssub.s32 32768, 32768
      %48 = vsyncadd [#allocation6], %s47
      %s49 = sshll.u32 [#allocation7], 4
      %s50 = int_to_ptr.vmem [resolvable:$true] %s49
      %55 = dma.hbm_to_vmem [thread:$0]  %s3, 32768, %s50, [#allocation6], 256, 256, 16
    $region17: #{_forward.1} parent=1 // pred_fallthru
      _
    // Predicated region
    $region18: #{_forward.1} parent=1 // pred_check
      _
    $region19: #{_forward.1} parent=1 // pred_check_branch
      %57 = sbr.rel (0) target = $region21
    $region20: #{_forward.1} parent=1 // pred_region
      %s59 = ssub.s32 64, 64
      %60 = vsyncadd [#allocation9], %s59
      %s62 = sshll.u32 [#allocation8], 4
      %s63 = int_to_ptr.vmem [resolvable:$true] %s62
      %65 = dma.hbm_to_vmem [thread:$0]  %s4, 64, %s63, [#allocation9]
    $region21: #{_forward.1} parent=1 // pred_fallthru
      _
    // Predicated region
    $region22: #{_forward.1} parent=1 // pred_check
      _
    $region23: #{_forward.1} parent=1 // pred_check_branch
      %67 = sbr.rel (0) target = $region25
    $region24: #{_forward.1} parent=1 // pred_region
      %s69 = ssub.s32 8192, 8192
      %70 = vsyncadd [#allocation9], %s69
      %s71 = sshll.u32 [#allocation10], 4
      %s72 = int_to_ptr.vmem [resolvable:$true] %s71
      %77 = dma.hbm_to_vmem [thread:$0]  %s5, 8192, %s72, [#allocation9], 128, 128, 8
    $region25: #{_forward.1} parent=1 // pred_fallthru
      _
    // Predicated region
    $region26: #{_forward.1} parent=1 // pred_check
      _
    $region27: #{_forward.1} parent=1 // pred_check_branch
      %79 = sbr.rel (0) target = $region29
    $region28: #{_forward.1} parent=1 // pred_region
      %s81 = ssub.s32 32, 32
      %82 = vsyncadd [#allocation12], %s81
      %s84 = sshll.u32 [#allocation11], 4
      %s85 = int_to_ptr.vmem [resolvable:$true] %s84
      %87 = dma.hbm_to_vmem [thread:$0]  %s6, 32, %s85, [#allocation12]
    $region29: #{_forward.1} parent=1 // pred_fallthru
      _
    // Predicated region
    $region30: #{_forward.1} parent=1 // pred_check
      _
    $region31: #{_forward.1} parent=1 // pred_check_branch
      %89 = sbr.rel (0) target = $region33
    $region32: #{_forward.1} parent=1 // pred_region
      %s91 = ssub.s32 32, 32
      %92 = vsyncadd [#allocation12], %s91
      %s94 = sshll.u32 [#allocation13], 4
      %s95 = int_to_ptr.vmem [resolvable:$true] %s94
      %97 = dma.hbm_to_vmem [thread:$0]  %s7, 32, %s95, [#allocation12]
    $region33: #{_forward.1} parent=1 // pred_fallthru
      _
    // Predicated region
    $region34: #{_forward.1} parent=1 // pred_check
      _
    $region35: #{_forward.1} parent=1 // pred_check_branch
      %99 = sbr.rel (0) target = $region37
    $region36: #{_forward.1} parent=1 // pred_region
      _
    $region37: #{_forward.1} parent=1 // pred_fallthru
      _
    // Predicated region
    $region38: #{_forward.1} parent=1 // pred_check
      _
    $region39: #{_forward.1} parent=1 // pred_check_branch
      %101 = sbr.rel (0) target = $region41
    $region40: #{_forward.1} parent=1 // pred_region
      %102 = dma.done [#allocation4], 50176
    $region41: #{_forward.1} parent=1 // pred_fallthru
      _
    // Predicated region
    $region42: #{_forward.1} parent=1 // pred_check
      _
    $region43: #{_forward.1} parent=1 // pred_check_branch
      %104 = sbr.rel (0) target = $region45
    $region44: #{_forward.1} parent=1 // pred_region
      %105 = dma.done [#allocation6], 128
    $region45: #{_forward.1} parent=1 // pred_fallthru
      _
    // Predicated region
    $region46: #{_forward.1} parent=1 // pred_check
      _
    $region47: #{_forward.1} parent=1 // pred_check_branch
      %107 = sbr.rel (0) target = $region49
    $region48: #{_forward.1} parent=1 // pred_region
      %108 = dma.done [#allocation6], 32768
    $region49: #{_forward.1} parent=1 // pred_fallthru
      _
    // Predicated region
    $region50: #{_forward.1} parent=1 // pred_check
      _
    $region51: #{_forward.1} parent=1 // pred_check_branch
      %110 = sbr.rel (0) target = $region53
    $region52: #{_forward.1} parent=1 // pred_region
      %111 = dma.done [#allocation9], 64
    $region53: #{_forward.1} parent=1 // pred_fallthru
      _
    // Predicated region
    $region54: #{_forward.1} parent=1 // pred_check
      _
    $region55: #{_forward.1} parent=1 // pred_check_branch
      %113 = sbr.rel (0) target = $region57
    $region56: #{_forward.1} parent=1 // pred_region
      %114 = dma.done [#allocation9], 8192
    $region57: #{_forward.1} parent=1 // pred_fallthru
      _
    // Predicated region
    $region58: #{_forward.1} parent=1 // pred_check
      _
    $region59: #{_forward.1} parent=1 // pred_check_branch
      %116 = sbr.rel (0) target = $region61
    $region60: #{_forward.1} parent=1 // pred_region
      %117 = dma.done [#allocation12], 32
    $region61: #{_forward.1} parent=1 // pred_fallthru
      _
    // Predicated region
    $region62: #{_forward.1} parent=1 // pred_check
      _
    $region63: #{_forward.1} parent=1 // pred_check_branch
      %119 = sbr.rel (0) target = $region65
    $region64: #{_forward.1} parent=1 // pred_region
      %120 = dma.done [#allocation12], 32
    $region65: #{_forward.1} parent=1 // pred_fallthru
      _
    %v122 = vld [vmem:[%s0] sm:$0xff]
    %v123 = vld [vmem:[%s0 + $0x8] sm:$0xff]
    %v124 = vld [vmem:[%s0 + $0x10] sm:$0xff]
    %v125 = vld [vmem:[%s0 + $0x18] sm:$0xf]
    %v126 = vld [vmem:[%s0 + $0x1c] sm:$0xff]
    %v127 = vld [vmem:[%s0 + $0x24] sm:$0xff]
    %v128 = vld [vmem:[%s0 + $0x2c] sm:$0xff]
    %v129 = vld [vmem:[%s0 + $0x34] sm:$0xf]
    %v130 = vld [vmem:[#allocation3] sm:$0xff]
    %v131 = vld [vmem:[#allocation3 + $0x8] sm:$0xff]
    %v132 = vld [vmem:[#allocation3 + $0x10] sm:$0xff]
    %v133 = vld [vmem:[#allocation3 + $0x18] sm:$0xff]
    %v134 = vld [vmem:[#allocation3 + $0x20] sm:$0xff]
    %v135 = vld [vmem:[#allocation3 + $0x28] sm:$0xff]
    %v136 = vld [vmem:[#allocation3 + $0x30] sm:$0xff]
    %v137 = vld [vmem:[#allocation3 + $0x38] sm:$0xff]
    %v138 = vld [vmem:[#allocation3 + $0x40] sm:$0xff]
    %v139 = vld [vmem:[#allocation3 + $0x48] sm:$0xff]
    %v140 = vld [vmem:[#allocation3 + $0x50] sm:$0xff]
    %v141 = vld [vmem:[#allocation3 + $0x58] sm:$0xff]
    %v142 = vld [vmem:[#allocation3 + $0x60] sm:$0xff]
    %v143 = vld [vmem:[#allocation3 + $0x68] sm:$0xff]
    %v144 = vld [vmem:[#allocation3 + $0x70] sm:$0xff]
    %v145 = vld [vmem:[#allocation3 + $0x78] sm:$0xff]
    %v146 = vld [vmem:[#allocation3 + $0x80] sm:$0xff]
    %v147 = vld [vmem:[#allocation3 + $0x88] sm:$0xff]
    %v148 = vld [vmem:[#allocation3 + $0x90] sm:$0xff]
    %v149 = vld [vmem:[#allocation3 + $0x98] sm:$0xff]
    %v150 = vld [vmem:[#allocation3 + $0xa0] sm:$0xff]
    %v151 = vld [vmem:[#allocation3 + $0xa8] sm:$0xff]
    %v152 = vld [vmem:[#allocation3 + $0xb0] sm:$0xff]
    %v153 = vld [vmem:[#allocation3 + $0xb8] sm:$0xff]
    %v154 = vld [vmem:[#allocation3 + $0xc0] sm:$0xff]
    %v155 = vld [vmem:[#allocation3 + $0xc8] sm:$0xff]
    %v156 = vld [vmem:[#allocation3 + $0xd0] sm:$0xff]
    %v157 = vld [vmem:[#allocation3 + $0xd8] sm:$0xff]
    %v158 = vld [vmem:[#allocation3 + $0xe0] sm:$0xff]
    %v159 = vld [vmem:[#allocation3 + $0xe8] sm:$0xff]
    %v160 = vld [vmem:[#allocation3 + $0xf0] sm:$0xff]
    %v161 = vld [vmem:[#allocation3 + $0xf8] sm:$0xff]
    %v162 = vld [vmem:[#allocation3 + $0x100] sm:$0xff]
    %v163 = vld [vmem:[#allocation3 + $0x108] sm:$0xff]
    %v164 = vld [vmem:[#allocation3 + $0x110] sm:$0xff]
    %v165 = vld [vmem:[#allocation3 + $0x118] sm:$0xff]
    %v166 = vld [vmem:[#allocation3 + $0x120] sm:$0xff]
    %v167 = vld [vmem:[#allocation3 + $0x128] sm:$0xff]
    %v168 = vld [vmem:[#allocation3 + $0x130] sm:$0xff]
    %v169 = vld [vmem:[#allocation3 + $0x138] sm:$0xff]
    %v170 = vld [vmem:[#allocation3 + $0x140] sm:$0xff]
    %v171 = vld [vmem:[#allocation3 + $0x148] sm:$0xff]
    %v172 = vld [vmem:[#allocation3 + $0x150] sm:$0xff]
    %v173 = vld [vmem:[#allocation3 + $0x158] sm:$0xff]
    %v174 = vld [vmem:[#allocation3 + $0x160] sm:$0xff]
    %v175 = vld [vmem:[#allocation3 + $0x168] sm:$0xff]
    %v176 = vld [vmem:[#allocation3 + $0x170] sm:$0xff]
    %v177 = vld [vmem:[#allocation3 + $0x178] sm:$0xff]
    %v178 = vld [vmem:[#allocation3 + $0x180] sm:$0xff]
    %v179 = vld [vmem:[#allocation3 + $0x188] sm:$0xff]
    %v180 = vld [vmem:[#allocation3 + $0x190] sm:$0xff]
    %v181 = vld [vmem:[#allocation3 + $0x198] sm:$0xff]
    %v182 = vld [vmem:[#allocation3 + $0x1a0] sm:$0xff]
    %v183 = vld [vmem:[#allocation3 + $0x1a8] sm:$0xff]
    %v184 = vld [vmem:[#allocation3 + $0x1b0] sm:$0xff]
    %v185 = vld [vmem:[#allocation3 + $0x1b8] sm:$0xff]
    %v186 = vld [vmem:[#allocation3 + $0x1c0] sm:$0xff]
    %v187 = vld [vmem:[#allocation3 + $0x1c8] sm:$0xff]
    %v188 = vld [vmem:[#allocation3 + $0x1d0] sm:$0xff]
    %v189 = vld [vmem:[#allocation3 + $0x1d8] sm:$0xff]
    %v190 = vld [vmem:[#allocation3 + $0x1e0] sm:$0xff]
    %v191 = vld [vmem:[#allocation3 + $0x1e8] sm:$0xff]
    %v192 = vld [vmem:[#allocation3 + $0x1f0] sm:$0xff]
    %v193 = vld [vmem:[#allocation3 + $0x1f8] sm:$0xff]
    %v194 = vld [vmem:[#allocation3 + $0x200] sm:$0xff]
    %v195 = vld [vmem:[#allocation3 + $0x208] sm:$0xff]
    %v196 = vld [vmem:[#allocation3 + $0x210] sm:$0xff]
    %v197 = vld [vmem:[#allocation3 + $0x218] sm:$0xff]
    %v198 = vld [vmem:[#allocation3 + $0x220] sm:$0xff]
    %v199 = vld [vmem:[#allocation3 + $0x228] sm:$0xff]
    %v200 = vld [vmem:[#allocation3 + $0x230] sm:$0xff]
    %v201 = vld [vmem:[#allocation3 + $0x238] sm:$0xff]
    %v202 = vld [vmem:[#allocation3 + $0x240] sm:$0xff]
    %v203 = vld [vmem:[#allocation3 + $0x248] sm:$0xff]
    %v204 = vld [vmem:[#allocation3 + $0x250] sm:$0xff]
    %v205 = vld [vmem:[#allocation3 + $0x258] sm:$0xff]
    %v206 = vld [vmem:[#allocation3 + $0x260] sm:$0xff]
    %v207 = vld [vmem:[#allocation3 + $0x268] sm:$0xff]
    %v208 = vld [vmem:[#allocation3 + $0x270] sm:$0xff]
    %v209 = vld [vmem:[#allocation3 + $0x278] sm:$0xff]
    %v210 = vld [vmem:[#allocation3 + $0x280] sm:$0xff]
    %v211 = vld [vmem:[#allocation3 + $0x288] sm:$0xff]
    %v212 = vld [vmem:[#allocation3 + $0x290] sm:$0xff]
    %v213 = vld [vmem:[#allocation3 + $0x298] sm:$0xff]
    %v214 = vld [vmem:[#allocation3 + $0x2a0] sm:$0xff]
    %v215 = vld [vmem:[#allocation3 + $0x2a8] sm:$0xff]
    %v216 = vld [vmem:[#allocation3 + $0x2b0] sm:$0xff]
    %v217 = vld [vmem:[#allocation3 + $0x2b8] sm:$0xff]
    %v218 = vld [vmem:[#allocation3 + $0x2c0] sm:$0xff]
    %v219 = vld [vmem:[#allocation3 + $0x2c8] sm:$0xff]
    %v220 = vld [vmem:[#allocation3 + $0x2d0] sm:$0xff]
    %v221 = vld [vmem:[#allocation3 + $0x2d8] sm:$0xff]
    %v222 = vld [vmem:[#allocation3 + $0x2e0] sm:$0xff]
    %v223 = vld [vmem:[#allocation3 + $0x2e8] sm:$0xff]
    %v224 = vld [vmem:[#allocation3 + $0x2f0] sm:$0xff]
    %v225 = vld [vmem:[#allocation3 + $0x2f8] sm:$0xff]
    %v226 = vld [vmem:[#allocation3 + $0x300] sm:$0xff]
    %v227 = vld [vmem:[#allocation3 + $0x308] sm:$0xff]
    %v228 = vld [vmem:[#allocation3 + $0x310] sm:$0xff]
    %v229 = vld [vmem:[#allocation3 + $0x318] sm:$0xff]
    %v230 = vld [vmem:[#allocation3 + $0x320] sm:$0xff]
    %v231 = vld [vmem:[#allocation3 + $0x328] sm:$0xff]
    %v232 = vld [vmem:[#allocation3 + $0x330] sm:$0xff]
    %v233 = vld [vmem:[#allocation3 + $0x338] sm:$0xff]
    %v234 = vld [vmem:[#allocation3 + $0x340] sm:$0xff]
    %v235 = vld [vmem:[#allocation3 + $0x348] sm:$0xff]
    %v236 = vld [vmem:[#allocation3 + $0x350] sm:$0xff]
    %v237 = vld [vmem:[#allocation3 + $0x358] sm:$0xff]
    %v238 = vld [vmem:[#allocation3 + $0x360] sm:$0xff]
    %v239 = vld [vmem:[#allocation3 + $0x368] sm:$0xff]
    %v240 = vld [vmem:[#allocation3 + $0x370] sm:$0xff]
    %v241 = vld [vmem:[#allocation3 + $0x378] sm:$0xff]
    %v242 = vld [vmem:[#allocation3 + $0x380] sm:$0xff]
    %v243 = vld [vmem:[#allocation3 + $0x388] sm:$0xff]
    %v244 = vld [vmem:[#allocation3 + $0x390] sm:$0xff]
    %v245 = vld [vmem:[#allocation3 + $0x398] sm:$0xff]
    %v246 = vld [vmem:[#allocation3 + $0x3a0] sm:$0xff]
    %v247 = vld [vmem:[#allocation3 + $0x3a8] sm:$0xff]
    %v248 = vld [vmem:[#allocation3 + $0x3b0] sm:$0xff]
    %v249 = vld [vmem:[#allocation3 + $0x3b8] sm:$0xff]
    %v250 = vld [vmem:[#allocation3 + $0x3c0] sm:$0xff]
    %v251 = vld [vmem:[#allocation3 + $0x3c8] sm:$0xff]
    %v252 = vld [vmem:[#allocation3 + $0x3d0] sm:$0xff]
    %v253 = vld [vmem:[#allocation3 + $0x3d8] sm:$0xff]
    %v254 = vld [vmem:[#allocation3 + $0x3e0] sm:$0xff]
    %v255 = vld [vmem:[#allocation3 + $0x3e8] sm:$0xff]
    %v256 = vld [vmem:[#allocation3 + $0x3f0] sm:$0xff]
    %v257 = vld [vmem:[#allocation3 + $0x3f8] sm:$0xff]
    %v258 = vld [vmem:[#allocation3 + $0x400] sm:$0xff]
    %v259 = vld [vmem:[#allocation3 + $0x408] sm:$0xff]
    %v260 = vld [vmem:[#allocation3 + $0x410] sm:$0xff]
    %v261 = vld [vmem:[#allocation3 + $0x418] sm:$0xff]
    %v262 = vld [vmem:[#allocation3 + $0x420] sm:$0xff]
    %v263 = vld [vmem:[#allocation3 + $0x428] sm:$0xff]
    %v264 = vld [vmem:[#allocation3 + $0x430] sm:$0xff]
    %v265 = vld [vmem:[#allocation3 + $0x438] sm:$0xff]
    %v266 = vld [vmem:[#allocation3 + $0x440] sm:$0xff]
    %v267 = vld [vmem:[#allocation3 + $0x448] sm:$0xff]
    %v268 = vld [vmem:[#allocation3 + $0x450] sm:$0xff]
    %v269 = vld [vmem:[#allocation3 + $0x458] sm:$0xff]
    %v270 = vld [vmem:[#allocation3 + $0x460] sm:$0xff]
    %v271 = vld [vmem:[#allocation3 + $0x468] sm:$0xff]
    %v272 = vld [vmem:[#allocation3 + $0x470] sm:$0xff]
    %v273 = vld [vmem:[#allocation3 + $0x478] sm:$0xff]
    %v274 = vld [vmem:[#allocation3 + $0x480] sm:$0xff]
    %v275 = vld [vmem:[#allocation3 + $0x488] sm:$0xff]
    %v276 = vld [vmem:[#allocation3 + $0x490] sm:$0xff]
    %v277 = vld [vmem:[#allocation3 + $0x498] sm:$0xff]
    %v278 = vld [vmem:[#allocation3 + $0x4a0] sm:$0xff]
    %v279 = vld [vmem:[#allocation3 + $0x4a8] sm:$0xff]
    %v280 = vld [vmem:[#allocation3 + $0x4b0] sm:$0xff]
    %v281 = vld [vmem:[#allocation3 + $0x4b8] sm:$0xff]
    %v282 = vld [vmem:[#allocation3 + $0x4c0] sm:$0xff]
    %v283 = vld [vmem:[#allocation3 + $0x4c8] sm:$0xff]
    %v284 = vld [vmem:[#allocation3 + $0x4d0] sm:$0xff]
    %v285 = vld [vmem:[#allocation3 + $0x4d8] sm:$0xff]
    %v286 = vld [vmem:[#allocation3 + $0x4e0] sm:$0xff]
    %v287 = vld [vmem:[#allocation3 + $0x4e8] sm:$0xff]
    %v288 = vld [vmem:[#allocation3 + $0x4f0] sm:$0xff]
    %v289 = vld [vmem:[#allocation3 + $0x4f8] sm:$0xff]
    %v290 = vld [vmem:[#allocation3 + $0x500] sm:$0xff]
    %v291 = vld [vmem:[#allocation3 + $0x508] sm:$0xff]
    %v292 = vld [vmem:[#allocation3 + $0x510] sm:$0xff]
    %v293 = vld [vmem:[#allocation3 + $0x518] sm:$0xff]
    %v294 = vld [vmem:[#allocation3 + $0x520] sm:$0xff]
    %v295 = vld [vmem:[#allocation3 + $0x528] sm:$0xff]
    %v296 = vld [vmem:[#allocation3 + $0x530] sm:$0xff]
    %v297 = vld [vmem:[#allocation3 + $0x538] sm:$0xff]
    %v298 = vld [vmem:[#allocation3 + $0x540] sm:$0xff]
    %v299 = vld [vmem:[#allocation3 + $0x548] sm:$0xff]
    %v300 = vld [vmem:[#allocation3 + $0x550] sm:$0xff]
    %v301 = vld [vmem:[#allocation3 + $0x558] sm:$0xff]
    %v302 = vld [vmem:[#allocation3 + $0x560] sm:$0xff]
    %v303 = vld [vmem:[#allocation3 + $0x568] sm:$0xff]
    %v304 = vld [vmem:[#allocation3 + $0x570] sm:$0xff]
    %v305 = vld [vmem:[#allocation3 + $0x578] sm:$0xff]
    %v306 = vld [vmem:[#allocation3 + $0x580] sm:$0xff]
    %v307 = vld [vmem:[#allocation3 + $0x588] sm:$0xff]
    %v308 = vld [vmem:[#allocation3 + $0x590] sm:$0xff]
    %v309 = vld [vmem:[#allocation3 + $0x598] sm:$0xff]
    %v310 = vld [vmem:[#allocation3 + $0x5a0] sm:$0xff]
    %v311 = vld [vmem:[#allocation3 + $0x5a8] sm:$0xff]
    %v312 = vld [vmem:[#allocation3 + $0x5b0] sm:$0xff]
    %v313 = vld [vmem:[#allocation3 + $0x5b8] sm:$0xff]
    %v314 = vld [vmem:[#allocation3 + $0x5c0] sm:$0xff]
    %v315 = vld [vmem:[#allocation3 + $0x5c8] sm:$0xff]
    %v316 = vld [vmem:[#allocation3 + $0x5d0] sm:$0xff]
    %v317 = vld [vmem:[#allocation3 + $0x5d8] sm:$0xff]
    %v318 = vld [vmem:[#allocation3 + $0x5e0] sm:$0xff]
    %v319 = vld [vmem:[#allocation3 + $0x5e8] sm:$0xff]
    %v320 = vld [vmem:[#allocation3 + $0x5f0] sm:$0xff]
    %v321 = vld [vmem:[#allocation3 + $0x5f8] sm:$0xff]
    %v322 = vld [vmem:[#allocation3 + $0x600] sm:$0xff]
    %v323 = vld [vmem:[#allocation3 + $0x608] sm:$0xff]
    %v324 = vld [vmem:[#allocation3 + $0x610] sm:$0xff]
    %v325 = vld [vmem:[#allocation3 + $0x618] sm:$0xff]
    %v326 = vld [vmem:[#allocation3 + $0x620] sm:$0xff]
    %v327 = vld [vmem:[#allocation3 + $0x628] sm:$0xff]
    %v328 = vld [vmem:[#allocation3 + $0x630] sm:$0xff]
    %v329 = vld [vmem:[#allocation3 + $0x638] sm:$0xff]
    %v330 = vld [vmem:[#allocation3 + $0x640] sm:$0xff]
    %v331 = vld [vmem:[#allocation3 + $0x648] sm:$0xff]
    %v332 = vld [vmem:[#allocation3 + $0x650] sm:$0xff]
    %v333 = vld [vmem:[#allocation3 + $0x658] sm:$0xff]
    %v334 = vld [vmem:[#allocation3 + $0x660] sm:$0xff]
    %v335 = vld [vmem:[#allocation3 + $0x668] sm:$0xff]
    %v336 = vld [vmem:[#allocation3 + $0x670] sm:$0xff]
    %v337 = vld [vmem:[#allocation3 + $0x678] sm:$0xff]
    %v338 = vld [vmem:[#allocation3 + $0x680] sm:$0xff]
    %v339 = vld [vmem:[#allocation3 + $0x688] sm:$0xff]
    %v340 = vld [vmem:[#allocation3 + $0x690] sm:$0xff]
    %v341 = vld [vmem:[#allocation3 + $0x698] sm:$0xff]
    %v342 = vld [vmem:[#allocation3 + $0x6a0] sm:$0xff]
    %v343 = vld [vmem:[#allocation3 + $0x6a8] sm:$0xff]
    %v344 = vld [vmem:[#allocation3 + $0x6b0] sm:$0xff]
    %v345 = vld [vmem:[#allocation3 + $0x6b8] sm:$0xff]
    %v346 = vld [vmem:[#allocation3 + $0x6c0] sm:$0xff]
    %v347 = vld [vmem:[#allocation3 + $0x6c8] sm:$0xff]
    %v348 = vld [vmem:[#allocation3 + $0x6d0] sm:$0xff]
    %v349 = vld [vmem:[#allocation3 + $0x6d8] sm:$0xff]
    %v350 = vld [vmem:[#allocation3 + $0x6e0] sm:$0xff]
    %v351 = vld [vmem:[#allocation3 + $0x6e8] sm:$0xff]
    %v352 = vld [vmem:[#allocation3 + $0x6f0] sm:$0xff]
    %v353 = vld [vmem:[#allocation3 + $0x6f8] sm:$0xff]
    %v354 = vld [vmem:[#allocation3 + $0x700] sm:$0xff]
    %v355 = vld [vmem:[#allocation3 + $0x708] sm:$0xff]
    %v356 = vld [vmem:[#allocation3 + $0x710] sm:$0xff]
    %v357 = vld [vmem:[#allocation3 + $0x718] sm:$0xff]
    %v358 = vld [vmem:[#allocation3 + $0x720] sm:$0xff]
    %v359 = vld [vmem:[#allocation3 + $0x728] sm:$0xff]
    %v360 = vld [vmem:[#allocation3 + $0x730] sm:$0xff]
    %v361 = vld [vmem:[#allocation3 + $0x738] sm:$0xff]
    %v362 = vld [vmem:[#allocation3 + $0x740] sm:$0xff]
    %v363 = vld [vmem:[#allocation3 + $0x748] sm:$0xff]
    %v364 = vld [vmem:[#allocation3 + $0x750] sm:$0xff]
    %v365 = vld [vmem:[#allocation3 + $0x758] sm:$0xff]
    %v366 = vld [vmem:[#allocation3 + $0x760] sm:$0xff]
    %v367 = vld [vmem:[#allocation3 + $0x768] sm:$0xff]
    %v368 = vld [vmem:[#allocation3 + $0x770] sm:$0xff]
    %v369 = vld [vmem:[#allocation3 + $0x778] sm:$0xff]
    %v370 = vld [vmem:[#allocation3 + $0x780] sm:$0xff]
    %v371 = vld [vmem:[#allocation3 + $0x788] sm:$0xff]
    %v372 = vld [vmem:[#allocation3 + $0x790] sm:$0xff]
    %v373 = vld [vmem:[#allocation3 + $0x798] sm:$0xff]
    %v374 = vld [vmem:[#allocation3 + $0x7a0] sm:$0xff]
    %v375 = vld [vmem:[#allocation3 + $0x7a8] sm:$0xff]
    %v376 = vld [vmem:[#allocation3 + $0x7b0] sm:$0xff]
    %v377 = vld [vmem:[#allocation3 + $0x7b8] sm:$0xff]
    %v378 = vld [vmem:[#allocation3 + $0x7c0] sm:$0xff]
    %v379 = vld [vmem:[#allocation3 + $0x7c8] sm:$0xff]
    %v380 = vld [vmem:[#allocation3 + $0x7d0] sm:$0xff]
    %v381 = vld [vmem:[#allocation3 + $0x7d8] sm:$0xff]
    %v382 = vld [vmem:[#allocation3 + $0x7e0] sm:$0xff]
    %v383 = vld [vmem:[#allocation3 + $0x7e8] sm:$0xff]
    %v384 = vld [vmem:[#allocation3 + $0x7f0] sm:$0xff]
    %v385 = vld [vmem:[#allocation3 + $0x7f8] sm:$0xff]
    %v386 = vld [vmem:[#allocation3 + $0x800] sm:$0xff]
    %v387 = vld [vmem:[#allocation3 + $0x808] sm:$0xff]
    %v388 = vld [vmem:[#allocation3 + $0x810] sm:$0xff]
    %v389 = vld [vmem:[#allocation3 + $0x818] sm:$0xff]
    %v390 = vld [vmem:[#allocation3 + $0x820] sm:$0xff]
    %v391 = vld [vmem:[#allocation3 + $0x828] sm:$0xff]
    %v392 = vld [vmem:[#allocation3 + $0x830] sm:$0xff]
    %v393 = vld [vmem:[#allocation3 + $0x838] sm:$0xff]
    %v394 = vld [vmem:[#allocation3 + $0x840] sm:$0xff]
    %v395 = vld [vmem:[#allocation3 + $0x848] sm:$0xff]
    %v396 = vld [vmem:[#allocation3 + $0x850] sm:$0xff]
    %v397 = vld [vmem:[#allocation3 + $0x858] sm:$0xff]
    %v398 = vld [vmem:[#allocation3 + $0x860] sm:$0xff]
    %v399 = vld [vmem:[#allocation3 + $0x868] sm:$0xff]
    %v400 = vld [vmem:[#allocation3 + $0x870] sm:$0xff]
    %v401 = vld [vmem:[#allocation3 + $0x878] sm:$0xff]
    %v402 = vld [vmem:[#allocation3 + $0x880] sm:$0xff]
    %v403 = vld [vmem:[#allocation3 + $0x888] sm:$0xff]
    %v404 = vld [vmem:[#allocation3 + $0x890] sm:$0xff]
    %v405 = vld [vmem:[#allocation3 + $0x898] sm:$0xff]
    %v406 = vld [vmem:[#allocation3 + $0x8a0] sm:$0xff]
    %v407 = vld [vmem:[#allocation3 + $0x8a8] sm:$0xff]
    %v408 = vld [vmem:[#allocation3 + $0x8b0] sm:$0xff]
    %v409 = vld [vmem:[#allocation3 + $0x8b8] sm:$0xff]
    %v410 = vld [vmem:[#allocation3 + $0x8c0] sm:$0xff]
    %v411 = vld [vmem:[#allocation3 + $0x8c8] sm:$0xff]
    %v412 = vld [vmem:[#allocation3 + $0x8d0] sm:$0xff]
    %v413 = vld [vmem:[#allocation3 + $0x8d8] sm:$0xff]
    %v414 = vld [vmem:[#allocation3 + $0x8e0] sm:$0xff]
    %v415 = vld [vmem:[#allocation3 + $0x8e8] sm:$0xff]
    %v416 = vld [vmem:[#allocation3 + $0x8f0] sm:$0xff]
    %v417 = vld [vmem:[#allocation3 + $0x8f8] sm:$0xff]
    %v418 = vld [vmem:[#allocation3 + $0x900] sm:$0xff]
    %v419 = vld [vmem:[#allocation3 + $0x908] sm:$0xff]
    %v420 = vld [vmem:[#allocation3 + $0x910] sm:$0xff]
    %v421 = vld [vmem:[#allocation3 + $0x918] sm:$0xff]
    %v422 = vld [vmem:[#allocation3 + $0x920] sm:$0xff]
    %v423 = vld [vmem:[#allocation3 + $0x928] sm:$0xff]
    %v424 = vld [vmem:[#allocation3 + $0x930] sm:$0xff]
    %v425 = vld [vmem:[#allocation3 + $0x938] sm:$0xff]
    %v426 = vld [vmem:[#allocation3 + $0x940] sm:$0xff]
    %v427 = vld [vmem:[#allocation3 + $0x948] sm:$0xff]
    %v428 = vld [vmem:[#allocation3 + $0x950] sm:$0xff]
    %v429 = vld [vmem:[#allocation3 + $0x958] sm:$0xff]
    %v430 = vld [vmem:[#allocation3 + $0x960] sm:$0xff]
    %v431 = vld [vmem:[#allocation3 + $0x968] sm:$0xff]
    %v432 = vld [vmem:[#allocation3 + $0x970] sm:$0xff]
    %v433 = vld [vmem:[#allocation3 + $0x978] sm:$0xff]
    %v434 = vld [vmem:[#allocation3 + $0x980] sm:$0xff]
    %v435 = vld [vmem:[#allocation3 + $0x988] sm:$0xff]
    %v436 = vld [vmem:[#allocation3 + $0x990] sm:$0xff]
    %v437 = vld [vmem:[#allocation3 + $0x998] sm:$0xff]
    %v438 = vld [vmem:[#allocation3 + $0x9a0] sm:$0xff]
    %v439 = vld [vmem:[#allocation3 + $0x9a8] sm:$0xff]
    %v440 = vld [vmem:[#allocation3 + $0x9b0] sm:$0xff]
    %v441 = vld [vmem:[#allocation3 + $0x9b8] sm:$0xff]
    %v442 = vld [vmem:[#allocation3 + $0x9c0] sm:$0xff]
    %v443 = vld [vmem:[#allocation3 + $0x9c8] sm:$0xff]
    %v444 = vld [vmem:[#allocation3 + $0x9d0] sm:$0xff]
    %v445 = vld [vmem:[#allocation3 + $0x9d8] sm:$0xff]
    %v446 = vld [vmem:[#allocation3 + $0x9e0] sm:$0xff]
    %v447 = vld [vmem:[#allocation3 + $0x9e8] sm:$0xff]
    %v448 = vld [vmem:[#allocation3 + $0x9f0] sm:$0xff]
    %v449 = vld [vmem:[#allocation3 + $0x9f8] sm:$0xff]
    %v450 = vld [vmem:[#allocation3 + $0xa00] sm:$0xff]
    %v451 = vld [vmem:[#allocation3 + $0xa08] sm:$0xff]
    %v452 = vld [vmem:[#allocation3 + $0xa10] sm:$0xff]
    %v453 = vld [vmem:[#allocation3 + $0xa18] sm:$0xff]
    %v454 = vld [vmem:[#allocation3 + $0xa20] sm:$0xff]
    %v455 = vld [vmem:[#allocation3 + $0xa28] sm:$0xff]
    %v456 = vld [vmem:[#allocation3 + $0xa30] sm:$0xff]
    %v457 = vld [vmem:[#allocation3 + $0xa38] sm:$0xff]
    %v458 = vld [vmem:[#allocation3 + $0xa40] sm:$0xff]
    %v459 = vld [vmem:[#allocation3 + $0xa48] sm:$0xff]
    %v460 = vld [vmem:[#allocation3 + $0xa50] sm:$0xff]
    %v461 = vld [vmem:[#allocation3 + $0xa58] sm:$0xff]
    %v462 = vld [vmem:[#allocation3 + $0xa60] sm:$0xff]
    %v463 = vld [vmem:[#allocation3 + $0xa68] sm:$0xff]
    %v464 = vld [vmem:[#allocation3 + $0xa70] sm:$0xff]
    %v465 = vld [vmem:[#allocation3 + $0xa78] sm:$0xff]
    %v466 = vld [vmem:[#allocation3 + $0xa80] sm:$0xff]
    %v467 = vld [vmem:[#allocation3 + $0xa88] sm:$0xff]
    %v468 = vld [vmem:[#allocation3 + $0xa90] sm:$0xff]
    %v469 = vld [vmem:[#allocation3 + $0xa98] sm:$0xff]
    %v470 = vld [vmem:[#allocation3 + $0xaa0] sm:$0xff]
    %v471 = vld [vmem:[#allocation3 + $0xaa8] sm:$0xff]
    %v472 = vld [vmem:[#allocation3 + $0xab0] sm:$0xff]
    %v473 = vld [vmem:[#allocation3 + $0xab8] sm:$0xff]
    %v474 = vld [vmem:[#allocation3 + $0xac0] sm:$0xff]
    %v475 = vld [vmem:[#allocation3 + $0xac8] sm:$0xff]
    %v476 = vld [vmem:[#allocation3 + $0xad0] sm:$0xff]
    %v477 = vld [vmem:[#allocation3 + $0xad8] sm:$0xff]
    %v478 = vld [vmem:[#allocation3 + $0xae0] sm:$0xff]
    %v479 = vld [vmem:[#allocation3 + $0xae8] sm:$0xff]
    %v480 = vld [vmem:[#allocation3 + $0xaf0] sm:$0xff]
    %v481 = vld [vmem:[#allocation3 + $0xaf8] sm:$0xff]
    %v482 = vld [vmem:[#allocation3 + $0xb00] sm:$0xff]
    %v483 = vld [vmem:[#allocation3 + $0xb08] sm:$0xff]
    %v484 = vld [vmem:[#allocation3 + $0xb10] sm:$0xff]
    %v485 = vld [vmem:[#allocation3 + $0xb18] sm:$0xff]
    %v486 = vld [vmem:[#allocation3 + $0xb20] sm:$0xff]
    %v487 = vld [vmem:[#allocation3 + $0xb28] sm:$0xff]
    %v488 = vld [vmem:[#allocation3 + $0xb30] sm:$0xff]
    %v489 = vld [vmem:[#allocation3 + $0xb38] sm:$0xff]
    %v490 = vld [vmem:[#allocation3 + $0xb40] sm:$0xff]
    %v491 = vld [vmem:[#allocation3 + $0xb48] sm:$0xff]
    %v492 = vld [vmem:[#allocation3 + $0xb50] sm:$0xff]
    %v493 = vld [vmem:[#allocation3 + $0xb58] sm:$0xff]
    %v494 = vld [vmem:[#allocation3 + $0xb60] sm:$0xff]
    %v495 = vld [vmem:[#allocation3 + $0xb68] sm:$0xff]
    %v496 = vld [vmem:[#allocation3 + $0xb70] sm:$0xff]
    %v497 = vld [vmem:[#allocation3 + $0xb78] sm:$0xff]
    %v498 = vld [vmem:[#allocation3 + $0xb80] sm:$0xff]
    %v499 = vld [vmem:[#allocation3 + $0xb88] sm:$0xff]
    %v500 = vld [vmem:[#allocation3 + $0xb90] sm:$0xff]
    %v501 = vld [vmem:[#allocation3 + $0xb98] sm:$0xff]
    %v502 = vld [vmem:[#allocation3 + $0xba0] sm:$0xff]
    %v503 = vld [vmem:[#allocation3 + $0xba8] sm:$0xff]
    %v504 = vld [vmem:[#allocation3 + $0xbb0] sm:$0xff]
    %v505 = vld [vmem:[#allocation3 + $0xbb8] sm:$0xff]
    %v506 = vld [vmem:[#allocation3 + $0xbc0] sm:$0xff]
    %v507 = vld [vmem:[#allocation3 + $0xbc8] sm:$0xff]
    %v508 = vld [vmem:[#allocation3 + $0xbd0] sm:$0xff]
    %v509 = vld [vmem:[#allocation3 + $0xbd8] sm:$0xff]
    %v510 = vld [vmem:[#allocation3 + $0xbe0] sm:$0xff]
    %v511 = vld [vmem:[#allocation3 + $0xbe8] sm:$0xff]
    %v512 = vld [vmem:[#allocation3 + $0xbf0] sm:$0xff]
    %v513 = vld [vmem:[#allocation3 + $0xbf8] sm:$0xff]
    %v514 = vld [vmem:[#allocation3 + $0xc00] sm:$0xff]
    %v515 = vld [vmem:[#allocation3 + $0xc08] sm:$0xff]
    %v516 = vld [vmem:[#allocation3 + $0xc10] sm:$0xff]
    %v517 = vld [vmem:[#allocation3 + $0xc18] sm:$0xff]
    %v518 = vld [vmem:[#allocation3 + $0xc20] sm:$0xff]
    %v519 = vld [vmem:[#allocation3 + $0xc28] sm:$0xff]
    %v520 = vld [vmem:[#allocation3 + $0xc30] sm:$0xff]
    %v521 = vld [vmem:[#allocation3 + $0xc38] sm:$0xff]
    %v522 = vld [vmem:[#allocation5] sm:$0xff]
    %v524 = vlaneseq
    %v525 = vshrl.u32 %v524, 7
    %v526 = vsub.s32 0, %v525
    %v527 = vrot.slane %v522, %v526
    %v528 = vlaneseq
    %v529 = vshrl.u32 %v528, 7
    %v530 = vsub.s32 1, %v529
    %v531 = vrot.slane %v522, %v530
    %v532 = vlaneseq
    %v533 = vshrl.u32 %v532, 7
    %v534 = vsub.s32 2, %v533
    %v535 = vrot.slane %v522, %v534
    %v536 = vlaneseq
    %v537 = vshrl.u32 %v536, 7
    %v538 = vsub.s32 3, %v537
    %v539 = vrot.slane %v522, %v538
    %v540 = vlaneseq
    %v541 = vshrl.u32 %v540, 7
    %v542 = vsub.s32 4, %v541
    %v543 = vrot.slane %v522, %v542
    %v544 = vlaneseq
    %v545 = vshrl.u32 %v544, 7
    %v546 = vsub.s32 5, %v545
    %v547 = vrot.slane %v522, %v546
    %v548 = vlaneseq
    %v549 = vshrl.u32 %v548, 7
    %v550 = vsub.s32 6, %v549
    %v551 = vrot.slane %v522, %v550
    %v552 = vlaneseq
    %v553 = vshrl.u32 %v552, 7
    %v554 = vsub.s32 7, %v553
    %v555 = vrot.slane %v522, %v554
    %v572 = vunpack.c.l.b16 %v122
    %v573 = vunpack.c.h.b16 %v122
    %v574 = vunpack.c.l.b16 %v123
    %v575 = vunpack.c.h.b16 %v123
    %v576 = vunpack.c.l.b16 %v124
    %v577 = vunpack.c.h.b16 %v124
    %v578 = vunpack.c.l.b16 %v125
    %v579 = vunpack.c.l.b16 %v126
    %v580 = vunpack.c.h.b16 %v126
    %v581 = vunpack.c.l.b16 %v127
    %v582 = vunpack.c.h.b16 %v127
    %v583 = vunpack.c.l.b16 %v128
    %v584 = vunpack.c.h.b16 %v128
    %v585 = vunpack.c.l.b16 %v129
    %v586 = vpack.c.b16 %v579, %v572
    %v587 = vpack.c.b16 %v580, %v573
    %v588 = vpack.c.b16 %v581, %v574
    %v589 = vpack.c.b16 %v582, %v575
    %v590 = vpack.c.b16 %v583, %v576
    %v591 = vpack.c.b16 %v584, %v577
    %v592 = vpack.c.b16 %v585, %v578
    %v991 = vunpack.c.l.b16 %v130
    %v992 = vunpack.c.h.b16 %v130
    %v993 = vunpack.c.l.b16 %v131
    %v994 = vunpack.c.h.b16 %v131
    %v995 = vunpack.c.l.b16 %v132
    %v996 = vunpack.c.h.b16 %v132
    %v997 = vunpack.c.l.b16 %v133
    %v998 = vunpack.c.h.b16 %v133
    %v999 = vunpack.c.l.b16 %v134
    %v1000 = vunpack.c.h.b16 %v134
    %v1001 = vunpack.c.l.b16 %v135
    %v1002 = vunpack.c.h.b16 %v135
    %v1003 = vunpack.c.l.b16 %v136
    %v1004 = vunpack.c.h.b16 %v136
    %v1005 = vunpack.c.l.b16 %v137
    %v1006 = vunpack.c.h.b16 %v137
    %v1007 = vunpack.c.l.b16 %v138
    %v1008 = vunpack.c.h.b16 %v138
    %v1009 = vunpack.c.l.b16 %v139
    %v1010 = vunpack.c.h.b16 %v139
    %v1011 = vunpack.c.l.b16 %v140
    %v1012 = vunpack.c.h.b16 %v140
    %v1013 = vunpack.c.l.b16 %v141
    %v1014 = vunpack.c.h.b16 %v141
    %v1015 = vunpack.c.l.b16 %v142
    %v1016 = vunpack.c.h.b16 %v142
    %v1017 = vunpack.c.l.b16 %v143
    %v1018 = vunpack.c.h.b16 %v143
    %v1019 = vunpack.c.l.b16 %v144
    %v1020 = vunpack.c.h.b16 %v144
    %v1021 = vunpack.c.l.b16 %v145
    %v1022 = vunpack.c.h.b16 %v145
    %v1023 = vunpack.c.l.b16 %v146
    %v1024 = vunpack.c.h.b16 %v146
    %v1025 = vunpack.c.l.b16 %v147
    %v1026 = vunpack.c.h.b16 %v147
    %v1027 = vunpack.c.l.b16 %v148
    %v1028 = vunpack.c.h.b16 %v148
    %v1029 = vunpack.c.l.b16 %v149
    %v1030 = vunpack.c.h.b16 %v149
    %v1031 = vunpack.c.l.b16 %v150
    %v1032 = vunpack.c.h.b16 %v150
    %v1033 = vunpack.c.l.b16 %v151
    %v1034 = vunpack.c.h.b16 %v151
    %v1035 = vunpack.c.l.b16 %v152
    %v1036 = vunpack.c.h.b16 %v152
    %v1037 = vunpack.c.l.b16 %v153
    %v1038 = vunpack.c.h.b16 %v153
    %v1039 = vunpack.c.l.b16 %v154
    %v1040 = vunpack.c.h.b16 %v154
    %v1041 = vunpack.c.l.b16 %v155
    %v1042 = vunpack.c.h.b16 %v155
    %v1043 = vunpack.c.l.b16 %v156
    %v1044 = vunpack.c.h.b16 %v156
    %v1045 = vunpack.c.l.b16 %v157
    %v1046 = vunpack.c.h.b16 %v157
    %v1047 = vunpack.c.l.b16 %v158
    %v1048 = vunpack.c.h.b16 %v158
    %v1049 = vunpack.c.l.b16 %v159
    %v1050 = vunpack.c.h.b16 %v159
    %v1051 = vunpack.c.l.b16 %v160
    %v1052 = vunpack.c.h.b16 %v160
    %v1053 = vunpack.c.l.b16 %v161
    %v1054 = vunpack.c.h.b16 %v161
    %v1055 = vunpack.c.l.b16 %v162
    %v1056 = vunpack.c.h.b16 %v162
    %v1057 = vunpack.c.l.b16 %v163
    %v1058 = vunpack.c.h.b16 %v163
    %v1059 = vunpack.c.l.b16 %v164
    %v1060 = vunpack.c.h.b16 %v164
    %v1061 = vunpack.c.l.b16 %v165
    %v1062 = vunpack.c.h.b16 %v165
    %v1063 = vunpack.c.l.b16 %v166
    %v1064 = vunpack.c.h.b16 %v166
    %v1065 = vunpack.c.l.b16 %v167
    %v1066 = vunpack.c.h.b16 %v167
    %v1067 = vunpack.c.l.b16 %v168
    %v1068 = vunpack.c.h.b16 %v168
    %v1069 = vunpack.c.l.b16 %v169
    %v1070 = vunpack.c.h.b16 %v169
    %v1071 = vunpack.c.l.b16 %v170
    %v1072 = vunpack.c.h.b16 %v170
    %v1073 = vunpack.c.l.b16 %v171
    %v1074 = vunpack.c.h.b16 %v171
    %v1075 = vunpack.c.l.b16 %v172
    %v1076 = vunpack.c.h.b16 %v172
    %v1077 = vunpack.c.l.b16 %v173
    %v1078 = vunpack.c.h.b16 %v173
    %v1079 = vunpack.c.l.b16 %v174
    %v1080 = vunpack.c.h.b16 %v174
    %v1081 = vunpack.c.l.b16 %v175
    %v1082 = vunpack.c.h.b16 %v175
    %v1083 = vunpack.c.l.b16 %v176
    %v1084 = vunpack.c.h.b16 %v176
    %v1085 = vunpack.c.l.b16 %v177
    %v1086 = vunpack.c.h.b16 %v177
    %v1087 = vunpack.c.l.b16 %v178
    %v1088 = vunpack.c.h.b16 %v178
    %v1089 = vunpack.c.l.b16 %v179
    %v1090 = vunpack.c.h.b16 %v179
    %v1091 = vunpack.c.l.b16 %v180
    %v1092 = vunpack.c.h.b16 %v180
    %v1093 = vunpack.c.l.b16 %v181
    %v1094 = vunpack.c.h.b16 %v181
    %v1095 = vunpack.c.l.b16 %v182
    %v1096 = vunpack.c.h.b16 %v182
    %v1097 = vunpack.c.l.b16 %v183
    %v1098 = vunpack.c.h.b16 %v183
    %v1099 = vunpack.c.l.b16 %v184
    %v1100 = vunpack.c.h.b16 %v184
    %v1101 = vunpack.c.l.b16 %v185
    %v1102 = vunpack.c.h.b16 %v185
    %v1103 = vunpack.c.l.b16 %v186
    %v1104 = vunpack.c.h.b16 %v186
    %v1105 = vunpack.c.l.b16 %v187
    %v1106 = vunpack.c.h.b16 %v187
    %v1107 = vunpack.c.l.b16 %v188
    %v1108 = vunpack.c.h.b16 %v188
    %v1109 = vunpack.c.l.b16 %v189
    %v1110 = vunpack.c.h.b16 %v189
    %v1111 = vunpack.c.l.b16 %v190
    %v1112 = vunpack.c.h.b16 %v190
    %v1113 = vunpack.c.l.b16 %v191
    %v1114 = vunpack.c.h.b16 %v191
    %v1115 = vunpack.c.l.b16 %v192
    %v1116 = vunpack.c.h.b16 %v192
    %v1117 = vunpack.c.l.b16 %v193
    %v1118 = vunpack.c.h.b16 %v193
    %v1119 = vunpack.c.l.b16 %v194
    %v1120 = vunpack.c.h.b16 %v194
    %v1121 = vunpack.c.l.b16 %v195
    %v1122 = vunpack.c.h.b16 %v195
    %v1123 = vunpack.c.l.b16 %v196
    %v1124 = vunpack.c.h.b16 %v196
    %v1125 = vunpack.c.l.b16 %v197
    %v1126 = vunpack.c.h.b16 %v197
    %v1127 = vunpack.c.l.b16 %v198
    %v1128 = vunpack.c.h.b16 %v198
    %v1129 = vunpack.c.l.b16 %v199
    %v1130 = vunpack.c.h.b16 %v199
    %v1131 = vunpack.c.l.b16 %v200
    %v1132 = vunpack.c.h.b16 %v200
    %v1133 = vunpack.c.l.b16 %v201
    %v1134 = vunpack.c.h.b16 %v201
    %v1135 = vunpack.c.l.b16 %v202
    %v1136 = vunpack.c.h.b16 %v202
    %v1137 = vunpack.c.l.b16 %v203
    %v1138 = vunpack.c.h.b16 %v203
    %v1139 = vunpack.c.l.b16 %v204
    %v1140 = vunpack.c.h.b16 %v204
    %v1141 = vunpack.c.l.b16 %v205
    %v1142 = vunpack.c.h.b16 %v205
    %v1143 = vunpack.c.l.b16 %v206
    %v1144 = vunpack.c.h.b16 %v206
    %v1145 = vunpack.c.l.b16 %v207
    %v1146 = vunpack.c.h.b16 %v207
    %v1147 = vunpack.c.l.b16 %v208
    %v1148 = vunpack.c.h.b16 %v208
    %v1149 = vunpack.c.l.b16 %v209
    %v1150 = vunpack.c.h.b16 %v209
    %v1151 = vunpack.c.l.b16 %v210
    %v1152 = vunpack.c.h.b16 %v210
    %v1153 = vunpack.c.l.b16 %v211
    %v1154 = vunpack.c.h.b16 %v211
    %v1155 = vunpack.c.l.b16 %v212
    %v1156 = vunpack.c.h.b16 %v212
    %v1157 = vunpack.c.l.b16 %v213
    %v1158 = vunpack.c.h.b16 %v213
    %v1159 = vunpack.c.l.b16 %v214
    %v1160 = vunpack.c.h.b16 %v214
    %v1161 = vunpack.c.l.b16 %v215
    %v1162 = vunpack.c.h.b16 %v215
    %v1163 = vunpack.c.l.b16 %v216
    %v1164 = vunpack.c.h.b16 %v216
    %v1165 = vunpack.c.l.b16 %v217
    %v1166 = vunpack.c.h.b16 %v217
    %v1167 = vunpack.c.l.b16 %v218
    %v1168 = vunpack.c.h.b16 %v218
    %v1169 = vunpack.c.l.b16 %v219
    %v1170 = vunpack.c.h.b16 %v219
    %v1171 = vunpack.c.l.b16 %v220
    %v1172 = vunpack.c.h.b16 %v220
    %v1173 = vunpack.c.l.b16 %v221
    %v1174 = vunpack.c.h.b16 %v221
    %v1175 = vunpack.c.l.b16 %v222
    %v1176 = vunpack.c.h.b16 %v222
    %v1177 = vunpack.c.l.b16 %v223
    %v1178 = vunpack.c.h.b16 %v223
    %v1179 = vunpack.c.l.b16 %v224
    %v1180 = vunpack.c.h.b16 %v224
    %v1181 = vunpack.c.l.b16 %v225
    %v1182 = vunpack.c.h.b16 %v225
    %v1183 = vunpack.c.l.b16 %v226
    %v1184 = vunpack.c.h.b16 %v226
    %v1185 = vunpack.c.l.b16 %v227
    %v1186 = vunpack.c.h.b16 %v227
    %v1187 = vunpack.c.l.b16 %v228
    %v1188 = vunpack.c.h.b16 %v228
    %v1189 = vunpack.c.l.b16 %v229
    %v1190 = vunpack.c.h.b16 %v229
    %v1191 = vunpack.c.l.b16 %v230
    %v1192 = vunpack.c.h.b16 %v230
    %v1193 = vunpack.c.l.b16 %v231
    %v1194 = vunpack.c.h.b16 %v231
    %v1195 = vunpack.c.l.b16 %v232
    %v1196 = vunpack.c.h.b16 %v232
    %v1197 = vunpack.c.l.b16 %v233
    %v1198 = vunpack.c.h.b16 %v233
    %v1199 = vunpack.c.l.b16 %v234
    %v1200 = vunpack.c.h.b16 %v234
    %v1201 = vunpack.c.l.b16 %v235
    %v1202 = vunpack.c.h.b16 %v235
    %v1203 = vunpack.c.l.b16 %v236
    %v1204 = vunpack.c.h.b16 %v236
    %v1205 = vunpack.c.l.b16 %v237
    %v1206 = vunpack.c.h.b16 %v237
    %v1207 = vunpack.c.l.b16 %v238
    %v1208 = vunpack.c.h.b16 %v238
    %v1209 = vunpack.c.l.b16 %v239
    %v1210 = vunpack.c.h.b16 %v239
    %v1211 = vunpack.c.l.b16 %v240
    %v1212 = vunpack.c.h.b16 %v240
    %v1213 = vunpack.c.l.b16 %v241
    %v1214 = vunpack.c.h.b16 %v241
    %v1215 = vunpack.c.l.b16 %v242
    %v1216 = vunpack.c.h.b16 %v242
    %v1217 = vunpack.c.l.b16 %v243
    %v1218 = vunpack.c.h.b16 %v243
    %v1219 = vunpack.c.l.b16 %v244
    %v1220 = vunpack.c.h.b16 %v244
    %v1221 = vunpack.c.l.b16 %v245
    %v1222 = vunpack.c.h.b16 %v245
    %v1223 = vunpack.c.l.b16 %v246
    %v1224 = vunpack.c.h.b16 %v246
    %v1225 = vunpack.c.l.b16 %v247
    %v1226 = vunpack.c.h.b16 %v247
    %v1227 = vunpack.c.l.b16 %v248
    %v1228 = vunpack.c.h.b16 %v248
    %v1229 = vunpack.c.l.b16 %v249
    %v1230 = vunpack.c.h.b16 %v249
    %v1231 = vunpack.c.l.b16 %v250
    %v1232 = vunpack.c.h.b16 %v250
    %v1233 = vunpack.c.l.b16 %v251
    %v1234 = vunpack.c.h.b16 %v251
    %v1235 = vunpack.c.l.b16 %v252
    %v1236 = vunpack.c.h.b16 %v252
    %v1237 = vunpack.c.l.b16 %v253
    %v1238 = vunpack.c.h.b16 %v253
    %v1239 = vunpack.c.l.b16 %v254
    %v1240 = vunpack.c.h.b16 %v254
    %v1241 = vunpack.c.l.b16 %v255
    %v1242 = vunpack.c.h.b16 %v255
    %v1243 = vunpack.c.l.b16 %v256
    %v1244 = vunpack.c.h.b16 %v256
    %v1245 = vunpack.c.l.b16 %v257
    %v1246 = vunpack.c.h.b16 %v257
    %v1247 = vunpack.c.l.b16 %v258
    %v1248 = vunpack.c.h.b16 %v258
    %v1249 = vunpack.c.l.b16 %v259
    %v1250 = vunpack.c.h.b16 %v259
    %v1251 = vunpack.c.l.b16 %v260
    %v1252 = vunpack.c.h.b16 %v260
    %v1253 = vunpack.c.l.b16 %v261
    %v1254 = vunpack.c.h.b16 %v261
    %v1255 = vunpack.c.l.b16 %v262
    %v1256 = vunpack.c.h.b16 %v262
    %v1257 = vunpack.c.l.b16 %v263
    %v1258 = vunpack.c.h.b16 %v263
    %v1259 = vunpack.c.l.b16 %v264
    %v1260 = vunpack.c.h.b16 %v264
    %v1261 = vunpack.c.l.b16 %v265
    %v1262 = vunpack.c.h.b16 %v265
    %v1263 = vunpack.c.l.b16 %v266
    %v1264 = vunpack.c.h.b16 %v266
    %v1265 = vunpack.c.l.b16 %v267
    %v1266 = vunpack.c.h.b16 %v267
    %v1267 = vunpack.c.l.b16 %v268
    %v1268 = vunpack.c.h.b16 %v268
    %v1269 = vunpack.c.l.b16 %v269
    %v1270 = vunpack.c.h.b16 %v269
    %v1271 = vunpack.c.l.b16 %v270
    %v1272 = vunpack.c.h.b16 %v270
    %v1273 = vunpack.c.l.b16 %v271
    %v1274 = vunpack.c.h.b16 %v271
    %v1275 = vunpack.c.l.b16 %v272
    %v1276 = vunpack.c.h.b16 %v272
    %v1277 = vunpack.c.l.b16 %v273
    %v1278 = vunpack.c.h.b16 %v273
    %v1279 = vunpack.c.l.b16 %v274
    %v1280 = vunpack.c.h.b16 %v274
    %v1281 = vunpack.c.l.b16 %v275
    %v1282 = vunpack.c.h.b16 %v275
    %v1283 = vunpack.c.l.b16 %v276
    %v1284 = vunpack.c.h.b16 %v276
    %v1285 = vunpack.c.l.b16 %v277
    %v1286 = vunpack.c.h.b16 %v277
    %v1287 = vunpack.c.l.b16 %v278
    %v1288 = vunpack.c.h.b16 %v278
    %v1289 = vunpack.c.l.b16 %v279
    %v1290 = vunpack.c.h.b16 %v279
    %v1291 = vunpack.c.l.b16 %v280
    %v1292 = vunpack.c.h.b16 %v280
    %v1293 = vunpack.c.l.b16 %v281
    %v1294 = vunpack.c.h.b16 %v281
    %v1295 = vunpack.c.l.b16 %v282
    %v1296 = vunpack.c.h.b16 %v282
    %v1297 = vunpack.c.l.b16 %v283
    %v1298 = vunpack.c.h.b16 %v283
    %v1299 = vunpack.c.l.b16 %v284
    %v1300 = vunpack.c.h.b16 %v284
    %v1301 = vunpack.c.l.b16 %v285
    %v1302 = vunpack.c.h.b16 %v285
    %v1303 = vunpack.c.l.b16 %v286
    %v1304 = vunpack.c.h.b16 %v286
    %v1305 = vunpack.c.l.b16 %v287
    %v1306 = vunpack.c.h.b16 %v287
    %v1307 = vunpack.c.l.b16 %v288
    %v1308 = vunpack.c.h.b16 %v288
    %v1309 = vunpack.c.l.b16 %v289
    %v1310 = vunpack.c.h.b16 %v289
    %v1311 = vunpack.c.l.b16 %v290
    %v1312 = vunpack.c.h.b16 %v290
    %v1313 = vunpack.c.l.b16 %v291
    %v1314 = vunpack.c.h.b16 %v291
    %v1315 = vunpack.c.l.b16 %v292
    %v1316 = vunpack.c.h.b16 %v292
    %v1317 = vunpack.c.l.b16 %v293
    %v1318 = vunpack.c.h.b16 %v293
    %v1319 = vunpack.c.l.b16 %v294
    %v1320 = vunpack.c.h.b16 %v294
    %v1321 = vunpack.c.l.b16 %v295
    %v1322 = vunpack.c.h.b16 %v295
    %v1323 = vunpack.c.l.b16 %v296
    %v1324 = vunpack.c.h.b16 %v296
    %v1325 = vunpack.c.l.b16 %v297
    %v1326 = vunpack.c.h.b16 %v297
    %v1327 = vunpack.c.l.b16 %v298
    %v1328 = vunpack.c.h.b16 %v298
    %v1329 = vunpack.c.l.b16 %v299
    %v1330 = vunpack.c.h.b16 %v299
    %v1331 = vunpack.c.l.b16 %v300
    %v1332 = vunpack.c.h.b16 %v300
    %v1333 = vunpack.c.l.b16 %v301
    %v1334 = vunpack.c.h.b16 %v301
    %v1335 = vunpack.c.l.b16 %v302
    %v1336 = vunpack.c.h.b16 %v302
    %v1337 = vunpack.c.l.b16 %v303
    %v1338 = vunpack.c.h.b16 %v303
    %v1339 = vunpack.c.l.b16 %v304
    %v1340 = vunpack.c.h.b16 %v304
    %v1341 = vunpack.c.l.b16 %v305
    %v1342 = vunpack.c.h.b16 %v305
    %v1343 = vunpack.c.l.b16 %v306
    %v1344 = vunpack.c.h.b16 %v306
    %v1345 = vunpack.c.l.b16 %v307
    %v1346 = vunpack.c.h.b16 %v307
    %v1347 = vunpack.c.l.b16 %v308
    %v1348 = vunpack.c.h.b16 %v308
    %v1349 = vunpack.c.l.b16 %v309
    %v1350 = vunpack.c.h.b16 %v309
    %v1351 = vunpack.c.l.b16 %v310
    %v1352 = vunpack.c.h.b16 %v310
    %v1353 = vunpack.c.l.b16 %v311
    %v1354 = vunpack.c.h.b16 %v311
    %v1355 = vunpack.c.l.b16 %v312
    %v1356 = vunpack.c.h.b16 %v312
    %v1357 = vunpack.c.l.b16 %v313
    %v1358 = vunpack.c.h.b16 %v313
    %v1359 = vunpack.c.l.b16 %v314
    %v1360 = vunpack.c.h.b16 %v314
    %v1361 = vunpack.c.l.b16 %v315
    %v1362 = vunpack.c.h.b16 %v315
    %v1363 = vunpack.c.l.b16 %v316
    %v1364 = vunpack.c.h.b16 %v316
    %v1365 = vunpack.c.l.b16 %v317
    %v1366 = vunpack.c.h.b16 %v317
    %v1367 = vunpack.c.l.b16 %v318
    %v1368 = vunpack.c.h.b16 %v318
    %v1369 = vunpack.c.l.b16 %v319
    %v1370 = vunpack.c.h.b16 %v319
    %v1371 = vunpack.c.l.b16 %v320
    %v1372 = vunpack.c.h.b16 %v320
    %v1373 = vunpack.c.l.b16 %v321
    %v1374 = vunpack.c.h.b16 %v321
    %v1375 = vunpack.c.l.b16 %v322
    %v1376 = vunpack.c.h.b16 %v322
    %v1377 = vunpack.c.l.b16 %v323
    %v1378 = vunpack.c.h.b16 %v323
    %v1379 = vunpack.c.l.b16 %v324
    %v1380 = vunpack.c.h.b16 %v324
    %v1381 = vunpack.c.l.b16 %v325
    %v1382 = vunpack.c.h.b16 %v325
    %v1383 = vunpack.c.l.b16 %v326
    %v1384 = vunpack.c.h.b16 %v326
    %v1385 = vunpack.c.l.b16 %v327
    %v1386 = vunpack.c.h.b16 %v327
    %v1387 = vunpack.c.l.b16 %v328
    %v1388 = vunpack.c.h.b16 %v328
    %v1389 = vunpack.c.l.b16 %v329
    %v1390 = vunpack.c.h.b16 %v329
    %v1391 = vunpack.c.l.b16 %v330
    %v1392 = vunpack.c.h.b16 %v330
    %v1393 = vunpack.c.l.b16 %v331
    %v1394 = vunpack.c.h.b16 %v331
    %v1395 = vunpack.c.l.b16 %v332
    %v1396 = vunpack.c.h.b16 %v332
    %v1397 = vunpack.c.l.b16 %v333
    %v1398 = vunpack.c.h.b16 %v333
    %v1399 = vunpack.c.l.b16 %v334
    %v1400 = vunpack.c.h.b16 %v334
    %v1401 = vunpack.c.l.b16 %v335
    %v1402 = vunpack.c.h.b16 %v335
    %v1403 = vunpack.c.l.b16 %v336
    %v1404 = vunpack.c.h.b16 %v336
    %v1405 = vunpack.c.l.b16 %v337
    %v1406 = vunpack.c.h.b16 %v337
    %v1407 = vunpack.c.l.b16 %v338
    %v1408 = vunpack.c.h.b16 %v338
    %v1409 = vunpack.c.l.b16 %v339
    %v1410 = vunpack.c.h.b16 %v339
    %v1411 = vunpack.c.l.b16 %v340
    %v1412 = vunpack.c.h.b16 %v340
    %v1413 = vunpack.c.l.b16 %v341
    %v1414 = vunpack.c.h.b16 %v341
    %v1415 = vunpack.c.l.b16 %v342
    %v1416 = vunpack.c.h.b16 %v342
    %v1417 = vunpack.c.l.b16 %v343
    %v1418 = vunpack.c.h.b16 %v343
    %v1419 = vunpack.c.l.b16 %v344
    %v1420 = vunpack.c.h.b16 %v344
    %v1421 = vunpack.c.l.b16 %v345
    %v1422 = vunpack.c.h.b16 %v345
    %v1423 = vunpack.c.l.b16 %v346
    %v1424 = vunpack.c.h.b16 %v346
    %v1425 = vunpack.c.l.b16 %v347
    %v1426 = vunpack.c.h.b16 %v347
    %v1427 = vunpack.c.l.b16 %v348
    %v1428 = vunpack.c.h.b16 %v348
    %v1429 = vunpack.c.l.b16 %v349
    %v1430 = vunpack.c.h.b16 %v349
    %v1431 = vunpack.c.l.b16 %v350
    %v1432 = vunpack.c.h.b16 %v350
    %v1433 = vunpack.c.l.b16 %v351
    %v1434 = vunpack.c.h.b16 %v351
    %v1435 = vunpack.c.l.b16 %v352
    %v1436 = vunpack.c.h.b16 %v352
    %v1437 = vunpack.c.l.b16 %v353
    %v1438 = vunpack.c.h.b16 %v353
    %v1439 = vunpack.c.l.b16 %v354
    %v1440 = vunpack.c.h.b16 %v354
    %v1441 = vunpack.c.l.b16 %v355
    %v1442 = vunpack.c.h.b16 %v355
    %v1443 = vunpack.c.l.b16 %v356
    %v1444 = vunpack.c.h.b16 %v356
    %v1445 = vunpack.c.l.b16 %v357
    %v1446 = vunpack.c.h.b16 %v357
    %v1447 = vunpack.c.l.b16 %v358
    %v1448 = vunpack.c.h.b16 %v358
    %v1449 = vunpack.c.l.b16 %v359
    %v1450 = vunpack.c.h.b16 %v359
    %v1451 = vunpack.c.l.b16 %v360
    %v1452 = vunpack.c.h.b16 %v360
    %v1453 = vunpack.c.l.b16 %v361
    %v1454 = vunpack.c.h.b16 %v361
    %v1455 = vunpack.c.l.b16 %v362
    %v1456 = vunpack.c.h.b16 %v362
    %v1457 = vunpack.c.l.b16 %v363
    %v1458 = vunpack.c.h.b16 %v363
    %v1459 = vunpack.c.l.b16 %v364
    %v1460 = vunpack.c.h.b16 %v364
    %v1461 = vunpack.c.l.b16 %v365
    %v1462 = vunpack.c.h.b16 %v365
    %v1463 = vunpack.c.l.b16 %v366
    %v1464 = vunpack.c.h.b16 %v366
    %v1465 = vunpack.c.l.b16 %v367
    %v1466 = vunpack.c.h.b16 %v367
    %v1467 = vunpack.c.l.b16 %v368
    %v1468 = vunpack.c.h.b16 %v368
    %v1469 = vunpack.c.l.b16 %v369
    %v1470 = vunpack.c.h.b16 %v369
    %v1471 = vunpack.c.l.b16 %v370
    %v1472 = vunpack.c.h.b16 %v370
    %v1473 = vunpack.c.l.b16 %v371
    %v1474 = vunpack.c.h.b16 %v371
    %v1475 = vunpack.c.l.b16 %v372
    %v1476 = vunpack.c.h.b16 %v372
    %v1477 = vunpack.c.l.b16 %v373
    %v1478 = vunpack.c.h.b16 %v373
    %v1479 = vunpack.c.l.b16 %v374
    %v1480 = vunpack.c.h.b16 %v374
    %v1481 = vunpack.c.l.b16 %v375
    %v1482 = vunpack.c.h.b16 %v375
    %v1483 = vunpack.c.l.b16 %v376
    %v1484 = vunpack.c.h.b16 %v376
    %v1485 = vunpack.c.l.b16 %v377
    %v1486 = vunpack.c.h.b16 %v377
    %v1487 = vunpack.c.l.b16 %v378
    %v1488 = vunpack.c.h.b16 %v378
    %v1489 = vunpack.c.l.b16 %v379
    %v1490 = vunpack.c.h.b16 %v379
    %v1491 = vunpack.c.l.b16 %v380
    %v1492 = vunpack.c.h.b16 %v380
    %v1493 = vunpack.c.l.b16 %v381
    %v1494 = vunpack.c.h.b16 %v381
    %v1495 = vunpack.c.l.b16 %v382
    %v1496 = vunpack.c.h.b16 %v382
    %v1497 = vunpack.c.l.b16 %v383
    %v1498 = vunpack.c.h.b16 %v383
    %v1499 = vunpack.c.l.b16 %v384
    %v1500 = vunpack.c.h.b16 %v384
    %v1501 = vunpack.c.l.b16 %v385
    %v1502 = vunpack.c.h.b16 %v385
    %v1503 = vunpack.c.l.b16 %v386
    %v1504 = vunpack.c.h.b16 %v386
    %v1505 = vunpack.c.l.b16 %v387
    %v1506 = vunpack.c.h.b16 %v387
    %v1507 = vunpack.c.l.b16 %v388
    %v1508 = vunpack.c.h.b16 %v388
    %v1509 = vunpack.c.l.b16 %v389
    %v1510 = vunpack.c.h.b16 %v389
    %v1511 = vunpack.c.l.b16 %v390
    %v1512 = vunpack.c.h.b16 %v390
    %v1513 = vunpack.c.l.b16 %v391
    %v1514 = vunpack.c.h.b16 %v391
    %v1515 = vunpack.c.l.b16 %v392
    %v1516 = vunpack.c.h.b16 %v392
    %v1517 = vunpack.c.l.b16 %v393
    %v1518 = vunpack.c.h.b16 %v393
    %v1519 = vunpack.c.l.b16 %v394
    %v1520 = vunpack.c.h.b16 %v394
    %v1521 = vunpack.c.l.b16 %v395
    %v1522 = vunpack.c.h.b16 %v395
    %v1523 = vunpack.c.l.b16 %v396
    %v1524 = vunpack.c.h.b16 %v396
    %v1525 = vunpack.c.l.b16 %v397
    %v1526 = vunpack.c.h.b16 %v397
    %v1527 = vunpack.c.l.b16 %v398
    %v1528 = vunpack.c.h.b16 %v398
    %v1529 = vunpack.c.l.b16 %v399
    %v1530 = vunpack.c.h.b16 %v399
    %v1531 = vunpack.c.l.b16 %v400
    %v1532 = vunpack.c.h.b16 %v400
    %v1533 = vunpack.c.l.b16 %v401
    %v1534 = vunpack.c.h.b16 %v401
    %v1535 = vunpack.c.l.b16 %v402
    %v1536 = vunpack.c.h.b16 %v402
    %v1537 = vunpack.c.l.b16 %v403
    %v1538 = vunpack.c.h.b16 %v403
    %v1539 = vunpack.c.l.b16 %v404
    %v1540 = vunpack.c.h.b16 %v404
    %v1541 = vunpack.c.l.b16 %v405
    %v1542 = vunpack.c.h.b16 %v405
    %v1543 = vunpack.c.l.b16 %v406
    %v1544 = vunpack.c.h.b16 %v406
    %v1545 = vunpack.c.l.b16 %v407
    %v1546 = vunpack.c.h.b16 %v407
    %v1547 = vunpack.c.l.b16 %v408
    %v1548 = vunpack.c.h.b16 %v408
    %v1549 = vunpack.c.l.b16 %v409
    %v1550 = vunpack.c.h.b16 %v409
    %v1551 = vunpack.c.l.b16 %v410
    %v1552 = vunpack.c.h.b16 %v410
    %v1553 = vunpack.c.l.b16 %v411
    %v1554 = vunpack.c.h.b16 %v411
    %v1555 = vunpack.c.l.b16 %v412
    %v1556 = vunpack.c.h.b16 %v412
    %v1557 = vunpack.c.l.b16 %v413
    %v1558 = vunpack.c.h.b16 %v413
    %v1559 = vunpack.c.l.b16 %v414
    %v1560 = vunpack.c.h.b16 %v414
    %v1561 = vunpack.c.l.b16 %v415
    %v1562 = vunpack.c.h.b16 %v415
    %v1563 = vunpack.c.l.b16 %v416
    %v1564 = vunpack.c.h.b16 %v416
    %v1565 = vunpack.c.l.b16 %v417
    %v1566 = vunpack.c.h.b16 %v417
    %v1567 = vunpack.c.l.b16 %v418
    %v1568 = vunpack.c.h.b16 %v418
    %v1569 = vunpack.c.l.b16 %v419
    %v1570 = vunpack.c.h.b16 %v419
    %v1571 = vunpack.c.l.b16 %v420
    %v1572 = vunpack.c.h.b16 %v420
    %v1573 = vunpack.c.l.b16 %v421
    %v1574 = vunpack.c.h.b16 %v421
    %v1575 = vunpack.c.l.b16 %v422
    %v1576 = vunpack.c.h.b16 %v422
    %v1577 = vunpack.c.l.b16 %v423
    %v1578 = vunpack.c.h.b16 %v423
    %v1579 = vunpack.c.l.b16 %v424
    %v1580 = vunpack.c.h.b16 %v424
    %v1581 = vunpack.c.l.b16 %v425
    %v1582 = vunpack.c.h.b16 %v425
    %v1583 = vunpack.c.l.b16 %v426
    %v1584 = vunpack.c.h.b16 %v426
    %v1585 = vunpack.c.l.b16 %v427
    %v1586 = vunpack.c.h.b16 %v427
    %v1587 = vunpack.c.l.b16 %v428
    %v1588 = vunpack.c.h.b16 %v428
    %v1589 = vunpack.c.l.b16 %v429
    %v1590 = vunpack.c.h.b16 %v429
    %v1591 = vunpack.c.l.b16 %v430
    %v1592 = vunpack.c.h.b16 %v430
    %v1593 = vunpack.c.l.b16 %v431
    %v1594 = vunpack.c.h.b16 %v431
    %v1595 = vunpack.c.l.b16 %v432
    %v1596 = vunpack.c.h.b16 %v432
    %v1597 = vunpack.c.l.b16 %v433
    %v1598 = vunpack.c.h.b16 %v433
    %v1599 = vunpack.c.l.b16 %v434
    %v1600 = vunpack.c.h.b16 %v434
    %v1601 = vunpack.c.l.b16 %v435
    %v1602 = vunpack.c.h.b16 %v435
    %v1603 = vunpack.c.l.b16 %v436
    %v1604 = vunpack.c.h.b16 %v436
    %v1605 = vunpack.c.l.b16 %v437
    %v1606 = vunpack.c.h.b16 %v437
    %v1607 = vunpack.c.l.b16 %v438
    %v1608 = vunpack.c.h.b16 %v438
    %v1609 = vunpack.c.l.b16 %v439
    %v1610 = vunpack.c.h.b16 %v439
    %v1611 = vunpack.c.l.b16 %v440
    %v1612 = vunpack.c.h.b16 %v440
    %v1613 = vunpack.c.l.b16 %v441
    %v1614 = vunpack.c.h.b16 %v441
    %v1615 = vunpack.c.l.b16 %v442
    %v1616 = vunpack.c.h.b16 %v442
    %v1617 = vunpack.c.l.b16 %v443
    %v1618 = vunpack.c.h.b16 %v443
    %v1619 = vunpack.c.l.b16 %v444
    %v1620 = vunpack.c.h.b16 %v444
    %v1621 = vunpack.c.l.b16 %v445
    %v1622 = vunpack.c.h.b16 %v445
    %v1623 = vunpack.c.l.b16 %v446
    %v1624 = vunpack.c.h.b16 %v446
    %v1625 = vunpack.c.l.b16 %v447
    %v1626 = vunpack.c.h.b16 %v447
    %v1627 = vunpack.c.l.b16 %v448
    %v1628 = vunpack.c.h.b16 %v448
    %v1629 = vunpack.c.l.b16 %v449
    %v1630 = vunpack.c.h.b16 %v449
    %v1631 = vunpack.c.l.b16 %v450
    %v1632 = vunpack.c.h.b16 %v450
    %v1633 = vunpack.c.l.b16 %v451
    %v1634 = vunpack.c.h.b16 %v451
    %v1635 = vunpack.c.l.b16 %v452
    %v1636 = vunpack.c.h.b16 %v452
    %v1637 = vunpack.c.l.b16 %v453
    %v1638 = vunpack.c.h.b16 %v453
    %v1639 = vunpack.c.l.b16 %v454
    %v1640 = vunpack.c.h.b16 %v454
    %v1641 = vunpack.c.l.b16 %v455
    %v1642 = vunpack.c.h.b16 %v455
    %v1643 = vunpack.c.l.b16 %v456
    %v1644 = vunpack.c.h.b16 %v456
    %v1645 = vunpack.c.l.b16 %v457
    %v1646 = vunpack.c.h.b16 %v457
    %v1647 = vunpack.c.l.b16 %v458
    %v1648 = vunpack.c.h.b16 %v458
    %v1649 = vunpack.c.l.b16 %v459
    %v1650 = vunpack.c.h.b16 %v459
    %v1651 = vunpack.c.l.b16 %v460
    %v1652 = vunpack.c.h.b16 %v460
    %v1653 = vunpack.c.l.b16 %v461
    %v1654 = vunpack.c.h.b16 %v461
    %v1655 = vunpack.c.l.b16 %v462
    %v1656 = vunpack.c.h.b16 %v462
    %v1657 = vunpack.c.l.b16 %v463
    %v1658 = vunpack.c.h.b16 %v463
    %v1659 = vunpack.c.l.b16 %v464
    %v1660 = vunpack.c.h.b16 %v464
    %v1661 = vunpack.c.l.b16 %v465
    %v1662 = vunpack.c.h.b16 %v465
    %v1663 = vunpack.c.l.b16 %v466
    %v1664 = vunpack.c.h.b16 %v466
    %v1665 = vunpack.c.l.b16 %v467
    %v1666 = vunpack.c.h.b16 %v467
    %v1667 = vunpack.c.l.b16 %v468
    %v1668 = vunpack.c.h.b16 %v468
    %v1669 = vunpack.c.l.b16 %v469
    %v1670 = vunpack.c.h.b16 %v469
    %v1671 = vunpack.c.l.b16 %v470
    %v1672 = vunpack.c.h.b16 %v470
    %v1673 = vunpack.c.l.b16 %v471
    %v1674 = vunpack.c.h.b16 %v471
    %v1675 = vunpack.c.l.b16 %v472
    %v1676 = vunpack.c.h.b16 %v472
    %v1677 = vunpack.c.l.b16 %v473
    %v1678 = vunpack.c.h.b16 %v473
    %v1679 = vunpack.c.l.b16 %v474
    %v1680 = vunpack.c.h.b16 %v474
    %v1681 = vunpack.c.l.b16 %v475
    %v1682 = vunpack.c.h.b16 %v475
    %v1683 = vunpack.c.l.b16 %v476
    %v1684 = vunpack.c.h.b16 %v476
    %v1685 = vunpack.c.l.b16 %v477
    %v1686 = vunpack.c.h.b16 %v477
    %v1687 = vunpack.c.l.b16 %v478
    %v1688 = vunpack.c.h.b16 %v478
    %v1689 = vunpack.c.l.b16 %v479
    %v1690 = vunpack.c.h.b16 %v479
    %v1691 = vunpack.c.l.b16 %v480
    %v1692 = vunpack.c.h.b16 %v480
    %v1693 = vunpack.c.l.b16 %v481
    %v1694 = vunpack.c.h.b16 %v481
    %v1695 = vunpack.c.l.b16 %v482
    %v1696 = vunpack.c.h.b16 %v482
    %v1697 = vunpack.c.l.b16 %v483
    %v1698 = vunpack.c.h.b16 %v483
    %v1699 = vunpack.c.l.b16 %v484
    %v1700 = vunpack.c.h.b16 %v484
    %v1701 = vunpack.c.l.b16 %v485
    %v1702 = vunpack.c.h.b16 %v485
    %v1703 = vunpack.c.l.b16 %v486
    %v1704 = vunpack.c.h.b16 %v486
    %v1705 = vunpack.c.l.b16 %v487
    %v1706 = vunpack.c.h.b16 %v487
    %v1707 = vunpack.c.l.b16 %v488
    %v1708 = vunpack.c.h.b16 %v488
    %v1709 = vunpack.c.l.b16 %v489
    %v1710 = vunpack.c.h.b16 %v489
    %v1711 = vunpack.c.l.b16 %v490
    %v1712 = vunpack.c.h.b16 %v490
    %v1713 = vunpack.c.l.b16 %v491
    %v1714 = vunpack.c.h.b16 %v491
    %v1715 = vunpack.c.l.b16 %v492
    %v1716 = vunpack.c.h.b16 %v492
    %v1717 = vunpack.c.l.b16 %v493
    %v1718 = vunpack.c.h.b16 %v493
    %v1719 = vunpack.c.l.b16 %v494
    %v1720 = vunpack.c.h.b16 %v494
    %v1721 = vunpack.c.l.b16 %v495
    %v1722 = vunpack.c.h.b16 %v495
    %v1723 = vunpack.c.l.b16 %v496
    %v1724 = vunpack.c.h.b16 %v496
    %v1725 = vunpack.c.l.b16 %v497
    %v1726 = vunpack.c.h.b16 %v497
    %v1727 = vunpack.c.l.b16 %v498
    %v1728 = vunpack.c.h.b16 %v498
    %v1729 = vunpack.c.l.b16 %v499
    %v1730 = vunpack.c.h.b16 %v499
    %v1731 = vunpack.c.l.b16 %v500
    %v1732 = vunpack.c.h.b16 %v500
    %v1733 = vunpack.c.l.b16 %v501
    %v1734 = vunpack.c.h.b16 %v501
    %v1735 = vunpack.c.l.b16 %v502
    %v1736 = vunpack.c.h.b16 %v502
    %v1737 = vunpack.c.l.b16 %v503
    %v1738 = vunpack.c.h.b16 %v503
    %v1739 = vunpack.c.l.b16 %v504
    %v1740 = vunpack.c.h.b16 %v504
    %v1741 = vunpack.c.l.b16 %v505
    %v1742 = vunpack.c.h.b16 %v505
    %v1743 = vunpack.c.l.b16 %v506
    %v1744 = vunpack.c.h.b16 %v506
    %v1745 = vunpack.c.l.b16 %v507
    %v1746 = vunpack.c.h.b16 %v507
    %v1747 = vunpack.c.l.b16 %v508
    %v1748 = vunpack.c.h.b16 %v508
    %v1749 = vunpack.c.l.b16 %v509
    %v1750 = vunpack.c.h.b16 %v509
    %v1751 = vunpack.c.l.b16 %v510
    %v1752 = vunpack.c.h.b16 %v510
    %v1753 = vunpack.c.l.b16 %v511
    %v1754 = vunpack.c.h.b16 %v511
    %v1755 = vunpack.c.l.b16 %v512
    %v1756 = vunpack.c.h.b16 %v512
    %v1757 = vunpack.c.l.b16 %v513
    %v1758 = vunpack.c.h.b16 %v513
    %v1759 = vunpack.c.l.b16 %v514
    %v1760 = vunpack.c.h.b16 %v514
    %v1761 = vunpack.c.l.b16 %v515
    %v1762 = vunpack.c.h.b16 %v515
    %v1763 = vunpack.c.l.b16 %v516
    %v1764 = vunpack.c.h.b16 %v516
    %v1765 = vunpack.c.l.b16 %v517
    %v1766 = vunpack.c.h.b16 %v517
    %v1767 = vunpack.c.l.b16 %v518
    %v1768 = vunpack.c.h.b16 %v518
    %v1769 = vunpack.c.l.b16 %v519
    %v1770 = vunpack.c.h.b16 %v519
    %v1771 = vunpack.c.l.b16 %v520
    %v1772 = vunpack.c.h.b16 %v520
    %v1773 = vunpack.c.l.b16 %v521
    %v1774 = vunpack.c.h.b16 %v521
    %v1775 = vpack.c.b16 %v999, %v991
    %v1776 = vpack.c.b16 %v1000, %v992
    %v1777 = vpack.c.b16 %v1001, %v993
    %v1778 = vpack.c.b16 %v1002, %v994
    %v1779 = vpack.c.b16 %v1003, %v995
    %v1780 = vpack.c.b16 %v1004, %v996
    %v1781 = vpack.c.b16 %v1005, %v997
    %v1782 = vpack.c.b16 %v1006, %v998
    %v1783 = vpack.c.b16 %v1015, %v1007
    %v1784 = vpack.c.b16 %v1016, %v1008
    %v1785 = vpack.c.b16 %v1017, %v1009
    %v1786 = vpack.c.b16 %v1018, %v1010
    %v1787 = vpack.c.b16 %v1019, %v1011
    %v1788 = vpack.c.b16 %v1020, %v1012
    %v1789 = vpack.c.b16 %v1021, %v1013
    %v1790 = vpack.c.b16 %v1022, %v1014
    %v1791 = vpack.c.b16 %v1031, %v1023
    %v1792 = vpack.c.b16 %v1032, %v1024
    %v1793 = vpack.c.b16 %v1033, %v1025
    %v1794 = vpack.c.b16 %v1034, %v1026
    %v1795 = vpack.c.b16 %v1035, %v1027
    %v1796 = vpack.c.b16 %v1036, %v1028
    %v1797 = vpack.c.b16 %v1037, %v1029
    %v1798 = vpack.c.b16 %v1038, %v1030
    %v1799 = vpack.c.b16 %v1047, %v1039
    %v1800 = vpack.c.b16 %v1048, %v1040
    %v1801 = vpack.c.b16 %v1049, %v1041
    %v1802 = vpack.c.b16 %v1050, %v1042
    %v1803 = vpack.c.b16 %v1051, %v1043
    %v1804 = vpack.c.b16 %v1052, %v1044
    %v1805 = vpack.c.b16 %v1053, %v1045
    %v1806 = vpack.c.b16 %v1054, %v1046
    %v1807 = vpack.c.b16 %v1063, %v1055
    %v1808 = vpack.c.b16 %v1064, %v1056
    %v1809 = vpack.c.b16 %v1065, %v1057
    %v1810 = vpack.c.b16 %v1066, %v1058
    %v1811 = vpack.c.b16 %v1067, %v1059
    %v1812 = vpack.c.b16 %v1068, %v1060
    %v1813 = vpack.c.b16 %v1069, %v1061
    %v1814 = vpack.c.b16 %v1070, %v1062
    %v1815 = vpack.c.b16 %v1079, %v1071
    %v1816 = vpack.c.b16 %v1080, %v1072
    %v1817 = vpack.c.b16 %v1081, %v1073
    %v1818 = vpack.c.b16 %v1082, %v1074
    %v1819 = vpack.c.b16 %v1083, %v1075
    %v1820 = vpack.c.b16 %v1084, %v1076
    %v1821 = vpack.c.b16 %v1085, %v1077
    %v1822 = vpack.c.b16 %v1086, %v1078
    %v1823 = vpack.c.b16 %v1095, %v1087
    %v1824 = vpack.c.b16 %v1096, %v1088
    %v1825 = vpack.c.b16 %v1097, %v1089
    %v1826 = vpack.c.b16 %v1098, %v1090
    %v1827 = vpack.c.b16 %v1099, %v1091
    %v1828 = vpack.c.b16 %v1100, %v1092
    %v1829 = vpack.c.b16 %v1101, %v1093
    %v1830 = vpack.c.b16 %v1102, %v1094
    %v1831 = vpack.c.b16 %v1111, %v1103
    %v1832 = vpack.c.b16 %v1112, %v1104
    %v1833 = vpack.c.b16 %v1113, %v1105
    %v1834 = vpack.c.b16 %v1114, %v1106
    %v1835 = vpack.c.b16 %v1115, %v1107
    %v1836 = vpack.c.b16 %v1116, %v1108
    %v1837 = vpack.c.b16 %v1117, %v1109
    %v1838 = vpack.c.b16 %v1118, %v1110
    %v1839 = vpack.c.b16 %v1127, %v1119
    %v1840 = vpack.c.b16 %v1128, %v1120
    %v1841 = vpack.c.b16 %v1129, %v1121
    %v1842 = vpack.c.b16 %v1130, %v1122
    %v1843 = vpack.c.b16 %v1131, %v1123
    %v1844 = vpack.c.b16 %v1132, %v1124
    %v1845 = vpack.c.b16 %v1133, %v1125
    %v1846 = vpack.c.b16 %v1134, %v1126
    %v1847 = vpack.c.b16 %v1143, %v1135
    %v1848 = vpack.c.b16 %v1144, %v1136
    %v1849 = vpack.c.b16 %v1145, %v1137
    %v1850 = vpack.c.b16 %v1146, %v1138
    %v1851 = vpack.c.b16 %v1147, %v1139
    %v1852 = vpack.c.b16 %v1148, %v1140
    %v1853 = vpack.c.b16 %v1149, %v1141
    %v1854 = vpack.c.b16 %v1150, %v1142
    %v1855 = vpack.c.b16 %v1159, %v1151
    %v1856 = vpack.c.b16 %v1160, %v1152
    %v1857 = vpack.c.b16 %v1161, %v1153
    %v1858 = vpack.c.b16 %v1162, %v1154
    %v1859 = vpack.c.b16 %v1163, %v1155
    %v1860 = vpack.c.b16 %v1164, %v1156
    %v1861 = vpack.c.b16 %v1165, %v1157
    %v1862 = vpack.c.b16 %v1166, %v1158
    %v1863 = vpack.c.b16 %v1175, %v1167
    %v1864 = vpack.c.b16 %v1176, %v1168
    %v1865 = vpack.c.b16 %v1177, %v1169
    %v1866 = vpack.c.b16 %v1178, %v1170
    %v1867 = vpack.c.b16 %v1179, %v1171
    %v1868 = vpack.c.b16 %v1180, %v1172
    %v1869 = vpack.c.b16 %v1181, %v1173
    %v1870 = vpack.c.b16 %v1182, %v1174
    %v1871 = vpack.c.b16 %v1191, %v1183
    %v1872 = vpack.c.b16 %v1192, %v1184
    %v1873 = vpack.c.b16 %v1193, %v1185
    %v1874 = vpack.c.b16 %v1194, %v1186
    %v1875 = vpack.c.b16 %v1195, %v1187
    %v1876 = vpack.c.b16 %v1196, %v1188
    %v1877 = vpack.c.b16 %v1197, %v1189
    %v1878 = vpack.c.b16 %v1198, %v1190
    %v1879 = vpack.c.b16 %v1207, %v1199
    %v1880 = vpack.c.b16 %v1208, %v1200
    %v1881 = vpack.c.b16 %v1209, %v1201
    %v1882 = vpack.c.b16 %v1210, %v1202
    %v1883 = vpack.c.b16 %v1211, %v1203
    %v1884 = vpack.c.b16 %v1212, %v1204
    %v1885 = vpack.c.b16 %v1213, %v1205
    %v1886 = vpack.c.b16 %v1214, %v1206
    %v1887 = vpack.c.b16 %v1223, %v1215
    %v1888 = vpack.c.b16 %v1224, %v1216
    %v1889 = vpack.c.b16 %v1225, %v1217
    %v1890 = vpack.c.b16 %v1226, %v1218
    %v1891 = vpack.c.b16 %v1227, %v1219
    %v1892 = vpack.c.b16 %v1228, %v1220
    %v1893 = vpack.c.b16 %v1229, %v1221
    %v1894 = vpack.c.b16 %v1230, %v1222
    %v1895 = vpack.c.b16 %v1239, %v1231
    %v1896 = vpack.c.b16 %v1240, %v1232
    %v1897 = vpack.c.b16 %v1241, %v1233
    %v1898 = vpack.c.b16 %v1242, %v1234
    %v1899 = vpack.c.b16 %v1243, %v1235
    %v1900 = vpack.c.b16 %v1244, %v1236
    %v1901 = vpack.c.b16 %v1245, %v1237
    %v1902 = vpack.c.b16 %v1246, %v1238
    %v1903 = vpack.c.b16 %v1255, %v1247
    %v1904 = vpack.c.b16 %v1256, %v1248
    %v1905 = vpack.c.b16 %v1257, %v1249
    %v1906 = vpack.c.b16 %v1258, %v1250
    %v1907 = vpack.c.b16 %v1259, %v1251
    %v1908 = vpack.c.b16 %v1260, %v1252
    %v1909 = vpack.c.b16 %v1261, %v1253
    %v1910 = vpack.c.b16 %v1262, %v1254
    %v1911 = vpack.c.b16 %v1271, %v1263
    %v1912 = vpack.c.b16 %v1272, %v1264
    %v1913 = vpack.c.b16 %v1273, %v1265
    %v1914 = vpack.c.b16 %v1274, %v1266
    %v1915 = vpack.c.b16 %v1275, %v1267
    %v1916 = vpack.c.b16 %v1276, %v1268
    %v1917 = vpack.c.b16 %v1277, %v1269
    %v1918 = vpack.c.b16 %v1278, %v1270
    %v1919 = vpack.c.b16 %v1287, %v1279
    %v1920 = vpack.c.b16 %v1288, %v1280
    %v1921 = vpack.c.b16 %v1289, %v1281
    %v1922 = vpack.c.b16 %v1290, %v1282
    %v1923 = vpack.c.b16 %v1291, %v1283
    %v1924 = vpack.c.b16 %v1292, %v1284
    %v1925 = vpack.c.b16 %v1293, %v1285
    %v1926 = vpack.c.b16 %v1294, %v1286
    %v1927 = vpack.c.b16 %v1303, %v1295
    %v1928 = vpack.c.b16 %v1304, %v1296
    %v1929 = vpack.c.b16 %v1305, %v1297
    %v1930 = vpack.c.b16 %v1306, %v1298
    %v1931 = vpack.c.b16 %v1307, %v1299
    %v1932 = vpack.c.b16 %v1308, %v1300
    %v1933 = vpack.c.b16 %v1309, %v1301
    %v1934 = vpack.c.b16 %v1310, %v1302
    %v1935 = vpack.c.b16 %v1319, %v1311
    %v1936 = vpack.c.b16 %v1320, %v1312
    %v1937 = vpack.c.b16 %v1321, %v1313
    %v1938 = vpack.c.b16 %v1322, %v1314
    %v1939 = vpack.c.b16 %v1323, %v1315
    %v1940 = vpack.c.b16 %v1324, %v1316
    %v1941 = vpack.c.b16 %v1325, %v1317
    %v1942 = vpack.c.b16 %v1326, %v1318
    %v1943 = vpack.c.b16 %v1335, %v1327
    %v1944 = vpack.c.b16 %v1336, %v1328
    %v1945 = vpack.c.b16 %v1337, %v1329
    %v1946 = vpack.c.b16 %v1338, %v1330
    %v1947 = vpack.c.b16 %v1339, %v1331
    %v1948 = vpack.c.b16 %v1340, %v1332
    %v1949 = vpack.c.b16 %v1341, %v1333
    %v1950 = vpack.c.b16 %v1342, %v1334
    %v1951 = vpack.c.b16 %v1351, %v1343
    %v1952 = vpack.c.b16 %v1352, %v1344
    %v1953 = vpack.c.b16 %v1353, %v1345
    %v1954 = vpack.c.b16 %v1354, %v1346
    %v1955 = vpack.c.b16 %v1355, %v1347
    %v1956 = vpack.c.b16 %v1356, %v1348
    %v1957 = vpack.c.b16 %v1357, %v1349
    %v1958 = vpack.c.b16 %v1358, %v1350
    %v1959 = vpack.c.b16 %v1367, %v1359
    %v1960 = vpack.c.b16 %v1368, %v1360
    %v1961 = vpack.c.b16 %v1369, %v1361
    %v1962 = vpack.c.b16 %v1370, %v1362
    %v1963 = vpack.c.b16 %v1371, %v1363
    %v1964 = vpack.c.b16 %v1372, %v1364
    %v1965 = vpack.c.b16 %v1373, %v1365
    %v1966 = vpack.c.b16 %v1374, %v1366
    %v1967 = vpack.c.b16 %v1383, %v1375
    %v1968 = vpack.c.b16 %v1384, %v1376
    %v1969 = vpack.c.b16 %v1385, %v1377
    %v1970 = vpack.c.b16 %v1386, %v1378
    %v1971 = vpack.c.b16 %v1387, %v1379
    %v1972 = vpack.c.b16 %v1388, %v1380
    %v1973 = vpack.c.b16 %v1389, %v1381
    %v1974 = vpack.c.b16 %v1390, %v1382
    %v1975 = vpack.c.b16 %v1399, %v1391
    %v1976 = vpack.c.b16 %v1400, %v1392
    %v1977 = vpack.c.b16 %v1401, %v1393
    %v1978 = vpack.c.b16 %v1402, %v1394
    %v1979 = vpack.c.b16 %v1403, %v1395
    %v1980 = vpack.c.b16 %v1404, %v1396
    %v1981 = vpack.c.b16 %v1405, %v1397
    %v1982 = vpack.c.b16 %v1406, %v1398
    %v1983 = vpack.c.b16 %v1415, %v1407
    %v1984 = vpack.c.b16 %v1416, %v1408
    %v1985 = vpack.c.b16 %v1417, %v1409
    %v1986 = vpack.c.b16 %v1418, %v1410
    %v1987 = vpack.c.b16 %v1419, %v1411
    %v1988 = vpack.c.b16 %v1420, %v1412
    %v1989 = vpack.c.b16 %v1421, %v1413
    %v1990 = vpack.c.b16 %v1422, %v1414
    %v1991 = vpack.c.b16 %v1431, %v1423
    %v1992 = vpack.c.b16 %v1432, %v1424
    %v1993 = vpack.c.b16 %v1433, %v1425
    %v1994 = vpack.c.b16 %v1434, %v1426
    %v1995 = vpack.c.b16 %v1435, %v1427
    %v1996 = vpack.c.b16 %v1436, %v1428
    %v1997 = vpack.c.b16 %v1437, %v1429
    %v1998 = vpack.c.b16 %v1438, %v1430
    %v1999 = vpack.c.b16 %v1447, %v1439
    %v2000 = vpack.c.b16 %v1448, %v1440
    %v2001 = vpack.c.b16 %v1449, %v1441
    %v2002 = vpack.c.b16 %v1450, %v1442
    %v2003 = vpack.c.b16 %v1451, %v1443
    %v2004 = vpack.c.b16 %v1452, %v1444
    %v2005 = vpack.c.b16 %v1453, %v1445
    %v2006 = vpack.c.b16 %v1454, %v1446
    %v2007 = vpack.c.b16 %v1463, %v1455
    %v2008 = vpack.c.b16 %v1464, %v1456
    %v2009 = vpack.c.b16 %v1465, %v1457
    %v2010 = vpack.c.b16 %v1466, %v1458
    %v2011 = vpack.c.b16 %v1467, %v1459
    %v2012 = vpack.c.b16 %v1468, %v1460
    %v2013 = vpack.c.b16 %v1469, %v1461
    %v2014 = vpack.c.b16 %v1470, %v1462
    %v2015 = vpack.c.b16 %v1479, %v1471
    %v2016 = vpack.c.b16 %v1480, %v1472
    %v2017 = vpack.c.b16 %v1481, %v1473
    %v2018 = vpack.c.b16 %v1482, %v1474
    %v2019 = vpack.c.b16 %v1483, %v1475
    %v2020 = vpack.c.b16 %v1484, %v1476
    %v2021 = vpack.c.b16 %v1485, %v1477
    %v2022 = vpack.c.b16 %v1486, %v1478
    %v2023 = vpack.c.b16 %v1495, %v1487
    %v2024 = vpack.c.b16 %v1496, %v1488
    %v2025 = vpack.c.b16 %v1497, %v1489
    %v2026 = vpack.c.b16 %v1498, %v1490
    %v2027 = vpack.c.b16 %v1499, %v1491
    %v2028 = vpack.c.b16 %v1500, %v1492
    %v2029 = vpack.c.b16 %v1501, %v1493
    %v2030 = vpack.c.b16 %v1502, %v1494
    %v2031 = vpack.c.b16 %v1511, %v1503
    %v2032 = vpack.c.b16 %v1512, %v1504
    %v2033 = vpack.c.b16 %v1513, %v1505
    %v2034 = vpack.c.b16 %v1514, %v1506
    %v2035 = vpack.c.b16 %v1515, %v1507
    %v2036 = vpack.c.b16 %v1516, %v1508
    %v2037 = vpack.c.b16 %v1517, %v1509
    %v2038 = vpack.c.b16 %v1518, %v1510
    %v2039 = vpack.c.b16 %v1527, %v1519
    %v2040 = vpack.c.b16 %v1528, %v1520
    %v2041 = vpack.c.b16 %v1529, %v1521
    %v2042 = vpack.c.b16 %v1530, %v1522
    %v2043 = vpack.c.b16 %v1531, %v1523
    %v2044 = vpack.c.b16 %v1532, %v1524
    %v2045 = vpack.c.b16 %v1533, %v1525
    %v2046 = vpack.c.b16 %v1534, %v1526
    %v2047 = vpack.c.b16 %v1543, %v1535
    %v2048 = vpack.c.b16 %v1544, %v1536
    %v2049 = vpack.c.b16 %v1545, %v1537
    %v2050 = vpack.c.b16 %v1546, %v1538
    %v2051 = vpack.c.b16 %v1547, %v1539
    %v2052 = vpack.c.b16 %v1548, %v1540
    %v2053 = vpack.c.b16 %v1549, %v1541
    %v2054 = vpack.c.b16 %v1550, %v1542
    %v2055 = vpack.c.b16 %v1559, %v1551
    %v2056 = vpack.c.b16 %v1560, %v1552
    %v2057 = vpack.c.b16 %v1561, %v1553
    %v2058 = vpack.c.b16 %v1562, %v1554
    %v2059 = vpack.c.b16 %v1563, %v1555
    %v2060 = vpack.c.b16 %v1564, %v1556
    %v2061 = vpack.c.b16 %v1565, %v1557
    %v2062 = vpack.c.b16 %v1566, %v1558
    %v2063 = vpack.c.b16 %v1575, %v1567
    %v2064 = vpack.c.b16 %v1576, %v1568
    %v2065 = vpack.c.b16 %v1577, %v1569
    %v2066 = vpack.c.b16 %v1578, %v1570
    %v2067 = vpack.c.b16 %v1579, %v1571
    %v2068 = vpack.c.b16 %v1580, %v1572
    %v2069 = vpack.c.b16 %v1581, %v1573
    %v2070 = vpack.c.b16 %v1582, %v1574
    %v2071 = vpack.c.b16 %v1591, %v1583
    %v2072 = vpack.c.b16 %v1592, %v1584
    %v2073 = vpack.c.b16 %v1593, %v1585
    %v2074 = vpack.c.b16 %v1594, %v1586
    %v2075 = vpack.c.b16 %v1595, %v1587
    %v2076 = vpack.c.b16 %v1596, %v1588
    %v2077 = vpack.c.b16 %v1597, %v1589
    %v2078 = vpack.c.b16 %v1598, %v1590
    %v2079 = vpack.c.b16 %v1607, %v1599
    %v2080 = vpack.c.b16 %v1608, %v1600
    %v2081 = vpack.c.b16 %v1609, %v1601
    %v2082 = vpack.c.b16 %v1610, %v1602
    %v2083 = vpack.c.b16 %v1611, %v1603
    %v2084 = vpack.c.b16 %v1612, %v1604
    %v2085 = vpack.c.b16 %v1613, %v1605
    %v2086 = vpack.c.b16 %v1614, %v1606
    %v2087 = vpack.c.b16 %v1623, %v1615
    %v2088 = vpack.c.b16 %v1624, %v1616
    %v2089 = vpack.c.b16 %v1625, %v1617
    %v2090 = vpack.c.b16 %v1626, %v1618
    %v2091 = vpack.c.b16 %v1627, %v1619
    %v2092 = vpack.c.b16 %v1628, %v1620
    %v2093 = vpack.c.b16 %v1629, %v1621
    %v2094 = vpack.c.b16 %v1630, %v1622
    %v2095 = vpack.c.b16 %v1639, %v1631
    %v2096 = vpack.c.b16 %v1640, %v1632
    %v2097 = vpack.c.b16 %v1641, %v1633
    %v2098 = vpack.c.b16 %v1642, %v1634
    %v2099 = vpack.c.b16 %v1643, %v1635
    %v2100 = vpack.c.b16 %v1644, %v1636
    %v2101 = vpack.c.b16 %v1645, %v1637
    %v2102 = vpack.c.b16 %v1646, %v1638
    %v2103 = vpack.c.b16 %v1655, %v1647
    %v2104 = vpack.c.b16 %v1656, %v1648
    %v2105 = vpack.c.b16 %v1657, %v1649
    %v2106 = vpack.c.b16 %v1658, %v1650
    %v2107 = vpack.c.b16 %v1659, %v1651
    %v2108 = vpack.c.b16 %v1660, %v1652
    %v2109 = vpack.c.b16 %v1661, %v1653
    %v2110 = vpack.c.b16 %v1662, %v1654
    %v2111 = vpack.c.b16 %v1671, %v1663
    %v2112 = vpack.c.b16 %v1672, %v1664
    %v2113 = vpack.c.b16 %v1673, %v1665
    %v2114 = vpack.c.b16 %v1674, %v1666
    %v2115 = vpack.c.b16 %v1675, %v1667
    %v2116 = vpack.c.b16 %v1676, %v1668
    %v2117 = vpack.c.b16 %v1677, %v1669
    %v2118 = vpack.c.b16 %v1678, %v1670
    %v2119 = vpack.c.b16 %v1687, %v1679
    %v2120 = vpack.c.b16 %v1688, %v1680
    %v2121 = vpack.c.b16 %v1689, %v1681
    %v2122 = vpack.c.b16 %v1690, %v1682
    %v2123 = vpack.c.b16 %v1691, %v1683
    %v2124 = vpack.c.b16 %v1692, %v1684
    %v2125 = vpack.c.b16 %v1693, %v1685
    %v2126 = vpack.c.b16 %v1694, %v1686
    %v2127 = vpack.c.b16 %v1703, %v1695
    %v2128 = vpack.c.b16 %v1704, %v1696
    %v2129 = vpack.c.b16 %v1705, %v1697
    %v2130 = vpack.c.b16 %v1706, %v1698
    %v2131 = vpack.c.b16 %v1707, %v1699
    %v2132 = vpack.c.b16 %v1708, %v1700
    %v2133 = vpack.c.b16 %v1709, %v1701
    %v2134 = vpack.c.b16 %v1710, %v1702
    %v2135 = vpack.c.b16 %v1719, %v1711
    %v2136 = vpack.c.b16 %v1720, %v1712
    %v2137 = vpack.c.b16 %v1721, %v1713
    %v2138 = vpack.c.b16 %v1722, %v1714
    %v2139 = vpack.c.b16 %v1723, %v1715
    %v2140 = vpack.c.b16 %v1724, %v1716
    %v2141 = vpack.c.b16 %v1725, %v1717
    %v2142 = vpack.c.b16 %v1726, %v1718
    %v2143 = vpack.c.b16 %v1735, %v1727
    %v2144 = vpack.c.b16 %v1736, %v1728
    %v2145 = vpack.c.b16 %v1737, %v1729
    %v2146 = vpack.c.b16 %v1738, %v1730
    %v2147 = vpack.c.b16 %v1739, %v1731
    %v2148 = vpack.c.b16 %v1740, %v1732
    %v2149 = vpack.c.b16 %v1741, %v1733
    %v2150 = vpack.c.b16 %v1742, %v1734
    %v2151 = vpack.c.b16 %v1751, %v1743
    %v2152 = vpack.c.b16 %v1752, %v1744
    %v2153 = vpack.c.b16 %v1753, %v1745
    %v2154 = vpack.c.b16 %v1754, %v1746
    %v2155 = vpack.c.b16 %v1755, %v1747
    %v2156 = vpack.c.b16 %v1756, %v1748
    %v2157 = vpack.c.b16 %v1757, %v1749
    %v2158 = vpack.c.b16 %v1758, %v1750
    %v2159 = vpack.c.b16 %v1767, %v1759
    %v2160 = vpack.c.b16 %v1768, %v1760
    %v2161 = vpack.c.b16 %v1769, %v1761
    %v2162 = vpack.c.b16 %v1770, %v1762
    %v2163 = vpack.c.b16 %v1771, %v1763
    %v2164 = vpack.c.b16 %v1772, %v1764
    %v2165 = vpack.c.b16 %v1773, %v1765
    %v2166 = vpack.c.b16 %v1774, %v1766
    %vm2559 = vcmask 130048
    %v2561 = vsel %vm2559, %v592, 0
    %2563 = vmatprep.subr.bf16.mxu0 %v1776
    %2564 = vmatpush1.bf16.msra.mxu0 %v1775
    %2565 = vmatprep.subr.bf16.mxu0 %v1784
    %2566 = vmatpush1.bf16.msra.mxu0 %v1783
    %2567 = vmatprep.subr.bf16.mxu0 %v1792
    %2568 = vmatpush1.bf16.msra.mxu0 %v1791
    %2569 = vmatprep.subr.bf16.mxu0 %v1800
    %2570 = vmatpush1.bf16.msra.mxu0 %v1799
    %2571 = vmatprep.subr.bf16.mxu0 %v1808
    %2572 = vmatpush1.bf16.msra.mxu0 %v1807
    %2573 = vmatprep.subr.bf16.mxu0 %v1816
    %2574 = vmatpush1.bf16.msra.mxu0 %v1815
    %2575 = vmatprep.subr.bf16.mxu0 %v1824
    %2576 = vmatpush1.bf16.msra.mxu0 %v1823
    %2577 = vmatprep.subr.bf16.mxu0 %v1832
    %2578 = vmatpush1.bf16.msra.mxu0 %v1831
    %2579 = vmatprep.subr.bf16.mxu0 %v1840
    %2580 = vmatpush1.bf16.msra.mxu0 %v1839
    %2581 = vmatprep.subr.bf16.mxu0 %v1848
    %2582 = vmatpush1.bf16.msra.mxu0 %v1847
    %2583 = vmatprep.subr.bf16.mxu0 %v1856
    %2584 = vmatpush1.bf16.msra.mxu0 %v1855
    %2585 = vmatprep.subr.bf16.mxu0 %v1864
    %2586 = vmatpush1.bf16.msra.mxu0 %v1863
    %2587 = vmatprep.subr.bf16.mxu0 %v1872
    %2588 = vmatpush1.bf16.msra.mxu0 %v1871
    %2589 = vmatprep.subr.bf16.mxu0 %v1880
    %2590 = vmatpush1.bf16.msra.mxu0 %v1879
    %2591 = vmatprep.subr.bf16.mxu0 %v1888
    %2592 = vmatpush1.bf16.msra.mxu0 %v1887
    %2593 = vmatprep.subr.bf16.mxu0 %v1896
    %2594 = vmatpush1.bf16.msra.mxu0 %v1895
    %2595 = vmatprep.mubr.bf16.mxu0 %v587
    %2596 = vmatmul.mubr.bf16.gmra.mrb[0].mxu0 %v586
    %v2597 = vpop.f32.mrb[0].mxu0
    %v2598 = vadd.f32 %v527, %v2597
    %v2599 = vpop.f32.mrb[0].mxu0
    %v2600 = vadd.f32 %v531, %v2599
    %v2601 = vpop.f32.mrb[0].mxu0
    %v2602 = vadd.f32 %v527, %v2601
    %v2603 = vpop.f32.mrb[0].mxu0
    %v2604 = vadd.f32 %v531, %v2603
    %2605 = vdwg.mxu0
    %2606 = vmatprep.subr.bf16.mxu0 %v1904
    %2607 = vmatpush1.bf16.msra.mxu0 %v1903
    %2608 = vmatprep.subr.bf16.mxu0 %v1912
    %2609 = vmatpush1.bf16.msra.mxu0 %v1911
    %2610 = vmatprep.subr.bf16.mxu0 %v1920
    %2611 = vmatpush1.bf16.msra.mxu0 %v1919
    %2612 = vmatprep.subr.bf16.mxu0 %v1928
    %2613 = vmatpush1.bf16.msra.mxu0 %v1927
    %2614 = vmatprep.subr.bf16.mxu0 %v1936
    %2615 = vmatpush1.bf16.msra.mxu0 %v1935
    %2616 = vmatprep.subr.bf16.mxu0 %v1944
    %2617 = vmatpush1.bf16.msra.mxu0 %v1943
    %2618 = vmatprep.subr.bf16.mxu0 %v1952
    %2619 = vmatpush1.bf16.msra.mxu0 %v1951
    %2620 = vmatprep.subr.bf16.mxu0 %v1960
    %2621 = vmatpush1.bf16.msra.mxu0 %v1959
    %2622 = vmatprep.subr.bf16.mxu0 %v1968
    %2623 = vmatpush1.bf16.msra.mxu0 %v1967
    %2624 = vmatprep.subr.bf16.mxu0 %v1976
    %2625 = vmatpush1.bf16.msra.mxu0 %v1975
    %2626 = vmatprep.subr.bf16.mxu0 %v1984
    %2627 = vmatpush1.bf16.msra.mxu0 %v1983
    %2628 = vmatprep.subr.bf16.mxu0 %v1992
    %2629 = vmatpush1.bf16.msra.mxu0 %v1991
    %2630 = vmatprep.subr.bf16.mxu0 %v2000
    %2631 = vmatpush1.bf16.msra.mxu0 %v1999
    %2632 = vmatprep.subr.bf16.mxu0 %v2008
    %2633 = vmatpush1.bf16.msra.mxu0 %v2007
    %2634 = vmatprep.subr.bf16.mxu0 %v2016
    %2635 = vmatpush1.bf16.msra.mxu0 %v2015
    %2636 = vmatprep.subr.bf16.mxu0 %v2024
    %2637 = vmatpush1.bf16.msra.mxu0 %v2023
    %2638 = vmatprep.mubr.bf16.mxu0 %v589
    %2639 = vmatmul.mubr.bf16.gmra.mrb[0].mxu0 %v588
    %v2640 = vpop.f32.mrb[0].mxu0
    %v2641 = vadd.f32 %v2598, %v2640
    %v2642 = vpop.f32.mrb[0].mxu0
    %v2643 = vadd.f32 %v2600, %v2642
    %v2644 = vpop.f32.mrb[0].mxu0
    %v2645 = vadd.f32 %v2602, %v2644
    %v2646 = vpop.f32.mrb[0].mxu0
    %v2647 = vadd.f32 %v2604, %v2646
    %2648 = vdwg.mxu0
    %2649 = vmatprep.subr.bf16.mxu0 %v2032
    %2650 = vmatpush1.bf16.msra.mxu0 %v2031
    %2651 = vmatprep.subr.bf16.mxu0 %v2040
    %2652 = vmatpush1.bf16.msra.mxu0 %v2039
    %2653 = vmatprep.subr.bf16.mxu0 %v2048
    %2654 = vmatpush1.bf16.msra.mxu0 %v2047
    %2655 = vmatprep.subr.bf16.mxu0 %v2056
    %2656 = vmatpush1.bf16.msra.mxu0 %v2055
    %2657 = vmatprep.subr.bf16.mxu0 %v2064
    %2658 = vmatpush1.bf16.msra.mxu0 %v2063
    %2659 = vmatprep.subr.bf16.mxu0 %v2072
    %2660 = vmatpush1.bf16.msra.mxu0 %v2071
    %2661 = vmatprep.subr.bf16.mxu0 %v2080
    %2662 = vmatpush1.bf16.msra.mxu0 %v2079
    %2663 = vmatprep.subr.bf16.mxu0 %v2088
    %2664 = vmatpush1.bf16.msra.mxu0 %v2087
    %2665 = vmatprep.subr.bf16.mxu0 %v2096
    %2666 = vmatpush1.bf16.msra.mxu0 %v2095
    %2667 = vmatprep.subr.bf16.mxu0 %v2104
    %2668 = vmatpush1.bf16.msra.mxu0 %v2103
    %2669 = vmatprep.subr.bf16.mxu0 %v2112
    %2670 = vmatpush1.bf16.msra.mxu0 %v2111
    %2671 = vmatprep.subr.bf16.mxu0 %v2120
    %2672 = vmatpush1.bf16.msra.mxu0 %v2119
    %2673 = vmatprep.subr.bf16.mxu0 %v2128
    %2674 = vmatpush1.bf16.msra.mxu0 %v2127
    %2675 = vmatprep.subr.bf16.mxu0 %v2136
    %2676 = vmatpush1.bf16.msra.mxu0 %v2135
    %2677 = vmatprep.subr.bf16.mxu0 %v2144
    %2678 = vmatpush1.bf16.msra.mxu0 %v2143
    %2679 = vmatprep.subr.bf16.mxu0 %v2152
    %2680 = vmatpush1.bf16.msra.mxu0 %v2151
    %2681 = vmatprep.mubr.bf16.mxu0 %v591
    %2682 = vmatmul.mubr.bf16.gmra.mrb[0].mxu0 %v590
    %v2683 = vpop.f32.mrb[0].mxu0
    %v2684 = vadd.f32 %v2641, %v2683
    %v2685 = vpop.f32.mrb[0].mxu0
    %v2686 = vadd.f32 %v2643, %v2685
    %v2687 = vpop.f32.mrb[0].mxu0
    %v2688 = vadd.f32 %v2645, %v2687
    %v2689 = vpop.f32.mrb[0].mxu0
    %v2690 = vadd.f32 %v2647, %v2689
    %2691 = vdwg.mxu0
    %2692 = vmatprep.subr.bf16.mxu0 %v2160
    %2693 = vmatpush1.bf16.msra.mxu0 %v2159
    %2694 = vmatprep.subr.bf16.mxu0 0
    %2695 = vmatpush1.bf16.msra.mxu0 0
    %2696 = vmatprep.subr.bf16.mxu0 0
    %2697 = vmatpush1.bf16.msra.mxu0 0
    %2698 = vmatprep.subr.bf16.mxu0 0
    %2699 = vmatpush1.bf16.msra.mxu0 0
    %2700 = vmatprep.subr.bf16.mxu0 0
    %2701 = vmatpush1.bf16.msra.mxu0 0
    %2702 = vmatprep.subr.bf16.mxu0 0
    %2703 = vmatpush1.bf16.msra.mxu0 0
    %2704 = vmatprep.subr.bf16.mxu0 0
    %2705 = vmatpush1.bf16.msra.mxu0 0
    %2706 = vmatprep.subr.bf16.mxu0 0
    %2707 = vmatpush1.bf16.msra.mxu0 0
    %2708 = vmatprep.subr.bf16.mxu0 0
    %2709 = vmatpush1.bf16.msra.mxu0 0
    %2710 = vmatprep.subr.bf16.mxu0 0
    %2711 = vmatpush1.bf16.msra.mxu0 0
    %2712 = vmatprep.subr.bf16.mxu0 0
    %2713 = vmatpush1.bf16.msra.mxu0 0
    %2714 = vmatprep.subr.bf16.mxu0 0
    %2715 = vmatpush1.bf16.msra.mxu0 0
    %2716 = vmatprep.subr.bf16.mxu0 0
    %2717 = vmatpush1.bf16.msra.mxu0 0
    %2718 = vmatprep.subr.bf16.mxu0 0
    %2719 = vmatpush1.bf16.msra.mxu0 0
    %2720 = vmatprep.subr.bf16.mxu0 0
    %2721 = vmatpush1.bf16.msra.mxu0 0
    %2722 = vmatprep.subr.bf16.mxu0 0
    %2723 = vmatpush1.bf16.msra.mxu0 0
    %2724 = vmatprep.mubr.bf16.mxu0 0
    %2725 = vmatmul.mubr.bf16.gmra.mrb[0].mxu0 %v2561
    %v2726 = vpop.f32.mrb[0].mxu0
    %v2727 = vadd.f32 %v2684, %v2726
    %v2728 = vpop.f32.mrb[0].mxu0
    %v2729 = vadd.f32 %v2686, %v2728
    %v2730 = vpop.f32.mrb[0].mxu0
    %v2731 = vadd.f32 %v2688, %v2730
    %v2732 = vpop.f32.mrb[0].mxu0
    %v2733 = vadd.f32 %v2690, %v2732
    %2734 = vdwg.mxu0
    %2735 = vmatprep.subr.bf16.mxu0 %v1778
    %2736 = vmatpush1.bf16.msra.mxu0 %v1777
    %2737 = vmatprep.subr.bf16.mxu0 %v1786
    %2738 = vmatpush1.bf16.msra.mxu0 %v1785
    %2739 = vmatprep.subr.bf16.mxu0 %v1794
    %2740 = vmatpush1.bf16.msra.mxu0 %v1793
    %2741 = vmatprep.subr.bf16.mxu0 %v1802
    %2742 = vmatpush1.bf16.msra.mxu0 %v1801
    %2743 = vmatprep.subr.bf16.mxu0 %v1810
    %2744 = vmatpush1.bf16.msra.mxu0 %v1809
    %2745 = vmatprep.subr.bf16.mxu0 %v1818
    %2746 = vmatpush1.bf16.msra.mxu0 %v1817
    %2747 = vmatprep.subr.bf16.mxu0 %v1826
    %2748 = vmatpush1.bf16.msra.mxu0 %v1825
    %2749 = vmatprep.subr.bf16.mxu0 %v1834
    %2750 = vmatpush1.bf16.msra.mxu0 %v1833
    %2751 = vmatprep.subr.bf16.mxu0 %v1842
    %2752 = vmatpush1.bf16.msra.mxu0 %v1841
    %2753 = vmatprep.subr.bf16.mxu0 %v1850
    %2754 = vmatpush1.bf16.msra.mxu0 %v1849
    %2755 = vmatprep.subr.bf16.mxu0 %v1858
    %2756 = vmatpush1.bf16.msra.mxu0 %v1857
    %2757 = vmatprep.subr.bf16.mxu0 %v1866
    %2758 = vmatpush1.bf16.msra.mxu0 %v1865
    %2759 = vmatprep.subr.bf16.mxu0 %v1874
    %2760 = vmatpush1.bf16.msra.mxu0 %v1873
    %2761 = vmatprep.subr.bf16.mxu0 %v1882
    %2762 = vmatpush1.bf16.msra.mxu0 %v1881
    %2763 = vmatprep.subr.bf16.mxu0 %v1890
    %2764 = vmatpush1.bf16.msra.mxu0 %v1889
    %2765 = vmatprep.subr.bf16.mxu0 %v1898
    %2766 = vmatpush1.bf16.msra.mxu0 %v1897
    %2767 = vmatprep.mubr.bf16.mxu0 %v587
    %2768 = vmatmul.mubr.bf16.gmra.mrb[0].mxu0 %v586
    %v2769 = vpop.f32.mrb[0].mxu0
    %v2770 = vadd.f32 %v535, %v2769
    %v2771 = vpop.f32.mrb[0].mxu0
    %v2772 = vadd.f32 %v539, %v2771
    %v2773 = vpop.f32.mrb[0].mxu0
    %v2774 = vadd.f32 %v535, %v2773
    %v2775 = vpop.f32.mrb[0].mxu0
    %v2776 = vadd.f32 %v539, %v2775
    %2777 = vdwg.mxu0
    %2778 = vmatprep.subr.bf16.mxu0 %v1906
    %2779 = vmatpush1.bf16.msra.mxu0 %v1905
    %2780 = vmatprep.subr.bf16.mxu0 %v1914
    %2781 = vmatpush1.bf16.msra.mxu0 %v1913
    %2782 = vmatprep.subr.bf16.mxu0 %v1922
    %2783 = vmatpush1.bf16.msra.mxu0 %v1921
    %2784 = vmatprep.subr.bf16.mxu0 %v1930
    %2785 = vmatpush1.bf16.msra.mxu0 %v1929
    %2786 = vmatprep.subr.bf16.mxu0 %v1938
    %2787 = vmatpush1.bf16.msra.mxu0 %v1937
    %2788 = vmatprep.subr.bf16.mxu0 %v1946
    %2789 = vmatpush1.bf16.msra.mxu0 %v1945
    %2790 = vmatprep.subr.bf16.mxu0 %v1954
    %2791 = vmatpush1.bf16.msra.mxu0 %v1953
    %2792 = vmatprep.subr.bf16.mxu0 %v1962
    %2793 = vmatpush1.bf16.msra.mxu0 %v1961
    %2794 = vmatprep.subr.bf16.mxu0 %v1970
    %2795 = vmatpush1.bf16.msra.mxu0 %v1969
    %2796 = vmatprep.subr.bf16.mxu0 %v1978
    %2797 = vmatpush1.bf16.msra.mxu0 %v1977
    %2798 = vmatprep.subr.bf16.mxu0 %v1986
    %2799 = vmatpush1.bf16.msra.mxu0 %v1985
    %2800 = vmatprep.subr.bf16.mxu0 %v1994
    %2801 = vmatpush1.bf16.msra.mxu0 %v1993
    %2802 = vmatprep.subr.bf16.mxu0 %v2002
    %2803 = vmatpush1.bf16.msra.mxu0 %v2001
    %2804 = vmatprep.subr.bf16.mxu0 %v2010
    %2805 = vmatpush1.bf16.msra.mxu0 %v2009
    %2806 = vmatprep.subr.bf16.mxu0 %v2018
    %2807 = vmatpush1.bf16.msra.mxu0 %v2017
    %2808 = vmatprep.subr.bf16.mxu0 %v2026
    %2809 = vmatpush1.bf16.msra.mxu0 %v2025
    %2810 = vmatprep.mubr.bf16.mxu0 %v589
    %2811 = vmatmul.mubr.bf16.gmra.mrb[0].mxu0 %v588
    %v2812 = vpop.f32.mrb[0].mxu0
    %v2813 = vadd.f32 %v2770, %v2812
    %v2814 = vpop.f32.mrb[0].mxu0
    %v2815 = vadd.f32 %v2772, %v2814
    %v2816 = vpop.f32.mrb[0].mxu0
    %v2817 = vadd.f32 %v2774, %v2816
    %v2818 = vpop.f32.mrb[0].mxu0
    %v2819 = vadd.f32 %v2776, %v2818
    %2820 = vdwg.mxu0
    %2821 = vmatprep.subr.bf16.mxu0 %v2034
    %2822 = vmatpush1.bf16.msra.mxu0 %v2033
    %2823 = vmatprep.subr.bf16.mxu0 %v2042
    %2824 = vmatpush1.bf16.msra.mxu0 %v2041
    %2825 = vmatprep.subr.bf16.mxu0 %v2050
    %2826 = vmatpush1.bf16.msra.mxu0 %v2049
    %2827 = vmatprep.subr.bf16.mxu0 %v2058
    %2828 = vmatpush1.bf16.msra.mxu0 %v2057
    %2829 = vmatprep.subr.bf16.mxu0 %v2066
    %2830 = vmatpush1.bf16.msra.mxu0 %v2065
    %2831 = vmatprep.subr.bf16.mxu0 %v2074
    %2832 = vmatpush1.bf16.msra.mxu0 %v2073
    %2833 = vmatprep.subr.bf16.mxu0 %v2082
    %2834 = vmatpush1.bf16.msra.mxu0 %v2081
    %2835 = vmatprep.subr.bf16.mxu0 %v2090
    %2836 = vmatpush1.bf16.msra.mxu0 %v2089
    %2837 = vmatprep.subr.bf16.mxu0 %v2098
    %2838 = vmatpush1.bf16.msra.mxu0 %v2097
    %2839 = vmatprep.subr.bf16.mxu0 %v2106
    %2840 = vmatpush1.bf16.msra.mxu0 %v2105
    %2841 = vmatprep.subr.bf16.mxu0 %v2114
    %2842 = vmatpush1.bf16.msra.mxu0 %v2113
    %2843 = vmatprep.subr.bf16.mxu0 %v2122
    %2844 = vmatpush1.bf16.msra.mxu0 %v2121
    %2845 = vmatprep.subr.bf16.mxu0 %v2130
    %2846 = vmatpush1.bf16.msra.mxu0 %v2129
    %2847 = vmatprep.subr.bf16.mxu0 %v2138
    %2848 = vmatpush1.bf16.msra.mxu0 %v2137
    %2849 = vmatprep.subr.bf16.mxu0 %v2146
    %2850 = vmatpush1.bf16.msra.mxu0 %v2145
    %2851 = vmatprep.subr.bf16.mxu0 %v2154
    %2852 = vmatpush1.bf16.msra.mxu0 %v2153
    %2853 = vmatprep.mubr.bf16.mxu0 %v591
    %2854 = vmatmul.mubr.bf16.gmra.mrb[0].mxu0 %v590
    %v2855 = vpop.f32.mrb[0].mxu0
    %v2856 = vadd.f32 %v2813, %v2855
    %v2857 = vpop.f32.mrb[0].mxu0
    %v2858 = vadd.f32 %v2815, %v2857
    %v2859 = vpop.f32.mrb[0].mxu0
    %v2860 = vadd.f32 %v2817, %v2859
    %v2861 = vpop.f32.mrb[0].mxu0
    %v2862 = vadd.f32 %v2819, %v2861
    %2863 = vdwg.mxu0
    %2864 = vmatprep.subr.bf16.mxu0 %v2162
    %2865 = vmatpush1.bf16.msra.mxu0 %v2161
    %2866 = vmatprep.subr.bf16.mxu0 0
    %2867 = vmatpush1.bf16.msra.mxu0 0
    %2868 = vmatprep.subr.bf16.mxu0 0
    %2869 = vmatpush1.bf16.msra.mxu0 0
    %2870 = vmatprep.subr.bf16.mxu0 0
    %2871 = vmatpush1.bf16.msra.mxu0 0
    %2872 = vmatprep.subr.bf16.mxu0 0
    %2873 = vmatpush1.bf16.msra.mxu0 0
    %2874 = vmatprep.subr.bf16.mxu0 0
    %2875 = vmatpush1.bf16.msra.mxu0 0
    %2876 = vmatprep.subr.bf16.mxu0 0
    %2877 = vmatpush1.bf16.msra.mxu0 0
    %2878 = vmatprep.subr.bf16.mxu0 0
    %2879 = vmatpush1.bf16.msra.mxu0 0
    %2880 = vmatprep.subr.bf16.mxu0 0
    %2881 = vmatpush1.bf16.msra.mxu0 0
    %2882 = vmatprep.subr.bf16.mxu0 0
    %2883 = vmatpush1.bf16.msra.mxu0 0
    %2884 = vmatprep.subr.bf16.mxu0 0
    %2885 = vmatpush1.bf16.msra.mxu0 0
    %2886 = vmatprep.subr.bf16.mxu0 0
    %2887 = vmatpush1.bf16.msra.mxu0 0
    %2888 = vmatprep.subr.bf16.mxu0 0
    %2889 = vmatpush1.bf16.msra.mxu0 0
    %2890 = vmatprep.subr.bf16.mxu0 0
    %2891 = vmatpush1.bf16.msra.mxu0 0
    %2892 = vmatprep.subr.bf16.mxu0 0
    %2893 = vmatpush1.bf16.msra.mxu0 0
    %2894 = vmatprep.subr.bf16.mxu0 0
    %2895 = vmatpush1.bf16.msra.mxu0 0
    %2896 = vmatprep.mubr.bf16.mxu0 0
    %2897 = vmatmul.mubr.bf16.gmra.mrb[0].mxu0 %v2561
    %v2898 = vpop.f32.mrb[0].mxu0
    %v2899 = vadd.f32 %v2856, %v2898
    %v2900 = vpop.f32.mrb[0].mxu0
    %v2901 = vadd.f32 %v2858, %v2900
    %v2902 = vpop.f32.mrb[0].mxu0
    %v2903 = vadd.f32 %v2860, %v2902
    %v2904 = vpop.f32.mrb[0].mxu0
    %v2905 = vadd.f32 %v2862, %v2904
    %2906 = vdwg.mxu0
    %2907 = vmatprep.subr.bf16.mxu0 %v1780
    %2908 = vmatpush1.bf16.msra.mxu0 %v1779
    %2909 = vmatprep.subr.bf16.mxu0 %v1788
    %2910 = vmatpush1.bf16.msra.mxu0 %v1787
    %2911 = vmatprep.subr.bf16.mxu0 %v1796
    %2912 = vmatpush1.bf16.msra.mxu0 %v1795
    %2913 = vmatprep.subr.bf16.mxu0 %v1804
    %2914 = vmatpush1.bf16.msra.mxu0 %v1803
    %2915 = vmatprep.subr.bf16.mxu0 %v1812
    %2916 = vmatpush1.bf16.msra.mxu0 %v1811
    %2917 = vmatprep.subr.bf16.mxu0 %v1820
    %2918 = vmatpush1.bf16.msra.mxu0 %v1819
    %2919 = vmatprep.subr.bf16.mxu0 %v1828
    %2920 = vmatpush1.bf16.msra.mxu0 %v1827
    %2921 = vmatprep.subr.bf16.mxu0 %v1836
    %2922 = vmatpush1.bf16.msra.mxu0 %v1835
    %2923 = vmatprep.subr.bf16.mxu0 %v1844
    %2924 = vmatpush1.bf16.msra.mxu0 %v1843
    %2925 = vmatprep.subr.bf16.mxu0 %v1852
    %2926 = vmatpush1.bf16.msra.mxu0 %v1851
    %2927 = vmatprep.subr.bf16.mxu0 %v1860
    %2928 = vmatpush1.bf16.msra.mxu0 %v1859
    %2929 = vmatprep.subr.bf16.mxu0 %v1868
    %2930 = vmatpush1.bf16.msra.mxu0 %v1867
    %2931 = vmatprep.subr.bf16.mxu0 %v1876
    %2932 = vmatpush1.bf16.msra.mxu0 %v1875
    %2933 = vmatprep.subr.bf16.mxu0 %v1884
    %2934 = vmatpush1.bf16.msra.mxu0 %v1883
    %2935 = vmatprep.subr.bf16.mxu0 %v1892
    %2936 = vmatpush1.bf16.msra.mxu0 %v1891
    %2937 = vmatprep.subr.bf16.mxu0 %v1900
    %2938 = vmatpush1.bf16.msra.mxu0 %v1899
    %2939 = vmatprep.mubr.bf16.mxu0 %v587
    %2940 = vmatmul.mubr.bf16.gmra.mrb[0].mxu0 %v586
    %v2941 = vpop.f32.mrb[0].mxu0
    %v2942 = vadd.f32 %v543, %v2941
    %v2943 = vpop.f32.mrb[0].mxu0
    %v2944 = vadd.f32 %v547, %v2943
    %v2945 = vpop.f32.mrb[0].mxu0
    %v2946 = vadd.f32 %v543, %v2945
    %v2947 = vpop.f32.mrb[0].mxu0
    %v2948 = vadd.f32 %v547, %v2947
    %2949 = vdwg.mxu0
    %2950 = vmatprep.subr.bf16.mxu0 %v1908
    %2951 = vmatpush1.bf16.msra.mxu0 %v1907
    %2952 = vmatprep.subr.bf16.mxu0 %v1916
    %2953 = vmatpush1.bf16.msra.mxu0 %v1915
    %2954 = vmatprep.subr.bf16.mxu0 %v1924
    %2955 = vmatpush1.bf16.msra.mxu0 %v1923
    %2956 = vmatprep.subr.bf16.mxu0 %v1932
    %2957 = vmatpush1.bf16.msra.mxu0 %v1931
    %2958 = vmatprep.subr.bf16.mxu0 %v1940
    %2959 = vmatpush1.bf16.msra.mxu0 %v1939
    %2960 = vmatprep.subr.bf16.mxu0 %v1948
    %2961 = vmatpush1.bf16.msra.mxu0 %v1947
    %2962 = vmatprep.subr.bf16.mxu0 %v1956
    %2963 = vmatpush1.bf16.msra.mxu0 %v1955
    %2964 = vmatprep.subr.bf16.mxu0 %v1964
    %2965 = vmatpush1.bf16.msra.mxu0 %v1963
    %2966 = vmatprep.subr.bf16.mxu0 %v1972
    %2967 = vmatpush1.bf16.msra.mxu0 %v1971
    %2968 = vmatprep.subr.bf16.mxu0 %v1980
    %2969 = vmatpush1.bf16.msra.mxu0 %v1979
    %2970 = vmatprep.subr.bf16.mxu0 %v1988
    %2971 = vmatpush1.bf16.msra.mxu0 %v1987
    %2972 = vmatprep.subr.bf16.mxu0 %v1996
    %2973 = vmatpush1.bf16.msra.mxu0 %v1995
    %2974 = vmatprep.subr.bf16.mxu0 %v2004
    %2975 = vmatpush1.bf16.msra.mxu0 %v2003
    %2976 = vmatprep.subr.bf16.mxu0 %v2012
    %2977 = vmatpush1.bf16.msra.mxu0 %v2011
    %2978 = vmatprep.subr.bf16.mxu0 %v2020
    %2979 = vmatpush1.bf16.msra.mxu0 %v2019
    %2980 = vmatprep.subr.bf16.mxu0 %v2028
    %2981 = vmatpush1.bf16.msra.mxu0 %v2027
    %2982 = vmatprep.mubr.bf16.mxu0 %v589
    %2983 = vmatmul.mubr.bf16.gmra.mrb[0].mxu0 %v588
    %v2984 = vpop.f32.mrb[0].mxu0
    %v2985 = vadd.f32 %v2942, %v2984
    %v2986 = vpop.f32.mrb[0].mxu0
    %v2987 = vadd.f32 %v2944, %v2986
    %v2988 = vpop.f32.mrb[0].mxu0
    %v2989 = vadd.f32 %v2946, %v2988
    %v2990 = vpop.f32.mrb[0].mxu0
    %v2991 = vadd.f32 %v2948, %v2990
    %2992 = vdwg.mxu0
    %2993 = vmatprep.subr.bf16.mxu0 %v2036
    %2994 = vmatpush1.bf16.msra.mxu0 %v2035
    %2995 = vmatprep.subr.bf16.mxu0 %v2044
    %2996 = vmatpush1.bf16.msra.mxu0 %v2043
    %2997 = vmatprep.subr.bf16.mxu0 %v2052
    %2998 = vmatpush1.bf16.msra.mxu0 %v2051
    %2999 = vmatprep.subr.bf16.mxu0 %v2060
    %3000 = vmatpush1.bf16.msra.mxu0 %v2059
    %3001 = vmatprep.subr.bf16.mxu0 %v2068
    %3002 = vmatpush1.bf16.msra.mxu0 %v2067
    %3003 = vmatprep.subr.bf16.mxu0 %v2076
    %3004 = vmatpush1.bf16.msra.mxu0 %v2075
    %3005 = vmatprep.subr.bf16.mxu0 %v2084
    %3006 = vmatpush1.bf16.msra.mxu0 %v2083
    %3007 = vmatprep.subr.bf16.mxu0 %v2092
    %3008 = vmatpush1.bf16.msra.mxu0 %v2091
    %3009 = vmatprep.subr.bf16.mxu0 %v2100
    %3010 = vmatpush1.bf16.msra.mxu0 %v2099
    %3011 = vmatprep.subr.bf16.mxu0 %v2108
    %3012 = vmatpush1.bf16.msra.mxu0 %v2107
    %3013 = vmatprep.subr.bf16.mxu0 %v2116
    %3014 = vmatpush1.bf16.msra.mxu0 %v2115
    %3015 = vmatprep.subr.bf16.mxu0 %v2124
    %3016 = vmatpush1.bf16.msra.mxu0 %v2123
    %3017 = vmatprep.subr.bf16.mxu0 %v2132
    %3018 = vmatpush1.bf16.msra.mxu0 %v2131
    %3019 = vmatprep.subr.bf16.mxu0 %v2140
    %3020 = vmatpush1.bf16.msra.mxu0 %v2139
    %3021 = vmatprep.subr.bf16.mxu0 %v2148
    %3022 = vmatpush1.bf16.msra.mxu0 %v2147
    %3023 = vmatprep.subr.bf16.mxu0 %v2156
    %3024 = vmatpush1.bf16.msra.mxu0 %v2155
    %3025 = vmatprep.mubr.bf16.mxu0 %v591
    %3026 = vmatmul.mubr.bf16.gmra.mrb[0].mxu0 %v590
    %v3027 = vpop.f32.mrb[0].mxu0
    %v3028 = vadd.f32 %v2985, %v3027
    %v3029 = vpop.f32.mrb[0].mxu0
    %v3030 = vadd.f32 %v2987, %v3029
    %v3031 = vpop.f32.mrb[0].mxu0
    %v3032 = vadd.f32 %v2989, %v3031
    %v3033 = vpop.f32.mrb[0].mxu0
    %v3034 = vadd.f32 %v2991, %v3033
    %3035 = vdwg.mxu0
    %3036 = vmatprep.subr.bf16.mxu0 %v2164
    %3037 = vmatpush1.bf16.msra.mxu0 %v2163
    %3038 = vmatprep.subr.bf16.mxu0 0
    %3039 = vmatpush1.bf16.msra.mxu0 0
    %3040 = vmatprep.subr.bf16.mxu0 0
    %3041 = vmatpush1.bf16.msra.mxu0 0
    %3042 = vmatprep.subr.bf16.mxu0 0
    %3043 = vmatpush1.bf16.msra.mxu0 0
    %3044 = vmatprep.subr.bf16.mxu0 0
    %3045 = vmatpush1.bf16.msra.mxu0 0
    %3046 = vmatprep.subr.bf16.mxu0 0
    %3047 = vmatpush1.bf16.msra.mxu0 0
    %3048 = vmatprep.subr.bf16.mxu0 0
    %3049 = vmatpush1.bf16.msra.mxu0 0
    %3050 = vmatprep.subr.bf16.mxu0 0
    %3051 = vmatpush1.bf16.msra.mxu0 0
    %3052 = vmatprep.subr.bf16.mxu0 0
    %3053 = vmatpush1.bf16.msra.mxu0 0
    %3054 = vmatprep.subr.bf16.mxu0 0
    %3055 = vmatpush1.bf16.msra.mxu0 0
    %3056 = vmatprep.subr.bf16.mxu0 0
    %3057 = vmatpush1.bf16.msra.mxu0 0
    %3058 = vmatprep.subr.bf16.mxu0 0
    %3059 = vmatpush1.bf16.msra.mxu0 0
    %3060 = vmatprep.subr.bf16.mxu0 0
    %3061 = vmatpush1.bf16.msra.mxu0 0
    %3062 = vmatprep.subr.bf16.mxu0 0
    %3063 = vmatpush1.bf16.msra.mxu0 0
    %3064 = vmatprep.subr.bf16.mxu0 0
    %3065 = vmatpush1.bf16.msra.mxu0 0
    %3066 = vmatprep.subr.bf16.mxu0 0
    %3067 = vmatpush1.bf16.msra.mxu0 0
    %3068 = vmatprep.mubr.bf16.mxu0 0
    %3069 = vmatmul.mubr.bf16.gmra.mrb[0].mxu0 %v2561
    %v3070 = vpop.f32.mrb[0].mxu0
    %v3071 = vadd.f32 %v3028, %v3070
    %v3072 = vpop.f32.mrb[0].mxu0
    %v3073 = vadd.f32 %v3030, %v3072
    %v3074 = vpop.f32.mrb[0].mxu0
    %v3075 = vadd.f32 %v3032, %v3074
    %v3076 = vpop.f32.mrb[0].mxu0
    %v3077 = vadd.f32 %v3034, %v3076
    %3078 = vdwg.mxu0
    %3079 = vmatprep.subr.bf16.mxu0 %v1782
    %3080 = vmatpush1.bf16.msra.mxu0 %v1781
    %3081 = vmatprep.subr.bf16.mxu0 %v1790
    %3082 = vmatpush1.bf16.msra.mxu0 %v1789
    %3083 = vmatprep.subr.bf16.mxu0 %v1798
    %3084 = vmatpush1.bf16.msra.mxu0 %v1797
    %3085 = vmatprep.subr.bf16.mxu0 %v1806
    %3086 = vmatpush1.bf16.msra.mxu0 %v1805
    %3087 = vmatprep.subr.bf16.mxu0 %v1814
    %3088 = vmatpush1.bf16.msra.mxu0 %v1813
    %3089 = vmatprep.subr.bf16.mxu0 %v1822
    %3090 = vmatpush1.bf16.msra.mxu0 %v1821
    %3091 = vmatprep.subr.bf16.mxu0 %v1830
    %3092 = vmatpush1.bf16.msra.mxu0 %v1829
    %3093 = vmatprep.subr.bf16.mxu0 %v1838
    %3094 = vmatpush1.bf16.msra.mxu0 %v1837
    %3095 = vmatprep.subr.bf16.mxu0 %v1846
    %3096 = vmatpush1.bf16.msra.mxu0 %v1845
    %3097 = vmatprep.subr.bf16.mxu0 %v1854
    %3098 = vmatpush1.bf16.msra.mxu0 %v1853
    %3099 = vmatprep.subr.bf16.mxu0 %v1862
    %3100 = vmatpush1.bf16.msra.mxu0 %v1861
    %3101 = vmatprep.subr.bf16.mxu0 %v1870
    %3102 = vmatpush1.bf16.msra.mxu0 %v1869
    %3103 = vmatprep.subr.bf16.mxu0 %v1878
    %3104 = vmatpush1.bf16.msra.mxu0 %v1877
    %3105 = vmatprep.subr.bf16.mxu0 %v1886
    %3106 = vmatpush1.bf16.msra.mxu0 %v1885
    %3107 = vmatprep.subr.bf16.mxu0 %v1894
    %3108 = vmatpush1.bf16.msra.mxu0 %v1893
    %3109 = vmatprep.subr.bf16.mxu0 %v1902
    %3110 = vmatpush1.bf16.msra.mxu0 %v1901
    %3111 = vmatprep.mubr.bf16.mxu0 %v587
    %3112 = vmatmul.mubr.bf16.gmra.mrb[0].mxu0 %v586
    %v3113 = vpop.f32.mrb[0].mxu0
    %v3114 = vadd.f32 %v551, %v3113
    %v3115 = vpop.f32.mrb[0].mxu0
    %v3116 = vadd.f32 %v555, %v3115
    %v3117 = vpop.f32.mrb[0].mxu0
    %v3118 = vadd.f32 %v551, %v3117
    %v3119 = vpop.f32.mrb[0].mxu0
    %v3120 = vadd.f32 %v555, %v3119
    %3121 = vdwg.mxu0
    %3122 = vmatprep.subr.bf16.mxu0 %v1910
    %3123 = vmatpush1.bf16.msra.mxu0 %v1909
    %3124 = vmatprep.subr.bf16.mxu0 %v1918
    %3125 = vmatpush1.bf16.msra.mxu0 %v1917
    %3126 = vmatprep.subr.bf16.mxu0 %v1926
    %3127 = vmatpush1.bf16.msra.mxu0 %v1925
    %3128 = vmatprep.subr.bf16.mxu0 %v1934
    %3129 = vmatpush1.bf16.msra.mxu0 %v1933
    %3130 = vmatprep.subr.bf16.mxu0 %v1942
    %3131 = vmatpush1.bf16.msra.mxu0 %v1941
    %3132 = vmatprep.subr.bf16.mxu0 %v1950
    %3133 = vmatpush1.bf16.msra.mxu0 %v1949
    %3134 = vmatprep.subr.bf16.mxu0 %v1958
    %3135 = vmatpush1.bf16.msra.mxu0 %v1957
    %3136 = vmatprep.subr.bf16.mxu0 %v1966
    %3137 = vmatpush1.bf16.msra.mxu0 %v1965
    %3138 = vmatprep.subr.bf16.mxu0 %v1974
    %3139 = vmatpush1.bf16.msra.mxu0 %v1973
    %3140 = vmatprep.subr.bf16.mxu0 %v1982
    %3141 = vmatpush1.bf16.msra.mxu0 %v1981
    %3142 = vmatprep.subr.bf16.mxu0 %v1990
    %3143 = vmatpush1.bf16.msra.mxu0 %v1989
    %3144 = vmatprep.subr.bf16.mxu0 %v1998
    %3145 = vmatpush1.bf16.msra.mxu0 %v1997
    %3146 = vmatprep.subr.bf16.mxu0 %v2006
    %3147 = vmatpush1.bf16.msra.mxu0 %v2005
    %3148 = vmatprep.subr.bf16.mxu0 %v2014
    %3149 = vmatpush1.bf16.msra.mxu0 %v2013
    %3150 = vmatprep.subr.bf16.mxu0 %v2022
    %3151 = vmatpush1.bf16.msra.mxu0 %v2021
    %3152 = vmatprep.subr.bf16.mxu0 %v2030
    %3153 = vmatpush1.bf16.msra.mxu0 %v2029
    %3154 = vmatprep.mubr.bf16.mxu0 %v589
    %3155 = vmatmul.mubr.bf16.gmra.mrb[0].mxu0 %v588
    %v3156 = vpop.f32.mrb[0].mxu0
    %v3157 = vadd.f32 %v3114, %v3156
    %v3158 = vpop.f32.mrb[0].mxu0
    %v3159 = vadd.f32 %v3116, %v3158
    %v3160 = vpop.f32.mrb[0].mxu0
    %v3161 = vadd.f32 %v3118, %v3160
    %v3162 = vpop.f32.mrb[0].mxu0
    %v3163 = vadd.f32 %v3120, %v3162
    %3164 = vdwg.mxu0
    %3165 = vmatprep.subr.bf16.mxu0 %v2038
    %3166 = vmatpush1.bf16.msra.mxu0 %v2037
    %3167 = vmatprep.subr.bf16.mxu0 %v2046
    %3168 = vmatpush1.bf16.msra.mxu0 %v2045
    %3169 = vmatprep.subr.bf16.mxu0 %v2054
    %3170 = vmatpush1.bf16.msra.mxu0 %v2053
    %3171 = vmatprep.subr.bf16.mxu0 %v2062
    %3172 = vmatpush1.bf16.msra.mxu0 %v2061
    %3173 = vmatprep.subr.bf16.mxu0 %v2070
    %3174 = vmatpush1.bf16.msra.mxu0 %v2069
    %3175 = vmatprep.subr.bf16.mxu0 %v2078
    %3176 = vmatpush1.bf16.msra.mxu0 %v2077
    %3177 = vmatprep.subr.bf16.mxu0 %v2086
    %3178 = vmatpush1.bf16.msra.mxu0 %v2085
    %3179 = vmatprep.subr.bf16.mxu0 %v2094
    %3180 = vmatpush1.bf16.msra.mxu0 %v2093
    %3181 = vmatprep.subr.bf16.mxu0 %v2102
    %3182 = vmatpush1.bf16.msra.mxu0 %v2101
    %3183 = vmatprep.subr.bf16.mxu0 %v2110
    %3184 = vmatpush1.bf16.msra.mxu0 %v2109
    %3185 = vmatprep.subr.bf16.mxu0 %v2118
    %3186 = vmatpush1.bf16.msra.mxu0 %v2117
    %3187 = vmatprep.subr.bf16.mxu0 %v2126
    %3188 = vmatpush1.bf16.msra.mxu0 %v2125
    %3189 = vmatprep.subr.bf16.mxu0 %v2134
    %3190 = vmatpush1.bf16.msra.mxu0 %v2133
    %3191 = vmatprep.subr.bf16.mxu0 %v2142
    %3192 = vmatpush1.bf16.msra.mxu0 %v2141
    %3193 = vmatprep.subr.bf16.mxu0 %v2150
    %3194 = vmatpush1.bf16.msra.mxu0 %v2149
    %3195 = vmatprep.subr.bf16.mxu0 %v2158
    %3196 = vmatpush1.bf16.msra.mxu0 %v2157
    %3197 = vmatprep.mubr.bf16.mxu0 %v591
    %3198 = vmatmul.mubr.bf16.gmra.mrb[0].mxu0 %v590
    %v3199 = vpop.f32.mrb[0].mxu0
    %v3200 = vadd.f32 %v3157, %v3199
    %v3201 = vpop.f32.mrb[0].mxu0
    %v3202 = vadd.f32 %v3159, %v3201
    %v3203 = vpop.f32.mrb[0].mxu0
    %v3204 = vadd.f32 %v3161, %v3203
    %v3205 = vpop.f32.mrb[0].mxu0
    %v3206 = vadd.f32 %v3163, %v3205
    %3207 = vdwg.mxu0
    %3208 = vmatprep.subr.bf16.mxu0 %v2166
    %3209 = vmatpush1.bf16.msra.mxu0 %v2165
    %3210 = vmatprep.subr.bf16.mxu0 0
    %3211 = vmatpush1.bf16.msra.mxu0 0
    %3212 = vmatprep.subr.bf16.mxu0 0
    %3213 = vmatpush1.bf16.msra.mxu0 0
    %3214 = vmatprep.subr.bf16.mxu0 0
    %3215 = vmatpush1.bf16.msra.mxu0 0
    %3216 = vmatprep.subr.bf16.mxu0 0
    %3217 = vmatpush1.bf16.msra.mxu0 0
    %3218 = vmatprep.subr.bf16.mxu0 0
    %3219 = vmatpush1.bf16.msra.mxu0 0
    %3220 = vmatprep.subr.bf16.mxu0 0
    %3221 = vmatpush1.bf16.msra.mxu0 0
    %3222 = vmatprep.subr.bf16.mxu0 0
    %3223 = vmatpush1.bf16.msra.mxu0 0
    %3224 = vmatprep.subr.bf16.mxu0 0
    %3225 = vmatpush1.bf16.msra.mxu0 0
    %3226 = vmatprep.subr.bf16.mxu0 0
    %3227 = vmatpush1.bf16.msra.mxu0 0
    %3228 = vmatprep.subr.bf16.mxu0 0
    %3229 = vmatpush1.bf16.msra.mxu0 0
    %3230 = vmatprep.subr.bf16.mxu0 0
    %3231 = vmatpush1.bf16.msra.mxu0 0
    %3232 = vmatprep.subr.bf16.mxu0 0
    %3233 = vmatpush1.bf16.msra.mxu0 0
    %3234 = vmatprep.subr.bf16.mxu0 0
    %3235 = vmatpush1.bf16.msra.mxu0 0
    %3236 = vmatprep.subr.bf16.mxu0 0
    %3237 = vmatpush1.bf16.msra.mxu0 0
    %3238 = vmatprep.subr.bf16.mxu0 0
    %3239 = vmatpush1.bf16.msra.mxu0 0
    %3240 = vmatprep.mubr.bf16.mxu0 0
    %3241 = vmatmul.mubr.bf16.gmra.mrb[0].mxu0 %v2561
    %v3242 = vpop.f32.mrb[0].mxu0
    %v3243 = vadd.f32 %v3200, %v3242
    %v3244 = vpop.f32.mrb[0].mxu0
    %v3245 = vadd.f32 %v3202, %v3244
    %v3246 = vpop.f32.mrb[0].mxu0
    %v3247 = vadd.f32 %v3204, %v3246
    %v3248 = vpop.f32.mrb[0].mxu0
    %v3249 = vadd.f32 %v3206, %v3248
    %3250 = vdwg.mxu0
    %vm3251 = vcmp.gt.f32.partialorder %v2727, 0.0
    %vm3252 = vcmp.gt.f32.partialorder %v2729, 0.0
    %vm3253 = vcmp.gt.f32.partialorder %v2899, 0.0
    %vm3254 = vcmp.gt.f32.partialorder %v2901, 0.0
    %vm3255 = vcmp.gt.f32.partialorder %v3071, 0.0
    %vm3256 = vcmp.gt.f32.partialorder %v3073, 0.0
    %vm3257 = vcmp.gt.f32.partialorder %v3243, 0.0
    %vm3258 = vcmp.gt.f32.partialorder %v3245, 0.0
    %vm3259 = vcmp.gt.f32.partialorder %v2731, 0.0
    %vm3260 = vcmp.gt.f32.partialorder %v2733, 0.0
    %vm3261 = vcmp.gt.f32.partialorder %v2903, 0.0
    %vm3262 = vcmp.gt.f32.partialorder %v2905, 0.0
    %vm3263 = vcmp.gt.f32.partialorder %v3075, 0.0
    %vm3264 = vcmp.gt.f32.partialorder %v3077, 0.0
    %vm3265 = vcmp.gt.f32.partialorder %v3247, 0.0
    %vm3266 = vcmp.gt.f32.partialorder %v3249, 0.0
    %v3267 = vmul.f32 %v2727, 0.2
    %v3268 = vmul.f32 %v2729, 0.2
    %v3269 = vmul.f32 %v2899, 0.2
    %v3270 = vmul.f32 %v2901, 0.2
    %v3271 = vmul.f32 %v3071, 0.2
    %v3272 = vmul.f32 %v3073, 0.2
    %v3273 = vmul.f32 %v3243, 0.2
    %v3274 = vmul.f32 %v3245, 0.2
    %v3275 = vmul.f32 %v2731, 0.2
    %v3276 = vmul.f32 %v2733, 0.2
    %v3277 = vmul.f32 %v2903, 0.2
    %v3278 = vmul.f32 %v2905, 0.2
    %v3279 = vmul.f32 %v3075, 0.2
    %v3280 = vmul.f32 %v3077, 0.2
    %v3281 = vmul.f32 %v3247, 0.2
    %v3282 = vmul.f32 %v3249, 0.2
    %v3283 = vsel %vm3251, %v2727, %v3267
    %v3284 = vsel %vm3252, %v2729, %v3268
    %v3285 = vsel %vm3253, %v2899, %v3269
    %v3286 = vsel %vm3254, %v2901, %v3270
    %v3287 = vsel %vm3255, %v3071, %v3271
    %v3288 = vsel %vm3256, %v3073, %v3272
    %v3289 = vsel %vm3257, %v3243, %v3273
    %v3290 = vsel %vm3258, %v3245, %v3274
    %v3291 = vsel %vm3259, %v2731, %v3275
    %v3292 = vsel %vm3260, %v2733, %v3276
    %v3293 = vsel %vm3261, %v2903, %v3277
    %v3294 = vsel %vm3262, %v2905, %v3278
    %v3295 = vsel %vm3263, %v3075, %v3279
    %v3296 = vsel %vm3264, %v3077, %v3280
    %v3297 = vsel %vm3265, %v3247, %v3281
    %v3298 = vsel %vm3266, %v3249, %v3282
    %v3299 = vpack.c.bf16 %v3291, %v3283
    %v3300 = vpack.c.bf16 %v3292, %v3284
    %v3301 = vpack.c.bf16 %v3293, %v3285
    %v3302 = vpack.c.bf16 %v3294, %v3286
    %v3303 = vpack.c.bf16 %v3295, %v3287
    %v3304 = vpack.c.bf16 %v3296, %v3288
    %v3305 = vpack.c.bf16 %v3297, %v3289
    %v3306 = vpack.c.bf16 %v3298, %v3290
    %v3307 = vld [vmem:[#allocation7] sm:$0xff]
    %v3308 = vld [vmem:[#allocation7 + $0x8] sm:$0xff]
    %v3309 = vld [vmem:[#allocation7 + $0x10] sm:$0xff]
    %v3310 = vld [vmem:[#allocation7 + $0x18] sm:$0xff]
    %v3311 = vld [vmem:[#allocation7 + $0x20] sm:$0xff]
    %v3312 = vld [vmem:[#allocation7 + $0x28] sm:$0xff]
    %v3313 = vld [vmem:[#allocation7 + $0x30] sm:$0xff]
    %v3314 = vld [vmem:[#allocation7 + $0x38] sm:$0xff]
    %v3315 = vld [vmem:[#allocation7 + $0x40] sm:$0xff]
    %v3316 = vld [vmem:[#allocation7 + $0x48] sm:$0xff]
    %v3317 = vld [vmem:[#allocation7 + $0x50] sm:$0xff]
    %v3318 = vld [vmem:[#allocation7 + $0x58] sm:$0xff]
    %v3319 = vld [vmem:[#allocation7 + $0x60] sm:$0xff]
    %v3320 = vld [vmem:[#allocation7 + $0x68] sm:$0xff]
    %v3321 = vld [vmem:[#allocation7 + $0x70] sm:$0xff]
    %v3322 = vld [vmem:[#allocation7 + $0x78] sm:$0xff]
    %v3323 = vld [vmem:[#allocation7 + $0x80] sm:$0xff]
    %v3324 = vld [vmem:[#allocation7 + $0x88] sm:$0xff]
    %v3325 = vld [vmem:[#allocation7 + $0x90] sm:$0xff]
    %v3326 = vld [vmem:[#allocation7 + $0x98] sm:$0xff]
    %v3327 = vld [vmem:[#allocation7 + $0xa0] sm:$0xff]
    %v3328 = vld [vmem:[#allocation7 + $0xa8] sm:$0xff]
    %v3329 = vld [vmem:[#allocation7 + $0xb0] sm:$0xff]
    %v3330 = vld [vmem:[#allocation7 + $0xb8] sm:$0xff]
    %v3331 = vld [vmem:[#allocation7 + $0xc0] sm:$0xff]
    %v3332 = vld [vmem:[#allocation7 + $0xc8] sm:$0xff]
    %v3333 = vld [vmem:[#allocation7 + $0xd0] sm:$0xff]
    %v3334 = vld [vmem:[#allocation7 + $0xd8] sm:$0xff]
    %v3335 = vld [vmem:[#allocation7 + $0xe0] sm:$0xff]
    %v3336 = vld [vmem:[#allocation7 + $0xe8] sm:$0xff]
    %v3337 = vld [vmem:[#allocation7 + $0xf0] sm:$0xff]
    %v3338 = vld [vmem:[#allocation7 + $0xf8] sm:$0xff]
    %v3339 = vld [vmem:[#allocation7 + $0x100] sm:$0xff]
    %v3340 = vld [vmem:[#allocation7 + $0x108] sm:$0xff]
    %v3341 = vld [vmem:[#allocation7 + $0x110] sm:$0xff]
    %v3342 = vld [vmem:[#allocation7 + $0x118] sm:$0xff]
    %v3343 = vld [vmem:[#allocation7 + $0x120] sm:$0xff]
    %v3344 = vld [vmem:[#allocation7 + $0x128] sm:$0xff]
    %v3345 = vld [vmem:[#allocation7 + $0x130] sm:$0xff]
    %v3346 = vld [vmem:[#allocation7 + $0x138] sm:$0xff]
    %v3347 = vld [vmem:[#allocation7 + $0x140] sm:$0xff]
    %v3348 = vld [vmem:[#allocation7 + $0x148] sm:$0xff]
    %v3349 = vld [vmem:[#allocation7 + $0x150] sm:$0xff]
    %v3350 = vld [vmem:[#allocation7 + $0x158] sm:$0xff]
    %v3351 = vld [vmem:[#allocation7 + $0x160] sm:$0xff]
    %v3352 = vld [vmem:[#allocation7 + $0x168] sm:$0xff]
    %v3353 = vld [vmem:[#allocation7 + $0x170] sm:$0xff]
    %v3354 = vld [vmem:[#allocation7 + $0x178] sm:$0xff]
    %v3355 = vld [vmem:[#allocation7 + $0x180] sm:$0xff]
    %v3356 = vld [vmem:[#allocation7 + $0x188] sm:$0xff]
    %v3357 = vld [vmem:[#allocation7 + $0x190] sm:$0xff]
    %v3358 = vld [vmem:[#allocation7 + $0x198] sm:$0xff]
    %v3359 = vld [vmem:[#allocation7 + $0x1a0] sm:$0xff]
    %v3360 = vld [vmem:[#allocation7 + $0x1a8] sm:$0xff]
    %v3361 = vld [vmem:[#allocation7 + $0x1b0] sm:$0xff]
    %v3362 = vld [vmem:[#allocation7 + $0x1b8] sm:$0xff]
    %v3363 = vld [vmem:[#allocation7 + $0x1c0] sm:$0xff]
    %v3364 = vld [vmem:[#allocation7 + $0x1c8] sm:$0xff]
    %v3365 = vld [vmem:[#allocation7 + $0x1d0] sm:$0xff]
    %v3366 = vld [vmem:[#allocation7 + $0x1d8] sm:$0xff]
    %v3367 = vld [vmem:[#allocation7 + $0x1e0] sm:$0xff]
    %v3368 = vld [vmem:[#allocation7 + $0x1e8] sm:$0xff]
    %v3369 = vld [vmem:[#allocation7 + $0x1f0] sm:$0xff]
    %v3370 = vld [vmem:[#allocation7 + $0x1f8] sm:$0xff]
    %v3371 = vld [vmem:[#allocation7 + $0x200] sm:$0xff]
    %v3372 = vld [vmem:[#allocation7 + $0x208] sm:$0xff]
    %v3373 = vld [vmem:[#allocation7 + $0x210] sm:$0xff]
    %v3374 = vld [vmem:[#allocation7 + $0x218] sm:$0xff]
    %v3375 = vld [vmem:[#allocation7 + $0x220] sm:$0xff]
    %v3376 = vld [vmem:[#allocation7 + $0x228] sm:$0xff]
    %v3377 = vld [vmem:[#allocation7 + $0x230] sm:$0xff]
    %v3378 = vld [vmem:[#allocation7 + $0x238] sm:$0xff]
    %v3379 = vld [vmem:[#allocation7 + $0x240] sm:$0xff]
    %v3380 = vld [vmem:[#allocation7 + $0x248] sm:$0xff]
    %v3381 = vld [vmem:[#allocation7 + $0x250] sm:$0xff]
    %v3382 = vld [vmem:[#allocation7 + $0x258] sm:$0xff]
    %v3383 = vld [vmem:[#allocation7 + $0x260] sm:$0xff]
    %v3384 = vld [vmem:[#allocation7 + $0x268] sm:$0xff]
    %v3385 = vld [vmem:[#allocation7 + $0x270] sm:$0xff]
    %v3386 = vld [vmem:[#allocation7 + $0x278] sm:$0xff]
    %v3387 = vld [vmem:[#allocation7 + $0x280] sm:$0xff]
    %v3388 = vld [vmem:[#allocation7 + $0x288] sm:$0xff]
    %v3389 = vld [vmem:[#allocation7 + $0x290] sm:$0xff]
    %v3390 = vld [vmem:[#allocation7 + $0x298] sm:$0xff]
    %v3391 = vld [vmem:[#allocation7 + $0x2a0] sm:$0xff]
    %v3392 = vld [vmem:[#allocation7 + $0x2a8] sm:$0xff]
    %v3393 = vld [vmem:[#allocation7 + $0x2b0] sm:$0xff]
    %v3394 = vld [vmem:[#allocation7 + $0x2b8] sm:$0xff]
    %v3395 = vld [vmem:[#allocation7 + $0x2c0] sm:$0xff]
    %v3396 = vld [vmem:[#allocation7 + $0x2c8] sm:$0xff]
    %v3397 = vld [vmem:[#allocation7 + $0x2d0] sm:$0xff]
    %v3398 = vld [vmem:[#allocation7 + $0x2d8] sm:$0xff]
    %v3399 = vld [vmem:[#allocation7 + $0x2e0] sm:$0xff]
    %v3400 = vld [vmem:[#allocation7 + $0x2e8] sm:$0xff]
    %v3401 = vld [vmem:[#allocation7 + $0x2f0] sm:$0xff]
    %v3402 = vld [vmem:[#allocation7 + $0x2f8] sm:$0xff]
    %v3403 = vld [vmem:[#allocation7 + $0x300] sm:$0xff]
    %v3404 = vld [vmem:[#allocation7 + $0x308] sm:$0xff]
    %v3405 = vld [vmem:[#allocation7 + $0x310] sm:$0xff]
    %v3406 = vld [vmem:[#allocation7 + $0x318] sm:$0xff]
    %v3407 = vld [vmem:[#allocation7 + $0x320] sm:$0xff]
    %v3408 = vld [vmem:[#allocation7 + $0x328] sm:$0xff]
    %v3409 = vld [vmem:[#allocation7 + $0x330] sm:$0xff]
    %v3410 = vld [vmem:[#allocation7 + $0x338] sm:$0xff]
    %v3411 = vld [vmem:[#allocation7 + $0x340] sm:$0xff]
    %v3412 = vld [vmem:[#allocation7 + $0x348] sm:$0xff]
    %v3413 = vld [vmem:[#allocation7 + $0x350] sm:$0xff]
    %v3414 = vld [vmem:[#allocation7 + $0x358] sm:$0xff]
    %v3415 = vld [vmem:[#allocation7 + $0x360] sm:$0xff]
    %v3416 = vld [vmem:[#allocation7 + $0x368] sm:$0xff]
    %v3417 = vld [vmem:[#allocation7 + $0x370] sm:$0xff]
    %v3418 = vld [vmem:[#allocation7 + $0x378] sm:$0xff]
    %v3419 = vld [vmem:[#allocation7 + $0x380] sm:$0xff]
    %v3420 = vld [vmem:[#allocation7 + $0x388] sm:$0xff]
    %v3421 = vld [vmem:[#allocation7 + $0x390] sm:$0xff]
    %v3422 = vld [vmem:[#allocation7 + $0x398] sm:$0xff]
    %v3423 = vld [vmem:[#allocation7 + $0x3a0] sm:$0xff]
    %v3424 = vld [vmem:[#allocation7 + $0x3a8] sm:$0xff]
    %v3425 = vld [vmem:[#allocation7 + $0x3b0] sm:$0xff]
    %v3426 = vld [vmem:[#allocation7 + $0x3b8] sm:$0xff]
    %v3427 = vld [vmem:[#allocation7 + $0x3c0] sm:$0xff]
    %v3428 = vld [vmem:[#allocation7 + $0x3c8] sm:$0xff]
    %v3429 = vld [vmem:[#allocation7 + $0x3d0] sm:$0xff]
    %v3430 = vld [vmem:[#allocation7 + $0x3d8] sm:$0xff]
    %v3431 = vld [vmem:[#allocation7 + $0x3e0] sm:$0xff]
    %v3432 = vld [vmem:[#allocation7 + $0x3e8] sm:$0xff]
    %v3433 = vld [vmem:[#allocation7 + $0x3f0] sm:$0xff]
    %v3434 = vld [vmem:[#allocation7 + $0x3f8] sm:$0xff]
    %v3435 = vld [vmem:[#allocation7 + $0x400] sm:$0xff]
    %v3436 = vld [vmem:[#allocation7 + $0x408] sm:$0xff]
    %v3437 = vld [vmem:[#allocation7 + $0x410] sm:$0xff]
    %v3438 = vld [vmem:[#allocation7 + $0x418] sm:$0xff]
    %v3439 = vld [vmem:[#allocation7 + $0x420] sm:$0xff]
    %v3440 = vld [vmem:[#allocation7 + $0x428] sm:$0xff]
    %v3441 = vld [vmem:[#allocation7 + $0x430] sm:$0xff]
    %v3442 = vld [vmem:[#allocation7 + $0x438] sm:$0xff]
    %v3443 = vld [vmem:[#allocation7 + $0x440] sm:$0xff]
    %v3444 = vld [vmem:[#allocation7 + $0x448] sm:$0xff]
    %v3445 = vld [vmem:[#allocation7 + $0x450] sm:$0xff]
    %v3446 = vld [vmem:[#allocation7 + $0x458] sm:$0xff]
    %v3447 = vld [vmem:[#allocation7 + $0x460] sm:$0xff]
    %v3448 = vld [vmem:[#allocation7 + $0x468] sm:$0xff]
    %v3449 = vld [vmem:[#allocation7 + $0x470] sm:$0xff]
    %v3450 = vld [vmem:[#allocation7 + $0x478] sm:$0xff]
    %v3451 = vld [vmem:[#allocation7 + $0x480] sm:$0xff]
    %v3452 = vld [vmem:[#allocation7 + $0x488] sm:$0xff]
    %v3453 = vld [vmem:[#allocation7 + $0x490] sm:$0xff]
    %v3454 = vld [vmem:[#allocation7 + $0x498] sm:$0xff]
    %v3455 = vld [vmem:[#allocation7 + $0x4a0] sm:$0xff]
    %v3456 = vld [vmem:[#allocation7 + $0x4a8] sm:$0xff]
    %v3457 = vld [vmem:[#allocation7 + $0x4b0] sm:$0xff]
    %v3458 = vld [vmem:[#allocation7 + $0x4b8] sm:$0xff]
    %v3459 = vld [vmem:[#allocation7 + $0x4c0] sm:$0xff]
    %v3460 = vld [vmem:[#allocation7 + $0x4c8] sm:$0xff]
    %v3461 = vld [vmem:[#allocation7 + $0x4d0] sm:$0xff]
    %v3462 = vld [vmem:[#allocation7 + $0x4d8] sm:$0xff]
    %v3463 = vld [vmem:[#allocation7 + $0x4e0] sm:$0xff]
    %v3464 = vld [vmem:[#allocation7 + $0x4e8] sm:$0xff]
    %v3465 = vld [vmem:[#allocation7 + $0x4f0] sm:$0xff]
    %v3466 = vld [vmem:[#allocation7 + $0x4f8] sm:$0xff]
    %v3467 = vld [vmem:[#allocation7 + $0x500] sm:$0xff]
    %v3468 = vld [vmem:[#allocation7 + $0x508] sm:$0xff]
    %v3469 = vld [vmem:[#allocation7 + $0x510] sm:$0xff]
    %v3470 = vld [vmem:[#allocation7 + $0x518] sm:$0xff]
    %v3471 = vld [vmem:[#allocation7 + $0x520] sm:$0xff]
    %v3472 = vld [vmem:[#allocation7 + $0x528] sm:$0xff]
    %v3473 = vld [vmem:[#allocation7 + $0x530] sm:$0xff]
    %v3474 = vld [vmem:[#allocation7 + $0x538] sm:$0xff]
    %v3475 = vld [vmem:[#allocation7 + $0x540] sm:$0xff]
    %v3476 = vld [vmem:[#allocation7 + $0x548] sm:$0xff]
    %v3477 = vld [vmem:[#allocation7 + $0x550] sm:$0xff]
    %v3478 = vld [vmem:[#allocation7 + $0x558] sm:$0xff]
    %v3479 = vld [vmem:[#allocation7 + $0x560] sm:$0xff]
    %v3480 = vld [vmem:[#allocation7 + $0x568] sm:$0xff]
    %v3481 = vld [vmem:[#allocation7 + $0x570] sm:$0xff]
    %v3482 = vld [vmem:[#allocation7 + $0x578] sm:$0xff]
    %v3483 = vld [vmem:[#allocation7 + $0x580] sm:$0xff]
    %v3484 = vld [vmem:[#allocation7 + $0x588] sm:$0xff]
    %v3485 = vld [vmem:[#allocation7 + $0x590] sm:$0xff]
    %v3486 = vld [vmem:[#allocation7 + $0x598] sm:$0xff]
    %v3487 = vld [vmem:[#allocation7 + $0x5a0] sm:$0xff]
    %v3488 = vld [vmem:[#allocation7 + $0x5a8] sm:$0xff]
    %v3489 = vld [vmem:[#allocation7 + $0x5b0] sm:$0xff]
    %v3490 = vld [vmem:[#allocation7 + $0x5b8] sm:$0xff]
    %v3491 = vld [vmem:[#allocation7 + $0x5c0] sm:$0xff]
    %v3492 = vld [vmem:[#allocation7 + $0x5c8] sm:$0xff]
    %v3493 = vld [vmem:[#allocation7 + $0x5d0] sm:$0xff]
    %v3494 = vld [vmem:[#allocation7 + $0x5d8] sm:$0xff]
    %v3495 = vld [vmem:[#allocation7 + $0x5e0] sm:$0xff]
    %v3496 = vld [vmem:[#allocation7 + $0x5e8] sm:$0xff]
    %v3497 = vld [vmem:[#allocation7 + $0x5f0] sm:$0xff]
    %v3498 = vld [vmem:[#allocation7 + $0x5f8] sm:$0xff]
    %v3499 = vld [vmem:[#allocation7 + $0x600] sm:$0xff]
    %v3500 = vld [vmem:[#allocation7 + $0x608] sm:$0xff]
    %v3501 = vld [vmem:[#allocation7 + $0x610] sm:$0xff]
    %v3502 = vld [vmem:[#allocation7 + $0x618] sm:$0xff]
    %v3503 = vld [vmem:[#allocation7 + $0x620] sm:$0xff]
    %v3504 = vld [vmem:[#allocation7 + $0x628] sm:$0xff]
    %v3505 = vld [vmem:[#allocation7 + $0x630] sm:$0xff]
    %v3506 = vld [vmem:[#allocation7 + $0x638] sm:$0xff]
    %v3507 = vld [vmem:[#allocation7 + $0x640] sm:$0xff]
    %v3508 = vld [vmem:[#allocation7 + $0x648] sm:$0xff]
    %v3509 = vld [vmem:[#allocation7 + $0x650] sm:$0xff]
    %v3510 = vld [vmem:[#allocation7 + $0x658] sm:$0xff]
    %v3511 = vld [vmem:[#allocation7 + $0x660] sm:$0xff]
    %v3512 = vld [vmem:[#allocation7 + $0x668] sm:$0xff]
    %v3513 = vld [vmem:[#allocation7 + $0x670] sm:$0xff]
    %v3514 = vld [vmem:[#allocation7 + $0x678] sm:$0xff]
    %v3515 = vld [vmem:[#allocation7 + $0x680] sm:$0xff]
    %v3516 = vld [vmem:[#allocation7 + $0x688] sm:$0xff]
    %v3517 = vld [vmem:[#allocation7 + $0x690] sm:$0xff]
    %v3518 = vld [vmem:[#allocation7 + $0x698] sm:$0xff]
    %v3519 = vld [vmem:[#allocation7 + $0x6a0] sm:$0xff]
    %v3520 = vld [vmem:[#allocation7 + $0x6a8] sm:$0xff]
    %v3521 = vld [vmem:[#allocation7 + $0x6b0] sm:$0xff]
    %v3522 = vld [vmem:[#allocation7 + $0x6b8] sm:$0xff]
    %v3523 = vld [vmem:[#allocation7 + $0x6c0] sm:$0xff]
    %v3524 = vld [vmem:[#allocation7 + $0x6c8] sm:$0xff]
    %v3525 = vld [vmem:[#allocation7 + $0x6d0] sm:$0xff]
    %v3526 = vld [vmem:[#allocation7 + $0x6d8] sm:$0xff]
    %v3527 = vld [vmem:[#allocation7 + $0x6e0] sm:$0xff]
    %v3528 = vld [vmem:[#allocation7 + $0x6e8] sm:$0xff]
    %v3529 = vld [vmem:[#allocation7 + $0x6f0] sm:$0xff]
    %v3530 = vld [vmem:[#allocation7 + $0x6f8] sm:$0xff]
    %v3531 = vld [vmem:[#allocation7 + $0x700] sm:$0xff]
    %v3532 = vld [vmem:[#allocation7 + $0x708] sm:$0xff]
    %v3533 = vld [vmem:[#allocation7 + $0x710] sm:$0xff]
    %v3534 = vld [vmem:[#allocation7 + $0x718] sm:$0xff]
    %v3535 = vld [vmem:[#allocation7 + $0x720] sm:$0xff]
    %v3536 = vld [vmem:[#allocation7 + $0x728] sm:$0xff]
    %v3537 = vld [vmem:[#allocation7 + $0x730] sm:$0xff]
    %v3538 = vld [vmem:[#allocation7 + $0x738] sm:$0xff]
    %v3539 = vld [vmem:[#allocation7 + $0x740] sm:$0xff]
    %v3540 = vld [vmem:[#allocation7 + $0x748] sm:$0xff]
    %v3541 = vld [vmem:[#allocation7 + $0x750] sm:$0xff]
    %v3542 = vld [vmem:[#allocation7 + $0x758] sm:$0xff]
    %v3543 = vld [vmem:[#allocation7 + $0x760] sm:$0xff]
    %v3544 = vld [vmem:[#allocation7 + $0x768] sm:$0xff]
    %v3545 = vld [vmem:[#allocation7 + $0x770] sm:$0xff]
    %v3546 = vld [vmem:[#allocation7 + $0x778] sm:$0xff]
    %v3547 = vld [vmem:[#allocation7 + $0x780] sm:$0xff]
    %v3548 = vld [vmem:[#allocation7 + $0x788] sm:$0xff]
    %v3549 = vld [vmem:[#allocation7 + $0x790] sm:$0xff]
    %v3550 = vld [vmem:[#allocation7 + $0x798] sm:$0xff]
    %v3551 = vld [vmem:[#allocation7 + $0x7a0] sm:$0xff]
    %v3552 = vld [vmem:[#allocation7 + $0x7a8] sm:$0xff]
    %v3553 = vld [vmem:[#allocation7 + $0x7b0] sm:$0xff]
    %v3554 = vld [vmem:[#allocation7 + $0x7b8] sm:$0xff]
    %v3555 = vld [vmem:[#allocation7 + $0x7c0] sm:$0xff]
    %v3556 = vld [vmem:[#allocation7 + $0x7c8] sm:$0xff]
    %v3557 = vld [vmem:[#allocation7 + $0x7d0] sm:$0xff]
    %v3558 = vld [vmem:[#allocation7 + $0x7d8] sm:$0xff]
    %v3559 = vld [vmem:[#allocation7 + $0x7e0] sm:$0xff]
    %v3560 = vld [vmem:[#allocation7 + $0x7e8] sm:$0xff]
    %v3561 = vld [vmem:[#allocation7 + $0x7f0] sm:$0xff]
    %v3562 = vld [vmem:[#allocation7 + $0x7f8] sm:$0xff]
    %v3563 = vld [vmem:[#allocation8] sm:$0xf]
    %v3565 = vlaneseq
    %v3566 = vshrl.u32 %v3565, 7
    %v3567 = vsub.s32 0, %v3566
    %v3568 = vrot.slane %v3563, %v3567
    %v3569 = vlaneseq
    %v3570 = vshrl.u32 %v3569, 7
    %v3571 = vsub.s32 1, %v3570
    %v3572 = vrot.slane %v3563, %v3571
    %v3573 = vlaneseq
    %v3574 = vshrl.u32 %v3573, 7
    %v3575 = vsub.s32 2, %v3574
    %v3576 = vrot.slane %v3563, %v3575
    %v3577 = vlaneseq
    %v3578 = vshrl.u32 %v3577, 7
    %v3579 = vsub.s32 3, %v3578
    %v3580 = vrot.slane %v3563, %v3579
    %v3841 = vunpack.c.l.b16 %v3307
    %v3842 = vunpack.c.h.b16 %v3307
    %v3843 = vunpack.c.l.b16 %v3308
    %v3844 = vunpack.c.h.b16 %v3308
    %v3845 = vunpack.c.l.b16 %v3309
    %v3846 = vunpack.c.h.b16 %v3309
    %v3847 = vunpack.c.l.b16 %v3310
    %v3848 = vunpack.c.h.b16 %v3310
    %v3849 = vunpack.c.l.b16 %v3311
    %v3850 = vunpack.c.h.b16 %v3311
    %v3851 = vunpack.c.l.b16 %v3312
    %v3852 = vunpack.c.h.b16 %v3312
    %v3853 = vunpack.c.l.b16 %v3313
    %v3854 = vunpack.c.h.b16 %v3313
    %v3855 = vunpack.c.l.b16 %v3314
    %v3856 = vunpack.c.h.b16 %v3314
    %v3857 = vunpack.c.l.b16 %v3315
    %v3858 = vunpack.c.h.b16 %v3315
    %v3859 = vunpack.c.l.b16 %v3316
    %v3860 = vunpack.c.h.b16 %v3316
    %v3861 = vunpack.c.l.b16 %v3317
    %v3862 = vunpack.c.h.b16 %v3317
    %v3863 = vunpack.c.l.b16 %v3318
    %v3864 = vunpack.c.h.b16 %v3318
    %v3865 = vunpack.c.l.b16 %v3319
    %v3866 = vunpack.c.h.b16 %v3319
    %v3867 = vunpack.c.l.b16 %v3320
    %v3868 = vunpack.c.h.b16 %v3320
    %v3869 = vunpack.c.l.b16 %v3321
    %v3870 = vunpack.c.h.b16 %v3321
    %v3871 = vunpack.c.l.b16 %v3322
    %v3872 = vunpack.c.h.b16 %v3322
    %v3873 = vunpack.c.l.b16 %v3323
    %v3874 = vunpack.c.h.b16 %v3323
    %v3875 = vunpack.c.l.b16 %v3324
    %v3876 = vunpack.c.h.b16 %v3324
    %v3877 = vunpack.c.l.b16 %v3325
    %v3878 = vunpack.c.h.b16 %v3325
    %v3879 = vunpack.c.l.b16 %v3326
    %v3880 = vunpack.c.h.b16 %v3326
    %v3881 = vunpack.c.l.b16 %v3327
    %v3882 = vunpack.c.h.b16 %v3327
    %v3883 = vunpack.c.l.b16 %v3328
    %v3884 = vunpack.c.h.b16 %v3328
    %v3885 = vunpack.c.l.b16 %v3329
    %v3886 = vunpack.c.h.b16 %v3329
    %v3887 = vunpack.c.l.b16 %v3330
    %v3888 = vunpack.c.h.b16 %v3330
    %v3889 = vunpack.c.l.b16 %v3331
    %v3890 = vunpack.c.h.b16 %v3331
    %v3891 = vunpack.c.l.b16 %v3332
    %v3892 = vunpack.c.h.b16 %v3332
    %v3893 = vunpack.c.l.b16 %v3333
    %v3894 = vunpack.c.h.b16 %v3333
    %v3895 = vunpack.c.l.b16 %v3334
    %v3896 = vunpack.c.h.b16 %v3334
    %v3897 = vunpack.c.l.b16 %v3335
    %v3898 = vunpack.c.h.b16 %v3335
    %v3899 = vunpack.c.l.b16 %v3336
    %v3900 = vunpack.c.h.b16 %v3336
    %v3901 = vunpack.c.l.b16 %v3337
    %v3902 = vunpack.c.h.b16 %v3337
    %v3903 = vunpack.c.l.b16 %v3338
    %v3904 = vunpack.c.h.b16 %v3338
    %v3905 = vunpack.c.l.b16 %v3339
    %v3906 = vunpack.c.h.b16 %v3339
    %v3907 = vunpack.c.l.b16 %v3340
    %v3908 = vunpack.c.h.b16 %v3340
    %v3909 = vunpack.c.l.b16 %v3341
    %v3910 = vunpack.c.h.b16 %v3341
    %v3911 = vunpack.c.l.b16 %v3342
    %v3912 = vunpack.c.h.b16 %v3342
    %v3913 = vunpack.c.l.b16 %v3343
    %v3914 = vunpack.c.h.b16 %v3343
    %v3915 = vunpack.c.l.b16 %v3344
    %v3916 = vunpack.c.h.b16 %v3344
    %v3917 = vunpack.c.l.b16 %v3345
    %v3918 = vunpack.c.h.b16 %v3345
    %v3919 = vunpack.c.l.b16 %v3346
    %v3920 = vunpack.c.h.b16 %v3346
    %v3921 = vunpack.c.l.b16 %v3347
    %v3922 = vunpack.c.h.b16 %v3347
    %v3923 = vunpack.c.l.b16 %v3348
    %v3924 = vunpack.c.h.b16 %v3348
    %v3925 = vunpack.c.l.b16 %v3349
    %v3926 = vunpack.c.h.b16 %v3349
    %v3927 = vunpack.c.l.b16 %v3350
    %v3928 = vunpack.c.h.b16 %v3350
    %v3929 = vunpack.c.l.b16 %v3351
    %v3930 = vunpack.c.h.b16 %v3351
    %v3931 = vunpack.c.l.b16 %v3352
    %v3932 = vunpack.c.h.b16 %v3352
    %v3933 = vunpack.c.l.b16 %v3353
    %v3934 = vunpack.c.h.b16 %v3353
    %v3935 = vunpack.c.l.b16 %v3354
    %v3936 = vunpack.c.h.b16 %v3354
    %v3937 = vunpack.c.l.b16 %v3355
    %v3938 = vunpack.c.h.b16 %v3355
    %v3939 = vunpack.c.l.b16 %v3356
    %v3940 = vunpack.c.h.b16 %v3356
    %v3941 = vunpack.c.l.b16 %v3357
    %v3942 = vunpack.c.h.b16 %v3357
    %v3943 = vunpack.c.l.b16 %v3358
    %v3944 = vunpack.c.h.b16 %v3358
    %v3945 = vunpack.c.l.b16 %v3359
    %v3946 = vunpack.c.h.b16 %v3359
    %v3947 = vunpack.c.l.b16 %v3360
    %v3948 = vunpack.c.h.b16 %v3360
    %v3949 = vunpack.c.l.b16 %v3361
    %v3950 = vunpack.c.h.b16 %v3361
    %v3951 = vunpack.c.l.b16 %v3362
    %v3952 = vunpack.c.h.b16 %v3362
    %v3953 = vunpack.c.l.b16 %v3363
    %v3954 = vunpack.c.h.b16 %v3363
    %v3955 = vunpack.c.l.b16 %v3364
    %v3956 = vunpack.c.h.b16 %v3364
    %v3957 = vunpack.c.l.b16 %v3365
    %v3958 = vunpack.c.h.b16 %v3365
    %v3959 = vunpack.c.l.b16 %v3366
    %v3960 = vunpack.c.h.b16 %v3366
    %v3961 = vunpack.c.l.b16 %v3367
    %v3962 = vunpack.c.h.b16 %v3367
    %v3963 = vunpack.c.l.b16 %v3368
    %v3964 = vunpack.c.h.b16 %v3368
    %v3965 = vunpack.c.l.b16 %v3369
    %v3966 = vunpack.c.h.b16 %v3369
    %v3967 = vunpack.c.l.b16 %v3370
    %v3968 = vunpack.c.h.b16 %v3370
    %v3969 = vunpack.c.l.b16 %v3371
    %v3970 = vunpack.c.h.b16 %v3371
    %v3971 = vunpack.c.l.b16 %v3372
    %v3972 = vunpack.c.h.b16 %v3372
    %v3973 = vunpack.c.l.b16 %v3373
    %v3974 = vunpack.c.h.b16 %v3373
    %v3975 = vunpack.c.l.b16 %v3374
    %v3976 = vunpack.c.h.b16 %v3374
    %v3977 = vunpack.c.l.b16 %v3375
    %v3978 = vunpack.c.h.b16 %v3375
    %v3979 = vunpack.c.l.b16 %v3376
    %v3980 = vunpack.c.h.b16 %v3376
    %v3981 = vunpack.c.l.b16 %v3377
    %v3982 = vunpack.c.h.b16 %v3377
    %v3983 = vunpack.c.l.b16 %v3378
    %v3984 = vunpack.c.h.b16 %v3378
    %v3985 = vunpack.c.l.b16 %v3379
    %v3986 = vunpack.c.h.b16 %v3379
    %v3987 = vunpack.c.l.b16 %v3380
    %v3988 = vunpack.c.h.b16 %v3380
    %v3989 = vunpack.c.l.b16 %v3381
    %v3990 = vunpack.c.h.b16 %v3381
    %v3991 = vunpack.c.l.b16 %v3382
    %v3992 = vunpack.c.h.b16 %v3382
    %v3993 = vunpack.c.l.b16 %v3383
    %v3994 = vunpack.c.h.b16 %v3383
    %v3995 = vunpack.c.l.b16 %v3384
    %v3996 = vunpack.c.h.b16 %v3384
    %v3997 = vunpack.c.l.b16 %v3385
    %v3998 = vunpack.c.h.b16 %v3385
    %v3999 = vunpack.c.l.b16 %v3386
    %v4000 = vunpack.c.h.b16 %v3386
    %v4001 = vunpack.c.l.b16 %v3387
    %v4002 = vunpack.c.h.b16 %v3387
    %v4003 = vunpack.c.l.b16 %v3388
    %v4004 = vunpack.c.h.b16 %v3388
    %v4005 = vunpack.c.l.b16 %v3389
    %v4006 = vunpack.c.h.b16 %v3389
    %v4007 = vunpack.c.l.b16 %v3390
    %v4008 = vunpack.c.h.b16 %v3390
    %v4009 = vunpack.c.l.b16 %v3391
    %v4010 = vunpack.c.h.b16 %v3391
    %v4011 = vunpack.c.l.b16 %v3392
    %v4012 = vunpack.c.h.b16 %v3392
    %v4013 = vunpack.c.l.b16 %v3393
    %v4014 = vunpack.c.h.b16 %v3393
    %v4015 = vunpack.c.l.b16 %v3394
    %v4016 = vunpack.c.h.b16 %v3394
    %v4017 = vunpack.c.l.b16 %v3395
    %v4018 = vunpack.c.h.b16 %v3395
    %v4019 = vunpack.c.l.b16 %v3396
    %v4020 = vunpack.c.h.b16 %v3396
    %v4021 = vunpack.c.l.b16 %v3397
    %v4022 = vunpack.c.h.b16 %v3397
    %v4023 = vunpack.c.l.b16 %v3398
    %v4024 = vunpack.c.h.b16 %v3398
    %v4025 = vunpack.c.l.b16 %v3399
    %v4026 = vunpack.c.h.b16 %v3399
    %v4027 = vunpack.c.l.b16 %v3400
    %v4028 = vunpack.c.h.b16 %v3400
    %v4029 = vunpack.c.l.b16 %v3401
    %v4030 = vunpack.c.h.b16 %v3401
    %v4031 = vunpack.c.l.b16 %v3402
    %v4032 = vunpack.c.h.b16 %v3402
    %v4033 = vunpack.c.l.b16 %v3403
    %v4034 = vunpack.c.h.b16 %v3403
    %v4035 = vunpack.c.l.b16 %v3404
    %v4036 = vunpack.c.h.b16 %v3404
    %v4037 = vunpack.c.l.b16 %v3405
    %v4038 = vunpack.c.h.b16 %v3405
    %v4039 = vunpack.c.l.b16 %v3406
    %v4040 = vunpack.c.h.b16 %v3406
    %v4041 = vunpack.c.l.b16 %v3407
    %v4042 = vunpack.c.h.b16 %v3407
    %v4043 = vunpack.c.l.b16 %v3408
    %v4044 = vunpack.c.h.b16 %v3408
    %v4045 = vunpack.c.l.b16 %v3409
    %v4046 = vunpack.c.h.b16 %v3409
    %v4047 = vunpack.c.l.b16 %v3410
    %v4048 = vunpack.c.h.b16 %v3410
    %v4049 = vunpack.c.l.b16 %v3411
    %v4050 = vunpack.c.h.b16 %v3411
    %v4051 = vunpack.c.l.b16 %v3412
    %v4052 = vunpack.c.h.b16 %v3412
    %v4053 = vunpack.c.l.b16 %v3413
    %v4054 = vunpack.c.h.b16 %v3413
    %v4055 = vunpack.c.l.b16 %v3414
    %v4056 = vunpack.c.h.b16 %v3414
    %v4057 = vunpack.c.l.b16 %v3415
    %v4058 = vunpack.c.h.b16 %v3415
    %v4059 = vunpack.c.l.b16 %v3416
    %v4060 = vunpack.c.h.b16 %v3416
    %v4061 = vunpack.c.l.b16 %v3417
    %v4062 = vunpack.c.h.b16 %v3417
    %v4063 = vunpack.c.l.b16 %v3418
    %v4064 = vunpack.c.h.b16 %v3418
    %v4065 = vunpack.c.l.b16 %v3419
    %v4066 = vunpack.c.h.b16 %v3419
    %v4067 = vunpack.c.l.b16 %v3420
    %v4068 = vunpack.c.h.b16 %v3420
    %v4069 = vunpack.c.l.b16 %v3421
    %v4070 = vunpack.c.h.b16 %v3421
    %v4071 = vunpack.c.l.b16 %v3422
    %v4072 = vunpack.c.h.b16 %v3422
    %v4073 = vunpack.c.l.b16 %v3423
    %v4074 = vunpack.c.h.b16 %v3423
    %v4075 = vunpack.c.l.b16 %v3424
    %v4076 = vunpack.c.h.b16 %v3424
    %v4077 = vunpack.c.l.b16 %v3425
    %v4078 = vunpack.c.h.b16 %v3425
    %v4079 = vunpack.c.l.b16 %v3426
    %v4080 = vunpack.c.h.b16 %v3426
    %v4081 = vunpack.c.l.b16 %v3427
    %v4082 = vunpack.c.h.b16 %v3427
    %v4083 = vunpack.c.l.b16 %v3428
    %v4084 = vunpack.c.h.b16 %v3428
    %v4085 = vunpack.c.l.b16 %v3429
    %v4086 = vunpack.c.h.b16 %v3429
    %v4087 = vunpack.c.l.b16 %v3430
    %v4088 = vunpack.c.h.b16 %v3430
    %v4089 = vunpack.c.l.b16 %v3431
    %v4090 = vunpack.c.h.b16 %v3431
    %v4091 = vunpack.c.l.b16 %v3432
    %v4092 = vunpack.c.h.b16 %v3432
    %v4093 = vunpack.c.l.b16 %v3433
    %v4094 = vunpack.c.h.b16 %v3433
    %v4095 = vunpack.c.l.b16 %v3434
    %v4096 = vunpack.c.h.b16 %v3434
    %v4097 = vunpack.c.l.b16 %v3435
    %v4098 = vunpack.c.h.b16 %v3435
    %v4099 = vunpack.c.l.b16 %v3436
    %v4100 = vunpack.c.h.b16 %v3436
    %v4101 = vunpack.c.l.b16 %v3437
    %v4102 = vunpack.c.h.b16 %v3437
    %v4103 = vunpack.c.l.b16 %v3438
    %v4104 = vunpack.c.h.b16 %v3438
    %v4105 = vunpack.c.l.b16 %v3439
    %v4106 = vunpack.c.h.b16 %v3439
    %v4107 = vunpack.c.l.b16 %v3440
    %v4108 = vunpack.c.h.b16 %v3440
    %v4109 = vunpack.c.l.b16 %v3441
    %v4110 = vunpack.c.h.b16 %v3441
    %v4111 = vunpack.c.l.b16 %v3442
    %v4112 = vunpack.c.h.b16 %v3442
    %v4113 = vunpack.c.l.b16 %v3443
    %v4114 = vunpack.c.h.b16 %v3443
    %v4115 = vunpack.c.l.b16 %v3444
    %v4116 = vunpack.c.h.b16 %v3444
    %v4117 = vunpack.c.l.b16 %v3445
    %v4118 = vunpack.c.h.b16 %v3445
    %v4119 = vunpack.c.l.b16 %v3446
    %v4120 = vunpack.c.h.b16 %v3446
    %v4121 = vunpack.c.l.b16 %v3447
    %v4122 = vunpack.c.h.b16 %v3447
    %v4123 = vunpack.c.l.b16 %v3448
    %v4124 = vunpack.c.h.b16 %v3448
    %v4125 = vunpack.c.l.b16 %v3449
    %v4126 = vunpack.c.h.b16 %v3449
    %v4127 = vunpack.c.l.b16 %v3450
    %v4128 = vunpack.c.h.b16 %v3450
    %v4129 = vunpack.c.l.b16 %v3451
    %v4130 = vunpack.c.h.b16 %v3451
    %v4131 = vunpack.c.l.b16 %v3452
    %v4132 = vunpack.c.h.b16 %v3452
    %v4133 = vunpack.c.l.b16 %v3453
    %v4134 = vunpack.c.h.b16 %v3453
    %v4135 = vunpack.c.l.b16 %v3454
    %v4136 = vunpack.c.h.b16 %v3454
    %v4137 = vunpack.c.l.b16 %v3455
    %v4138 = vunpack.c.h.b16 %v3455
    %v4139 = vunpack.c.l.b16 %v3456
    %v4140 = vunpack.c.h.b16 %v3456
    %v4141 = vunpack.c.l.b16 %v3457
    %v4142 = vunpack.c.h.b16 %v3457
    %v4143 = vunpack.c.l.b16 %v3458
    %v4144 = vunpack.c.h.b16 %v3458
    %v4145 = vunpack.c.l.b16 %v3459
    %v4146 = vunpack.c.h.b16 %v3459
    %v4147 = vunpack.c.l.b16 %v3460
    %v4148 = vunpack.c.h.b16 %v3460
    %v4149 = vunpack.c.l.b16 %v3461
    %v4150 = vunpack.c.h.b16 %v3461
    %v4151 = vunpack.c.l.b16 %v3462
    %v4152 = vunpack.c.h.b16 %v3462
    %v4153 = vunpack.c.l.b16 %v3463
    %v4154 = vunpack.c.h.b16 %v3463
    %v4155 = vunpack.c.l.b16 %v3464
    %v4156 = vunpack.c.h.b16 %v3464
    %v4157 = vunpack.c.l.b16 %v3465
    %v4158 = vunpack.c.h.b16 %v3465
    %v4159 = vunpack.c.l.b16 %v3466
    %v4160 = vunpack.c.h.b16 %v3466
    %v4161 = vunpack.c.l.b16 %v3467
    %v4162 = vunpack.c.h.b16 %v3467
    %v4163 = vunpack.c.l.b16 %v3468
    %v4164 = vunpack.c.h.b16 %v3468
    %v4165 = vunpack.c.l.b16 %v3469
    %v4166 = vunpack.c.h.b16 %v3469
    %v4167 = vunpack.c.l.b16 %v3470
    %v4168 = vunpack.c.h.b16 %v3470
    %v4169 = vunpack.c.l.b16 %v3471
    %v4170 = vunpack.c.h.b16 %v3471
    %v4171 = vunpack.c.l.b16 %v3472
    %v4172 = vunpack.c.h.b16 %v3472
    %v4173 = vunpack.c.l.b16 %v3473
    %v4174 = vunpack.c.h.b16 %v3473
    %v4175 = vunpack.c.l.b16 %v3474
    %v4176 = vunpack.c.h.b16 %v3474
    %v4177 = vunpack.c.l.b16 %v3475
    %v4178 = vunpack.c.h.b16 %v3475
    %v4179 = vunpack.c.l.b16 %v3476
    %v4180 = vunpack.c.h.b16 %v3476
    %v4181 = vunpack.c.l.b16 %v3477
    %v4182 = vunpack.c.h.b16 %v3477
    %v4183 = vunpack.c.l.b16 %v3478
    %v4184 = vunpack.c.h.b16 %v3478
    %v4185 = vunpack.c.l.b16 %v3479
    %v4186 = vunpack.c.h.b16 %v3479
    %v4187 = vunpack.c.l.b16 %v3480
    %v4188 = vunpack.c.h.b16 %v3480
    %v4189 = vunpack.c.l.b16 %v3481
    %v4190 = vunpack.c.h.b16 %v3481
    %v4191 = vunpack.c.l.b16 %v3482
    %v4192 = vunpack.c.h.b16 %v3482
    %v4193 = vunpack.c.l.b16 %v3483
    %v4194 = vunpack.c.h.b16 %v3483
    %v4195 = vunpack.c.l.b16 %v3484
    %v4196 = vunpack.c.h.b16 %v3484
    %v4197 = vunpack.c.l.b16 %v3485
    %v4198 = vunpack.c.h.b16 %v3485
    %v4199 = vunpack.c.l.b16 %v3486
    %v4200 = vunpack.c.h.b16 %v3486
    %v4201 = vunpack.c.l.b16 %v3487
    %v4202 = vunpack.c.h.b16 %v3487
    %v4203 = vunpack.c.l.b16 %v3488
    %v4204 = vunpack.c.h.b16 %v3488
    %v4205 = vunpack.c.l.b16 %v3489
    %v4206 = vunpack.c.h.b16 %v3489
    %v4207 = vunpack.c.l.b16 %v3490
    %v4208 = vunpack.c.h.b16 %v3490
    %v4209 = vunpack.c.l.b16 %v3491
    %v4210 = vunpack.c.h.b16 %v3491
    %v4211 = vunpack.c.l.b16 %v3492
    %v4212 = vunpack.c.h.b16 %v3492
    %v4213 = vunpack.c.l.b16 %v3493
    %v4214 = vunpack.c.h.b16 %v3493
    %v4215 = vunpack.c.l.b16 %v3494
    %v4216 = vunpack.c.h.b16 %v3494
    %v4217 = vunpack.c.l.b16 %v3495
    %v4218 = vunpack.c.h.b16 %v3495
    %v4219 = vunpack.c.l.b16 %v3496
    %v4220 = vunpack.c.h.b16 %v3496
    %v4221 = vunpack.c.l.b16 %v3497
    %v4222 = vunpack.c.h.b16 %v3497
    %v4223 = vunpack.c.l.b16 %v3498
    %v4224 = vunpack.c.h.b16 %v3498
    %v4225 = vunpack.c.l.b16 %v3499
    %v4226 = vunpack.c.h.b16 %v3499
    %v4227 = vunpack.c.l.b16 %v3500
    %v4228 = vunpack.c.h.b16 %v3500
    %v4229 = vunpack.c.l.b16 %v3501
    %v4230 = vunpack.c.h.b16 %v3501
    %v4231 = vunpack.c.l.b16 %v3502
    %v4232 = vunpack.c.h.b16 %v3502
    %v4233 = vunpack.c.l.b16 %v3503
    %v4234 = vunpack.c.h.b16 %v3503
    %v4235 = vunpack.c.l.b16 %v3504
    %v4236 = vunpack.c.h.b16 %v3504
    %v4237 = vunpack.c.l.b16 %v3505
    %v4238 = vunpack.c.h.b16 %v3505
    %v4239 = vunpack.c.l.b16 %v3506
    %v4240 = vunpack.c.h.b16 %v3506
    %v4241 = vunpack.c.l.b16 %v3507
    %v4242 = vunpack.c.h.b16 %v3507
    %v4243 = vunpack.c.l.b16 %v3508
    %v4244 = vunpack.c.h.b16 %v3508
    %v4245 = vunpack.c.l.b16 %v3509
    %v4246 = vunpack.c.h.b16 %v3509
    %v4247 = vunpack.c.l.b16 %v3510
    %v4248 = vunpack.c.h.b16 %v3510
    %v4249 = vunpack.c.l.b16 %v3511
    %v4250 = vunpack.c.h.b16 %v3511
    %v4251 = vunpack.c.l.b16 %v3512
    %v4252 = vunpack.c.h.b16 %v3512
    %v4253 = vunpack.c.l.b16 %v3513
    %v4254 = vunpack.c.h.b16 %v3513
    %v4255 = vunpack.c.l.b16 %v3514
    %v4256 = vunpack.c.h.b16 %v3514
    %v4257 = vunpack.c.l.b16 %v3515
    %v4258 = vunpack.c.h.b16 %v3515
    %v4259 = vunpack.c.l.b16 %v3516
    %v4260 = vunpack.c.h.b16 %v3516
    %v4261 = vunpack.c.l.b16 %v3517
    %v4262 = vunpack.c.h.b16 %v3517
    %v4263 = vunpack.c.l.b16 %v3518
    %v4264 = vunpack.c.h.b16 %v3518
    %v4265 = vunpack.c.l.b16 %v3519
    %v4266 = vunpack.c.h.b16 %v3519
    %v4267 = vunpack.c.l.b16 %v3520
    %v4268 = vunpack.c.h.b16 %v3520
    %v4269 = vunpack.c.l.b16 %v3521
    %v4270 = vunpack.c.h.b16 %v3521
    %v4271 = vunpack.c.l.b16 %v3522
    %v4272 = vunpack.c.h.b16 %v3522
    %v4273 = vunpack.c.l.b16 %v3523
    %v4274 = vunpack.c.h.b16 %v3523
    %v4275 = vunpack.c.l.b16 %v3524
    %v4276 = vunpack.c.h.b16 %v3524
    %v4277 = vunpack.c.l.b16 %v3525
    %v4278 = vunpack.c.h.b16 %v3525
    %v4279 = vunpack.c.l.b16 %v3526
    %v4280 = vunpack.c.h.b16 %v3526
    %v4281 = vunpack.c.l.b16 %v3527
    %v4282 = vunpack.c.h.b16 %v3527
    %v4283 = vunpack.c.l.b16 %v3528
    %v4284 = vunpack.c.h.b16 %v3528
    %v4285 = vunpack.c.l.b16 %v3529
    %v4286 = vunpack.c.h.b16 %v3529
    %v4287 = vunpack.c.l.b16 %v3530
    %v4288 = vunpack.c.h.b16 %v3530
    %v4289 = vunpack.c.l.b16 %v3531
    %v4290 = vunpack.c.h.b16 %v3531
    %v4291 = vunpack.c.l.b16 %v3532
    %v4292 = vunpack.c.h.b16 %v3532
    %v4293 = vunpack.c.l.b16 %v3533
    %v4294 = vunpack.c.h.b16 %v3533
    %v4295 = vunpack.c.l.b16 %v3534
    %v4296 = vunpack.c.h.b16 %v3534
    %v4297 = vunpack.c.l.b16 %v3535
    %v4298 = vunpack.c.h.b16 %v3535
    %v4299 = vunpack.c.l.b16 %v3536
    %v4300 = vunpack.c.h.b16 %v3536
    %v4301 = vunpack.c.l.b16 %v3537
    %v4302 = vunpack.c.h.b16 %v3537
    %v4303 = vunpack.c.l.b16 %v3538
    %v4304 = vunpack.c.h.b16 %v3538
    %v4305 = vunpack.c.l.b16 %v3539
    %v4306 = vunpack.c.h.b16 %v3539
    %v4307 = vunpack.c.l.b16 %v3540
    %v4308 = vunpack.c.h.b16 %v3540
    %v4309 = vunpack.c.l.b16 %v3541
    %v4310 = vunpack.c.h.b16 %v3541
    %v4311 = vunpack.c.l.b16 %v3542
    %v4312 = vunpack.c.h.b16 %v3542
    %v4313 = vunpack.c.l.b16 %v3543
    %v4314 = vunpack.c.h.b16 %v3543
    %v4315 = vunpack.c.l.b16 %v3544
    %v4316 = vunpack.c.h.b16 %v3544
    %v4317 = vunpack.c.l.b16 %v3545
    %v4318 = vunpack.c.h.b16 %v3545
    %v4319 = vunpack.c.l.b16 %v3546
    %v4320 = vunpack.c.h.b16 %v3546
    %v4321 = vunpack.c.l.b16 %v3547
    %v4322 = vunpack.c.h.b16 %v3547
    %v4323 = vunpack.c.l.b16 %v3548
    %v4324 = vunpack.c.h.b16 %v3548
    %v4325 = vunpack.c.l.b16 %v3549
    %v4326 = vunpack.c.h.b16 %v3549
    %v4327 = vunpack.c.l.b16 %v3550
    %v4328 = vunpack.c.h.b16 %v3550
    %v4329 = vunpack.c.l.b16 %v3551
    %v4330 = vunpack.c.h.b16 %v3551
    %v4331 = vunpack.c.l.b16 %v3552
    %v4332 = vunpack.c.h.b16 %v3552
    %v4333 = vunpack.c.l.b16 %v3553
    %v4334 = vunpack.c.h.b16 %v3553
    %v4335 = vunpack.c.l.b16 %v3554
    %v4336 = vunpack.c.h.b16 %v3554
    %v4337 = vunpack.c.l.b16 %v3555
    %v4338 = vunpack.c.h.b16 %v3555
    %v4339 = vunpack.c.l.b16 %v3556
    %v4340 = vunpack.c.h.b16 %v3556
    %v4341 = vunpack.c.l.b16 %v3557
    %v4342 = vunpack.c.h.b16 %v3557
    %v4343 = vunpack.c.l.b16 %v3558
    %v4344 = vunpack.c.h.b16 %v3558
    %v4345 = vunpack.c.l.b16 %v3559
    %v4346 = vunpack.c.h.b16 %v3559
    %v4347 = vunpack.c.l.b16 %v3560
    %v4348 = vunpack.c.h.b16 %v3560
    %v4349 = vunpack.c.l.b16 %v3561
    %v4350 = vunpack.c.h.b16 %v3561
    %v4351 = vunpack.c.l.b16 %v3562
    %v4352 = vunpack.c.h.b16 %v3562
    %v4353 = vpack.c.b16 %v3845, %v3841
    %v4354 = vpack.c.b16 %v3846, %v3842
    %v4355 = vpack.c.b16 %v3847, %v3843
    %v4356 = vpack.c.b16 %v3848, %v3844
    %v4357 = vpack.c.b16 %v3853, %v3849
    %v4358 = vpack.c.b16 %v3854, %v3850
    %v4359 = vpack.c.b16 %v3855, %v3851
    %v4360 = vpack.c.b16 %v3856, %v3852
    %v4361 = vpack.c.b16 %v3861, %v3857
    %v4362 = vpack.c.b16 %v3862, %v3858
    %v4363 = vpack.c.b16 %v3863, %v3859
    %v4364 = vpack.c.b16 %v3864, %v3860
    %v4365 = vpack.c.b16 %v3869, %v3865
    %v4366 = vpack.c.b16 %v3870, %v3866
    %v4367 = vpack.c.b16 %v3871, %v3867
    %v4368 = vpack.c.b16 %v3872, %v3868
    %v4369 = vpack.c.b16 %v3877, %v3873
    %v4370 = vpack.c.b16 %v3878, %v3874
    %v4371 = vpack.c.b16 %v3879, %v3875
    %v4372 = vpack.c.b16 %v3880, %v3876
    %v4373 = vpack.c.b16 %v3885, %v3881
    %v4374 = vpack.c.b16 %v3886, %v3882
    %v4375 = vpack.c.b16 %v3887, %v3883
    %v4376 = vpack.c.b16 %v3888, %v3884
    %v4377 = vpack.c.b16 %v3893, %v3889
    %v4378 = vpack.c.b16 %v3894, %v3890
    %v4379 = vpack.c.b16 %v3895, %v3891
    %v4380 = vpack.c.b16 %v3896, %v3892
    %v4381 = vpack.c.b16 %v3901, %v3897
    %v4382 = vpack.c.b16 %v3902, %v3898
    %v4383 = vpack.c.b16 %v3903, %v3899
    %v4384 = vpack.c.b16 %v3904, %v3900
    %v4385 = vpack.c.b16 %v3909, %v3905
    %v4386 = vpack.c.b16 %v3910, %v3906
    %v4387 = vpack.c.b16 %v3911, %v3907
    %v4388 = vpack.c.b16 %v3912, %v3908
    %v4389 = vpack.c.b16 %v3917, %v3913
    %v4390 = vpack.c.b16 %v3918, %v3914
    %v4391 = vpack.c.b16 %v3919, %v3915
    %v4392 = vpack.c.b16 %v3920, %v3916
    %v4393 = vpack.c.b16 %v3925, %v3921
    %v4394 = vpack.c.b16 %v3926, %v3922
    %v4395 = vpack.c.b16 %v3927, %v3923
    %v4396 = vpack.c.b16 %v3928, %v3924
    %v4397 = vpack.c.b16 %v3933, %v3929
    %v4398 = vpack.c.b16 %v3934, %v3930
    %v4399 = vpack.c.b16 %v3935, %v3931
    %v4400 = vpack.c.b16 %v3936, %v3932
    %v4401 = vpack.c.b16 %v3941, %v3937
    %v4402 = vpack.c.b16 %v3942, %v3938
    %v4403 = vpack.c.b16 %v3943, %v3939
    %v4404 = vpack.c.b16 %v3944, %v3940
    %v4405 = vpack.c.b16 %v3949, %v3945
    %v4406 = vpack.c.b16 %v3950, %v3946
    %v4407 = vpack.c.b16 %v3951, %v3947
    %v4408 = vpack.c.b16 %v3952, %v3948
    %v4409 = vpack.c.b16 %v3957, %v3953
    %v4410 = vpack.c.b16 %v3958, %v3954
    %v4411 = vpack.c.b16 %v3959, %v3955
    %v4412 = vpack.c.b16 %v3960, %v3956
    %v4413 = vpack.c.b16 %v3965, %v3961
    %v4414 = vpack.c.b16 %v3966, %v3962
    %v4415 = vpack.c.b16 %v3967, %v3963
    %v4416 = vpack.c.b16 %v3968, %v3964
    %v4417 = vpack.c.b16 %v3973, %v3969
    %v4418 = vpack.c.b16 %v3974, %v3970
    %v4419 = vpack.c.b16 %v3975, %v3971
    %v4420 = vpack.c.b16 %v3976, %v3972
    %v4421 = vpack.c.b16 %v3981, %v3977
    %v4422 = vpack.c.b16 %v3982, %v3978
    %v4423 = vpack.c.b16 %v3983, %v3979
    %v4424 = vpack.c.b16 %v3984, %v3980
    %v4425 = vpack.c.b16 %v3989, %v3985
    %v4426 = vpack.c.b16 %v3990, %v3986
    %v4427 = vpack.c.b16 %v3991, %v3987
    %v4428 = vpack.c.b16 %v3992, %v3988
    %v4429 = vpack.c.b16 %v3997, %v3993
    %v4430 = vpack.c.b16 %v3998, %v3994
    %v4431 = vpack.c.b16 %v3999, %v3995
    %v4432 = vpack.c.b16 %v4000, %v3996
    %v4433 = vpack.c.b16 %v4005, %v4001
    %v4434 = vpack.c.b16 %v4006, %v4002
    %v4435 = vpack.c.b16 %v4007, %v4003
    %v4436 = vpack.c.b16 %v4008, %v4004
    %v4437 = vpack.c.b16 %v4013, %v4009
    %v4438 = vpack.c.b16 %v4014, %v4010
    %v4439 = vpack.c.b16 %v4015, %v4011
    %v4440 = vpack.c.b16 %v4016, %v4012
    %v4441 = vpack.c.b16 %v4021, %v4017
    %v4442 = vpack.c.b16 %v4022, %v4018
    %v4443 = vpack.c.b16 %v4023, %v4019
    %v4444 = vpack.c.b16 %v4024, %v4020
    %v4445 = vpack.c.b16 %v4029, %v4025
    %v4446 = vpack.c.b16 %v4030, %v4026
    %v4447 = vpack.c.b16 %v4031, %v4027
    %v4448 = vpack.c.b16 %v4032, %v4028
    %v4449 = vpack.c.b16 %v4037, %v4033
    %v4450 = vpack.c.b16 %v4038, %v4034
    %v4451 = vpack.c.b16 %v4039, %v4035
    %v4452 = vpack.c.b16 %v4040, %v4036
    %v4453 = vpack.c.b16 %v4045, %v4041
    %v4454 = vpack.c.b16 %v4046, %v4042
    %v4455 = vpack.c.b16 %v4047, %v4043
    %v4456 = vpack.c.b16 %v4048, %v4044
    %v4457 = vpack.c.b16 %v4053, %v4049
    %v4458 = vpack.c.b16 %v4054, %v4050
    %v4459 = vpack.c.b16 %v4055, %v4051
    %v4460 = vpack.c.b16 %v4056, %v4052
    %v4461 = vpack.c.b16 %v4061, %v4057
    %v4462 = vpack.c.b16 %v4062, %v4058
    %v4463 = vpack.c.b16 %v4063, %v4059
    %v4464 = vpack.c.b16 %v4064, %v4060
    %v4465 = vpack.c.b16 %v4069, %v4065
    %v4466 = vpack.c.b16 %v4070, %v4066
    %v4467 = vpack.c.b16 %v4071, %v4067
    %v4468 = vpack.c.b16 %v4072, %v4068
    %v4469 = vpack.c.b16 %v4077, %v4073
    %v4470 = vpack.c.b16 %v4078, %v4074
    %v4471 = vpack.c.b16 %v4079, %v4075
    %v4472 = vpack.c.b16 %v4080, %v4076
    %v4473 = vpack.c.b16 %v4085, %v4081
    %v4474 = vpack.c.b16 %v4086, %v4082
    %v4475 = vpack.c.b16 %v4087, %v4083
    %v4476 = vpack.c.b16 %v4088, %v4084
    %v4477 = vpack.c.b16 %v4093, %v4089
    %v4478 = vpack.c.b16 %v4094, %v4090
    %v4479 = vpack.c.b16 %v4095, %v4091
    %v4480 = vpack.c.b16 %v4096, %v4092
    %v4481 = vpack.c.b16 %v4101, %v4097
    %v4482 = vpack.c.b16 %v4102, %v4098
    %v4483 = vpack.c.b16 %v4103, %v4099
    %v4484 = vpack.c.b16 %v4104, %v4100
    %v4485 = vpack.c.b16 %v4109, %v4105
    %v4486 = vpack.c.b16 %v4110, %v4106
    %v4487 = vpack.c.b16 %v4111, %v4107
    %v4488 = vpack.c.b16 %v4112, %v4108
    %v4489 = vpack.c.b16 %v4117, %v4113
    %v4490 = vpack.c.b16 %v4118, %v4114
    %v4491 = vpack.c.b16 %v4119, %v4115
    %v4492 = vpack.c.b16 %v4120, %v4116
    %v4493 = vpack.c.b16 %v4125, %v4121
    %v4494 = vpack.c.b16 %v4126, %v4122
    %v4495 = vpack.c.b16 %v4127, %v4123
    %v4496 = vpack.c.b16 %v4128, %v4124
    %v4497 = vpack.c.b16 %v4133, %v4129
    %v4498 = vpack.c.b16 %v4134, %v4130
    %v4499 = vpack.c.b16 %v4135, %v4131
    %v4500 = vpack.c.b16 %v4136, %v4132
    %v4501 = vpack.c.b16 %v4141, %v4137
    %v4502 = vpack.c.b16 %v4142, %v4138
    %v4503 = vpack.c.b16 %v4143, %v4139
    %v4504 = vpack.c.b16 %v4144, %v4140
    %v4505 = vpack.c.b16 %v4149, %v4145
    %v4506 = vpack.c.b16 %v4150, %v4146
    %v4507 = vpack.c.b16 %v4151, %v4147
    %v4508 = vpack.c.b16 %v4152, %v4148
    %v4509 = vpack.c.b16 %v4157, %v4153
    %v4510 = vpack.c.b16 %v4158, %v4154
    %v4511 = vpack.c.b16 %v4159, %v4155
    %v4512 = vpack.c.b16 %v4160, %v4156
    %v4513 = vpack.c.b16 %v4165, %v4161
    %v4514 = vpack.c.b16 %v4166, %v4162
    %v4515 = vpack.c.b16 %v4167, %v4163
    %v4516 = vpack.c.b16 %v4168, %v4164
    %v4517 = vpack.c.b16 %v4173, %v4169
    %v4518 = vpack.c.b16 %v4174, %v4170
    %v4519 = vpack.c.b16 %v4175, %v4171
    %v4520 = vpack.c.b16 %v4176, %v4172
    %v4521 = vpack.c.b16 %v4181, %v4177
    %v4522 = vpack.c.b16 %v4182, %v4178
    %v4523 = vpack.c.b16 %v4183, %v4179
    %v4524 = vpack.c.b16 %v4184, %v4180
    %v4525 = vpack.c.b16 %v4189, %v4185
    %v4526 = vpack.c.b16 %v4190, %v4186
    %v4527 = vpack.c.b16 %v4191, %v4187
    %v4528 = vpack.c.b16 %v4192, %v4188
    %v4529 = vpack.c.b16 %v4197, %v4193
    %v4530 = vpack.c.b16 %v4198, %v4194
    %v4531 = vpack.c.b16 %v4199, %v4195
    %v4532 = vpack.c.b16 %v4200, %v4196
    %v4533 = vpack.c.b16 %v4205, %v4201
    %v4534 = vpack.c.b16 %v4206, %v4202
    %v4535 = vpack.c.b16 %v4207, %v4203
    %v4536 = vpack.c.b16 %v4208, %v4204
    %v4537 = vpack.c.b16 %v4213, %v4209
    %v4538 = vpack.c.b16 %v4214, %v4210
    %v4539 = vpack.c.b16 %v4215, %v4211
    %v4540 = vpack.c.b16 %v4216, %v4212
    %v4541 = vpack.c.b16 %v4221, %v4217
    %v4542 = vpack.c.b16 %v4222, %v4218
    %v4543 = vpack.c.b16 %v4223, %v4219
    %v4544 = vpack.c.b16 %v4224, %v4220
    %v4545 = vpack.c.b16 %v4229, %v4225
    %v4546 = vpack.c.b16 %v4230, %v4226
    %v4547 = vpack.c.b16 %v4231, %v4227
    %v4548 = vpack.c.b16 %v4232, %v4228
    %v4549 = vpack.c.b16 %v4237, %v4233
    %v4550 = vpack.c.b16 %v4238, %v4234
    %v4551 = vpack.c.b16 %v4239, %v4235
    %v4552 = vpack.c.b16 %v4240, %v4236
    %v4553 = vpack.c.b16 %v4245, %v4241
    %v4554 = vpack.c.b16 %v4246, %v4242
    %v4555 = vpack.c.b16 %v4247, %v4243
    %v4556 = vpack.c.b16 %v4248, %v4244
    %v4557 = vpack.c.b16 %v4253, %v4249
    %v4558 = vpack.c.b16 %v4254, %v4250
    %v4559 = vpack.c.b16 %v4255, %v4251
    %v4560 = vpack.c.b16 %v4256, %v4252
    %v4561 = vpack.c.b16 %v4261, %v4257
    %v4562 = vpack.c.b16 %v4262, %v4258
    %v4563 = vpack.c.b16 %v4263, %v4259
    %v4564 = vpack.c.b16 %v4264, %v4260
    %v4565 = vpack.c.b16 %v4269, %v4265
    %v4566 = vpack.c.b16 %v4270, %v4266
    %v4567 = vpack.c.b16 %v4271, %v4267
    %v4568 = vpack.c.b16 %v4272, %v4268
    %v4569 = vpack.c.b16 %v4277, %v4273
    %v4570 = vpack.c.b16 %v4278, %v4274
    %v4571 = vpack.c.b16 %v4279, %v4275
    %v4572 = vpack.c.b16 %v4280, %v4276
    %v4573 = vpack.c.b16 %v4285, %v4281
    %v4574 = vpack.c.b16 %v4286, %v4282
    %v4575 = vpack.c.b16 %v4287, %v4283
    %v4576 = vpack.c.b16 %v4288, %v4284
    %v4577 = vpack.c.b16 %v4293, %v4289
    %v4578 = vpack.c.b16 %v4294, %v4290
    %v4579 = vpack.c.b16 %v4295, %v4291
    %v4580 = vpack.c.b16 %v4296, %v4292
    %v4581 = vpack.c.b16 %v4301, %v4297
    %v4582 = vpack.c.b16 %v4302, %v4298
    %v4583 = vpack.c.b16 %v4303, %v4299
    %v4584 = vpack.c.b16 %v4304, %v4300
    %v4585 = vpack.c.b16 %v4309, %v4305
    %v4586 = vpack.c.b16 %v4310, %v4306
    %v4587 = vpack.c.b16 %v4311, %v4307
    %v4588 = vpack.c.b16 %v4312, %v4308
    %v4589 = vpack.c.b16 %v4317, %v4313
    %v4590 = vpack.c.b16 %v4318, %v4314
    %v4591 = vpack.c.b16 %v4319, %v4315
    %v4592 = vpack.c.b16 %v4320, %v4316
    %v4593 = vpack.c.b16 %v4325, %v4321
    %v4594 = vpack.c.b16 %v4326, %v4322
    %v4595 = vpack.c.b16 %v4327, %v4323
    %v4596 = vpack.c.b16 %v4328, %v4324
    %v4597 = vpack.c.b16 %v4333, %v4329
    %v4598 = vpack.c.b16 %v4334, %v4330
    %v4599 = vpack.c.b16 %v4335, %v4331
    %v4600 = vpack.c.b16 %v4336, %v4332
    %v4601 = vpack.c.b16 %v4341, %v4337
    %v4602 = vpack.c.b16 %v4342, %v4338
    %v4603 = vpack.c.b16 %v4343, %v4339
    %v4604 = vpack.c.b16 %v4344, %v4340
    %v4605 = vpack.c.b16 %v4349, %v4345
    %v4606 = vpack.c.b16 %v4350, %v4346
    %v4607 = vpack.c.b16 %v4351, %v4347
    %v4608 = vpack.c.b16 %v4352, %v4348
    %4865 = vmatprep.subr.bf16.mxu0 %v4354
    %4866 = vmatpush1.bf16.msra.mxu0 %v4353
    %4867 = vmatprep.subr.bf16.mxu0 %v4358
    %4868 = vmatpush1.bf16.msra.mxu0 %v4357
    %4869 = vmatprep.subr.bf16.mxu0 %v4362
    %4870 = vmatpush1.bf16.msra.mxu0 %v4361
    %4871 = vmatprep.subr.bf16.mxu0 %v4366
    %4872 = vmatpush1.bf16.msra.mxu0 %v4365
    %4873 = vmatprep.subr.bf16.mxu0 %v4370
    %4874 = vmatpush1.bf16.msra.mxu0 %v4369
    %4875 = vmatprep.subr.bf16.mxu0 %v4374
    %4876 = vmatpush1.bf16.msra.mxu0 %v4373
    %4877 = vmatprep.subr.bf16.mxu0 %v4378
    %4878 = vmatpush1.bf16.msra.mxu0 %v4377
    %4879 = vmatprep.subr.bf16.mxu0 %v4382
    %4880 = vmatpush1.bf16.msra.mxu0 %v4381
    %4881 = vmatprep.subr.bf16.mxu0 %v4386
    %4882 = vmatpush1.bf16.msra.mxu0 %v4385
    %4883 = vmatprep.subr.bf16.mxu0 %v4390
    %4884 = vmatpush1.bf16.msra.mxu0 %v4389
    %4885 = vmatprep.subr.bf16.mxu0 %v4394
    %4886 = vmatpush1.bf16.msra.mxu0 %v4393
    %4887 = vmatprep.subr.bf16.mxu0 %v4398
    %4888 = vmatpush1.bf16.msra.mxu0 %v4397
    %4889 = vmatprep.subr.bf16.mxu0 %v4402
    %4890 = vmatpush1.bf16.msra.mxu0 %v4401
    %4891 = vmatprep.subr.bf16.mxu0 %v4406
    %4892 = vmatpush1.bf16.msra.mxu0 %v4405
    %4893 = vmatprep.subr.bf16.mxu0 %v4410
    %4894 = vmatpush1.bf16.msra.mxu0 %v4409
    %4895 = vmatprep.subr.bf16.mxu0 %v4414
    %4896 = vmatpush1.bf16.msra.mxu0 %v4413
    %4897 = vmatprep.mubr.bf16.mxu0 %v3300
    %4898 = vmatmul.mubr.bf16.gmra.mrb[0].mxu0 %v3299
    %v4899 = vpop.f32.mrb[0].mxu0
    %v4900 = vadd.f32 %v3568, %v4899
    %v4901 = vpop.f32.mrb[0].mxu0
    %v4902 = vadd.f32 %v3572, %v4901
    %v4903 = vpop.f32.mrb[0].mxu0
    %v4904 = vadd.f32 %v3568, %v4903
    %v4905 = vpop.f32.mrb[0].mxu0
    %v4906 = vadd.f32 %v3572, %v4905
    %4907 = vdwg.mxu0
    %4908 = vmatprep.subr.bf16.mxu0 %v4418
    %4909 = vmatpush1.bf16.msra.mxu0 %v4417
    %4910 = vmatprep.subr.bf16.mxu0 %v4422
    %4911 = vmatpush1.bf16.msra.mxu0 %v4421
    %4912 = vmatprep.subr.bf16.mxu0 %v4426
    %4913 = vmatpush1.bf16.msra.mxu0 %v4425
    %4914 = vmatprep.subr.bf16.mxu0 %v4430
    %4915 = vmatpush1.bf16.msra.mxu0 %v4429
    %4916 = vmatprep.subr.bf16.mxu0 %v4434
    %4917 = vmatpush1.bf16.msra.mxu0 %v4433
    %4918 = vmatprep.subr.bf16.mxu0 %v4438
    %4919 = vmatpush1.bf16.msra.mxu0 %v4437
    %4920 = vmatprep.subr.bf16.mxu0 %v4442
    %4921 = vmatpush1.bf16.msra.mxu0 %v4441
    %4922 = vmatprep.subr.bf16.mxu0 %v4446
    %4923 = vmatpush1.bf16.msra.mxu0 %v4445
    %4924 = vmatprep.subr.bf16.mxu0 %v4450
    %4925 = vmatpush1.bf16.msra.mxu0 %v4449
    %4926 = vmatprep.subr.bf16.mxu0 %v4454
    %4927 = vmatpush1.bf16.msra.mxu0 %v4453
    %4928 = vmatprep.subr.bf16.mxu0 %v4458
    %4929 = vmatpush1.bf16.msra.mxu0 %v4457
    %4930 = vmatprep.subr.bf16.mxu0 %v4462
    %4931 = vmatpush1.bf16.msra.mxu0 %v4461
    %4932 = vmatprep.subr.bf16.mxu0 %v4466
    %4933 = vmatpush1.bf16.msra.mxu0 %v4465
    %4934 = vmatprep.subr.bf16.mxu0 %v4470
    %4935 = vmatpush1.bf16.msra.mxu0 %v4469
    %4936 = vmatprep.subr.bf16.mxu0 %v4474
    %4937 = vmatpush1.bf16.msra.mxu0 %v4473
    %4938 = vmatprep.subr.bf16.mxu0 %v4478
    %4939 = vmatpush1.bf16.msra.mxu0 %v4477
    %4940 = vmatprep.mubr.bf16.mxu0 %v3302
    %4941 = vmatmul.mubr.bf16.gmra.mrb[0].mxu0 %v3301
    %v4942 = vpop.f32.mrb[0].mxu0
    %v4943 = vadd.f32 %v4900, %v4942
    %v4944 = vpop.f32.mrb[0].mxu0
    %v4945 = vadd.f32 %v4902, %v4944
    %v4946 = vpop.f32.mrb[0].mxu0
    %v4947 = vadd.f32 %v4904, %v4946
    %v4948 = vpop.f32.mrb[0].mxu0
    %v4949 = vadd.f32 %v4906, %v4948
    %4950 = vdwg.mxu0
    %4951 = vmatprep.subr.bf16.mxu0 %v4482
    %4952 = vmatpush1.bf16.msra.mxu0 %v4481
    %4953 = vmatprep.subr.bf16.mxu0 %v4486
    %4954 = vmatpush1.bf16.msra.mxu0 %v4485
    %4955 = vmatprep.subr.bf16.mxu0 %v4490
    %4956 = vmatpush1.bf16.msra.mxu0 %v4489
    %4957 = vmatprep.subr.bf16.mxu0 %v4494
    %4958 = vmatpush1.bf16.msra.mxu0 %v4493
    %4959 = vmatprep.subr.bf16.mxu0 %v4498
    %4960 = vmatpush1.bf16.msra.mxu0 %v4497
    %4961 = vmatprep.subr.bf16.mxu0 %v4502
    %4962 = vmatpush1.bf16.msra.mxu0 %v4501
    %4963 = vmatprep.subr.bf16.mxu0 %v4506
    %4964 = vmatpush1.bf16.msra.mxu0 %v4505
    %4965 = vmatprep.subr.bf16.mxu0 %v4510
    %4966 = vmatpush1.bf16.msra.mxu0 %v4509
    %4967 = vmatprep.subr.bf16.mxu0 %v4514
    %4968 = vmatpush1.bf16.msra.mxu0 %v4513
    %4969 = vmatprep.subr.bf16.mxu0 %v4518
    %4970 = vmatpush1.bf16.msra.mxu0 %v4517
    %4971 = vmatprep.subr.bf16.mxu0 %v4522
    %4972 = vmatpush1.bf16.msra.mxu0 %v4521
    %4973 = vmatprep.subr.bf16.mxu0 %v4526
    %4974 = vmatpush1.bf16.msra.mxu0 %v4525
    %4975 = vmatprep.subr.bf16.mxu0 %v4530
    %4976 = vmatpush1.bf16.msra.mxu0 %v4529
    %4977 = vmatprep.subr.bf16.mxu0 %v4534
    %4978 = vmatpush1.bf16.msra.mxu0 %v4533
    %4979 = vmatprep.subr.bf16.mxu0 %v4538
    %4980 = vmatpush1.bf16.msra.mxu0 %v4537
    %4981 = vmatprep.subr.bf16.mxu0 %v4542
    %4982 = vmatpush1.bf16.msra.mxu0 %v4541
    %4983 = vmatprep.mubr.bf16.mxu0 %v3304
    %4984 = vmatmul.mubr.bf16.gmra.mrb[0].mxu0 %v3303
    %v4985 = vpop.f32.mrb[0].mxu0
    %v4986 = vadd.f32 %v4943, %v4985
    %v4987 = vpop.f32.mrb[0].mxu0
    %v4988 = vadd.f32 %v4945, %v4987
    %v4989 = vpop.f32.mrb[0].mxu0
    %v4990 = vadd.f32 %v4947, %v4989
    %v4991 = vpop.f32.mrb[0].mxu0
    %v4992 = vadd.f32 %v4949, %v4991
    %4993 = vdwg.mxu0
    %4994 = vmatprep.subr.bf16.mxu0 %v4546
    %4995 = vmatpush1.bf16.msra.mxu0 %v4545
    %4996 = vmatprep.subr.bf16.mxu0 %v4550
    %4997 = vmatpush1.bf16.msra.mxu0 %v4549
    %4998 = vmatprep.subr.bf16.mxu0 %v4554
    %4999 = vmatpush1.bf16.msra.mxu0 %v4553
    %5000 = vmatprep.subr.bf16.mxu0 %v4558
    %5001 = vmatpush1.bf16.msra.mxu0 %v4557
    %5002 = vmatprep.subr.bf16.mxu0 %v4562
    %5003 = vmatpush1.bf16.msra.mxu0 %v4561
    %5004 = vmatprep.subr.bf16.mxu0 %v4566
    %5005 = vmatpush1.bf16.msra.mxu0 %v4565
    %5006 = vmatprep.subr.bf16.mxu0 %v4570
    %5007 = vmatpush1.bf16.msra.mxu0 %v4569
    %5008 = vmatprep.subr.bf16.mxu0 %v4574
    %5009 = vmatpush1.bf16.msra.mxu0 %v4573
    %5010 = vmatprep.subr.bf16.mxu0 %v4578
    %5011 = vmatpush1.bf16.msra.mxu0 %v4577
    %5012 = vmatprep.subr.bf16.mxu0 %v4582
    %5013 = vmatpush1.bf16.msra.mxu0 %v4581
    %5014 = vmatprep.subr.bf16.mxu0 %v4586
    %5015 = vmatpush1.bf16.msra.mxu0 %v4585
    %5016 = vmatprep.subr.bf16.mxu0 %v4590
    %5017 = vmatpush1.bf16.msra.mxu0 %v4589
    %5018 = vmatprep.subr.bf16.mxu0 %v4594
    %5019 = vmatpush1.bf16.msra.mxu0 %v4593
    %5020 = vmatprep.subr.bf16.mxu0 %v4598
    %5021 = vmatpush1.bf16.msra.mxu0 %v4597
    %5022 = vmatprep.subr.bf16.mxu0 %v4602
    %5023 = vmatpush1.bf16.msra.mxu0 %v4601
    %5024 = vmatprep.subr.bf16.mxu0 %v4606
    %5025 = vmatpush1.bf16.msra.mxu0 %v4605
    %5026 = vmatprep.mubr.bf16.mxu0 %v3306
    %5027 = vmatmul.mubr.bf16.gmra.mrb[0].mxu0 %v3305
    %v5028 = vpop.f32.mrb[0].mxu0
    %v5029 = vadd.f32 %v4986, %v5028
    %v5030 = vpop.f32.mrb[0].mxu0
    %v5031 = vadd.f32 %v4988, %v5030
    %v5032 = vpop.f32.mrb[0].mxu0
    %v5033 = vadd.f32 %v4990, %v5032
    %v5034 = vpop.f32.mrb[0].mxu0
    %v5035 = vadd.f32 %v4992, %v5034
    %5036 = vdwg.mxu0
    %5037 = vmatprep.subr.bf16.mxu0 %v4356
    %5038 = vmatpush1.bf16.msra.mxu0 %v4355
    %5039 = vmatprep.subr.bf16.mxu0 %v4360
    %5040 = vmatpush1.bf16.msra.mxu0 %v4359
    %5041 = vmatprep.subr.bf16.mxu0 %v4364
    %5042 = vmatpush1.bf16.msra.mxu0 %v4363
    %5043 = vmatprep.subr.bf16.mxu0 %v4368
    %5044 = vmatpush1.bf16.msra.mxu0 %v4367
    %5045 = vmatprep.subr.bf16.mxu0 %v4372
    %5046 = vmatpush1.bf16.msra.mxu0 %v4371
    %5047 = vmatprep.subr.bf16.mxu0 %v4376
    %5048 = vmatpush1.bf16.msra.mxu0 %v4375
    %5049 = vmatprep.subr.bf16.mxu0 %v4380
    %5050 = vmatpush1.bf16.msra.mxu0 %v4379
    %5051 = vmatprep.subr.bf16.mxu0 %v4384
    %5052 = vmatpush1.bf16.msra.mxu0 %v4383
    %5053 = vmatprep.subr.bf16.mxu0 %v4388
    %5054 = vmatpush1.bf16.msra.mxu0 %v4387
    %5055 = vmatprep.subr.bf16.mxu0 %v4392
    %5056 = vmatpush1.bf16.msra.mxu0 %v4391
    %5057 = vmatprep.subr.bf16.mxu0 %v4396
    %5058 = vmatpush1.bf16.msra.mxu0 %v4395
    %5059 = vmatprep.subr.bf16.mxu0 %v4400
    %5060 = vmatpush1.bf16.msra.mxu0 %v4399
    %5061 = vmatprep.subr.bf16.mxu0 %v4404
    %5062 = vmatpush1.bf16.msra.mxu0 %v4403
    %5063 = vmatprep.subr.bf16.mxu0 %v4408
    %5064 = vmatpush1.bf16.msra.mxu0 %v4407
    %5065 = vmatprep.subr.bf16.mxu0 %v4412
    %5066 = vmatpush1.bf16.msra.mxu0 %v4411
    %5067 = vmatprep.subr.bf16.mxu0 %v4416
    %5068 = vmatpush1.bf16.msra.mxu0 %v4415
    %5069 = vmatprep.mubr.bf16.mxu0 %v3300
    %5070 = vmatmul.mubr.bf16.gmra.mrb[0].mxu0 %v3299
    %v5071 = vpop.f32.mrb[0].mxu0
    %v5072 = vadd.f32 %v3576, %v5071
    %v5073 = vpop.f32.mrb[0].mxu0
    %v5074 = vadd.f32 %v3580, %v5073
    %v5075 = vpop.f32.mrb[0].mxu0
    %v5076 = vadd.f32 %v3576, %v5075
    %v5077 = vpop.f32.mrb[0].mxu0
    %v5078 = vadd.f32 %v3580, %v5077
    %5079 = vdwg.mxu0
    %5080 = vmatprep.subr.bf16.mxu0 %v4420
    %5081 = vmatpush1.bf16.msra.mxu0 %v4419
    %5082 = vmatprep.subr.bf16.mxu0 %v4424
    %5083 = vmatpush1.bf16.msra.mxu0 %v4423
    %5084 = vmatprep.subr.bf16.mxu0 %v4428
    %5085 = vmatpush1.bf16.msra.mxu0 %v4427
    %5086 = vmatprep.subr.bf16.mxu0 %v4432
    %5087 = vmatpush1.bf16.msra.mxu0 %v4431
    %5088 = vmatprep.subr.bf16.mxu0 %v4436
    %5089 = vmatpush1.bf16.msra.mxu0 %v4435
    %5090 = vmatprep.subr.bf16.mxu0 %v4440
    %5091 = vmatpush1.bf16.msra.mxu0 %v4439
    %5092 = vmatprep.subr.bf16.mxu0 %v4444
    %5093 = vmatpush1.bf16.msra.mxu0 %v4443
    %5094 = vmatprep.subr.bf16.mxu0 %v4448
    %5095 = vmatpush1.bf16.msra.mxu0 %v4447
    %5096 = vmatprep.subr.bf16.mxu0 %v4452
    %5097 = vmatpush1.bf16.msra.mxu0 %v4451
    %5098 = vmatprep.subr.bf16.mxu0 %v4456
    %5099 = vmatpush1.bf16.msra.mxu0 %v4455
    %5100 = vmatprep.subr.bf16.mxu0 %v4460
    %5101 = vmatpush1.bf16.msra.mxu0 %v4459
    %5102 = vmatprep.subr.bf16.mxu0 %v4464
    %5103 = vmatpush1.bf16.msra.mxu0 %v4463
    %5104 = vmatprep.subr.bf16.mxu0 %v4468
    %5105 = vmatpush1.bf16.msra.mxu0 %v4467
    %5106 = vmatprep.subr.bf16.mxu0 %v4472
    %5107 = vmatpush1.bf16.msra.mxu0 %v4471
    %5108 = vmatprep.subr.bf16.mxu0 %v4476
    %5109 = vmatpush1.bf16.msra.mxu0 %v4475
    %5110 = vmatprep.subr.bf16.mxu0 %v4480
    %5111 = vmatpush1.bf16.msra.mxu0 %v4479
    %5112 = vmatprep.mubr.bf16.mxu0 %v3302
    %5113 = vmatmul.mubr.bf16.gmra.mrb[0].mxu0 %v3301
    %v5114 = vpop.f32.mrb[0].mxu0
    %v5115 = vadd.f32 %v5072, %v5114
    %v5116 = vpop.f32.mrb[0].mxu0
    %v5117 = vadd.f32 %v5074, %v5116
    %v5118 = vpop.f32.mrb[0].mxu0
    %v5119 = vadd.f32 %v5076, %v5118
    %v5120 = vpop.f32.mrb[0].mxu0
    %v5121 = vadd.f32 %v5078, %v5120
    %5122 = vdwg.mxu0
    %5123 = vmatprep.subr.bf16.mxu0 %v4484
    %5124 = vmatpush1.bf16.msra.mxu0 %v4483
    %5125 = vmatprep.subr.bf16.mxu0 %v4488
    %5126 = vmatpush1.bf16.msra.mxu0 %v4487
    %5127 = vmatprep.subr.bf16.mxu0 %v4492
    %5128 = vmatpush1.bf16.msra.mxu0 %v4491
    %5129 = vmatprep.subr.bf16.mxu0 %v4496
    %5130 = vmatpush1.bf16.msra.mxu0 %v4495
    %5131 = vmatprep.subr.bf16.mxu0 %v4500
    %5132 = vmatpush1.bf16.msra.mxu0 %v4499
    %5133 = vmatprep.subr.bf16.mxu0 %v4504
    %5134 = vmatpush1.bf16.msra.mxu0 %v4503
    %5135 = vmatprep.subr.bf16.mxu0 %v4508
    %5136 = vmatpush1.bf16.msra.mxu0 %v4507
    %5137 = vmatprep.subr.bf16.mxu0 %v4512
    %5138 = vmatpush1.bf16.msra.mxu0 %v4511
    %5139 = vmatprep.subr.bf16.mxu0 %v4516
    %5140 = vmatpush1.bf16.msra.mxu0 %v4515
    %5141 = vmatprep.subr.bf16.mxu0 %v4520
    %5142 = vmatpush1.bf16.msra.mxu0 %v4519
    %5143 = vmatprep.subr.bf16.mxu0 %v4524
    %5144 = vmatpush1.bf16.msra.mxu0 %v4523
    %5145 = vmatprep.subr.bf16.mxu0 %v4528
    %5146 = vmatpush1.bf16.msra.mxu0 %v4527
    %5147 = vmatprep.subr.bf16.mxu0 %v4532
    %5148 = vmatpush1.bf16.msra.mxu0 %v4531
    %5149 = vmatprep.subr.bf16.mxu0 %v4536
    %5150 = vmatpush1.bf16.msra.mxu0 %v4535
    %5151 = vmatprep.subr.bf16.mxu0 %v4540
    %5152 = vmatpush1.bf16.msra.mxu0 %v4539
    %5153 = vmatprep.subr.bf16.mxu0 %v4544
    %5154 = vmatpush1.bf16.msra.mxu0 %v4543
    %5155 = vmatprep.mubr.bf16.mxu0 %v3304
    %5156 = vmatmul.mubr.bf16.gmra.mrb[0].mxu0 %v3303
    %v5157 = vpop.f32.mrb[0].mxu0
    %v5158 = vadd.f32 %v5115, %v5157
    %v5159 = vpop.f32.mrb[0].mxu0
    %v5160 = vadd.f32 %v5117, %v5159
    %v5161 = vpop.f32.mrb[0].mxu0
    %v5162 = vadd.f32 %v5119, %v5161
    %v5163 = vpop.f32.mrb[0].mxu0
    %v5164 = vadd.f32 %v5121, %v5163
    %5165 = vdwg.mxu0
    %5166 = vmatprep.subr.bf16.mxu0 %v4548
    %5167 = vmatpush1.bf16.msra.mxu0 %v4547
    %5168 = vmatprep.subr.bf16.mxu0 %v4552
    %5169 = vmatpush1.bf16.msra.mxu0 %v4551
    %5170 = vmatprep.subr.bf16.mxu0 %v4556
    %5171 = vmatpush1.bf16.msra.mxu0 %v4555
    %5172 = vmatprep.subr.bf16.mxu0 %v4560
    %5173 = vmatpush1.bf16.msra.mxu0 %v4559
    %5174 = vmatprep.subr.bf16.mxu0 %v4564
    %5175 = vmatpush1.bf16.msra.mxu0 %v4563
    %5176 = vmatprep.subr.bf16.mxu0 %v4568
    %5177 = vmatpush1.bf16.msra.mxu0 %v4567
    %5178 = vmatprep.subr.bf16.mxu0 %v4572
    %5179 = vmatpush1.bf16.msra.mxu0 %v4571
    %5180 = vmatprep.subr.bf16.mxu0 %v4576
    %5181 = vmatpush1.bf16.msra.mxu0 %v4575
    %5182 = vmatprep.subr.bf16.mxu0 %v4580
    %5183 = vmatpush1.bf16.msra.mxu0 %v4579
    %5184 = vmatprep.subr.bf16.mxu0 %v4584
    %5185 = vmatpush1.bf16.msra.mxu0 %v4583
    %5186 = vmatprep.subr.bf16.mxu0 %v4588
    %5187 = vmatpush1.bf16.msra.mxu0 %v4587
    %5188 = vmatprep.subr.bf16.mxu0 %v4592
    %5189 = vmatpush1.bf16.msra.mxu0 %v4591
    %5190 = vmatprep.subr.bf16.mxu0 %v4596
    %5191 = vmatpush1.bf16.msra.mxu0 %v4595
    %5192 = vmatprep.subr.bf16.mxu0 %v4600
    %5193 = vmatpush1.bf16.msra.mxu0 %v4599
    %5194 = vmatprep.subr.bf16.mxu0 %v4604
    %5195 = vmatpush1.bf16.msra.mxu0 %v4603
    %5196 = vmatprep.subr.bf16.mxu0 %v4608
    %5197 = vmatpush1.bf16.msra.mxu0 %v4607
    %5198 = vmatprep.mubr.bf16.mxu0 %v3306
    %5199 = vmatmul.mubr.bf16.gmra.mrb[0].mxu0 %v3305
    %v5200 = vpop.f32.mrb[0].mxu0
    %v5201 = vadd.f32 %v5158, %v5200
    %v5202 = vpop.f32.mrb[0].mxu0
    %v5203 = vadd.f32 %v5160, %v5202
    %v5204 = vpop.f32.mrb[0].mxu0
    %v5205 = vadd.f32 %v5162, %v5204
    %v5206 = vpop.f32.mrb[0].mxu0
    %v5207 = vadd.f32 %v5164, %v5206
    %5208 = vdwg.mxu0
    %vm5209 = vcmp.gt.f32.partialorder %v5029, 0.0
    %vm5210 = vcmp.gt.f32.partialorder %v5031, 0.0
    %vm5211 = vcmp.gt.f32.partialorder %v5201, 0.0
    %vm5212 = vcmp.gt.f32.partialorder %v5203, 0.0
    %vm5213 = vcmp.gt.f32.partialorder %v5033, 0.0
    %vm5214 = vcmp.gt.f32.partialorder %v5035, 0.0
    %vm5215 = vcmp.gt.f32.partialorder %v5205, 0.0
    %vm5216 = vcmp.gt.f32.partialorder %v5207, 0.0
    %v5217 = vmul.f32 %v5029, 0.2
    %v5218 = vmul.f32 %v5031, 0.2
    %v5219 = vmul.f32 %v5201, 0.2
    %v5220 = vmul.f32 %v5203, 0.2
    %v5221 = vmul.f32 %v5033, 0.2
    %v5222 = vmul.f32 %v5035, 0.2
    %v5223 = vmul.f32 %v5205, 0.2
    %v5224 = vmul.f32 %v5207, 0.2
    %v5225 = vsel %vm5209, %v5029, %v5217
    %v5226 = vsel %vm5210, %v5031, %v5218
    %v5227 = vsel %vm5211, %v5201, %v5219
    %v5228 = vsel %vm5212, %v5203, %v5220
    %v5229 = vsel %vm5213, %v5033, %v5221
    %v5230 = vsel %vm5214, %v5035, %v5222
    %v5231 = vsel %vm5215, %v5205, %v5223
    %v5232 = vsel %vm5216, %v5207, %v5224
    %v5233 = vpack.c.bf16 %v5229, %v5225
    %v5234 = vpack.c.bf16 %v5230, %v5226
    %v5235 = vpack.c.bf16 %v5231, %v5227
    %v5236 = vpack.c.bf16 %v5232, %v5228
    %v5237 = vld [vmem:[#allocation10] sm:$0xff]
    %v5238 = vld [vmem:[#allocation10 + $0x8] sm:$0xff]
    %v5239 = vld [vmem:[#allocation10 + $0x10] sm:$0xff]
    %v5240 = vld [vmem:[#allocation10 + $0x18] sm:$0xff]
    %v5241 = vld [vmem:[#allocation10 + $0x20] sm:$0xff]
    %v5242 = vld [vmem:[#allocation10 + $0x28] sm:$0xff]
    %v5243 = vld [vmem:[#allocation10 + $0x30] sm:$0xff]
    %v5244 = vld [vmem:[#allocation10 + $0x38] sm:$0xff]
    %v5245 = vld [vmem:[#allocation10 + $0x40] sm:$0xff]
    %v5246 = vld [vmem:[#allocation10 + $0x48] sm:$0xff]
    %v5247 = vld [vmem:[#allocation10 + $0x50] sm:$0xff]
    %v5248 = vld [vmem:[#allocation10 + $0x58] sm:$0xff]
    %v5249 = vld [vmem:[#allocation10 + $0x60] sm:$0xff]
    %v5250 = vld [vmem:[#allocation10 + $0x68] sm:$0xff]
    %v5251 = vld [vmem:[#allocation10 + $0x70] sm:$0xff]
    %v5252 = vld [vmem:[#allocation10 + $0x78] sm:$0xff]
    %v5253 = vld [vmem:[#allocation10 + $0x80] sm:$0xff]
    %v5254 = vld [vmem:[#allocation10 + $0x88] sm:$0xff]
    %v5255 = vld [vmem:[#allocation10 + $0x90] sm:$0xff]
    %v5256 = vld [vmem:[#allocation10 + $0x98] sm:$0xff]
    %v5257 = vld [vmem:[#allocation10 + $0xa0] sm:$0xff]
    %v5258 = vld [vmem:[#allocation10 + $0xa8] sm:$0xff]
    %v5259 = vld [vmem:[#allocation10 + $0xb0] sm:$0xff]
    %v5260 = vld [vmem:[#allocation10 + $0xb8] sm:$0xff]
    %v5261 = vld [vmem:[#allocation10 + $0xc0] sm:$0xff]
    %v5262 = vld [vmem:[#allocation10 + $0xc8] sm:$0xff]
    %v5263 = vld [vmem:[#allocation10 + $0xd0] sm:$0xff]
    %v5264 = vld [vmem:[#allocation10 + $0xd8] sm:$0xff]
    %v5265 = vld [vmem:[#allocation10 + $0xe0] sm:$0xff]
    %v5266 = vld [vmem:[#allocation10 + $0xe8] sm:$0xff]
    %v5267 = vld [vmem:[#allocation10 + $0xf0] sm:$0xff]
    %v5268 = vld [vmem:[#allocation10 + $0xf8] sm:$0xff]
    %v5269 = vld [vmem:[#allocation10 + $0x100] sm:$0xff]
    %v5270 = vld [vmem:[#allocation10 + $0x108] sm:$0xff]
    %v5271 = vld [vmem:[#allocation10 + $0x110] sm:$0xff]
    %v5272 = vld [vmem:[#allocation10 + $0x118] sm:$0xff]
    %v5273 = vld [vmem:[#allocation10 + $0x120] sm:$0xff]
    %v5274 = vld [vmem:[#allocation10 + $0x128] sm:$0xff]
    %v5275 = vld [vmem:[#allocation10 + $0x130] sm:$0xff]
    %v5276 = vld [vmem:[#allocation10 + $0x138] sm:$0xff]
    %v5277 = vld [vmem:[#allocation10 + $0x140] sm:$0xff]
    %v5278 = vld [vmem:[#allocation10 + $0x148] sm:$0xff]
    %v5279 = vld [vmem:[#allocation10 + $0x150] sm:$0xff]
    %v5280 = vld [vmem:[#allocation10 + $0x158] sm:$0xff]
    %v5281 = vld [vmem:[#allocation10 + $0x160] sm:$0xff]
    %v5282 = vld [vmem:[#allocation10 + $0x168] sm:$0xff]
    %v5283 = vld [vmem:[#allocation10 + $0x170] sm:$0xff]
    %v5284 = vld [vmem:[#allocation10 + $0x178] sm:$0xff]
    %v5285 = vld [vmem:[#allocation10 + $0x180] sm:$0xff]
    %v5286 = vld [vmem:[#allocation10 + $0x188] sm:$0xff]
    %v5287 = vld [vmem:[#allocation10 + $0x190] sm:$0xff]
    %v5288 = vld [vmem:[#allocation10 + $0x198] sm:$0xff]
    %v5289 = vld [vmem:[#allocation10 + $0x1a0] sm:$0xff]
    %v5290 = vld [vmem:[#allocation10 + $0x1a8] sm:$0xff]
    %v5291 = vld [vmem:[#allocation10 + $0x1b0] sm:$0xff]
    %v5292 = vld [vmem:[#allocation10 + $0x1b8] sm:$0xff]
    %v5293 = vld [vmem:[#allocation10 + $0x1c0] sm:$0xff]
    %v5294 = vld [vmem:[#allocation10 + $0x1c8] sm:$0xff]
    %v5295 = vld [vmem:[#allocation10 + $0x1d0] sm:$0xff]
    %v5296 = vld [vmem:[#allocation10 + $0x1d8] sm:$0xff]
    %v5297 = vld [vmem:[#allocation10 + $0x1e0] sm:$0xff]
    %v5298 = vld [vmem:[#allocation10 + $0x1e8] sm:$0xff]
    %v5299 = vld [vmem:[#allocation10 + $0x1f0] sm:$0xff]
    %v5300 = vld [vmem:[#allocation10 + $0x1f8] sm:$0xff]
    %v5301 = vld [vmem:[#allocation11] sm:$0x3]
    %v5303 = vlaneseq
    %v5304 = vshrl.u32 %v5303, 7
    %v5305 = vsub.s32 0, %v5304
    %v5306 = vrot.slane %v5301, %v5305
    %v5307 = vlaneseq
    %v5308 = vshrl.u32 %v5307, 7
    %v5309 = vsub.s32 1, %v5308
    %v5310 = vrot.slane %v5301, %v5309
    %v5377 = vunpack.c.l.b16 %v5237
    %v5378 = vunpack.c.h.b16 %v5237
    %v5379 = vunpack.c.l.b16 %v5238
    %v5380 = vunpack.c.h.b16 %v5238
    %v5381 = vunpack.c.l.b16 %v5239
    %v5382 = vunpack.c.h.b16 %v5239
    %v5383 = vunpack.c.l.b16 %v5240
    %v5384 = vunpack.c.h.b16 %v5240
    %v5385 = vunpack.c.l.b16 %v5241
    %v5386 = vunpack.c.h.b16 %v5241
    %v5387 = vunpack.c.l.b16 %v5242
    %v5388 = vunpack.c.h.b16 %v5242
    %v5389 = vunpack.c.l.b16 %v5243
    %v5390 = vunpack.c.h.b16 %v5243
    %v5391 = vunpack.c.l.b16 %v5244
    %v5392 = vunpack.c.h.b16 %v5244
    %v5393 = vunpack.c.l.b16 %v5245
    %v5394 = vunpack.c.h.b16 %v5245
    %v5395 = vunpack.c.l.b16 %v5246
    %v5396 = vunpack.c.h.b16 %v5246
    %v5397 = vunpack.c.l.b16 %v5247
    %v5398 = vunpack.c.h.b16 %v5247
    %v5399 = vunpack.c.l.b16 %v5248
    %v5400 = vunpack.c.h.b16 %v5248
    %v5401 = vunpack.c.l.b16 %v5249
    %v5402 = vunpack.c.h.b16 %v5249
    %v5403 = vunpack.c.l.b16 %v5250
    %v5404 = vunpack.c.h.b16 %v5250
    %v5405 = vunpack.c.l.b16 %v5251
    %v5406 = vunpack.c.h.b16 %v5251
    %v5407 = vunpack.c.l.b16 %v5252
    %v5408 = vunpack.c.h.b16 %v5252
    %v5409 = vunpack.c.l.b16 %v5253
    %v5410 = vunpack.c.h.b16 %v5253
    %v5411 = vunpack.c.l.b16 %v5254
    %v5412 = vunpack.c.h.b16 %v5254
    %v5413 = vunpack.c.l.b16 %v5255
    %v5414 = vunpack.c.h.b16 %v5255
    %v5415 = vunpack.c.l.b16 %v5256
    %v5416 = vunpack.c.h.b16 %v5256
    %v5417 = vunpack.c.l.b16 %v5257
    %v5418 = vunpack.c.h.b16 %v5257
    %v5419 = vunpack.c.l.b16 %v5258
    %v5420 = vunpack.c.h.b16 %v5258
    %v5421 = vunpack.c.l.b16 %v5259
    %v5422 = vunpack.c.h.b16 %v5259
    %v5423 = vunpack.c.l.b16 %v5260
    %v5424 = vunpack.c.h.b16 %v5260
    %v5425 = vunpack.c.l.b16 %v5261
    %v5426 = vunpack.c.h.b16 %v5261
    %v5427 = vunpack.c.l.b16 %v5262
    %v5428 = vunpack.c.h.b16 %v5262
    %v5429 = vunpack.c.l.b16 %v5263
    %v5430 = vunpack.c.h.b16 %v5263
    %v5431 = vunpack.c.l.b16 %v5264
    %v5432 = vunpack.c.h.b16 %v5264
    %v5433 = vunpack.c.l.b16 %v5265
    %v5434 = vunpack.c.h.b16 %v5265
    %v5435 = vunpack.c.l.b16 %v5266
    %v5436 = vunpack.c.h.b16 %v5266
    %v5437 = vunpack.c.l.b16 %v5267
    %v5438 = vunpack.c.h.b16 %v5267
    %v5439 = vunpack.c.l.b16 %v5268
    %v5440 = vunpack.c.h.b16 %v5268
    %v5441 = vunpack.c.l.b16 %v5269
    %v5442 = vunpack.c.h.b16 %v5269
    %v5443 = vunpack.c.l.b16 %v5270
    %v5444 = vunpack.c.h.b16 %v5270
    %v5445 = vunpack.c.l.b16 %v5271
    %v5446 = vunpack.c.h.b16 %v5271
    %v5447 = vunpack.c.l.b16 %v5272
    %v5448 = vunpack.c.h.b16 %v5272
    %v5449 = vunpack.c.l.b16 %v5273
    %v5450 = vunpack.c.h.b16 %v5273
    %v5451 = vunpack.c.l.b16 %v5274
    %v5452 = vunpack.c.h.b16 %v5274
    %v5453 = vunpack.c.l.b16 %v5275
    %v5454 = vunpack.c.h.b16 %v5275
    %v5455 = vunpack.c.l.b16 %v5276
    %v5456 = vunpack.c.h.b16 %v5276
    %v5457 = vunpack.c.l.b16 %v5277
    %v5458 = vunpack.c.h.b16 %v5277
    %v5459 = vunpack.c.l.b16 %v5278
    %v5460 = vunpack.c.h.b16 %v5278
    %v5461 = vunpack.c.l.b16 %v5279
    %v5462 = vunpack.c.h.b16 %v5279
    %v5463 = vunpack.c.l.b16 %v5280
    %v5464 = vunpack.c.h.b16 %v5280
    %v5465 = vunpack.c.l.b16 %v5281
    %v5466 = vunpack.c.h.b16 %v5281
    %v5467 = vunpack.c.l.b16 %v5282
    %v5468 = vunpack.c.h.b16 %v5282
    %v5469 = vunpack.c.l.b16 %v5283
    %v5470 = vunpack.c.h.b16 %v5283
    %v5471 = vunpack.c.l.b16 %v5284
    %v5472 = vunpack.c.h.b16 %v5284
    %v5473 = vunpack.c.l.b16 %v5285
    %v5474 = vunpack.c.h.b16 %v5285
    %v5475 = vunpack.c.l.b16 %v5286
    %v5476 = vunpack.c.h.b16 %v5286
    %v5477 = vunpack.c.l.b16 %v5287
    %v5478 = vunpack.c.h.b16 %v5287
    %v5479 = vunpack.c.l.b16 %v5288
    %v5480 = vunpack.c.h.b16 %v5288
    %v5481 = vunpack.c.l.b16 %v5289
    %v5482 = vunpack.c.h.b16 %v5289
    %v5483 = vunpack.c.l.b16 %v5290
    %v5484 = vunpack.c.h.b16 %v5290
    %v5485 = vunpack.c.l.b16 %v5291
    %v5486 = vunpack.c.h.b16 %v5291
    %v5487 = vunpack.c.l.b16 %v5292
    %v5488 = vunpack.c.h.b16 %v5292
    %v5489 = vunpack.c.l.b16 %v5293
    %v5490 = vunpack.c.h.b16 %v5293
    %v5491 = vunpack.c.l.b16 %v5294
    %v5492 = vunpack.c.h.b16 %v5294
    %v5493 = vunpack.c.l.b16 %v5295
    %v5494 = vunpack.c.h.b16 %v5295
    %v5495 = vunpack.c.l.b16 %v5296
    %v5496 = vunpack.c.h.b16 %v5296
    %v5497 = vunpack.c.l.b16 %v5297
    %v5498 = vunpack.c.h.b16 %v5297
    %v5499 = vunpack.c.l.b16 %v5298
    %v5500 = vunpack.c.h.b16 %v5298
    %v5501 = vunpack.c.l.b16 %v5299
    %v5502 = vunpack.c.h.b16 %v5299
    %v5503 = vunpack.c.l.b16 %v5300
    %v5504 = vunpack.c.h.b16 %v5300
    %v5505 = vpack.c.b16 %v5379, %v5377
    %v5506 = vpack.c.b16 %v5380, %v5378
    %v5507 = vpack.c.b16 %v5383, %v5381
    %v5508 = vpack.c.b16 %v5384, %v5382
    %v5509 = vpack.c.b16 %v5387, %v5385
    %v5510 = vpack.c.b16 %v5388, %v5386
    %v5511 = vpack.c.b16 %v5391, %v5389
    %v5512 = vpack.c.b16 %v5392, %v5390
    %v5513 = vpack.c.b16 %v5395, %v5393
    %v5514 = vpack.c.b16 %v5396, %v5394
    %v5515 = vpack.c.b16 %v5399, %v5397
    %v5516 = vpack.c.b16 %v5400, %v5398
    %v5517 = vpack.c.b16 %v5403, %v5401
    %v5518 = vpack.c.b16 %v5404, %v5402
    %v5519 = vpack.c.b16 %v5407, %v5405
    %v5520 = vpack.c.b16 %v5408, %v5406
    %v5521 = vpack.c.b16 %v5411, %v5409
    %v5522 = vpack.c.b16 %v5412, %v5410
    %v5523 = vpack.c.b16 %v5415, %v5413
    %v5524 = vpack.c.b16 %v5416, %v5414
    %v5525 = vpack.c.b16 %v5419, %v5417
    %v5526 = vpack.c.b16 %v5420, %v5418
    %v5527 = vpack.c.b16 %v5423, %v5421
    %v5528 = vpack.c.b16 %v5424, %v5422
    %v5529 = vpack.c.b16 %v5427, %v5425
    %v5530 = vpack.c.b16 %v5428, %v5426
    %v5531 = vpack.c.b16 %v5431, %v5429
    %v5532 = vpack.c.b16 %v5432, %v5430
    %v5533 = vpack.c.b16 %v5435, %v5433
    %v5534 = vpack.c.b16 %v5436, %v5434
    %v5535 = vpack.c.b16 %v5439, %v5437
    %v5536 = vpack.c.b16 %v5440, %v5438
    %v5537 = vpack.c.b16 %v5443, %v5441
    %v5538 = vpack.c.b16 %v5444, %v5442
    %v5539 = vpack.c.b16 %v5447, %v5445
    %v5540 = vpack.c.b16 %v5448, %v5446
    %v5541 = vpack.c.b16 %v5451, %v5449
    %v5542 = vpack.c.b16 %v5452, %v5450
    %v5543 = vpack.c.b16 %v5455, %v5453
    %v5544 = vpack.c.b16 %v5456, %v5454
    %v5545 = vpack.c.b16 %v5459, %v5457
    %v5546 = vpack.c.b16 %v5460, %v5458
    %v5547 = vpack.c.b16 %v5463, %v5461
    %v5548 = vpack.c.b16 %v5464, %v5462
    %v5549 = vpack.c.b16 %v5467, %v5465
    %v5550 = vpack.c.b16 %v5468, %v5466
    %v5551 = vpack.c.b16 %v5471, %v5469
    %v5552 = vpack.c.b16 %v5472, %v5470
    %v5553 = vpack.c.b16 %v5475, %v5473
    %v5554 = vpack.c.b16 %v5476, %v5474
    %v5555 = vpack.c.b16 %v5479, %v5477
    %v5556 = vpack.c.b16 %v5480, %v5478
    %v5557 = vpack.c.b16 %v5483, %v5481
    %v5558 = vpack.c.b16 %v5484, %v5482
    %v5559 = vpack.c.b16 %v5487, %v5485
    %v5560 = vpack.c.b16 %v5488, %v5486
    %v5561 = vpack.c.b16 %v5491, %v5489
    %v5562 = vpack.c.b16 %v5492, %v5490
    %v5563 = vpack.c.b16 %v5495, %v5493
    %v5564 = vpack.c.b16 %v5496, %v5494
    %v5565 = vpack.c.b16 %v5499, %v5497
    %v5566 = vpack.c.b16 %v5500, %v5498
    %v5567 = vpack.c.b16 %v5503, %v5501
    %v5568 = vpack.c.b16 %v5504, %v5502
    %5633 = vmatprep.subr.bf16.mxu0 %v5506
    %5634 = vmatpush1.bf16.msra.mxu0 %v5505
    %5635 = vmatprep.subr.bf16.mxu0 %v5508
    %5636 = vmatpush1.bf16.msra.mxu0 %v5507
    %5637 = vmatprep.subr.bf16.mxu0 %v5510
    %5638 = vmatpush1.bf16.msra.mxu0 %v5509
    %5639 = vmatprep.subr.bf16.mxu0 %v5512
    %5640 = vmatpush1.bf16.msra.mxu0 %v5511
    %5641 = vmatprep.subr.bf16.mxu0 %v5514
    %5642 = vmatpush1.bf16.msra.mxu0 %v5513
    %5643 = vmatprep.subr.bf16.mxu0 %v5516
    %5644 = vmatpush1.bf16.msra.mxu0 %v5515
    %5645 = vmatprep.subr.bf16.mxu0 %v5518
    %5646 = vmatpush1.bf16.msra.mxu0 %v5517
    %5647 = vmatprep.subr.bf16.mxu0 %v5520
    %5648 = vmatpush1.bf16.msra.mxu0 %v5519
    %5649 = vmatprep.subr.bf16.mxu0 %v5522
    %5650 = vmatpush1.bf16.msra.mxu0 %v5521
    %5651 = vmatprep.subr.bf16.mxu0 %v5524
    %5652 = vmatpush1.bf16.msra.mxu0 %v5523
    %5653 = vmatprep.subr.bf16.mxu0 %v5526
    %5654 = vmatpush1.bf16.msra.mxu0 %v5525
    %5655 = vmatprep.subr.bf16.mxu0 %v5528
    %5656 = vmatpush1.bf16.msra.mxu0 %v5527
    %5657 = vmatprep.subr.bf16.mxu0 %v5530
    %5658 = vmatpush1.bf16.msra.mxu0 %v5529
    %5659 = vmatprep.subr.bf16.mxu0 %v5532
    %5660 = vmatpush1.bf16.msra.mxu0 %v5531
    %5661 = vmatprep.subr.bf16.mxu0 %v5534
    %5662 = vmatpush1.bf16.msra.mxu0 %v5533
    %5663 = vmatprep.subr.bf16.mxu0 %v5536
    %5664 = vmatpush1.bf16.msra.mxu0 %v5535
    %5665 = vmatprep.mubr.bf16.mxu0 %v5234
    %5666 = vmatmul.mubr.bf16.gmra.mrb[0].mxu0 %v5233
    %v5667 = vpop.f32.mrb[0].mxu0
    %v5668 = vadd.f32 %v5306, %v5667
    %v5669 = vpop.f32.mrb[0].mxu0
    %v5670 = vadd.f32 %v5310, %v5669
    %v5671 = vpop.f32.mrb[0].mxu0
    %v5672 = vadd.f32 %v5306, %v5671
    %v5673 = vpop.f32.mrb[0].mxu0
    %v5674 = vadd.f32 %v5310, %v5673
    %5675 = vdwg.mxu0
    %5676 = vmatprep.subr.bf16.mxu0 %v5538
    %5677 = vmatpush1.bf16.msra.mxu0 %v5537
    %5678 = vmatprep.subr.bf16.mxu0 %v5540
    %5679 = vmatpush1.bf16.msra.mxu0 %v5539
    %5680 = vmatprep.subr.bf16.mxu0 %v5542
    %5681 = vmatpush1.bf16.msra.mxu0 %v5541
    %5682 = vmatprep.subr.bf16.mxu0 %v5544
    %5683 = vmatpush1.bf16.msra.mxu0 %v5543
    %5684 = vmatprep.subr.bf16.mxu0 %v5546
    %5685 = vmatpush1.bf16.msra.mxu0 %v5545
    %5686 = vmatprep.subr.bf16.mxu0 %v5548
    %5687 = vmatpush1.bf16.msra.mxu0 %v5547
    %5688 = vmatprep.subr.bf16.mxu0 %v5550
    %5689 = vmatpush1.bf16.msra.mxu0 %v5549
    %5690 = vmatprep.subr.bf16.mxu0 %v5552
    %5691 = vmatpush1.bf16.msra.mxu0 %v5551
    %5692 = vmatprep.subr.bf16.mxu0 %v5554
    %5693 = vmatpush1.bf16.msra.mxu0 %v5553
    %5694 = vmatprep.subr.bf16.mxu0 %v5556
    %5695 = vmatpush1.bf16.msra.mxu0 %v5555
    %5696 = vmatprep.subr.bf16.mxu0 %v5558
    %5697 = vmatpush1.bf16.msra.mxu0 %v5557
    %5698 = vmatprep.subr.bf16.mxu0 %v5560
    %5699 = vmatpush1.bf16.msra.mxu0 %v5559
    %5700 = vmatprep.subr.bf16.mxu0 %v5562
    %5701 = vmatpush1.bf16.msra.mxu0 %v5561
    %5702 = vmatprep.subr.bf16.mxu0 %v5564
    %5703 = vmatpush1.bf16.msra.mxu0 %v5563
    %5704 = vmatprep.subr.bf16.mxu0 %v5566
    %5705 = vmatpush1.bf16.msra.mxu0 %v5565
    %5706 = vmatprep.subr.bf16.mxu0 %v5568
    %5707 = vmatpush1.bf16.msra.mxu0 %v5567
    %5708 = vmatprep.mubr.bf16.mxu0 %v5236
    %5709 = vmatmul.mubr.bf16.gmra.mrb[0].mxu0 %v5235
    %v5710 = vpop.f32.mrb[0].mxu0
    %v5711 = vadd.f32 %v5668, %v5710
    %v5712 = vpop.f32.mrb[0].mxu0
    %v5713 = vadd.f32 %v5670, %v5712
    %v5714 = vpop.f32.mrb[0].mxu0
    %v5715 = vadd.f32 %v5672, %v5714
    %v5716 = vpop.f32.mrb[0].mxu0
    %v5717 = vadd.f32 %v5674, %v5716
    %5718 = vdwg.mxu0
    %vm5719 = vcmp.gt.f32.partialorder %v5711, 0.0
    %vm5720 = vcmp.gt.f32.partialorder %v5713, 0.0
    %vm5721 = vcmp.gt.f32.partialorder %v5715, 0.0
    %vm5722 = vcmp.gt.f32.partialorder %v5717, 0.0
    %v5723 = vmul.f32 %v5711, 0.2
    %v5724 = vmul.f32 %v5713, 0.2
    %v5725 = vmul.f32 %v5715, 0.2
    %v5726 = vmul.f32 %v5717, 0.2
    %v5727 = vsel %vm5719, %v5711, %v5723
    %v5728 = vsel %vm5720, %v5713, %v5724
    %v5729 = vsel %vm5721, %v5715, %v5725
    %v5730 = vsel %vm5722, %v5717, %v5726
    %v5731 = vld [vmem:[#allocation13] sm:$0x3]
    %v5733 = vlaneseq
    %v5734 = vshrl.u32 %v5733, 7
    %v5735 = vsub.s32 0, %v5734
    %v5736 = vrot.slane %v5731, %v5735
    %v5737 = vlaneseq
    %v5738 = vshrl.u32 %v5737, 7
    %v5739 = vsub.s32 1, %v5738
    %v5740 = vrot.slane %v5731, %v5739
    %v5743 = vmul.f32 %v5727, %v5736
    %v5744 = vmul.f32 %v5728, %v5740
    %v5745 = vmul.f32 %v5729, %v5736
    %v5746 = vmul.f32 %v5730, %v5740
    %v5747 = vadd.f32 %v5743, %v5744
    %5748 = vadd.xlane.f32.xlu0 %v5747
    %v5749 = vpop.xlane.xlu0 %5748
    %v5750 = vadd.f32 %v5745, %v5746
    %5751 = vadd.xlane.f32.xlu0 %v5750
    %v5752 = vpop.xlane.xlu0 %5751
    %v5753 = vld [vmem:[#allocation2] sm:$0x1]
    %v5755 = vlaneseq
    %v5756 = vshrl.u32 %v5755, 7
    %v5757 = vsub.s32 0, %v5756
    %v5758 = vrot.slane %v5753, %v5757
    %v5760 = vadd.f32 %v5749, %v5758
    %v5761 = vadd.f32 %v5752, %v5758
    %v5762 = vsub.f32 0.0, %v5760
    %v5763 = vsub.f32 0.0, %v5761
    %v5764 = vmul.f32 %v5762, 1.442695
    %v5765 = vpow.pop %v5764
    %v5766 = vmul.f32 %v5763, 1.442695
    %v5767 = vpow.pop %v5766
    %v5768 = vadd.f32 %v5765, 1.0
    %v5769 = vadd.f32 %v5767, 1.0
    %v5770 = vrcp.pop %v5768
    %v5771 = vrcp.pop %v5769
    %vm5772 = vcmask 7168
    %5773 = vst.msk [vmem:[%s9] sm:$0xff] %vm5772, %v5770
    %5774 = vst.msk [vmem:[%s9 + $0x8] sm:$0xff] %vm5772, %v5771
    // Predicated region
    $region66: #{_forward.1} parent=1 // pred_check
      _
    $region67: #{_forward.1} parent=1 // pred_check_branch
      %5776 = sbr.rel (0) target = $region69
    $region68: #{_forward.1} parent=1 // pred_region
      _
    $region69: #{_forward.1} parent=1 // pred_fallthru
      _
    // Predicated region
    $region70: #{_forward.1} parent=1 // pred_check
      _
    $region71: #{_forward.1} parent=1 // pred_check_branch
      %5778 = sbr.rel (0) target = $region73
    $region72: #{_forward.1} parent=1 // pred_region
      _
    $region73: #{_forward.1} parent=1 // pred_fallthru
      _
    %5779 = vsyncpa [#allocation4], 1
    %5780 = vsyncpa [#allocation6], 1
    %5781 = vsyncpa [#allocation9], 1
    %5782 = vsyncpa [#allocation12], 1

</llo_original>
